<compile_context>
chip_gen: v5e
topology: v5e:2x2
jax: 0.10.0
libtpu: 0.0.40
codegen_flags: <defaults>
</compile_context>

<pallas_src>
import jax
import jax.numpy as jnp
from jax.experimental import pallas as pl
from jax.experimental.pallas import tpu as pltpu


def _fusion_kernel(s1_ref, s2_ref, s3_ref, w1_ref, w2_ref, w3_ref, o_ref):
    # All refs are lane-dense 2D (tile_rows, W) tiles (W multiple of 128,
    # tile_rows multiple of 8).  Pure VPU FMA work; DMA-bound overall.
    o_ref[...] = (
        s1_ref[...] * w1_ref[...]
        + s2_ref[...] * w2_ref[...]
        + s3_ref[...] * w3_ref[...]
    )


def _vmem_capacity_bytes():
    try:
        return int(pltpu.get_tpu_info().vmem_capacity_bytes)
    except Exception:
        # Conservative fallback (v7x per-core figure).
        return 64 * 1024 * 1024


def _pick_tile_rows(rows, width, target_block_bytes):
    """Largest row-tile <= target bytes that is a multiple of 8 and divides rows."""
    max_rows = max(8, target_block_bytes // (width * 4))
    tr = min(rows, max_rows)
    tr -= tr % 8
    tr = max(tr, 8)
    while tr > 8 and rows % tr != 0:
        tr -= 8
    return tr


def fusion_model_512(seg1, seg2, seg3, w1, w2, w3):
    """Computes seg1*w1 + seg2*w2 + seg3*w3 with weight broadcast over batch.

    seg*: (B, C, H, W) float32
    w*  : (C, H, W)    float32
    """
    B, C, H, W = seg1.shape
    assert w1.shape == (C, H, W) and w2.shape == (C, H, W) and w3.shape == (C, H, W)
    assert W % 128 == 0, "W must be lane-dense (multiple of 128)"

    rows = C * H
    assert rows % 8 == 0

    # Per-generation tile sizing: big enough to amortize the ~0.35 us per-grid-
    # step overhead, small enough that 7 arrays x 2 buffers stays well inside
    # VMEM on every generation.
    vmem_cap = _vmem_capacity_bytes()
    if vmem_cap >= 100 * 1024 * 1024:          # v5e / v6e (128 MiB VMEM)
        target_block_bytes = 4 * 1024 * 1024   # ~56 MiB double-buffered
        vmem_limit = 96 * 1024 * 1024
    else:                                       # v7x (64 MiB per-core VMEM)
        target_block_bytes = 2 * 1024 * 1024   # ~28 MiB double-buffered
        vmem_limit = 48 * 1024 * 1024

    tile_rows = _pick_tile_rows(rows, W, target_block_bytes)
    assert rows % tile_rows == 0 and tile_rows % 8 == 0

    # Collapse (C, H) -> rows.  Contiguous reshape: pure metadata, no copy.
    s1 = seg1.reshape(B, rows, W)
    s2 = seg2.reshape(B, rows, W)
    s3 = seg3.reshape(B, rows, W)
    w1f = w1.reshape(rows, W)
    w2f = w2.reshape(rows, W)
    w3f = w3.reshape(rows, W)

    # Batch innermost: weight block index (r, 0) is constant across the b steps,
    # so Pallas keeps the weight tiles resident (no redundant weight DMA).
    # TODO(synk): verify in xprof / bundle dump that Mosaic elides the repeated
    # weight DMA across the innermost b steps; if not, fall back to weights in
    # memory_space=pl.ANY with one manual make_async_copy per row block.
    grid = (rows // tile_rows, B)

    seg_spec = pl.BlockSpec(
        (pl.Squeezed(), tile_rows, W),
        lambda r, b: (b, r, 0),
    )
    w_spec = pl.BlockSpec(
        (tile_rows, W),
        lambda r, b: (r, 0),
    )
    out_spec = pl.BlockSpec(
        (pl.Squeezed(), tile_rows, W),
        lambda r, b: (b, r, 0),
    )

    # 5 flops/elem (3 mul + 2 add); bytes = 3 seg reads + 1 write per batch
    # element, plus the 3 weight arrays read once each.
    elems = B * rows * W
    cost = pl.CostEstimate(
        flops=5 * elems,
        transcendentals=0,
        bytes_accessed=(4 * B + 3) * rows * W * 4,
    )

    out = pl.pallas_call(
        _fusion_kernel,
        out_shape=jax.ShapeDtypeStruct((B, rows, W), seg1.dtype),
        grid=grid,
        in_specs=[seg_spec, seg_spec, seg_spec, w_spec, w_spec, w_spec],
        out_specs=out_spec,
        cost_estimate=cost,
        compiler_params=pltpu.CompilerParams(
            # Row axis carries the megacore split (v7x); b must stay "arbitrary"
            # so weight residency across consecutive b steps holds on each core.
            dimension_semantics=("parallel", "arbitrary"),
            vmem_limit_bytes=vmem_limit,
        ),
    )(s1, s2, s3, w1f, w2f, w3f)

    return out.reshape(B, C, H, W)


if __name__ == "__main__":
    # Small-but-faithful shapes: the module hardcodes 512x512 spatial weights.
    B = 2          # batch
    CLASS_NUM = 4  # class_num (reference uses 150; kept small here)
    H = W = 512

    key = jax.random.PRNGKey(0)
    k1, k2, k3, k4, k5, k6 = jax.random.split(key, 6)

    # Parameters (deterministic, mimicking np.random.rand -> uniform [0, 1)).
    w1 = jax.random.uniform(k1, (CLASS_NUM, H, W), dtype=jnp.float32)
    w2 = jax.random.uniform(k2, (CLASS_NUM, H, W), dtype=jnp.float32)
    w3 = jax.random.uniform(k3, (CLASS_NUM, H, W), dtype=jnp.float32)

    # Inputs: three per-class segmentation score maps.
    seg1 = jax.random.uniform(k4, (B, CLASS_NUM, H, W), dtype=jnp.float32)
    seg2 = jax.random.uniform(k5, (B, CLASS_NUM, H, W), dtype=jnp.float32)
    seg3 = jax.random.uniform(k6, (B, CLASS_NUM, H, W), dtype=jnp.float32)

    out = fusion_model_512(seg1, seg2, seg3, w1, w2, w3)
    out = jax.block_until_ready(out)

    # Reference check against plain JAX (same broadcasting as PyTorch).
    ref = seg1 * w1[None] + seg2 * w2[None] + seg3 * w3[None]
    assert out.shape == (B, CLASS_NUM, H, W)
    assert jnp.allclose(out, ref, atol=1e-5, rtol=1e-5)

    print("KERNEL_OK")
</pallas_src>

<mosaic_0001>
module attributes {stable_mosaic.version = 11 : i64} {
  func.func @_fusion_kernel(%arg0: i32, %arg1: i32, %arg2: memref<1x1024x512xf32, #tpu.memory_space<vmem>>, %arg3: memref<1x1024x512xf32, #tpu.memory_space<vmem>>, %arg4: memref<1x1024x512xf32, #tpu.memory_space<vmem>>, %arg5: memref<1024x512xf32, #tpu.memory_space<vmem>>, %arg6: memref<1024x512xf32, #tpu.memory_space<vmem>>, %arg7: memref<1024x512xf32, #tpu.memory_space<vmem>>, %arg8: memref<1x1024x512xf32, #tpu.memory_space<vmem>>) attributes {dimension_semantics = [#tpu.dimension_semantics<parallel>, #tpu.dimension_semantics<arbitrary>], iteration_bounds = array<i64: 2, 2>, scalar_prefetch = 0 : i64, scratch_operands = 0 : i64, tpu.core_type = #tpu.core_type<tc>, window_params = [{transform_indices = @transform_0, window_bounds = array<i64: 1, 1024, 512>}, {transform_indices = @transform_1, window_bounds = array<i64: 1, 1024, 512>}, {transform_indices = @transform_2, window_bounds = array<i64: 1, 1024, 512>}, {transform_indices = @transform_3, window_bounds = array<i64: 1024, 512>}, {transform_indices = @transform_4, window_bounds = array<i64: 1024, 512>}, {transform_indices = @transform_5, window_bounds = array<i64: 1024, 512>}, {transform_indices = @transform_6, window_bounds = array<i64: 1, 1024, 512>}]} {
    %c0 = arith.constant 0 : index
    %c0_0 = arith.constant 0 : index
    %c0_1 = arith.constant 0 : index
    %0 = vector.load %arg2[%c0, %c0_0, %c0_1] : memref<1x1024x512xf32, #tpu.memory_space<vmem>>, vector<1x1024x512xf32>
    %1 = vector.shape_cast %0 : vector<1x1024x512xf32> to vector<1024x512xf32>
    %c0_2 = arith.constant 0 : index
    %c0_3 = arith.constant 0 : index
    %2 = vector.load %arg5[%c0_2, %c0_3] : memref<1024x512xf32, #tpu.memory_space<vmem>>, vector<1024x512xf32>
    %3 = arith.mulf %1, %2 : vector<1024x512xf32>
    %c0_4 = arith.constant 0 : index
    %c0_5 = arith.constant 0 : index
    %c0_6 = arith.constant 0 : index
    %4 = vector.load %arg3[%c0_4, %c0_5, %c0_6] : memref<1x1024x512xf32, #tpu.memory_space<vmem>>, vector<1x1024x512xf32>
    %5 = vector.shape_cast %4 : vector<1x1024x512xf32> to vector<1024x512xf32>
    %c0_7 = arith.constant 0 : index
    %c0_8 = arith.constant 0 : index
    %6 = vector.load %arg6[%c0_7, %c0_8] : memref<1024x512xf32, #tpu.memory_space<vmem>>, vector<1024x512xf32>
    %7 = arith.mulf %5, %6 : vector<1024x512xf32>
    %8 = arith.addf %3, %7 : vector<1024x512xf32>
    %c0_9 = arith.constant 0 : index
    %c0_10 = arith.constant 0 : index
    %c0_11 = arith.constant 0 : index
    %9 = vector.load %arg4[%c0_9, %c0_10, %c0_11] : memref<1x1024x512xf32, #tpu.memory_space<vmem>>, vector<1x1024x512xf32>
    %10 = vector.shape_cast %9 : vector<1x1024x512xf32> to vector<1024x512xf32>
    %c0_12 = arith.constant 0 : index
    %c0_13 = arith.constant 0 : index
    %11 = vector.load %arg7[%c0_12, %c0_13] : memref<1024x512xf32, #tpu.memory_space<vmem>>, vector<1024x512xf32>
    %12 = arith.mulf %10, %11 : vector<1024x512xf32>
    %13 = arith.addf %8, %12 : vector<1024x512xf32>
    %c0_14 = arith.constant 0 : index
    %c0_15 = arith.constant 0 : index
    %c0_16 = arith.constant 0 : index
    %14 = vector.load %arg8[%c0_14, %c0_15, %c0_16] : memref<1x1024x512xf32, #tpu.memory_space<vmem>>, vector<1x1024x512xf32>
    %15 = vector.shape_cast %14 : vector<1x1024x512xf32> to vector<1024x512xf32>
    %16 = vector.shape_cast %13 : vector<1024x512xf32> to vector<1x1024x512xf32>
    tpu.vector_store %arg8[%c0_14, %c0_15, %c0_16], %16 {strides = array<i32>} : memref<1x1024x512xf32, #tpu.memory_space<vmem>>, vector<1x1024x512xf32>,
    return
  }
  func.func @transform_0(%arg0: i32, %arg1: i32) -> (i32, i32, i32) {
    %c0_i32 = arith.constant 0 : i32
    %c0_i32_0 = arith.constant 0 : i32
    return %arg1, %arg0, %c0_i32 : i32, i32, i32
  }
  func.func @transform_1(%arg0: i32, %arg1: i32) -> (i32, i32, i32) {
    %c0_i32 = arith.constant 0 : i32
    %c0_i32_0 = arith.constant 0 : i32
    return %arg1, %arg0, %c0_i32 : i32, i32, i32
  }
  func.func @transform_2(%arg0: i32, %arg1: i32) -> (i32, i32, i32) {
    %c0_i32 = arith.constant 0 : i32
    %c0_i32_0 = arith.constant 0 : i32
    return %arg1, %arg0, %c0_i32 : i32, i32, i32
  }
  func.func @transform_3(%arg0: i32, %arg1: i32) -> (i32, i32) {
    %c0_i32 = arith.constant 0 : i32
    %c0_i32_0 = arith.constant 0 : i32
    return %arg0, %c0_i32 : i32, i32
  }
  func.func @transform_4(%arg0: i32, %arg1: i32) -> (i32, i32) {
    %c0_i32 = arith.constant 0 : i32
    %c0_i32_0 = arith.constant 0 : i32
    return %arg0, %c0_i32 : i32, i32
  }
  func.func @transform_5(%arg0: i32, %arg1: i32) -> (i32, i32) {
    %c0_i32 = arith.constant 0 : i32
    %c0_i32_0 = arith.constant 0 : i32
    return %arg0, %c0_i32 : i32, i32
  }
  func.func @transform_6(%arg0: i32, %arg1: i32) -> (i32, i32, i32) {
    %c0_i32 = arith.constant 0 : i32
    %c0_i32_0 = arith.constant 0 : i32
    return %arg1, %arg0, %c0_i32 : i32, i32, i32
  }
}

</mosaic_0001>

<llo_original>
// kernel: tpu_custom_call.1
$region0: #{tpu_custom_call.1}
  #allocation0 [shape = 'u32[]', space=smem, size = 0x4, offset = 0x4, fixed_abs, tag = 'smem constant byte address 0x4 - core index']
  #allocation1 [shape = 'u32[72,128]{1,0:T(1,128)}', space=vmem, size = 0x9000, scoped, tag = 'internal scratch']
  %s0 = inlined_call_operand.hbm [shape: f32[2,2048,512], index: 0, kind: input, shape index: {}]
  %s1 = inlined_call_operand.hbm [shape: f32[2,2048,512], index: 1, kind: input, shape index: {}]
  %s2 = inlined_call_operand.hbm [shape: f32[2,2048,512], index: 2, kind: input, shape index: {}]
  %s3 = inlined_call_operand.hbm [shape: f32[2048,512], index: 3, kind: input, shape index: {}]
  %s4 = inlined_call_operand.hbm [shape: f32[2048,512], index: 4, kind: input, shape index: {}]
  %s5 = inlined_call_operand.hbm [shape: f32[2048,512], index: 5, kind: input, shape index: {}]
  %s6 = inlined_call_operand.hbm [shape: f32[2,2048,512], index: 6, kind: output, shape index: {}]
  %s7 = sld [smem:[#allocation0]]
  $region81: #{tpu_custom_call.1} parent=0
    _
  %s9 = ssub.s32 1, %s7
  %s10 = scalar_select 0, %s9, %s7
  $region1: #{tpu_custom_call.1} parent=0
    #allocation2 [shape = 'u8[4194304]{0}', space=vmem, size = 0x400000, scoped, tag = 'input window, operand 0']
    #allocation3 [shape = 's32[2]{0}', space=sflag, size = 0x8, scoped, tag = 'scoped memory for tpu_custom_call.1']
    #allocation4 [shape = 's32[2]{0}', space=sflag, size = 0x8, scoped, tag = 'scoped memory for tpu_custom_call.1']
    #allocation5 [shape = 'u8[4194304]{0}', space=vmem, size = 0x400000, scoped, tag = 'input window, operand 1']
    #allocation6 [shape = 's32[2]{0}', space=sflag, size = 0x8, scoped, tag = 'scoped memory for tpu_custom_call.1']
    #allocation7 [shape = 'u8[4194304]{0}', space=vmem, size = 0x400000, scoped, tag = 'input window, operand 2']
    #allocation8 [shape = 'u8[4194304]{0}', space=vmem, size = 0x400000, scoped, tag = 'input window, operand 3']
    #allocation9 [shape = 's32[2]{0}', space=sflag, size = 0x8, scoped, tag = 'scoped memory for tpu_custom_call.1']
    #allocation10 [shape = 'u8[4194304]{0}', space=vmem, size = 0x400000, scoped, tag = 'input window, operand 4']
    #allocation11 [shape = 'u8[4194304]{0}', space=vmem, size = 0x400000, scoped, tag = 'input window, operand 5']
    #allocation12 [shape = 's32[2]{0}', space=sflag, size = 0x8, scoped, tag = 'scoped memory for tpu_custom_call.1']
    #allocation13 [shape = 'u8[4194304]{0}', space=vmem, size = 0x400000, scoped, tag = 'output window, operand 0']
    %11 = vsyncpa [#allocation3], 0
    %s12 = scalar_lea.sflag [#allocation3], 1
    %13 = vsyncpa %s12, 0
    %14 = vsyncpa [#allocation6], 0
    %s15 = scalar_lea.sflag [#allocation6], 1
    %16 = vsyncpa %s15, 0
    %17 = vsyncpa [#allocation9], 0
    %s18 = scalar_lea.sflag [#allocation9], 1
    %19 = vsyncpa %s18, 0
    %20 = vsyncpa [#allocation12], 0
    %s21 = scalar_lea.sflag [#allocation12], 1
    %22 = vsyncpa %s21, 0
    %23 = vsyncpa [#allocation4], 0
    %s24 = scalar_lea.sflag [#allocation4], 1
    %25 = vsyncpa %s24, 0
    loop: start=0, step=1, limit=6
    $region2: #{tpu_custom_call.1} parent=1 // loop_pre_header
      _
    $region3: #{tpu_custom_call.1} parent=1 // loop_header
      %s27 = sphi 0, %s31
      %p28 = scmp.ge.s32.totalorder %s27, 6
      %s34 = sphi 0, %s46
      %s35 = sphi 0, %s42
      %s36 = sphi 0, %s34
      %s37 = sphi 0, %s35
      %s38 = sphi 0, %s36
      %s39 = sphi 0, %s37
      %s51 = sphi 0, %s53
      %s54 = sphi 0, %s51
      %s55 = sphi 0, %s54
      %s71 = sphi 0, %s55
      %s79 = sphi 0, %s81
      %s82 = sphi 0, %s79
      %s83 = sphi 0, %s82
      %s99 = sphi 0, %s83
      %s107 = sphi 0, %s109
      %s110 = sphi 0, %s107
      %s111 = sphi 0, %s110
      %s127 = sphi 0, %s111
      %s133 = sphi 0, %s135
      %s136 = sphi 0, %s133
      %s137 = sphi 0, %s136
      %s153 = sphi 0, %s137
      %s159 = sphi 0, %s161
      %s162 = sphi 0, %s159
      %s163 = sphi 0, %s162
      %s179 = sphi 0, %s163
      %s185 = sphi 0, %s187
      %s188 = sphi 0, %s185
      %s189 = sphi 0, %s188
      %s205 = sphi 0, %s189
      %s213 = sphi 0, %s215
      %s216 = sphi 0, %s213
      %s217 = sphi 0, %s216
      %s233 = sphi 0, %s217
    $region4: #{tpu_custom_call.1} parent=1 // loop_header_branch
      %30 = sbr.rel (%p28) target = $region8
    $region5: #{tpu_custom_call.1} parent=1 // loop_body
      %s32 = ssub.s32 %s27, 1
      %s33 = ssub.s32 %s27, 2
      %s40 = sadd.s32 1, %s35
      %p41 = scmp.ge.s32.totalorder %s40, 2
      %s42 = scalar_select %p41, 0, %s40
      %s43 = sadd.s32 1, %s34
      %s44 = scalar_select %p41, %s43, %s34
      %p45 = scmp.ge.s32.totalorder %s44, 2
      %s46 = scalar_select %p45, 0, %s44
      %s47 = ssub.s32 %s35, %s42
      %s48 = ssub.s32 %s34, %s46
      %s49 = sor.u32 %s47, %s48
      %p50 = scmp.eq.s32.totalorder %s49, 0
      %s52 = sadd.s32 %s51, 1
      %s53 = scalar_select %p50, %s51, %s52
      %p56 = pneg %p50
      %p57 = scmp.eq.s32.totalorder %s27, 3
      %p58 = por %p56, %p57
      %p59 = scmp.ne.s32.totalorder %s51, %s54
      %p60 = scmp.eq.s32.totalorder %s27, 0
      %p61 = por %p59, %p60
      %p62 = scmp.ne.s32.totalorder %s51, %s54
      %p63 = scmp.eq.s32.totalorder %s32, 3
      %p64 = por %p62, %p63
      %p65 = scmp.ne.s32.totalorder %s54, %s55
      %p66 = scmp.eq.s32.totalorder %s32, 0
      %p67 = por %p65, %p66
      %p68 = scmp.ne.s32.totalorder %s54, %s55
      %p69 = scmp.eq.s32.totalorder %s33, 3
      %p70 = por %p68, %p69
      %p72 = scmp.ne.s32.totalorder %s55, %s71
      %p73 = scmp.eq.s32.totalorder %s33, 0
      %p74 = por %p72, %p73
      %s75 = ssub.s32 %s35, %s42
      %s76 = ssub.s32 %s34, %s46
      %s77 = sor.u32 %s75, %s76
      %p78 = scmp.eq.s32.totalorder %s77, 0
      %s80 = sadd.s32 %s79, 1
      %s81 = scalar_select %p78, %s79, %s80
      %p84 = pneg %p78
      %p85 = scmp.eq.s32.totalorder %s27, 3
      %p86 = por %p84, %p85
      %p87 = scmp.ne.s32.totalorder %s79, %s82
      %p88 = scmp.eq.s32.totalorder %s27, 0
      %p89 = por %p87, %p88
      %p90 = scmp.ne.s32.totalorder %s79, %s82
      %p91 = scmp.eq.s32.totalorder %s32, 3
      %p92 = por %p90, %p91
      %p93 = scmp.ne.s32.totalorder %s82, %s83
      %p94 = scmp.eq.s32.totalorder %s32, 0
      %p95 = por %p93, %p94
      %p96 = scmp.ne.s32.totalorder %s82, %s83
      %p97 = scmp.eq.s32.totalorder %s33, 3
      %p98 = por %p96, %p97
      %p100 = scmp.ne.s32.totalorder %s83, %s99
      %p101 = scmp.eq.s32.totalorder %s33, 0
      %p102 = por %p100, %p101
      %s103 = ssub.s32 %s35, %s42
      %s104 = ssub.s32 %s34, %s46
      %s105 = sor.u32 %s103, %s104
      %p106 = scmp.eq.s32.totalorder %s105, 0
      %s108 = sadd.s32 %s107, 1
      %s109 = scalar_select %p106, %s107, %s108
      %p112 = pneg %p106
      %p113 = scmp.eq.s32.totalorder %s27, 3
      %p114 = por %p112, %p113
      %p115 = scmp.ne.s32.totalorder %s107, %s110
      %p116 = scmp.eq.s32.totalorder %s27, 0
      %p117 = por %p115, %p116
      %p118 = scmp.ne.s32.totalorder %s107, %s110
      %p119 = scmp.eq.s32.totalorder %s32, 3
      %p120 = por %p118, %p119
      %p121 = scmp.ne.s32.totalorder %s110, %s111
      %p122 = scmp.eq.s32.totalorder %s32, 0
      %p123 = por %p121, %p122
      %p124 = scmp.ne.s32.totalorder %s110, %s111
      %p125 = scmp.eq.s32.totalorder %s33, 3
      %p126 = por %p124, %p125
      %p128 = scmp.ne.s32.totalorder %s111, %s127
      %p129 = scmp.eq.s32.totalorder %s33, 0
      %p130 = por %p128, %p129
      %s131 = ssub.s32 %s34, %s46
      %p132 = scmp.eq.s32.totalorder %s131, 0
      %s134 = sadd.s32 %s133, 1
      %s135 = scalar_select %p132, %s133, %s134
      %p138 = pneg %p132
      %p139 = scmp.eq.s32.totalorder %s27, 3
      %p140 = por %p138, %p139
      %p141 = scmp.ne.s32.totalorder %s133, %s136
      %p142 = scmp.eq.s32.totalorder %s27, 0
      %p143 = por %p141, %p142
      %p144 = scmp.ne.s32.totalorder %s133, %s136
      %p145 = scmp.eq.s32.totalorder %s32, 3
      %p146 = por %p144, %p145
      %p147 = scmp.ne.s32.totalorder %s136, %s137
      %p148 = scmp.eq.s32.totalorder %s32, 0
      %p149 = por %p147, %p148
      %p150 = scmp.ne.s32.totalorder %s136, %s137
      %p151 = scmp.eq.s32.totalorder %s33, 3
      %p152 = por %p150, %p151
      %p154 = scmp.ne.s32.totalorder %s137, %s153
      %p155 = scmp.eq.s32.totalorder %s33, 0
      %p156 = por %p154, %p155
      %s157 = ssub.s32 %s34, %s46
      %p158 = scmp.eq.s32.totalorder %s157, 0
      %s160 = sadd.s32 %s159, 1
      %s161 = scalar_select %p158, %s159, %s160
      %p164 = pneg %p158
      %p165 = scmp.eq.s32.totalorder %s27, 3
      %p166 = por %p164, %p165
      %p167 = scmp.ne.s32.totalorder %s159, %s162
      %p168 = scmp.eq.s32.totalorder %s27, 0
      %p169 = por %p167, %p168
      %p170 = scmp.ne.s32.totalorder %s159, %s162
      %p171 = scmp.eq.s32.totalorder %s32, 3
      %p172 = por %p170, %p171
      %p173 = scmp.ne.s32.totalorder %s162, %s163
      %p174 = scmp.eq.s32.totalorder %s32, 0
      %p175 = por %p173, %p174
      %p176 = scmp.ne.s32.totalorder %s162, %s163
      %p177 = scmp.eq.s32.totalorder %s33, 3
      %p178 = por %p176, %p177
      %p180 = scmp.ne.s32.totalorder %s163, %s179
      %p181 = scmp.eq.s32.totalorder %s33, 0
      %p182 = por %p180, %p181
      %s183 = ssub.s32 %s34, %s46
      %p184 = scmp.eq.s32.totalorder %s183, 0
      %s186 = sadd.s32 %s185, 1
      %s187 = scalar_select %p184, %s185, %s186
      %p190 = pneg %p184
      %p191 = scmp.eq.s32.totalorder %s27, 3
      %p192 = por %p190, %p191
      %p193 = scmp.ne.s32.totalorder %s185, %s188
      %p194 = scmp.eq.s32.totalorder %s27, 0
      %p195 = por %p193, %p194
      %p196 = scmp.ne.s32.totalorder %s185, %s188
      %p197 = scmp.eq.s32.totalorder %s32, 3
      %p198 = por %p196, %p197
      %p199 = scmp.ne.s32.totalorder %s188, %s189
      %p200 = scmp.eq.s32.totalorder %s32, 0
      %p201 = por %p199, %p200
      %p202 = scmp.ne.s32.totalorder %s188, %s189
      %p203 = scmp.eq.s32.totalorder %s33, 3
      %p204 = por %p202, %p203
      %p206 = scmp.ne.s32.totalorder %s189, %s205
      %p207 = scmp.eq.s32.totalorder %s33, 0
      %p208 = por %p206, %p207
      %s209 = ssub.s32 %s35, %s42
      %s210 = ssub.s32 %s34, %s46
      %s211 = sor.u32 %s209, %s210
      %p212 = scmp.eq.s32.totalorder %s211, 0
      %s214 = sadd.s32 %s213, 1
      %s215 = scalar_select %p212, %s213, %s214
      %p218 = pneg %p212
      %p219 = scmp.eq.s32.totalorder %s27, 3
      %p220 = por %p218, %p219
      %p221 = scmp.ne.s32.totalorder %s213, %s216
      %p222 = scmp.eq.s32.totalorder %s27, 0
      %p223 = por %p221, %p222
      %p224 = scmp.ne.s32.totalorder %s213, %s216
      %p225 = scmp.eq.s32.totalorder %s32, 3
      %p226 = por %p224, %p225
      %p227 = scmp.ne.s32.totalorder %s216, %s217
      %p228 = scmp.eq.s32.totalorder %s32, 0
      %p229 = por %p227, %p228
      %p230 = scmp.ne.s32.totalorder %s216, %s217
      %p231 = scmp.eq.s32.totalorder %s33, 3
      %p232 = por %p230, %p231
      %p234 = scmp.ne.s32.totalorder %s217, %s233
      %p235 = scmp.eq.s32.totalorder %s33, 0
      %p236 = por %p234, %p235
      %p237 = scmp.le.s32.totalorder 1, %s27
      %p238 = scmp.lt.s32.totalorder %s27, 5
      %p239 = pnand %p237, %p238
      %p240 = pneg %p239
      // Predicated region
      $region9: #{tpu_custom_call.1} parent=5 // pred_check
        _
      $region10: #{tpu_custom_call.1} parent=5 // pred_check_branch
        %242 = sbr.rel (%p239) target = $region12
      $region11: #{tpu_custom_call.1} parent=5 // pred_region
        %s243 = ssub.s32 %s27, 1
      $region12: #{tpu_custom_call.1} parent=5 // pred_fallthru
        _
      %p244 = scmp.lt.s32.totalorder %s27, 4
      // Predicated region
      $region13: #{tpu_custom_call.1} parent=5 // pred_check
        %p245 = pneg %p244
      $region14: #{tpu_custom_call.1} parent=5 // pred_check_branch
        %247 = sbr.rel (%p245) target = $region16
      $region15: #{tpu_custom_call.1} parent=5 // pred_region
        // Predicated region
        $region17: #{tpu_custom_call.1} parent=15 // pred_check
          %p248 = pneg %p61
        $region18: #{tpu_custom_call.1} parent=15 // pred_check_branch
          %250 = sbr.rel (%p248) target = $region20
        $region19: #{tpu_custom_call.1} parent=15 // pred_region
          %s251 = sand.u32 %s51, 1
          %s252 = scalar_lea.sflag [#allocation3], %s251
          %s253 = sand.u32 %s51, 1
          %s254 = smul.addr %s253, 4096
          %s255 = scalar_lea.vmem [#allocation2], %s254
          %s256 = smul.u32 128, %s34
          %258 = vsyncadd %s252, 0
          %s259 = smul.addr %s256, 4
          %s260 = smul.addr %s35, 1024
          %s261 = sadd.s32 %s259, %s260
          %s262 = smul.addr %s261, 8
          %s263 = scalar_lea.hbm %s0, %s262
          %s264 = sshll.u32 %s263, 4
          %s265 = int_to_ptr.hbm [resolvable:$true] %s264
          %s266 = sshll.u32 %s255, 4
          %s267 = int_to_ptr.vmem [resolvable:$true] %s266
          %272 = dma.hbm_to_vmem [thread:$0]  %s265, 65536, %s267, %s252, 512, 512, 32
        $region20: #{tpu_custom_call.1} parent=15 // pred_fallthru
          _
        // Predicated region
        $region21: #{tpu_custom_call.1} parent=15 // pred_check
          %p273 = pneg %p89
        $region22: #{tpu_custom_call.1} parent=15 // pred_check_branch
          %275 = sbr.rel (%p273) target = $region24
        $region23: #{tpu_custom_call.1} parent=15 // pred_region
          %s276 = sand.u32 %s27, 1
          %s277 = scalar_lea.sflag [#allocation6], %s276
          %s278 = sand.u32 %s79, 1
          %s279 = smul.addr %s278, 4096
          %s280 = scalar_lea.vmem [#allocation5], %s279
          %s281 = smul.u32 128, %s34
          %283 = vsyncadd %s277, 0
          %s284 = smul.addr %s281, 4
          %s285 = smul.addr %s35, 1024
          %s286 = sadd.s32 %s284, %s285
          %s287 = smul.addr %s286, 8
          %s288 = scalar_lea.hbm %s1, %s287
          %s289 = sshll.u32 %s288, 4
          %s290 = int_to_ptr.hbm [resolvable:$true] %s289
          %s291 = sshll.u32 %s280, 4
          %s292 = int_to_ptr.vmem [resolvable:$true] %s291
          %297 = dma.hbm_to_vmem [thread:$0]  %s290, 65536, %s292, %s277, 512, 512, 32
        $region24: #{tpu_custom_call.1} parent=15 // pred_fallthru
          _
        // Predicated region
        $region25: #{tpu_custom_call.1} parent=15 // pred_check
          %p298 = pneg %p117
        $region26: #{tpu_custom_call.1} parent=15 // pred_check_branch
          %300 = sbr.rel (%p298) target = $region28
        $region27: #{tpu_custom_call.1} parent=15 // pred_region
          %s301 = sand.u32 %s27, 1
          %s302 = scalar_lea.sflag [#allocation6], %s301
          %s303 = sand.u32 %s107, 1
          %s304 = smul.addr %s303, 4096
          %s305 = scalar_lea.vmem [#allocation7], %s304
          %s306 = smul.u32 128, %s34
          %308 = vsyncadd %s302, 0
          %s309 = smul.addr %s306, 4
          %s310 = smul.addr %s35, 1024
          %s311 = sadd.s32 %s309, %s310
          %s312 = smul.addr %s311, 8
          %s313 = scalar_lea.hbm %s2, %s312
          %s314 = sshll.u32 %s313, 4
          %s315 = int_to_ptr.hbm [resolvable:$true] %s314
          %s316 = sshll.u32 %s305, 4
          %s317 = int_to_ptr.vmem [resolvable:$true] %s316
          %322 = dma.hbm_to_vmem [thread:$0]  %s315, 65536, %s317, %s302, 512, 512, 32
        $region28: #{tpu_custom_call.1} parent=15 // pred_fallthru
          _
        // Predicated region
        $region29: #{tpu_custom_call.1} parent=15 // pred_check
          %p323 = pneg %p143
        $region30: #{tpu_custom_call.1} parent=15 // pred_check_branch
          %325 = sbr.rel (%p323) target = $region32
        $region31: #{tpu_custom_call.1} parent=15 // pred_region
          %s326 = sand.u32 %s27, 1
          %s327 = scalar_lea.sflag [#allocation9], %s326
          %s328 = sand.u32 %s133, 1
          %s329 = smul.addr %s328, 4096
          %s330 = scalar_lea.vmem [#allocation8], %s329
          %s331 = smul.u32 128, %s34
          %333 = vsyncadd %s327, 0
          %s334 = smul.addr %s331, 4
          %s335 = smul.addr %s334, 8
          %s336 = scalar_lea.hbm %s3, %s335
          %s337 = sshll.u32 %s336, 4
          %s338 = int_to_ptr.hbm [resolvable:$true] %s337
          %s339 = sshll.u32 %s330, 4
          %s340 = int_to_ptr.vmem [resolvable:$true] %s339
          %345 = dma.hbm_to_vmem [thread:$0]  %s338, 65536, %s340, %s327, 512, 512, 32
        $region32: #{tpu_custom_call.1} parent=15 // pred_fallthru
          _
        // Predicated region
        $region33: #{tpu_custom_call.1} parent=15 // pred_check
          %p346 = pneg %p169
        $region34: #{tpu_custom_call.1} parent=15 // pred_check_branch
          %348 = sbr.rel (%p346) target = $region36
        $region35: #{tpu_custom_call.1} parent=15 // pred_region
          %s349 = sand.u32 %s27, 1
          %s350 = scalar_lea.sflag [#allocation9], %s349
          %s351 = sand.u32 %s159, 1
          %s352 = smul.addr %s351, 4096
          %s353 = scalar_lea.vmem [#allocation10], %s352
          %s354 = smul.u32 128, %s34
          %356 = vsyncadd %s350, 0
          %s357 = smul.addr %s354, 4
          %s358 = smul.addr %s357, 8
          %s359 = scalar_lea.hbm %s4, %s358
          %s360 = sshll.u32 %s359, 4
          %s361 = int_to_ptr.hbm [resolvable:$true] %s360
          %s362 = sshll.u32 %s353, 4
          %s363 = int_to_ptr.vmem [resolvable:$true] %s362
          %368 = dma.hbm_to_vmem [thread:$0]  %s361, 65536, %s363, %s350, 512, 512, 32
        $region36: #{tpu_custom_call.1} parent=15 // pred_fallthru
          _
        // Predicated region
        $region37: #{tpu_custom_call.1} parent=15 // pred_check
          %p369 = pneg %p195
        $region38: #{tpu_custom_call.1} parent=15 // pred_check_branch
          %371 = sbr.rel (%p369) target = $region40
        $region39: #{tpu_custom_call.1} parent=15 // pred_region
          %s372 = sand.u32 %s185, 1
          %s373 = scalar_lea.sflag [#allocation12], %s372
          %s374 = sand.u32 %s185, 1
          %s375 = smul.addr %s374, 4096
          %s376 = scalar_lea.vmem [#allocation11], %s375
          %s377 = smul.u32 128, %s34
          %379 = vsyncadd %s373, 0
          %s380 = smul.addr %s377, 4
          %s381 = smul.addr %s380, 8
          %s382 = scalar_lea.hbm %s5, %s381
          %s383 = sshll.u32 %s382, 4
          %s384 = int_to_ptr.hbm [resolvable:$true] %s383
          %s385 = sshll.u32 %s376, 4
          %s386 = int_to_ptr.vmem [resolvable:$true] %s385
          %391 = dma.hbm_to_vmem [thread:$0]  %s384, 65536, %s386, %s373, 512, 512, 32
        $region40: #{tpu_custom_call.1} parent=15 // pred_fallthru
          _
      $region16: #{tpu_custom_call.1} parent=5 // pred_fallthru
        _
      %p392 = scmp.le.s32.totalorder 1, %s27
      %p393 = scmp.lt.s32.totalorder %s27, 5
      %p394 = pnand %p392, %p393
      %p395 = pneg %p394
      // Predicated region
      $region41: #{tpu_custom_call.1} parent=5 // pred_check
        _
      $region42: #{tpu_custom_call.1} parent=5 // pred_check_branch
        %397 = sbr.rel (%p394) target = $region44
      $region43: #{tpu_custom_call.1} parent=5 // pred_region
        %s398 = ssub.s32 %s27, 1
        %s399 = sand.u32 %s54, 1
        %s400 = scalar_lea.sflag [#allocation3], %s399
        %s401 = sand.u32 %s54, 1
        %s402 = smul.addr %s401, 4096
        %s403 = scalar_lea.vmem [#allocation2], %s402
        // Predicated region
        $region45: #{tpu_custom_call.1} parent=43 // pred_check
          %p404 = pneg %p67
        $region46: #{tpu_custom_call.1} parent=43 // pred_check_branch
          %406 = sbr.rel (%p404) target = $region48
        $region47: #{tpu_custom_call.1} parent=43 // pred_region
          %408 = dma.done %s400, 65536
        $region48: #{tpu_custom_call.1} parent=43 // pred_fallthru
          _
        %s409 = sand.u32 %s32, 1
        %s410 = scalar_lea.sflag [#allocation6], %s409
        %s411 = sand.u32 %s82, 1
        %s412 = smul.addr %s411, 4096
        %s413 = scalar_lea.vmem [#allocation5], %s412
        // Predicated region
        $region49: #{tpu_custom_call.1} parent=43 // pred_check
          %p414 = pneg %p95
        $region50: #{tpu_custom_call.1} parent=43 // pred_check_branch
          %416 = sbr.rel (%p414) target = $region52
        $region51: #{tpu_custom_call.1} parent=43 // pred_region
          %418 = dma.done %s410, 65536
        $region52: #{tpu_custom_call.1} parent=43 // pred_fallthru
          _
        %s419 = sand.u32 %s32, 1
        %s420 = scalar_lea.sflag [#allocation6], %s419
        %s421 = sand.u32 %s110, 1
        %s422 = smul.addr %s421, 4096
        %s423 = scalar_lea.vmem [#allocation7], %s422
        // Predicated region
        $region53: #{tpu_custom_call.1} parent=43 // pred_check
          %p424 = pneg %p123
        $region54: #{tpu_custom_call.1} parent=43 // pred_check_branch
          %426 = sbr.rel (%p424) target = $region56
        $region55: #{tpu_custom_call.1} parent=43 // pred_region
          %428 = dma.done %s420, 65536
        $region56: #{tpu_custom_call.1} parent=43 // pred_fallthru
          _
        %s429 = sand.u32 %s32, 1
        %s430 = scalar_lea.sflag [#allocation9], %s429
        %s431 = sand.u32 %s136, 1
        %s432 = smul.addr %s431, 4096
        %s433 = scalar_lea.vmem [#allocation8], %s432
        // Predicated region
        $region57: #{tpu_custom_call.1} parent=43 // pred_check
          %p434 = pneg %p149
        $region58: #{tpu_custom_call.1} parent=43 // pred_check_branch
          %436 = sbr.rel (%p434) target = $region60
        $region59: #{tpu_custom_call.1} parent=43 // pred_region
          %438 = dma.done %s430, 65536
        $region60: #{tpu_custom_call.1} parent=43 // pred_fallthru
          _
        %s439 = sand.u32 %s32, 1
        %s440 = scalar_lea.sflag [#allocation9], %s439
        %s441 = sand.u32 %s162, 1
        %s442 = smul.addr %s441, 4096
        %s443 = scalar_lea.vmem [#allocation10], %s442
        // Predicated region
        $region61: #{tpu_custom_call.1} parent=43 // pred_check
          %p444 = pneg %p175
        $region62: #{tpu_custom_call.1} parent=43 // pred_check_branch
          %446 = sbr.rel (%p444) target = $region64
        $region63: #{tpu_custom_call.1} parent=43 // pred_region
          %448 = dma.done %s440, 65536
        $region64: #{tpu_custom_call.1} parent=43 // pred_fallthru
          _
        %s449 = sand.u32 %s188, 1
        %s450 = scalar_lea.sflag [#allocation12], %s449
        %s451 = sand.u32 %s188, 1
        %s452 = smul.addr %s451, 4096
        %s453 = scalar_lea.vmem [#allocation11], %s452
        // Predicated region
        $region65: #{tpu_custom_call.1} parent=43 // pred_check
          %p454 = pneg %p201
        $region66: #{tpu_custom_call.1} parent=43 // pred_check_branch
          %456 = sbr.rel (%p454) target = $region68
        $region67: #{tpu_custom_call.1} parent=43 // pred_region
          %458 = dma.done %s450, 65536
        $region68: #{tpu_custom_call.1} parent=43 // pred_fallthru
          _
        %s459 = sand.u32 %s54, 1
        %s460 = scalar_lea.sflag [#allocation3], %s459
        %s461 = sand.u32 %s54, 1
        %s462 = smul.addr %s461, 4096
        %s463 = scalar_lea.vmem [#allocation2], %s462
        %p464 = pneg %p67
        %p465 = pneg %p64
        %s466 = sand.u32 %s32, 1
        %s467 = scalar_lea.sflag [#allocation6], %s466
        %s468 = sand.u32 %s82, 1
        %s469 = smul.addr %s468, 4096
        %s470 = scalar_lea.vmem [#allocation5], %s469
        %p471 = pneg %p95
        %p472 = pneg %p92
        %s473 = sand.u32 %s32, 1
        %s474 = scalar_lea.sflag [#allocation6], %s473
        %s475 = sand.u32 %s110, 1
        %s476 = smul.addr %s475, 4096
        %s477 = scalar_lea.vmem [#allocation7], %s476
        %p478 = pneg %p123
        %p479 = pneg %p120
        %s480 = sand.u32 %s32, 1
        %s481 = scalar_lea.sflag [#allocation9], %s480
        %s482 = sand.u32 %s136, 1
        %s483 = smul.addr %s482, 4096
        %s484 = scalar_lea.vmem [#allocation8], %s483
        %p485 = pneg %p149
        %p486 = pneg %p146
        %s487 = sand.u32 %s32, 1
        %s488 = scalar_lea.sflag [#allocation9], %s487
        %s489 = sand.u32 %s162, 1
        %s490 = smul.addr %s489, 4096
        %s491 = scalar_lea.vmem [#allocation10], %s490
        %p492 = pneg %p175
        %p493 = pneg %p172
        %s494 = sand.u32 %s188, 1
        %s495 = scalar_lea.sflag [#allocation12], %s494
        %s496 = sand.u32 %s188, 1
        %s497 = smul.addr %s496, 4096
        %s498 = scalar_lea.vmem [#allocation11], %s497
        %p499 = pneg %p201
        %p500 = pneg %p198
        %p501 = pneg %p229
        %p502 = pneg %p226
        %s503 = sand.u32 %s216, 1
        %s504 = scalar_lea.sflag [#allocation4], %s503
        %s505 = sand.u32 %s216, 1
        %s506 = smul.addr %s505, 4096
        %s507 = scalar_lea.vmem [#allocation13], %s506
        %s508 = smul.u32 128, %s36
        %s509 = smul.u32 128, %s36
        %s510 = smul.u32 128, %s36
        %s511 = smul.u32 128, %s36
        %s512 = smul.u32 128, %s36
        %s513 = smul.u32 128, %s36
        %s514 = smul.u32 128, %s36
        %v515 = vld [vmem:[%s403] sm:$0xff]
        %v516 = vld [vmem:[%s403 + $0x8] sm:$0xff]
        %v517 = vld [vmem:[%s403 + $0x10] sm:$0xff]
        %v518 = vld [vmem:[%s403 + $0x18] sm:$0xff]
        %v519 = vld [vmem:[%s403 + $0x20] sm:$0xff]
        %v520 = vld [vmem:[%s403 + $0x28] sm:$0xff]
        %v521 = vld [vmem:[%s403 + $0x30] sm:$0xff]
        %v522 = vld [vmem:[%s403 + $0x38] sm:$0xff]
        %v523 = vld [vmem:[%s403 + $0x40] sm:$0xff]
        %v524 = vld [vmem:[%s403 + $0x48] sm:$0xff]
        %v525 = vld [vmem:[%s403 + $0x50] sm:$0xff]
        %v526 = vld [vmem:[%s403 + $0x58] sm:$0xff]
        %v527 = vld [vmem:[%s403 + $0x60] sm:$0xff]
        %v528 = vld [vmem:[%s403 + $0x68] sm:$0xff]
        %v529 = vld [vmem:[%s403 + $0x70] sm:$0xff]
        %v530 = vld [vmem:[%s403 + $0x78] sm:$0xff]
        %v531 = vld [vmem:[%s403 + $0x80] sm:$0xff]
        %v532 = vld [vmem:[%s403 + $0x88] sm:$0xff]
        %v533 = vld [vmem:[%s403 + $0x90] sm:$0xff]
        %v534 = vld [vmem:[%s403 + $0x98] sm:$0xff]
        %v535 = vld [vmem:[%s403 + $0xa0] sm:$0xff]
        %v536 = vld [vmem:[%s403 + $0xa8] sm:$0xff]
        %v537 = vld [vmem:[%s403 + $0xb0] sm:$0xff]
        %v538 = vld [vmem:[%s403 + $0xb8] sm:$0xff]
        %v539 = vld [vmem:[%s403 + $0xc0] sm:$0xff]
        %v540 = vld [vmem:[%s403 + $0xc8] sm:$0xff]
        %v541 = vld [vmem:[%s403 + $0xd0] sm:$0xff]
        %v542 = vld [vmem:[%s403 + $0xd8] sm:$0xff]
        %v543 = vld [vmem:[%s403 + $0xe0] sm:$0xff]
        %v544 = vld [vmem:[%s403 + $0xe8] sm:$0xff]
        %v545 = vld [vmem:[%s403 + $0xf0] sm:$0xff]
        %v546 = vld [vmem:[%s403 + $0xf8] sm:$0xff]
        %v547 = vld [vmem:[%s403 + $0x100] sm:$0xff]
        %v548 = vld [vmem:[%s403 + $0x108] sm:$0xff]
        %v549 = vld [vmem:[%s403 + $0x110] sm:$0xff]
        %v550 = vld [vmem:[%s403 + $0x118] sm:$0xff]
        %v551 = vld [vmem:[%s403 + $0x120] sm:$0xff]
        %v552 = vld [vmem:[%s403 + $0x128] sm:$0xff]
        %v553 = vld [vmem:[%s403 + $0x130] sm:$0xff]
        %v554 = vld [vmem:[%s403 + $0x138] sm:$0xff]
        %v555 = vld [vmem:[%s403 + $0x140] sm:$0xff]
        %v556 = vld [vmem:[%s403 + $0x148] sm:$0xff]
        %v557 = vld [vmem:[%s403 + $0x150] sm:$0xff]
        %v558 = vld [vmem:[%s403 + $0x158] sm:$0xff]
        %v559 = vld [vmem:[%s403 + $0x160] sm:$0xff]
        %v560 = vld [vmem:[%s403 + $0x168] sm:$0xff]
        %v561 = vld [vmem:[%s403 + $0x170] sm:$0xff]
        %v562 = vld [vmem:[%s403 + $0x178] sm:$0xff]
        %v563 = vld [vmem:[%s403 + $0x180] sm:$0xff]
        %v564 = vld [vmem:[%s403 + $0x188] sm:$0xff]
        %v565 = vld [vmem:[%s403 + $0x190] sm:$0xff]
        %v566 = vld [vmem:[%s403 + $0x198] sm:$0xff]
        %v567 = vld [vmem:[%s403 + $0x1a0] sm:$0xff]
        %v568 = vld [vmem:[%s403 + $0x1a8] sm:$0xff]
        %v569 = vld [vmem:[%s403 + $0x1b0] sm:$0xff]
        %v570 = vld [vmem:[%s403 + $0x1b8] sm:$0xff]
        %v571 = vld [vmem:[%s403 + $0x1c0] sm:$0xff]
        %v572 = vld [vmem:[%s403 + $0x1c8] sm:$0xff]
        %v573 = vld [vmem:[%s403 + $0x1d0] sm:$0xff]
        %v574 = vld [vmem:[%s403 + $0x1d8] sm:$0xff]
        %v575 = vld [vmem:[%s403 + $0x1e0] sm:$0xff]
        %v576 = vld [vmem:[%s403 + $0x1e8] sm:$0xff]
        %v577 = vld [vmem:[%s403 + $0x1f0] sm:$0xff]
        %v578 = vld [vmem:[%s403 + $0x1f8] sm:$0xff]
        %v579 = vld [vmem:[%s403 + $0x200] sm:$0xff]
        %v580 = vld [vmem:[%s403 + $0x208] sm:$0xff]
        %v581 = vld [vmem:[%s403 + $0x210] sm:$0xff]
        %v582 = vld [vmem:[%s403 + $0x218] sm:$0xff]
        %v583 = vld [vmem:[%s403 + $0x220] sm:$0xff]
        %v584 = vld [vmem:[%s403 + $0x228] sm:$0xff]
        %v585 = vld [vmem:[%s403 + $0x230] sm:$0xff]
        %v586 = vld [vmem:[%s403 + $0x238] sm:$0xff]
        %v587 = vld [vmem:[%s403 + $0x240] sm:$0xff]
        %v588 = vld [vmem:[%s403 + $0x248] sm:$0xff]
        %v589 = vld [vmem:[%s403 + $0x250] sm:$0xff]
        %v590 = vld [vmem:[%s403 + $0x258] sm:$0xff]
        %v591 = vld [vmem:[%s403 + $0x260] sm:$0xff]
        %v592 = vld [vmem:[%s403 + $0x268] sm:$0xff]
        %v593 = vld [vmem:[%s403 + $0x270] sm:$0xff]
        %v594 = vld [vmem:[%s403 + $0x278] sm:$0xff]
        %v595 = vld [vmem:[%s403 + $0x280] sm:$0xff]
        %v596 = vld [vmem:[%s403 + $0x288] sm:$0xff]
        %v597 = vld [vmem:[%s403 + $0x290] sm:$0xff]
        %v598 = vld [vmem:[%s403 + $0x298] sm:$0xff]
        %v599 = vld [vmem:[%s403 + $0x2a0] sm:$0xff]
        %v600 = vld [vmem:[%s403 + $0x2a8] sm:$0xff]
        %v601 = vld [vmem:[%s403 + $0x2b0] sm:$0xff]
        %v602 = vld [vmem:[%s403 + $0x2b8] sm:$0xff]
        %v603 = vld [vmem:[%s403 + $0x2c0] sm:$0xff]
        %v604 = vld [vmem:[%s403 + $0x2c8] sm:$0xff]
        %v605 = vld [vmem:[%s403 + $0x2d0] sm:$0xff]
        %v606 = vld [vmem:[%s403 + $0x2d8] sm:$0xff]
        %v607 = vld [vmem:[%s403 + $0x2e0] sm:$0xff]
        %v608 = vld [vmem:[%s403 + $0x2e8] sm:$0xff]
        %v609 = vld [vmem:[%s403 + $0x2f0] sm:$0xff]
        %v610 = vld [vmem:[%s403 + $0x2f8] sm:$0xff]
        %v611 = vld [vmem:[%s403 + $0x300] sm:$0xff]
        %v612 = vld [vmem:[%s403 + $0x308] sm:$0xff]
        %v613 = vld [vmem:[%s403 + $0x310] sm:$0xff]
        %v614 = vld [vmem:[%s403 + $0x318] sm:$0xff]
        %v615 = vld [vmem:[%s403 + $0x320] sm:$0xff]
        %v616 = vld [vmem:[%s403 + $0x328] sm:$0xff]
        %v617 = vld [vmem:[%s403 + $0x330] sm:$0xff]
        %v618 = vld [vmem:[%s403 + $0x338] sm:$0xff]
        %v619 = vld [vmem:[%s403 + $0x340] sm:$0xff]
        %v620 = vld [vmem:[%s403 + $0x348] sm:$0xff]
        %v621 = vld [vmem:[%s403 + $0x350] sm:$0xff]
        %v622 = vld [vmem:[%s403 + $0x358] sm:$0xff]
        %v623 = vld [vmem:[%s403 + $0x360] sm:$0xff]
        %v624 = vld [vmem:[%s403 + $0x368] sm:$0xff]
        %v625 = vld [vmem:[%s403 + $0x370] sm:$0xff]
        %v626 = vld [vmem:[%s403 + $0x378] sm:$0xff]
        %v627 = vld [vmem:[%s403 + $0x380] sm:$0xff]
        %v628 = vld [vmem:[%s403 + $0x388] sm:$0xff]
        %v629 = vld [vmem:[%s403 + $0x390] sm:$0xff]
        %v630 = vld [vmem:[%s403 + $0x398] sm:$0xff]
        %v631 = vld [vmem:[%s403 + $0x3a0] sm:$0xff]
        %v632 = vld [vmem:[%s403 + $0x3a8] sm:$0xff]
        %v633 = vld [vmem:[%s403 + $0x3b0] sm:$0xff]
        %v634 = vld [vmem:[%s403 + $0x3b8] sm:$0xff]
        %v635 = vld [vmem:[%s403 + $0x3c0] sm:$0xff]
        %v636 = vld [vmem:[%s403 + $0x3c8] sm:$0xff]
        %v637 = vld [vmem:[%s403 + $0x3d0] sm:$0xff]
        %v638 = vld [vmem:[%s403 + $0x3d8] sm:$0xff]
        %v639 = vld [vmem:[%s403 + $0x3e0] sm:$0xff]
        %v640 = vld [vmem:[%s403 + $0x3e8] sm:$0xff]
        %v641 = vld [vmem:[%s403 + $0x3f0] sm:$0xff]
        %v642 = vld [vmem:[%s403 + $0x3f8] sm:$0xff]
        %v643 = vld [vmem:[%s403 + $0x400] sm:$0xff]
        %v644 = vld [vmem:[%s403 + $0x408] sm:$0xff]
        %v645 = vld [vmem:[%s403 + $0x410] sm:$0xff]
        %v646 = vld [vmem:[%s403 + $0x418] sm:$0xff]
        %v647 = vld [vmem:[%s403 + $0x420] sm:$0xff]
        %v648 = vld [vmem:[%s403 + $0x428] sm:$0xff]
        %v649 = vld [vmem:[%s403 + $0x430] sm:$0xff]
        %v650 = vld [vmem:[%s403 + $0x438] sm:$0xff]
        %v651 = vld [vmem:[%s403 + $0x440] sm:$0xff]
        %v652 = vld [vmem:[%s403 + $0x448] sm:$0xff]
        %v653 = vld [vmem:[%s403 + $0x450] sm:$0xff]
        %v654 = vld [vmem:[%s403 + $0x458] sm:$0xff]
        %v655 = vld [vmem:[%s403 + $0x460] sm:$0xff]
        %v656 = vld [vmem:[%s403 + $0x468] sm:$0xff]
        %v657 = vld [vmem:[%s403 + $0x470] sm:$0xff]
        %v658 = vld [vmem:[%s403 + $0x478] sm:$0xff]
        %v659 = vld [vmem:[%s403 + $0x480] sm:$0xff]
        %v660 = vld [vmem:[%s403 + $0x488] sm:$0xff]
        %v661 = vld [vmem:[%s403 + $0x490] sm:$0xff]
        %v662 = vld [vmem:[%s403 + $0x498] sm:$0xff]
        %v663 = vld [vmem:[%s403 + $0x4a0] sm:$0xff]
        %v664 = vld [vmem:[%s403 + $0x4a8] sm:$0xff]
        %v665 = vld [vmem:[%s403 + $0x4b0] sm:$0xff]
        %v666 = vld [vmem:[%s403 + $0x4b8] sm:$0xff]
        %v667 = vld [vmem:[%s403 + $0x4c0] sm:$0xff]
        %v668 = vld [vmem:[%s403 + $0x4c8] sm:$0xff]
        %v669 = vld [vmem:[%s403 + $0x4d0] sm:$0xff]
        %v670 = vld [vmem:[%s403 + $0x4d8] sm:$0xff]
        %v671 = vld [vmem:[%s403 + $0x4e0] sm:$0xff]
        %v672 = vld [vmem:[%s403 + $0x4e8] sm:$0xff]
        %v673 = vld [vmem:[%s403 + $0x4f0] sm:$0xff]
        %v674 = vld [vmem:[%s403 + $0x4f8] sm:$0xff]
        %v675 = vld [vmem:[%s403 + $0x500] sm:$0xff]
        %v676 = vld [vmem:[%s403 + $0x508] sm:$0xff]
        %v677 = vld [vmem:[%s403 + $0x510] sm:$0xff]
        %v678 = vld [vmem:[%s403 + $0x518] sm:$0xff]
        %v679 = vld [vmem:[%s403 + $0x520] sm:$0xff]
        %v680 = vld [vmem:[%s403 + $0x528] sm:$0xff]
        %v681 = vld [vmem:[%s403 + $0x530] sm:$0xff]
        %v682 = vld [vmem:[%s403 + $0x538] sm:$0xff]
        %v683 = vld [vmem:[%s403 + $0x540] sm:$0xff]
        %v684 = vld [vmem:[%s403 + $0x548] sm:$0xff]
        %v685 = vld [vmem:[%s403 + $0x550] sm:$0xff]
        %v686 = vld [vmem:[%s403 + $0x558] sm:$0xff]
        %v687 = vld [vmem:[%s403 + $0x560] sm:$0xff]
        %v688 = vld [vmem:[%s403 + $0x568] sm:$0xff]
        %v689 = vld [vmem:[%s403 + $0x570] sm:$0xff]
        %v690 = vld [vmem:[%s403 + $0x578] sm:$0xff]
        %v691 = vld [vmem:[%s403 + $0x580] sm:$0xff]
        %v692 = vld [vmem:[%s403 + $0x588] sm:$0xff]
        %v693 = vld [vmem:[%s403 + $0x590] sm:$0xff]
        %v694 = vld [vmem:[%s403 + $0x598] sm:$0xff]
        %v695 = vld [vmem:[%s403 + $0x5a0] sm:$0xff]
        %v696 = vld [vmem:[%s403 + $0x5a8] sm:$0xff]
        %v697 = vld [vmem:[%s403 + $0x5b0] sm:$0xff]
        %v698 = vld [vmem:[%s403 + $0x5b8] sm:$0xff]
        %v699 = vld [vmem:[%s403 + $0x5c0] sm:$0xff]
        %v700 = vld [vmem:[%s403 + $0x5c8] sm:$0xff]
        %v701 = vld [vmem:[%s403 + $0x5d0] sm:$0xff]
        %v702 = vld [vmem:[%s403 + $0x5d8] sm:$0xff]
        %v703 = vld [vmem:[%s403 + $0x5e0] sm:$0xff]
        %v704 = vld [vmem:[%s403 + $0x5e8] sm:$0xff]
        %v705 = vld [vmem:[%s403 + $0x5f0] sm:$0xff]
        %v706 = vld [vmem:[%s403 + $0x5f8] sm:$0xff]
        %v707 = vld [vmem:[%s403 + $0x600] sm:$0xff]
        %v708 = vld [vmem:[%s403 + $0x608] sm:$0xff]
        %v709 = vld [vmem:[%s403 + $0x610] sm:$0xff]
        %v710 = vld [vmem:[%s403 + $0x618] sm:$0xff]
        %v711 = vld [vmem:[%s403 + $0x620] sm:$0xff]
        %v712 = vld [vmem:[%s403 + $0x628] sm:$0xff]
        %v713 = vld [vmem:[%s403 + $0x630] sm:$0xff]
        %v714 = vld [vmem:[%s403 + $0x638] sm:$0xff]
        %v715 = vld [vmem:[%s403 + $0x640] sm:$0xff]
        %v716 = vld [vmem:[%s403 + $0x648] sm:$0xff]
        %v717 = vld [vmem:[%s403 + $0x650] sm:$0xff]
        %v718 = vld [vmem:[%s403 + $0x658] sm:$0xff]
        %v719 = vld [vmem:[%s403 + $0x660] sm:$0xff]
        %v720 = vld [vmem:[%s403 + $0x668] sm:$0xff]
        %v721 = vld [vmem:[%s403 + $0x670] sm:$0xff]
        %v722 = vld [vmem:[%s403 + $0x678] sm:$0xff]
        %v723 = vld [vmem:[%s403 + $0x680] sm:$0xff]
        %v724 = vld [vmem:[%s403 + $0x688] sm:$0xff]
        %v725 = vld [vmem:[%s403 + $0x690] sm:$0xff]
        %v726 = vld [vmem:[%s403 + $0x698] sm:$0xff]
        %v727 = vld [vmem:[%s403 + $0x6a0] sm:$0xff]
        %v728 = vld [vmem:[%s403 + $0x6a8] sm:$0xff]
        %v729 = vld [vmem:[%s403 + $0x6b0] sm:$0xff]
        %v730 = vld [vmem:[%s403 + $0x6b8] sm:$0xff]
        %v731 = vld [vmem:[%s403 + $0x6c0] sm:$0xff]
        %v732 = vld [vmem:[%s403 + $0x6c8] sm:$0xff]
        %v733 = vld [vmem:[%s403 + $0x6d0] sm:$0xff]
        %v734 = vld [vmem:[%s403 + $0x6d8] sm:$0xff]
        %v735 = vld [vmem:[%s403 + $0x6e0] sm:$0xff]
        %v736 = vld [vmem:[%s403 + $0x6e8] sm:$0xff]
        %v737 = vld [vmem:[%s403 + $0x6f0] sm:$0xff]
        %v738 = vld [vmem:[%s403 + $0x6f8] sm:$0xff]
        %v739 = vld [vmem:[%s403 + $0x700] sm:$0xff]
        %v740 = vld [vmem:[%s403 + $0x708] sm:$0xff]
        %v741 = vld [vmem:[%s403 + $0x710] sm:$0xff]
        %v742 = vld [vmem:[%s403 + $0x718] sm:$0xff]
        %v743 = vld [vmem:[%s403 + $0x720] sm:$0xff]
        %v744 = vld [vmem:[%s403 + $0x728] sm:$0xff]
        %v745 = vld [vmem:[%s403 + $0x730] sm:$0xff]
        %v746 = vld [vmem:[%s403 + $0x738] sm:$0xff]
        %v747 = vld [vmem:[%s403 + $0x740] sm:$0xff]
        %v748 = vld [vmem:[%s403 + $0x748] sm:$0xff]
        %v749 = vld [vmem:[%s403 + $0x750] sm:$0xff]
        %v750 = vld [vmem:[%s403 + $0x758] sm:$0xff]
        %v751 = vld [vmem:[%s403 + $0x760] sm:$0xff]
        %v752 = vld [vmem:[%s403 + $0x768] sm:$0xff]
        %v753 = vld [vmem:[%s403 + $0x770] sm:$0xff]
        %v754 = vld [vmem:[%s403 + $0x778] sm:$0xff]
        %v755 = vld [vmem:[%s403 + $0x780] sm:$0xff]
        %v756 = vld [vmem:[%s403 + $0x788] sm:$0xff]
        %v757 = vld [vmem:[%s403 + $0x790] sm:$0xff]
        %v758 = vld [vmem:[%s403 + $0x798] sm:$0xff]
        %v759 = vld [vmem:[%s403 + $0x7a0] sm:$0xff]
        %v760 = vld [vmem:[%s403 + $0x7a8] sm:$0xff]
        %v761 = vld [vmem:[%s403 + $0x7b0] sm:$0xff]
        %v762 = vld [vmem:[%s403 + $0x7b8] sm:$0xff]
        %v763 = vld [vmem:[%s403 + $0x7c0] sm:$0xff]
        %v764 = vld [vmem:[%s403 + $0x7c8] sm:$0xff]
        %v765 = vld [vmem:[%s403 + $0x7d0] sm:$0xff]
        %v766 = vld [vmem:[%s403 + $0x7d8] sm:$0xff]
        %v767 = vld [vmem:[%s403 + $0x7e0] sm:$0xff]
        %v768 = vld [vmem:[%s403 + $0x7e8] sm:$0xff]
        %v769 = vld [vmem:[%s403 + $0x7f0] sm:$0xff]
        %v770 = vld [vmem:[%s403 + $0x7f8] sm:$0xff]
        %v771 = vld [vmem:[%s403 + $0x800] sm:$0xff]
        %v772 = vld [vmem:[%s403 + $0x808] sm:$0xff]
        %v773 = vld [vmem:[%s403 + $0x810] sm:$0xff]
        %v774 = vld [vmem:[%s403 + $0x818] sm:$0xff]
        %v775 = vld [vmem:[%s403 + $0x820] sm:$0xff]
        %v776 = vld [vmem:[%s403 + $0x828] sm:$0xff]
        %v777 = vld [vmem:[%s403 + $0x830] sm:$0xff]
        %v778 = vld [vmem:[%s403 + $0x838] sm:$0xff]
        %v779 = vld [vmem:[%s403 + $0x840] sm:$0xff]
        %v780 = vld [vmem:[%s403 + $0x848] sm:$0xff]
        %v781 = vld [vmem:[%s403 + $0x850] sm:$0xff]
        %v782 = vld [vmem:[%s403 + $0x858] sm:$0xff]
        %v783 = vld [vmem:[%s403 + $0x860] sm:$0xff]
        %v784 = vld [vmem:[%s403 + $0x868] sm:$0xff]
        %v785 = vld [vmem:[%s403 + $0x870] sm:$0xff]
        %v786 = vld [vmem:[%s403 + $0x878] sm:$0xff]
        %v787 = vld [vmem:[%s403 + $0x880] sm:$0xff]
        %v788 = vld [vmem:[%s403 + $0x888] sm:$0xff]
        %v789 = vld [vmem:[%s403 + $0x890] sm:$0xff]
        %v790 = vld [vmem:[%s403 + $0x898] sm:$0xff]
        %v791 = vld [vmem:[%s403 + $0x8a0] sm:$0xff]
        %v792 = vld [vmem:[%s403 + $0x8a8] sm:$0xff]
        %v793 = vld [vmem:[%s403 + $0x8b0] sm:$0xff]
        %v794 = vld [vmem:[%s403 + $0x8b8] sm:$0xff]
        %v795 = vld [vmem:[%s403 + $0x8c0] sm:$0xff]
        %v796 = vld [vmem:[%s403 + $0x8c8] sm:$0xff]
        %v797 = vld [vmem:[%s403 + $0x8d0] sm:$0xff]
        %v798 = vld [vmem:[%s403 + $0x8d8] sm:$0xff]
        %v799 = vld [vmem:[%s403 + $0x8e0] sm:$0xff]
        %v800 = vld [vmem:[%s403 + $0x8e8] sm:$0xff]
        %v801 = vld [vmem:[%s403 + $0x8f0] sm:$0xff]
        %v802 = vld [vmem:[%s403 + $0x8f8] sm:$0xff]
        %v803 = vld [vmem:[%s403 + $0x900] sm:$0xff]
        %v804 = vld [vmem:[%s403 + $0x908] sm:$0xff]
        %v805 = vld [vmem:[%s403 + $0x910] sm:$0xff]
        %v806 = vld [vmem:[%s403 + $0x918] sm:$0xff]
        %v807 = vld [vmem:[%s403 + $0x920] sm:$0xff]
        %v808 = vld [vmem:[%s403 + $0x928] sm:$0xff]
        %v809 = vld [vmem:[%s403 + $0x930] sm:$0xff]
        %v810 = vld [vmem:[%s403 + $0x938] sm:$0xff]
        %v811 = vld [vmem:[%s403 + $0x940] sm:$0xff]
        %v812 = vld [vmem:[%s403 + $0x948] sm:$0xff]
        %v813 = vld [vmem:[%s403 + $0x950] sm:$0xff]
        %v814 = vld [vmem:[%s403 + $0x958] sm:$0xff]
        %v815 = vld [vmem:[%s403 + $0x960] sm:$0xff]
        %v816 = vld [vmem:[%s403 + $0x968] sm:$0xff]
        %v817 = vld [vmem:[%s403 + $0x970] sm:$0xff]
        %v818 = vld [vmem:[%s403 + $0x978] sm:$0xff]
        %v819 = vld [vmem:[%s403 + $0x980] sm:$0xff]
        %v820 = vld [vmem:[%s403 + $0x988] sm:$0xff]
        %v821 = vld [vmem:[%s403 + $0x990] sm:$0xff]
        %v822 = vld [vmem:[%s403 + $0x998] sm:$0xff]
        %v823 = vld [vmem:[%s403 + $0x9a0] sm:$0xff]
        %v824 = vld [vmem:[%s403 + $0x9a8] sm:$0xff]
        %v825 = vld [vmem:[%s403 + $0x9b0] sm:$0xff]
        %v826 = vld [vmem:[%s403 + $0x9b8] sm:$0xff]
        %v827 = vld [vmem:[%s403 + $0x9c0] sm:$0xff]
        %v828 = vld [vmem:[%s403 + $0x9c8] sm:$0xff]
        %v829 = vld [vmem:[%s403 + $0x9d0] sm:$0xff]
        %v830 = vld [vmem:[%s403 + $0x9d8] sm:$0xff]
        %v831 = vld [vmem:[%s403 + $0x9e0] sm:$0xff]
        %v832 = vld [vmem:[%s403 + $0x9e8] sm:$0xff]
        %v833 = vld [vmem:[%s403 + $0x9f0] sm:$0xff]
        %v834 = vld [vmem:[%s403 + $0x9f8] sm:$0xff]
        %v835 = vld [vmem:[%s403 + $0xa00] sm:$0xff]
        %v836 = vld [vmem:[%s403 + $0xa08] sm:$0xff]
        %v837 = vld [vmem:[%s403 + $0xa10] sm:$0xff]
        %v838 = vld [vmem:[%s403 + $0xa18] sm:$0xff]
        %v839 = vld [vmem:[%s403 + $0xa20] sm:$0xff]
        %v840 = vld [vmem:[%s403 + $0xa28] sm:$0xff]
        %v841 = vld [vmem:[%s403 + $0xa30] sm:$0xff]
        %v842 = vld [vmem:[%s403 + $0xa38] sm:$0xff]
        %v843 = vld [vmem:[%s403 + $0xa40] sm:$0xff]
        %v844 = vld [vmem:[%s403 + $0xa48] sm:$0xff]
        %v845 = vld [vmem:[%s403 + $0xa50] sm:$0xff]
        %v846 = vld [vmem:[%s403 + $0xa58] sm:$0xff]
        %v847 = vld [vmem:[%s403 + $0xa60] sm:$0xff]
        %v848 = vld [vmem:[%s403 + $0xa68] sm:$0xff]
        %v849 = vld [vmem:[%s403 + $0xa70] sm:$0xff]
        %v850 = vld [vmem:[%s403 + $0xa78] sm:$0xff]
        %v851 = vld [vmem:[%s403 + $0xa80] sm:$0xff]
        %v852 = vld [vmem:[%s403 + $0xa88] sm:$0xff]
        %v853 = vld [vmem:[%s403 + $0xa90] sm:$0xff]
        %v854 = vld [vmem:[%s403 + $0xa98] sm:$0xff]
        %v855 = vld [vmem:[%s403 + $0xaa0] sm:$0xff]
        %v856 = vld [vmem:[%s403 + $0xaa8] sm:$0xff]
        %v857 = vld [vmem:[%s403 + $0xab0] sm:$0xff]
        %v858 = vld [vmem:[%s403 + $0xab8] sm:$0xff]
        %v859 = vld [vmem:[%s403 + $0xac0] sm:$0xff]
        %v860 = vld [vmem:[%s403 + $0xac8] sm:$0xff]
        %v861 = vld [vmem:[%s403 + $0xad0] sm:$0xff]
        %v862 = vld [vmem:[%s403 + $0xad8] sm:$0xff]
        %v863 = vld [vmem:[%s403 + $0xae0] sm:$0xff]
        %v864 = vld [vmem:[%s403 + $0xae8] sm:$0xff]
        %v865 = vld [vmem:[%s403 + $0xaf0] sm:$0xff]
        %v866 = vld [vmem:[%s403 + $0xaf8] sm:$0xff]
        %v867 = vld [vmem:[%s403 + $0xb00] sm:$0xff]
        %v868 = vld [vmem:[%s403 + $0xb08] sm:$0xff]
        %v869 = vld [vmem:[%s403 + $0xb10] sm:$0xff]
        %v870 = vld [vmem:[%s403 + $0xb18] sm:$0xff]
        %v871 = vld [vmem:[%s403 + $0xb20] sm:$0xff]
        %v872 = vld [vmem:[%s403 + $0xb28] sm:$0xff]
        %v873 = vld [vmem:[%s403 + $0xb30] sm:$0xff]
        %v874 = vld [vmem:[%s403 + $0xb38] sm:$0xff]
        %v875 = vld [vmem:[%s403 + $0xb40] sm:$0xff]
        %v876 = vld [vmem:[%s403 + $0xb48] sm:$0xff]
        %v877 = vld [vmem:[%s403 + $0xb50] sm:$0xff]
        %v878 = vld [vmem:[%s403 + $0xb58] sm:$0xff]
        %v879 = vld [vmem:[%s403 + $0xb60] sm:$0xff]
        %v880 = vld [vmem:[%s403 + $0xb68] sm:$0xff]
        %v881 = vld [vmem:[%s403 + $0xb70] sm:$0xff]
        %v882 = vld [vmem:[%s403 + $0xb78] sm:$0xff]
        %v883 = vld [vmem:[%s403 + $0xb80] sm:$0xff]
        %v884 = vld [vmem:[%s403 + $0xb88] sm:$0xff]
        %v885 = vld [vmem:[%s403 + $0xb90] sm:$0xff]
        %v886 = vld [vmem:[%s403 + $0xb98] sm:$0xff]
        %v887 = vld [vmem:[%s403 + $0xba0] sm:$0xff]
        %v888 = vld [vmem:[%s403 + $0xba8] sm:$0xff]
        %v889 = vld [vmem:[%s403 + $0xbb0] sm:$0xff]
        %v890 = vld [vmem:[%s403 + $0xbb8] sm:$0xff]
        %v891 = vld [vmem:[%s403 + $0xbc0] sm:$0xff]
        %v892 = vld [vmem:[%s403 + $0xbc8] sm:$0xff]
        %v893 = vld [vmem:[%s403 + $0xbd0] sm:$0xff]
        %v894 = vld [vmem:[%s403 + $0xbd8] sm:$0xff]
        %v895 = vld [vmem:[%s403 + $0xbe0] sm:$0xff]
        %v896 = vld [vmem:[%s403 + $0xbe8] sm:$0xff]
        %v897 = vld [vmem:[%s403 + $0xbf0] sm:$0xff]
        %v898 = vld [vmem:[%s403 + $0xbf8] sm:$0xff]
        %v899 = vld [vmem:[%s403 + $0xc00] sm:$0xff]
        %v900 = vld [vmem:[%s403 + $0xc08] sm:$0xff]
        %v901 = vld [vmem:[%s403 + $0xc10] sm:$0xff]
        %v902 = vld [vmem:[%s403 + $0xc18] sm:$0xff]
        %v903 = vld [vmem:[%s403 + $0xc20] sm:$0xff]
        %v904 = vld [vmem:[%s403 + $0xc28] sm:$0xff]
        %v905 = vld [vmem:[%s403 + $0xc30] sm:$0xff]
        %v906 = vld [vmem:[%s403 + $0xc38] sm:$0xff]
        %v907 = vld [vmem:[%s403 + $0xc40] sm:$0xff]
        %v908 = vld [vmem:[%s403 + $0xc48] sm:$0xff]
        %v909 = vld [vmem:[%s403 + $0xc50] sm:$0xff]
        %v910 = vld [vmem:[%s403 + $0xc58] sm:$0xff]
        %v911 = vld [vmem:[%s403 + $0xc60] sm:$0xff]
        %v912 = vld [vmem:[%s403 + $0xc68] sm:$0xff]
        %v913 = vld [vmem:[%s403 + $0xc70] sm:$0xff]
        %v914 = vld [vmem:[%s403 + $0xc78] sm:$0xff]
        %v915 = vld [vmem:[%s403 + $0xc80] sm:$0xff]
        %v916 = vld [vmem:[%s403 + $0xc88] sm:$0xff]
        %v917 = vld [vmem:[%s403 + $0xc90] sm:$0xff]
        %v918 = vld [vmem:[%s403 + $0xc98] sm:$0xff]
        %v919 = vld [vmem:[%s403 + $0xca0] sm:$0xff]
        %v920 = vld [vmem:[%s403 + $0xca8] sm:$0xff]
        %v921 = vld [vmem:[%s403 + $0xcb0] sm:$0xff]
        %v922 = vld [vmem:[%s403 + $0xcb8] sm:$0xff]
        %v923 = vld [vmem:[%s403 + $0xcc0] sm:$0xff]
        %v924 = vld [vmem:[%s403 + $0xcc8] sm:$0xff]
        %v925 = vld [vmem:[%s403 + $0xcd0] sm:$0xff]
        %v926 = vld [vmem:[%s403 + $0xcd8] sm:$0xff]
        %v927 = vld [vmem:[%s403 + $0xce0] sm:$0xff]
        %v928 = vld [vmem:[%s403 + $0xce8] sm:$0xff]
        %v929 = vld [vmem:[%s403 + $0xcf0] sm:$0xff]
        %v930 = vld [vmem:[%s403 + $0xcf8] sm:$0xff]
        %v931 = vld [vmem:[%s403 + $0xd00] sm:$0xff]
        %v932 = vld [vmem:[%s403 + $0xd08] sm:$0xff]
        %v933 = vld [vmem:[%s403 + $0xd10] sm:$0xff]
        %v934 = vld [vmem:[%s403 + $0xd18] sm:$0xff]
        %v935 = vld [vmem:[%s403 + $0xd20] sm:$0xff]
        %v936 = vld [vmem:[%s403 + $0xd28] sm:$0xff]
        %v937 = vld [vmem:[%s403 + $0xd30] sm:$0xff]
        %v938 = vld [vmem:[%s403 + $0xd38] sm:$0xff]
        %v939 = vld [vmem:[%s403 + $0xd40] sm:$0xff]
        %v940 = vld [vmem:[%s403 + $0xd48] sm:$0xff]
        %v941 = vld [vmem:[%s403 + $0xd50] sm:$0xff]
        %v942 = vld [vmem:[%s403 + $0xd58] sm:$0xff]
        %v943 = vld [vmem:[%s403 + $0xd60] sm:$0xff]
        %v944 = vld [vmem:[%s403 + $0xd68] sm:$0xff]
        %v945 = vld [vmem:[%s403 + $0xd70] sm:$0xff]
        %v946 = vld [vmem:[%s403 + $0xd78] sm:$0xff]
        %v947 = vld [vmem:[%s403 + $0xd80] sm:$0xff]
        %v948 = vld [vmem:[%s403 + $0xd88] sm:$0xff]
        %v949 = vld [vmem:[%s403 + $0xd90] sm:$0xff]
        %v950 = vld [vmem:[%s403 + $0xd98] sm:$0xff]
        %v951 = vld [vmem:[%s403 + $0xda0] sm:$0xff]
        %v952 = vld [vmem:[%s403 + $0xda8] sm:$0xff]
        %v953 = vld [vmem:[%s403 + $0xdb0] sm:$0xff]
        %v954 = vld [vmem:[%s403 + $0xdb8] sm:$0xff]
        %v955 = vld [vmem:[%s403 + $0xdc0] sm:$0xff]
        %v956 = vld [vmem:[%s403 + $0xdc8] sm:$0xff]
        %v957 = vld [vmem:[%s403 + $0xdd0] sm:$0xff]
        %v958 = vld [vmem:[%s403 + $0xdd8] sm:$0xff]
        %v959 = vld [vmem:[%s403 + $0xde0] sm:$0xff]
        %v960 = vld [vmem:[%s403 + $0xde8] sm:$0xff]
        %v961 = vld [vmem:[%s403 + $0xdf0] sm:$0xff]
        %v962 = vld [vmem:[%s403 + $0xdf8] sm:$0xff]
        %v963 = vld [vmem:[%s403 + $0xe00] sm:$0xff]
        %v964 = vld [vmem:[%s403 + $0xe08] sm:$0xff]
        %v965 = vld [vmem:[%s403 + $0xe10] sm:$0xff]
        %v966 = vld [vmem:[%s403 + $0xe18] sm:$0xff]
        %v967 = vld [vmem:[%s403 + $0xe20] sm:$0xff]
        %v968 = vld [vmem:[%s403 + $0xe28] sm:$0xff]
        %v969 = vld [vmem:[%s403 + $0xe30] sm:$0xff]
        %v970 = vld [vmem:[%s403 + $0xe38] sm:$0xff]
        %v971 = vld [vmem:[%s403 + $0xe40] sm:$0xff]
        %v972 = vld [vmem:[%s403 + $0xe48] sm:$0xff]
        %v973 = vld [vmem:[%s403 + $0xe50] sm:$0xff]
        %v974 = vld [vmem:[%s403 + $0xe58] sm:$0xff]
        %v975 = vld [vmem:[%s403 + $0xe60] sm:$0xff]
        %v976 = vld [vmem:[%s403 + $0xe68] sm:$0xff]
        %v977 = vld [vmem:[%s403 + $0xe70] sm:$0xff]
        %v978 = vld [vmem:[%s403 + $0xe78] sm:$0xff]
        %v979 = vld [vmem:[%s403 + $0xe80] sm:$0xff]
        %v980 = vld [vmem:[%s403 + $0xe88] sm:$0xff]
        %v981 = vld [vmem:[%s403 + $0xe90] sm:$0xff]
        %v982 = vld [vmem:[%s403 + $0xe98] sm:$0xff]
        %v983 = vld [vmem:[%s403 + $0xea0] sm:$0xff]
        %v984 = vld [vmem:[%s403 + $0xea8] sm:$0xff]
        %v985 = vld [vmem:[%s403 + $0xeb0] sm:$0xff]
        %v986 = vld [vmem:[%s403 + $0xeb8] sm:$0xff]
        %v987 = vld [vmem:[%s403 + $0xec0] sm:$0xff]
        %v988 = vld [vmem:[%s403 + $0xec8] sm:$0xff]
        %v989 = vld [vmem:[%s403 + $0xed0] sm:$0xff]
        %v990 = vld [vmem:[%s403 + $0xed8] sm:$0xff]
        %v991 = vld [vmem:[%s403 + $0xee0] sm:$0xff]
        %v992 = vld [vmem:[%s403 + $0xee8] sm:$0xff]
        %v993 = vld [vmem:[%s403 + $0xef0] sm:$0xff]
        %v994 = vld [vmem:[%s403 + $0xef8] sm:$0xff]
        %v995 = vld [vmem:[%s403 + $0xf00] sm:$0xff]
        %v996 = vld [vmem:[%s403 + $0xf08] sm:$0xff]
        %v997 = vld [vmem:[%s403 + $0xf10] sm:$0xff]
        %v998 = vld [vmem:[%s403 + $0xf18] sm:$0xff]
        %v999 = vld [vmem:[%s403 + $0xf20] sm:$0xff]
        %v1000 = vld [vmem:[%s403 + $0xf28] sm:$0xff]
        %v1001 = vld [vmem:[%s403 + $0xf30] sm:$0xff]
        %v1002 = vld [vmem:[%s403 + $0xf38] sm:$0xff]
        %v1003 = vld [vmem:[%s403 + $0xf40] sm:$0xff]
        %v1004 = vld [vmem:[%s403 + $0xf48] sm:$0xff]
        %v1005 = vld [vmem:[%s403 + $0xf50] sm:$0xff]
        %v1006 = vld [vmem:[%s403 + $0xf58] sm:$0xff]
        %v1007 = vld [vmem:[%s403 + $0xf60] sm:$0xff]
        %v1008 = vld [vmem:[%s403 + $0xf68] sm:$0xff]
        %v1009 = vld [vmem:[%s403 + $0xf70] sm:$0xff]
        %v1010 = vld [vmem:[%s403 + $0xf78] sm:$0xff]
        %v1011 = vld [vmem:[%s403 + $0xf80] sm:$0xff]
        %v1012 = vld [vmem:[%s403 + $0xf88] sm:$0xff]
        %v1013 = vld [vmem:[%s403 + $0xf90] sm:$0xff]
        %v1014 = vld [vmem:[%s403 + $0xf98] sm:$0xff]
        %v1015 = vld [vmem:[%s403 + $0xfa0] sm:$0xff]
        %v1016 = vld [vmem:[%s403 + $0xfa8] sm:$0xff]
        %v1017 = vld [vmem:[%s403 + $0xfb0] sm:$0xff]
        %v1018 = vld [vmem:[%s403 + $0xfb8] sm:$0xff]
        %v1019 = vld [vmem:[%s403 + $0xfc0] sm:$0xff]
        %v1020 = vld [vmem:[%s403 + $0xfc8] sm:$0xff]
        %v1021 = vld [vmem:[%s403 + $0xfd0] sm:$0xff]
        %v1022 = vld [vmem:[%s403 + $0xfd8] sm:$0xff]
        %v1023 = vld [vmem:[%s403 + $0xfe0] sm:$0xff]
        %v1024 = vld [vmem:[%s403 + $0xfe8] sm:$0xff]
        %v1025 = vld [vmem:[%s403 + $0xff0] sm:$0xff]
        %v1026 = vld [vmem:[%s403 + $0xff8] sm:$0xff]
        %v1027 = vld [vmem:[%s433] sm:$0xff]
        %v1028 = vld [vmem:[%s433 + $0x8] sm:$0xff]
        %v1029 = vld [vmem:[%s433 + $0x10] sm:$0xff]
        %v1030 = vld [vmem:[%s433 + $0x18] sm:$0xff]
        %v1031 = vld [vmem:[%s433 + $0x20] sm:$0xff]
        %v1032 = vld [vmem:[%s433 + $0x28] sm:$0xff]
        %v1033 = vld [vmem:[%s433 + $0x30] sm:$0xff]
        %v1034 = vld [vmem:[%s433 + $0x38] sm:$0xff]
        %v1035 = vld [vmem:[%s433 + $0x40] sm:$0xff]
        %v1036 = vld [vmem:[%s433 + $0x48] sm:$0xff]
        %v1037 = vld [vmem:[%s433 + $0x50] sm:$0xff]
        %v1038 = vld [vmem:[%s433 + $0x58] sm:$0xff]
        %v1039 = vld [vmem:[%s433 + $0x60] sm:$0xff]
        %v1040 = vld [vmem:[%s433 + $0x68] sm:$0xff]
        %v1041 = vld [vmem:[%s433 + $0x70] sm:$0xff]
        %v1042 = vld [vmem:[%s433 + $0x78] sm:$0xff]
        %v1043 = vld [vmem:[%s433 + $0x80] sm:$0xff]
        %v1044 = vld [vmem:[%s433 + $0x88] sm:$0xff]
        %v1045 = vld [vmem:[%s433 + $0x90] sm:$0xff]
        %v1046 = vld [vmem:[%s433 + $0x98] sm:$0xff]
        %v1047 = vld [vmem:[%s433 + $0xa0] sm:$0xff]
        %v1048 = vld [vmem:[%s433 + $0xa8] sm:$0xff]
        %v1049 = vld [vmem:[%s433 + $0xb0] sm:$0xff]
        %v1050 = vld [vmem:[%s433 + $0xb8] sm:$0xff]
        %v1051 = vld [vmem:[%s433 + $0xc0] sm:$0xff]
        %v1052 = vld [vmem:[%s433 + $0xc8] sm:$0xff]
        %v1053 = vld [vmem:[%s433 + $0xd0] sm:$0xff]
        %v1054 = vld [vmem:[%s433 + $0xd8] sm:$0xff]
        %v1055 = vld [vmem:[%s433 + $0xe0] sm:$0xff]
        %v1056 = vld [vmem:[%s433 + $0xe8] sm:$0xff]
        %v1057 = vld [vmem:[%s433 + $0xf0] sm:$0xff]
        %v1058 = vld [vmem:[%s433 + $0xf8] sm:$0xff]
        %v1059 = vld [vmem:[%s433 + $0x100] sm:$0xff]
        %v1060 = vld [vmem:[%s433 + $0x108] sm:$0xff]
        %v1061 = vld [vmem:[%s433 + $0x110] sm:$0xff]
        %v1062 = vld [vmem:[%s433 + $0x118] sm:$0xff]
        %v1063 = vld [vmem:[%s433 + $0x120] sm:$0xff]
        %v1064 = vld [vmem:[%s433 + $0x128] sm:$0xff]
        %v1065 = vld [vmem:[%s433 + $0x130] sm:$0xff]
        %v1066 = vld [vmem:[%s433 + $0x138] sm:$0xff]
        %v1067 = vld [vmem:[%s433 + $0x140] sm:$0xff]
        %v1068 = vld [vmem:[%s433 + $0x148] sm:$0xff]
        %v1069 = vld [vmem:[%s433 + $0x150] sm:$0xff]
        %v1070 = vld [vmem:[%s433 + $0x158] sm:$0xff]
        %v1071 = vld [vmem:[%s433 + $0x160] sm:$0xff]
        %v1072 = vld [vmem:[%s433 + $0x168] sm:$0xff]
        %v1073 = vld [vmem:[%s433 + $0x170] sm:$0xff]
        %v1074 = vld [vmem:[%s433 + $0x178] sm:$0xff]
        %v1075 = vld [vmem:[%s433 + $0x180] sm:$0xff]
        %v1076 = vld [vmem:[%s433 + $0x188] sm:$0xff]
        %v1077 = vld [vmem:[%s433 + $0x190] sm:$0xff]
        %v1078 = vld [vmem:[%s433 + $0x198] sm:$0xff]
        %v1079 = vld [vmem:[%s433 + $0x1a0] sm:$0xff]
        %v1080 = vld [vmem:[%s433 + $0x1a8] sm:$0xff]
        %v1081 = vld [vmem:[%s433 + $0x1b0] sm:$0xff]
        %v1082 = vld [vmem:[%s433 + $0x1b8] sm:$0xff]
        %v1083 = vld [vmem:[%s433 + $0x1c0] sm:$0xff]
        %v1084 = vld [vmem:[%s433 + $0x1c8] sm:$0xff]
        %v1085 = vld [vmem:[%s433 + $0x1d0] sm:$0xff]
        %v1086 = vld [vmem:[%s433 + $0x1d8] sm:$0xff]
        %v1087 = vld [vmem:[%s433 + $0x1e0] sm:$0xff]
        %v1088 = vld [vmem:[%s433 + $0x1e8] sm:$0xff]
        %v1089 = vld [vmem:[%s433 + $0x1f0] sm:$0xff]
        %v1090 = vld [vmem:[%s433 + $0x1f8] sm:$0xff]
        %v1091 = vld [vmem:[%s433 + $0x200] sm:$0xff]
        %v1092 = vld [vmem:[%s433 + $0x208] sm:$0xff]
        %v1093 = vld [vmem:[%s433 + $0x210] sm:$0xff]
        %v1094 = vld [vmem:[%s433 + $0x218] sm:$0xff]
        %v1095 = vld [vmem:[%s433 + $0x220] sm:$0xff]
        %v1096 = vld [vmem:[%s433 + $0x228] sm:$0xff]
        %v1097 = vld [vmem:[%s433 + $0x230] sm:$0xff]
        %v1098 = vld [vmem:[%s433 + $0x238] sm:$0xff]
        %v1099 = vld [vmem:[%s433 + $0x240] sm:$0xff]
        %v1100 = vld [vmem:[%s433 + $0x248] sm:$0xff]
        %v1101 = vld [vmem:[%s433 + $0x250] sm:$0xff]
        %v1102 = vld [vmem:[%s433 + $0x258] sm:$0xff]
        %v1103 = vld [vmem:[%s433 + $0x260] sm:$0xff]
        %v1104 = vld [vmem:[%s433 + $0x268] sm:$0xff]
        %v1105 = vld [vmem:[%s433 + $0x270] sm:$0xff]
        %v1106 = vld [vmem:[%s433 + $0x278] sm:$0xff]
        %v1107 = vld [vmem:[%s433 + $0x280] sm:$0xff]
        %v1108 = vld [vmem:[%s433 + $0x288] sm:$0xff]
        %v1109 = vld [vmem:[%s433 + $0x290] sm:$0xff]
        %v1110 = vld [vmem:[%s433 + $0x298] sm:$0xff]
        %v1111 = vld [vmem:[%s433 + $0x2a0] sm:$0xff]
        %v1112 = vld [vmem:[%s433 + $0x2a8] sm:$0xff]
        %v1113 = vld [vmem:[%s433 + $0x2b0] sm:$0xff]
        %v1114 = vld [vmem:[%s433 + $0x2b8] sm:$0xff]
        %v1115 = vld [vmem:[%s433 + $0x2c0] sm:$0xff]
        %v1116 = vld [vmem:[%s433 + $0x2c8] sm:$0xff]
        %v1117 = vld [vmem:[%s433 + $0x2d0] sm:$0xff]
        %v1118 = vld [vmem:[%s433 + $0x2d8] sm:$0xff]
        %v1119 = vld [vmem:[%s433 + $0x2e0] sm:$0xff]
        %v1120 = vld [vmem:[%s433 + $0x2e8] sm:$0xff]
        %v1121 = vld [vmem:[%s433 + $0x2f0] sm:$0xff]
        %v1122 = vld [vmem:[%s433 + $0x2f8] sm:$0xff]
        %v1123 = vld [vmem:[%s433 + $0x300] sm:$0xff]
        %v1124 = vld [vmem:[%s433 + $0x308] sm:$0xff]
        %v1125 = vld [vmem:[%s433 + $0x310] sm:$0xff]
        %v1126 = vld [vmem:[%s433 + $0x318] sm:$0xff]
        %v1127 = vld [vmem:[%s433 + $0x320] sm:$0xff]
        %v1128 = vld [vmem:[%s433 + $0x328] sm:$0xff]
        %v1129 = vld [vmem:[%s433 + $0x330] sm:$0xff]
        %v1130 = vld [vmem:[%s433 + $0x338] sm:$0xff]
        %v1131 = vld [vmem:[%s433 + $0x340] sm:$0xff]
        %v1132 = vld [vmem:[%s433 + $0x348] sm:$0xff]
        %v1133 = vld [vmem:[%s433 + $0x350] sm:$0xff]
        %v1134 = vld [vmem:[%s433 + $0x358] sm:$0xff]
        %v1135 = vld [vmem:[%s433 + $0x360] sm:$0xff]
        %v1136 = vld [vmem:[%s433 + $0x368] sm:$0xff]
        %v1137 = vld [vmem:[%s433 + $0x370] sm:$0xff]
        %v1138 = vld [vmem:[%s433 + $0x378] sm:$0xff]
        %v1139 = vld [vmem:[%s433 + $0x380] sm:$0xff]
        %v1140 = vld [vmem:[%s433 + $0x388] sm:$0xff]
        %v1141 = vld [vmem:[%s433 + $0x390] sm:$0xff]
        %v1142 = vld [vmem:[%s433 + $0x398] sm:$0xff]
        %v1143 = vld [vmem:[%s433 + $0x3a0] sm:$0xff]
        %v1144 = vld [vmem:[%s433 + $0x3a8] sm:$0xff]
        %v1145 = vld [vmem:[%s433 + $0x3b0] sm:$0xff]
        %v1146 = vld [vmem:[%s433 + $0x3b8] sm:$0xff]
        %v1147 = vld [vmem:[%s433 + $0x3c0] sm:$0xff]
        %v1148 = vld [vmem:[%s433 + $0x3c8] sm:$0xff]
        %v1149 = vld [vmem:[%s433 + $0x3d0] sm:$0xff]
        %v1150 = vld [vmem:[%s433 + $0x3d8] sm:$0xff]
        %v1151 = vld [vmem:[%s433 + $0x3e0] sm:$0xff]
        %v1152 = vld [vmem:[%s433 + $0x3e8] sm:$0xff]
        %v1153 = vld [vmem:[%s433 + $0x3f0] sm:$0xff]
        %v1154 = vld [vmem:[%s433 + $0x3f8] sm:$0xff]
        %v1155 = vld [vmem:[%s433 + $0x400] sm:$0xff]
        %v1156 = vld [vmem:[%s433 + $0x408] sm:$0xff]
        %v1157 = vld [vmem:[%s433 + $0x410] sm:$0xff]
        %v1158 = vld [vmem:[%s433 + $0x418] sm:$0xff]
        %v1159 = vld [vmem:[%s433 + $0x420] sm:$0xff]
        %v1160 = vld [vmem:[%s433 + $0x428] sm:$0xff]
        %v1161 = vld [vmem:[%s433 + $0x430] sm:$0xff]
        %v1162 = vld [vmem:[%s433 + $0x438] sm:$0xff]
        %v1163 = vld [vmem:[%s433 + $0x440] sm:$0xff]
        %v1164 = vld [vmem:[%s433 + $0x448] sm:$0xff]
        %v1165 = vld [vmem:[%s433 + $0x450] sm:$0xff]
        %v1166 = vld [vmem:[%s433 + $0x458] sm:$0xff]
        %v1167 = vld [vmem:[%s433 + $0x460] sm:$0xff]
        %v1168 = vld [vmem:[%s433 + $0x468] sm:$0xff]
        %v1169 = vld [vmem:[%s433 + $0x470] sm:$0xff]
        %v1170 = vld [vmem:[%s433 + $0x478] sm:$0xff]
        %v1171 = vld [vmem:[%s433 + $0x480] sm:$0xff]
        %v1172 = vld [vmem:[%s433 + $0x488] sm:$0xff]
        %v1173 = vld [vmem:[%s433 + $0x490] sm:$0xff]
        %v1174 = vld [vmem:[%s433 + $0x498] sm:$0xff]
        %v1175 = vld [vmem:[%s433 + $0x4a0] sm:$0xff]
        %v1176 = vld [vmem:[%s433 + $0x4a8] sm:$0xff]
        %v1177 = vld [vmem:[%s433 + $0x4b0] sm:$0xff]
        %v1178 = vld [vmem:[%s433 + $0x4b8] sm:$0xff]
        %v1179 = vld [vmem:[%s433 + $0x4c0] sm:$0xff]
        %v1180 = vld [vmem:[%s433 + $0x4c8] sm:$0xff]
        %v1181 = vld [vmem:[%s433 + $0x4d0] sm:$0xff]
        %v1182 = vld [vmem:[%s433 + $0x4d8] sm:$0xff]
        %v1183 = vld [vmem:[%s433 + $0x4e0] sm:$0xff]
        %v1184 = vld [vmem:[%s433 + $0x4e8] sm:$0xff]
        %v1185 = vld [vmem:[%s433 + $0x4f0] sm:$0xff]
        %v1186 = vld [vmem:[%s433 + $0x4f8] sm:$0xff]
        %v1187 = vld [vmem:[%s433 + $0x500] sm:$0xff]
        %v1188 = vld [vmem:[%s433 + $0x508] sm:$0xff]
        %v1189 = vld [vmem:[%s433 + $0x510] sm:$0xff]
        %v1190 = vld [vmem:[%s433 + $0x518] sm:$0xff]
        %v1191 = vld [vmem:[%s433 + $0x520] sm:$0xff]
        %v1192 = vld [vmem:[%s433 + $0x528] sm:$0xff]
        %v1193 = vld [vmem:[%s433 + $0x530] sm:$0xff]
        %v1194 = vld [vmem:[%s433 + $0x538] sm:$0xff]
        %v1195 = vld [vmem:[%s433 + $0x540] sm:$0xff]
        %v1196 = vld [vmem:[%s433 + $0x548] sm:$0xff]
        %v1197 = vld [vmem:[%s433 + $0x550] sm:$0xff]
        %v1198 = vld [vmem:[%s433 + $0x558] sm:$0xff]
        %v1199 = vld [vmem:[%s433 + $0x560] sm:$0xff]
        %v1200 = vld [vmem:[%s433 + $0x568] sm:$0xff]
        %v1201 = vld [vmem:[%s433 + $0x570] sm:$0xff]
        %v1202 = vld [vmem:[%s433 + $0x578] sm:$0xff]
        %v1203 = vld [vmem:[%s433 + $0x580] sm:$0xff]
        %v1204 = vld [vmem:[%s433 + $0x588] sm:$0xff]
        %v1205 = vld [vmem:[%s433 + $0x590] sm:$0xff]
        %v1206 = vld [vmem:[%s433 + $0x598] sm:$0xff]
        %v1207 = vld [vmem:[%s433 + $0x5a0] sm:$0xff]
        %v1208 = vld [vmem:[%s433 + $0x5a8] sm:$0xff]
        %v1209 = vld [vmem:[%s433 + $0x5b0] sm:$0xff]
        %v1210 = vld [vmem:[%s433 + $0x5b8] sm:$0xff]
        %v1211 = vld [vmem:[%s433 + $0x5c0] sm:$0xff]
        %v1212 = vld [vmem:[%s433 + $0x5c8] sm:$0xff]
        %v1213 = vld [vmem:[%s433 + $0x5d0] sm:$0xff]
        %v1214 = vld [vmem:[%s433 + $0x5d8] sm:$0xff]
        %v1215 = vld [vmem:[%s433 + $0x5e0] sm:$0xff]
        %v1216 = vld [vmem:[%s433 + $0x5e8] sm:$0xff]
        %v1217 = vld [vmem:[%s433 + $0x5f0] sm:$0xff]
        %v1218 = vld [vmem:[%s433 + $0x5f8] sm:$0xff]
        %v1219 = vld [vmem:[%s433 + $0x600] sm:$0xff]
        %v1220 = vld [vmem:[%s433 + $0x608] sm:$0xff]
        %v1221 = vld [vmem:[%s433 + $0x610] sm:$0xff]
        %v1222 = vld [vmem:[%s433 + $0x618] sm:$0xff]
        %v1223 = vld [vmem:[%s433 + $0x620] sm:$0xff]
        %v1224 = vld [vmem:[%s433 + $0x628] sm:$0xff]
        %v1225 = vld [vmem:[%s433 + $0x630] sm:$0xff]
        %v1226 = vld [vmem:[%s433 + $0x638] sm:$0xff]
        %v1227 = vld [vmem:[%s433 + $0x640] sm:$0xff]
        %v1228 = vld [vmem:[%s433 + $0x648] sm:$0xff]
        %v1229 = vld [vmem:[%s433 + $0x650] sm:$0xff]
        %v1230 = vld [vmem:[%s433 + $0x658] sm:$0xff]
        %v1231 = vld [vmem:[%s433 + $0x660] sm:$0xff]
        %v1232 = vld [vmem:[%s433 + $0x668] sm:$0xff]
        %v1233 = vld [vmem:[%s433 + $0x670] sm:$0xff]
        %v1234 = vld [vmem:[%s433 + $0x678] sm:$0xff]
        %v1235 = vld [vmem:[%s433 + $0x680] sm:$0xff]
        %v1236 = vld [vmem:[%s433 + $0x688] sm:$0xff]
        %v1237 = vld [vmem:[%s433 + $0x690] sm:$0xff]
        %v1238 = vld [vmem:[%s433 + $0x698] sm:$0xff]
        %v1239 = vld [vmem:[%s433 + $0x6a0] sm:$0xff]
        %v1240 = vld [vmem:[%s433 + $0x6a8] sm:$0xff]
        %v1241 = vld [vmem:[%s433 + $0x6b0] sm:$0xff]
        %v1242 = vld [vmem:[%s433 + $0x6b8] sm:$0xff]
        %v1243 = vld [vmem:[%s433 + $0x6c0] sm:$0xff]
        %v1244 = vld [vmem:[%s433 + $0x6c8] sm:$0xff]
        %v1245 = vld [vmem:[%s433 + $0x6d0] sm:$0xff]
        %v1246 = vld [vmem:[%s433 + $0x6d8] sm:$0xff]
        %v1247 = vld [vmem:[%s433 + $0x6e0] sm:$0xff]
        %v1248 = vld [vmem:[%s433 + $0x6e8] sm:$0xff]
        %v1249 = vld [vmem:[%s433 + $0x6f0] sm:$0xff]
        %v1250 = vld [vmem:[%s433 + $0x6f8] sm:$0xff]
        %v1251 = vld [vmem:[%s433 + $0x700] sm:$0xff]
        %v1252 = vld [vmem:[%s433 + $0x708] sm:$0xff]
        %v1253 = vld [vmem:[%s433 + $0x710] sm:$0xff]
        %v1254 = vld [vmem:[%s433 + $0x718] sm:$0xff]
        %v1255 = vld [vmem:[%s433 + $0x720] sm:$0xff]
        %v1256 = vld [vmem:[%s433 + $0x728] sm:$0xff]
        %v1257 = vld [vmem:[%s433 + $0x730] sm:$0xff]
        %v1258 = vld [vmem:[%s433 + $0x738] sm:$0xff]
        %v1259 = vld [vmem:[%s433 + $0x740] sm:$0xff]
        %v1260 = vld [vmem:[%s433 + $0x748] sm:$0xff]
        %v1261 = vld [vmem:[%s433 + $0x750] sm:$0xff]
        %v1262 = vld [vmem:[%s433 + $0x758] sm:$0xff]
        %v1263 = vld [vmem:[%s433 + $0x760] sm:$0xff]
        %v1264 = vld [vmem:[%s433 + $0x768] sm:$0xff]
        %v1265 = vld [vmem:[%s433 + $0x770] sm:$0xff]
        %v1266 = vld [vmem:[%s433 + $0x778] sm:$0xff]
        %v1267 = vld [vmem:[%s433 + $0x780] sm:$0xff]
        %v1268 = vld [vmem:[%s433 + $0x788] sm:$0xff]
        %v1269 = vld [vmem:[%s433 + $0x790] sm:$0xff]
        %v1270 = vld [vmem:[%s433 + $0x798] sm:$0xff]
        %v1271 = vld [vmem:[%s433 + $0x7a0] sm:$0xff]
        %v1272 = vld [vmem:[%s433 + $0x7a8] sm:$0xff]
        %v1273 = vld [vmem:[%s433 + $0x7b0] sm:$0xff]
        %v1274 = vld [vmem:[%s433 + $0x7b8] sm:$0xff]
        %v1275 = vld [vmem:[%s433 + $0x7c0] sm:$0xff]
        %v1276 = vld [vmem:[%s433 + $0x7c8] sm:$0xff]
        %v1277 = vld [vmem:[%s433 + $0x7d0] sm:$0xff]
        %v1278 = vld [vmem:[%s433 + $0x7d8] sm:$0xff]
        %v1279 = vld [vmem:[%s433 + $0x7e0] sm:$0xff]
        %v1280 = vld [vmem:[%s433 + $0x7e8] sm:$0xff]
        %v1281 = vld [vmem:[%s433 + $0x7f0] sm:$0xff]
        %v1282 = vld [vmem:[%s433 + $0x7f8] sm:$0xff]
        %v1283 = vld [vmem:[%s433 + $0x800] sm:$0xff]
        %v1284 = vld [vmem:[%s433 + $0x808] sm:$0xff]
        %v1285 = vld [vmem:[%s433 + $0x810] sm:$0xff]
        %v1286 = vld [vmem:[%s433 + $0x818] sm:$0xff]
        %v1287 = vld [vmem:[%s433 + $0x820] sm:$0xff]
        %v1288 = vld [vmem:[%s433 + $0x828] sm:$0xff]
        %v1289 = vld [vmem:[%s433 + $0x830] sm:$0xff]
        %v1290 = vld [vmem:[%s433 + $0x838] sm:$0xff]
        %v1291 = vld [vmem:[%s433 + $0x840] sm:$0xff]
        %v1292 = vld [vmem:[%s433 + $0x848] sm:$0xff]
        %v1293 = vld [vmem:[%s433 + $0x850] sm:$0xff]
        %v1294 = vld [vmem:[%s433 + $0x858] sm:$0xff]
        %v1295 = vld [vmem:[%s433 + $0x860] sm:$0xff]
        %v1296 = vld [vmem:[%s433 + $0x868] sm:$0xff]
        %v1297 = vld [vmem:[%s433 + $0x870] sm:$0xff]
        %v1298 = vld [vmem:[%s433 + $0x878] sm:$0xff]
        %v1299 = vld [vmem:[%s433 + $0x880] sm:$0xff]
        %v1300 = vld [vmem:[%s433 + $0x888] sm:$0xff]
        %v1301 = vld [vmem:[%s433 + $0x890] sm:$0xff]
        %v1302 = vld [vmem:[%s433 + $0x898] sm:$0xff]
        %v1303 = vld [vmem:[%s433 + $0x8a0] sm:$0xff]
        %v1304 = vld [vmem:[%s433 + $0x8a8] sm:$0xff]
        %v1305 = vld [vmem:[%s433 + $0x8b0] sm:$0xff]
        %v1306 = vld [vmem:[%s433 + $0x8b8] sm:$0xff]
        %v1307 = vld [vmem:[%s433 + $0x8c0] sm:$0xff]
        %v1308 = vld [vmem:[%s433 + $0x8c8] sm:$0xff]
        %v1309 = vld [vmem:[%s433 + $0x8d0] sm:$0xff]
        %v1310 = vld [vmem:[%s433 + $0x8d8] sm:$0xff]
        %v1311 = vld [vmem:[%s433 + $0x8e0] sm:$0xff]
        %v1312 = vld [vmem:[%s433 + $0x8e8] sm:$0xff]
        %v1313 = vld [vmem:[%s433 + $0x8f0] sm:$0xff]
        %v1314 = vld [vmem:[%s433 + $0x8f8] sm:$0xff]
        %v1315 = vld [vmem:[%s433 + $0x900] sm:$0xff]
        %v1316 = vld [vmem:[%s433 + $0x908] sm:$0xff]
        %v1317 = vld [vmem:[%s433 + $0x910] sm:$0xff]
        %v1318 = vld [vmem:[%s433 + $0x918] sm:$0xff]
        %v1319 = vld [vmem:[%s433 + $0x920] sm:$0xff]
        %v1320 = vld [vmem:[%s433 + $0x928] sm:$0xff]
        %v1321 = vld [vmem:[%s433 + $0x930] sm:$0xff]
        %v1322 = vld [vmem:[%s433 + $0x938] sm:$0xff]
        %v1323 = vld [vmem:[%s433 + $0x940] sm:$0xff]
        %v1324 = vld [vmem:[%s433 + $0x948] sm:$0xff]
        %v1325 = vld [vmem:[%s433 + $0x950] sm:$0xff]
        %v1326 = vld [vmem:[%s433 + $0x958] sm:$0xff]
        %v1327 = vld [vmem:[%s433 + $0x960] sm:$0xff]
        %v1328 = vld [vmem:[%s433 + $0x968] sm:$0xff]
        %v1329 = vld [vmem:[%s433 + $0x970] sm:$0xff]
        %v1330 = vld [vmem:[%s433 + $0x978] sm:$0xff]
        %v1331 = vld [vmem:[%s433 + $0x980] sm:$0xff]
        %v1332 = vld [vmem:[%s433 + $0x988] sm:$0xff]
        %v1333 = vld [vmem:[%s433 + $0x990] sm:$0xff]
        %v1334 = vld [vmem:[%s433 + $0x998] sm:$0xff]
        %v1335 = vld [vmem:[%s433 + $0x9a0] sm:$0xff]
        %v1336 = vld [vmem:[%s433 + $0x9a8] sm:$0xff]
        %v1337 = vld [vmem:[%s433 + $0x9b0] sm:$0xff]
        %v1338 = vld [vmem:[%s433 + $0x9b8] sm:$0xff]
        %v1339 = vld [vmem:[%s433 + $0x9c0] sm:$0xff]
        %v1340 = vld [vmem:[%s433 + $0x9c8] sm:$0xff]
        %v1341 = vld [vmem:[%s433 + $0x9d0] sm:$0xff]
        %v1342 = vld [vmem:[%s433 + $0x9d8] sm:$0xff]
        %v1343 = vld [vmem:[%s433 + $0x9e0] sm:$0xff]
        %v1344 = vld [vmem:[%s433 + $0x9e8] sm:$0xff]
        %v1345 = vld [vmem:[%s433 + $0x9f0] sm:$0xff]
        %v1346 = vld [vmem:[%s433 + $0x9f8] sm:$0xff]
        %v1347 = vld [vmem:[%s433 + $0xa00] sm:$0xff]
        %v1348 = vld [vmem:[%s433 + $0xa08] sm:$0xff]
        %v1349 = vld [vmem:[%s433 + $0xa10] sm:$0xff]
        %v1350 = vld [vmem:[%s433 + $0xa18] sm:$0xff]
        %v1351 = vld [vmem:[%s433 + $0xa20] sm:$0xff]
        %v1352 = vld [vmem:[%s433 + $0xa28] sm:$0xff]
        %v1353 = vld [vmem:[%s433 + $0xa30] sm:$0xff]
        %v1354 = vld [vmem:[%s433 + $0xa38] sm:$0xff]
        %v1355 = vld [vmem:[%s433 + $0xa40] sm:$0xff]
        %v1356 = vld [vmem:[%s433 + $0xa48] sm:$0xff]
        %v1357 = vld [vmem:[%s433 + $0xa50] sm:$0xff]
        %v1358 = vld [vmem:[%s433 + $0xa58] sm:$0xff]
        %v1359 = vld [vmem:[%s433 + $0xa60] sm:$0xff]
        %v1360 = vld [vmem:[%s433 + $0xa68] sm:$0xff]
        %v1361 = vld [vmem:[%s433 + $0xa70] sm:$0xff]
        %v1362 = vld [vmem:[%s433 + $0xa78] sm:$0xff]
        %v1363 = vld [vmem:[%s433 + $0xa80] sm:$0xff]
        %v1364 = vld [vmem:[%s433 + $0xa88] sm:$0xff]
        %v1365 = vld [vmem:[%s433 + $0xa90] sm:$0xff]
        %v1366 = vld [vmem:[%s433 + $0xa98] sm:$0xff]
        %v1367 = vld [vmem:[%s433 + $0xaa0] sm:$0xff]
        %v1368 = vld [vmem:[%s433 + $0xaa8] sm:$0xff]
        %v1369 = vld [vmem:[%s433 + $0xab0] sm:$0xff]
        %v1370 = vld [vmem:[%s433 + $0xab8] sm:$0xff]
        %v1371 = vld [vmem:[%s433 + $0xac0] sm:$0xff]
        %v1372 = vld [vmem:[%s433 + $0xac8] sm:$0xff]
        %v1373 = vld [vmem:[%s433 + $0xad0] sm:$0xff]
        %v1374 = vld [vmem:[%s433 + $0xad8] sm:$0xff]
        %v1375 = vld [vmem:[%s433 + $0xae0] sm:$0xff]
        %v1376 = vld [vmem:[%s433 + $0xae8] sm:$0xff]
        %v1377 = vld [vmem:[%s433 + $0xaf0] sm:$0xff]
        %v1378 = vld [vmem:[%s433 + $0xaf8] sm:$0xff]
        %v1379 = vld [vmem:[%s433 + $0xb00] sm:$0xff]
        %v1380 = vld [vmem:[%s433 + $0xb08] sm:$0xff]
        %v1381 = vld [vmem:[%s433 + $0xb10] sm:$0xff]
        %v1382 = vld [vmem:[%s433 + $0xb18] sm:$0xff]
        %v1383 = vld [vmem:[%s433 + $0xb20] sm:$0xff]
        %v1384 = vld [vmem:[%s433 + $0xb28] sm:$0xff]
        %v1385 = vld [vmem:[%s433 + $0xb30] sm:$0xff]
        %v1386 = vld [vmem:[%s433 + $0xb38] sm:$0xff]
        %v1387 = vld [vmem:[%s433 + $0xb40] sm:$0xff]
        %v1388 = vld [vmem:[%s433 + $0xb48] sm:$0xff]
        %v1389 = vld [vmem:[%s433 + $0xb50] sm:$0xff]
        %v1390 = vld [vmem:[%s433 + $0xb58] sm:$0xff]
        %v1391 = vld [vmem:[%s433 + $0xb60] sm:$0xff]
        %v1392 = vld [vmem:[%s433 + $0xb68] sm:$0xff]
        %v1393 = vld [vmem:[%s433 + $0xb70] sm:$0xff]
        %v1394 = vld [vmem:[%s433 + $0xb78] sm:$0xff]
        %v1395 = vld [vmem:[%s433 + $0xb80] sm:$0xff]
        %v1396 = vld [vmem:[%s433 + $0xb88] sm:$0xff]
        %v1397 = vld [vmem:[%s433 + $0xb90] sm:$0xff]
        %v1398 = vld [vmem:[%s433 + $0xb98] sm:$0xff]
        %v1399 = vld [vmem:[%s433 + $0xba0] sm:$0xff]
        %v1400 = vld [vmem:[%s433 + $0xba8] sm:$0xff]
        %v1401 = vld [vmem:[%s433 + $0xbb0] sm:$0xff]
        %v1402 = vld [vmem:[%s433 + $0xbb8] sm:$0xff]
        %v1403 = vld [vmem:[%s433 + $0xbc0] sm:$0xff]
        %v1404 = vld [vmem:[%s433 + $0xbc8] sm:$0xff]
        %v1405 = vld [vmem:[%s433 + $0xbd0] sm:$0xff]
        %v1406 = vld [vmem:[%s433 + $0xbd8] sm:$0xff]
        %v1407 = vld [vmem:[%s433 + $0xbe0] sm:$0xff]
        %v1408 = vld [vmem:[%s433 + $0xbe8] sm:$0xff]
        %v1409 = vld [vmem:[%s433 + $0xbf0] sm:$0xff]
        %v1410 = vld [vmem:[%s433 + $0xbf8] sm:$0xff]
        %v1411 = vld [vmem:[%s433 + $0xc00] sm:$0xff]
        %v1412 = vld [vmem:[%s433 + $0xc08] sm:$0xff]
        %v1413 = vld [vmem:[%s433 + $0xc10] sm:$0xff]
        %v1414 = vld [vmem:[%s433 + $0xc18] sm:$0xff]
        %v1415 = vld [vmem:[%s433 + $0xc20] sm:$0xff]
        %v1416 = vld [vmem:[%s433 + $0xc28] sm:$0xff]
        %v1417 = vld [vmem:[%s433 + $0xc30] sm:$0xff]
        %v1418 = vld [vmem:[%s433 + $0xc38] sm:$0xff]
        %v1419 = vld [vmem:[%s433 + $0xc40] sm:$0xff]
        %v1420 = vld [vmem:[%s433 + $0xc48] sm:$0xff]
        %v1421 = vld [vmem:[%s433 + $0xc50] sm:$0xff]
        %v1422 = vld [vmem:[%s433 + $0xc58] sm:$0xff]
        %v1423 = vld [vmem:[%s433 + $0xc60] sm:$0xff]
        %v1424 = vld [vmem:[%s433 + $0xc68] sm:$0xff]
        %v1425 = vld [vmem:[%s433 + $0xc70] sm:$0xff]
        %v1426 = vld [vmem:[%s433 + $0xc78] sm:$0xff]
        %v1427 = vld [vmem:[%s433 + $0xc80] sm:$0xff]
        %v1428 = vld [vmem:[%s433 + $0xc88] sm:$0xff]
        %v1429 = vld [vmem:[%s433 + $0xc90] sm:$0xff]
        %v1430 = vld [vmem:[%s433 + $0xc98] sm:$0xff]
        %v1431 = vld [vmem:[%s433 + $0xca0] sm:$0xff]
        %v1432 = vld [vmem:[%s433 + $0xca8] sm:$0xff]
        %v1433 = vld [vmem:[%s433 + $0xcb0] sm:$0xff]
        %v1434 = vld [vmem:[%s433 + $0xcb8] sm:$0xff]
        %v1435 = vld [vmem:[%s433 + $0xcc0] sm:$0xff]
        %v1436 = vld [vmem:[%s433 + $0xcc8] sm:$0xff]
        %v1437 = vld [vmem:[%s433 + $0xcd0] sm:$0xff]
        %v1438 = vld [vmem:[%s433 + $0xcd8] sm:$0xff]
        %v1439 = vld [vmem:[%s433 + $0xce0] sm:$0xff]
        %v1440 = vld [vmem:[%s433 + $0xce8] sm:$0xff]
        %v1441 = vld [vmem:[%s433 + $0xcf0] sm:$0xff]
        %v1442 = vld [vmem:[%s433 + $0xcf8] sm:$0xff]
        %v1443 = vld [vmem:[%s433 + $0xd00] sm:$0xff]
        %v1444 = vld [vmem:[%s433 + $0xd08] sm:$0xff]
        %v1445 = vld [vmem:[%s433 + $0xd10] sm:$0xff]
        %v1446 = vld [vmem:[%s433 + $0xd18] sm:$0xff]
        %v1447 = vld [vmem:[%s433 + $0xd20] sm:$0xff]
        %v1448 = vld [vmem:[%s433 + $0xd28] sm:$0xff]
        %v1449 = vld [vmem:[%s433 + $0xd30] sm:$0xff]
        %v1450 = vld [vmem:[%s433 + $0xd38] sm:$0xff]
        %v1451 = vld [vmem:[%s433 + $0xd40] sm:$0xff]
        %v1452 = vld [vmem:[%s433 + $0xd48] sm:$0xff]
        %v1453 = vld [vmem:[%s433 + $0xd50] sm:$0xff]
        %v1454 = vld [vmem:[%s433 + $0xd58] sm:$0xff]
        %v1455 = vld [vmem:[%s433 + $0xd60] sm:$0xff]
        %v1456 = vld [vmem:[%s433 + $0xd68] sm:$0xff]
        %v1457 = vld [vmem:[%s433 + $0xd70] sm:$0xff]
        %v1458 = vld [vmem:[%s433 + $0xd78] sm:$0xff]
        %v1459 = vld [vmem:[%s433 + $0xd80] sm:$0xff]
        %v1460 = vld [vmem:[%s433 + $0xd88] sm:$0xff]
        %v1461 = vld [vmem:[%s433 + $0xd90] sm:$0xff]
        %v1462 = vld [vmem:[%s433 + $0xd98] sm:$0xff]
        %v1463 = vld [vmem:[%s433 + $0xda0] sm:$0xff]
        %v1464 = vld [vmem:[%s433 + $0xda8] sm:$0xff]
        %v1465 = vld [vmem:[%s433 + $0xdb0] sm:$0xff]
        %v1466 = vld [vmem:[%s433 + $0xdb8] sm:$0xff]
        %v1467 = vld [vmem:[%s433 + $0xdc0] sm:$0xff]
        %v1468 = vld [vmem:[%s433 + $0xdc8] sm:$0xff]
        %v1469 = vld [vmem:[%s433 + $0xdd0] sm:$0xff]
        %v1470 = vld [vmem:[%s433 + $0xdd8] sm:$0xff]
        %v1471 = vld [vmem:[%s433 + $0xde0] sm:$0xff]
        %v1472 = vld [vmem:[%s433 + $0xde8] sm:$0xff]
        %v1473 = vld [vmem:[%s433 + $0xdf0] sm:$0xff]
        %v1474 = vld [vmem:[%s433 + $0xdf8] sm:$0xff]
        %v1475 = vld [vmem:[%s433 + $0xe00] sm:$0xff]
        %v1476 = vld [vmem:[%s433 + $0xe08] sm:$0xff]
        %v1477 = vld [vmem:[%s433 + $0xe10] sm:$0xff]
        %v1478 = vld [vmem:[%s433 + $0xe18] sm:$0xff]
        %v1479 = vld [vmem:[%s433 + $0xe20] sm:$0xff]
        %v1480 = vld [vmem:[%s433 + $0xe28] sm:$0xff]
        %v1481 = vld [vmem:[%s433 + $0xe30] sm:$0xff]
        %v1482 = vld [vmem:[%s433 + $0xe38] sm:$0xff]
        %v1483 = vld [vmem:[%s433 + $0xe40] sm:$0xff]
        %v1484 = vld [vmem:[%s433 + $0xe48] sm:$0xff]
        %v1485 = vld [vmem:[%s433 + $0xe50] sm:$0xff]
        %v1486 = vld [vmem:[%s433 + $0xe58] sm:$0xff]
        %v1487 = vld [vmem:[%s433 + $0xe60] sm:$0xff]
        %v1488 = vld [vmem:[%s433 + $0xe68] sm:$0xff]
        %v1489 = vld [vmem:[%s433 + $0xe70] sm:$0xff]
        %v1490 = vld [vmem:[%s433 + $0xe78] sm:$0xff]
        %v1491 = vld [vmem:[%s433 + $0xe80] sm:$0xff]
        %v1492 = vld [vmem:[%s433 + $0xe88] sm:$0xff]
        %v1493 = vld [vmem:[%s433 + $0xe90] sm:$0xff]
        %v1494 = vld [vmem:[%s433 + $0xe98] sm:$0xff]
        %v1495 = vld [vmem:[%s433 + $0xea0] sm:$0xff]
        %v1496 = vld [vmem:[%s433 + $0xea8] sm:$0xff]
        %v1497 = vld [vmem:[%s433 + $0xeb0] sm:$0xff]
        %v1498 = vld [vmem:[%s433 + $0xeb8] sm:$0xff]
        %v1499 = vld [vmem:[%s433 + $0xec0] sm:$0xff]
        %v1500 = vld [vmem:[%s433 + $0xec8] sm:$0xff]
        %v1501 = vld [vmem:[%s433 + $0xed0] sm:$0xff]
        %v1502 = vld [vmem:[%s433 + $0xed8] sm:$0xff]
        %v1503 = vld [vmem:[%s433 + $0xee0] sm:$0xff]
        %v1504 = vld [vmem:[%s433 + $0xee8] sm:$0xff]
        %v1505 = vld [vmem:[%s433 + $0xef0] sm:$0xff]
        %v1506 = vld [vmem:[%s433 + $0xef8] sm:$0xff]
        %v1507 = vld [vmem:[%s433 + $0xf00] sm:$0xff]
        %v1508 = vld [vmem:[%s433 + $0xf08] sm:$0xff]
        %v1509 = vld [vmem:[%s433 + $0xf10] sm:$0xff]
        %v1510 = vld [vmem:[%s433 + $0xf18] sm:$0xff]
        %v1511 = vld [vmem:[%s433 + $0xf20] sm:$0xff]
        %v1512 = vld [vmem:[%s433 + $0xf28] sm:$0xff]
        %v1513 = vld [vmem:[%s433 + $0xf30] sm:$0xff]
        %v1514 = vld [vmem:[%s433 + $0xf38] sm:$0xff]
        %v1515 = vld [vmem:[%s433 + $0xf40] sm:$0xff]
        %v1516 = vld [vmem:[%s433 + $0xf48] sm:$0xff]
        %v1517 = vld [vmem:[%s433 + $0xf50] sm:$0xff]
        %v1518 = vld [vmem:[%s433 + $0xf58] sm:$0xff]
        %v1519 = vld [vmem:[%s433 + $0xf60] sm:$0xff]
        %v1520 = vld [vmem:[%s433 + $0xf68] sm:$0xff]
        %v1521 = vld [vmem:[%s433 + $0xf70] sm:$0xff]
        %v1522 = vld [vmem:[%s433 + $0xf78] sm:$0xff]
        %v1523 = vld [vmem:[%s433 + $0xf80] sm:$0xff]
        %v1524 = vld [vmem:[%s433 + $0xf88] sm:$0xff]
        %v1525 = vld [vmem:[%s433 + $0xf90] sm:$0xff]
        %v1526 = vld [vmem:[%s433 + $0xf98] sm:$0xff]
        %v1527 = vld [vmem:[%s433 + $0xfa0] sm:$0xff]
        %v1528 = vld [vmem:[%s433 + $0xfa8] sm:$0xff]
        %v1529 = vld [vmem:[%s433 + $0xfb0] sm:$0xff]
        %v1530 = vld [vmem:[%s433 + $0xfb8] sm:$0xff]
        %v1531 = vld [vmem:[%s433 + $0xfc0] sm:$0xff]
        %v1532 = vld [vmem:[%s433 + $0xfc8] sm:$0xff]
        %v1533 = vld [vmem:[%s433 + $0xfd0] sm:$0xff]
        %v1534 = vld [vmem:[%s433 + $0xfd8] sm:$0xff]
        %v1535 = vld [vmem:[%s433 + $0xfe0] sm:$0xff]
        %v1536 = vld [vmem:[%s433 + $0xfe8] sm:$0xff]
        %v1537 = vld [vmem:[%s433 + $0xff0] sm:$0xff]
        %v1538 = vld [vmem:[%s433 + $0xff8] sm:$0xff]
        %v1539 = vmul.f32 %v515, %v1027
        %v1540 = vmul.f32 %v516, %v1028
        %v1541 = vmul.f32 %v517, %v1029
        %v1542 = vmul.f32 %v518, %v1030
        %v1543 = vmul.f32 %v519, %v1031
        %v1544 = vmul.f32 %v520, %v1032
        %v1545 = vmul.f32 %v521, %v1033
        %v1546 = vmul.f32 %v522, %v1034
        %v1547 = vmul.f32 %v523, %v1035
        %v1548 = vmul.f32 %v524, %v1036
        %v1549 = vmul.f32 %v525, %v1037
        %v1550 = vmul.f32 %v526, %v1038
        %v1551 = vmul.f32 %v527, %v1039
        %v1552 = vmul.f32 %v528, %v1040
        %v1553 = vmul.f32 %v529, %v1041
        %v1554 = vmul.f32 %v530, %v1042
        %v1555 = vmul.f32 %v531, %v1043
        %v1556 = vmul.f32 %v532, %v1044
        %v1557 = vmul.f32 %v533, %v1045
        %v1558 = vmul.f32 %v534, %v1046
        %v1559 = vmul.f32 %v535, %v1047
        %v1560 = vmul.f32 %v536, %v1048
        %v1561 = vmul.f32 %v537, %v1049
        %v1562 = vmul.f32 %v538, %v1050
        %v1563 = vmul.f32 %v539, %v1051
        %v1564 = vmul.f32 %v540, %v1052
        %v1565 = vmul.f32 %v541, %v1053
        %v1566 = vmul.f32 %v542, %v1054
        %v1567 = vmul.f32 %v543, %v1055
        %v1568 = vmul.f32 %v544, %v1056
        %v1569 = vmul.f32 %v545, %v1057
        %v1570 = vmul.f32 %v546, %v1058
        %v1571 = vmul.f32 %v547, %v1059
        %v1572 = vmul.f32 %v548, %v1060
        %v1573 = vmul.f32 %v549, %v1061
        %v1574 = vmul.f32 %v550, %v1062
        %v1575 = vmul.f32 %v551, %v1063
        %v1576 = vmul.f32 %v552, %v1064
        %v1577 = vmul.f32 %v553, %v1065
        %v1578 = vmul.f32 %v554, %v1066
        %v1579 = vmul.f32 %v555, %v1067
        %v1580 = vmul.f32 %v556, %v1068
        %v1581 = vmul.f32 %v557, %v1069
        %v1582 = vmul.f32 %v558, %v1070
        %v1583 = vmul.f32 %v559, %v1071
        %v1584 = vmul.f32 %v560, %v1072
        %v1585 = vmul.f32 %v561, %v1073
        %v1586 = vmul.f32 %v562, %v1074
        %v1587 = vmul.f32 %v563, %v1075
        %v1588 = vmul.f32 %v564, %v1076
        %v1589 = vmul.f32 %v565, %v1077
        %v1590 = vmul.f32 %v566, %v1078
        %v1591 = vmul.f32 %v567, %v1079
        %v1592 = vmul.f32 %v568, %v1080
        %v1593 = vmul.f32 %v569, %v1081
        %v1594 = vmul.f32 %v570, %v1082
        %v1595 = vmul.f32 %v571, %v1083
        %v1596 = vmul.f32 %v572, %v1084
        %v1597 = vmul.f32 %v573, %v1085
        %v1598 = vmul.f32 %v574, %v1086
        %v1599 = vmul.f32 %v575, %v1087
        %v1600 = vmul.f32 %v576, %v1088
        %v1601 = vmul.f32 %v577, %v1089
        %v1602 = vmul.f32 %v578, %v1090
        %v1603 = vmul.f32 %v579, %v1091
        %v1604 = vmul.f32 %v580, %v1092
        %v1605 = vmul.f32 %v581, %v1093
        %v1606 = vmul.f32 %v582, %v1094
        %v1607 = vmul.f32 %v583, %v1095
        %v1608 = vmul.f32 %v584, %v1096
        %v1609 = vmul.f32 %v585, %v1097
        %v1610 = vmul.f32 %v586, %v1098
        %v1611 = vmul.f32 %v587, %v1099
        %v1612 = vmul.f32 %v588, %v1100
        %v1613 = vmul.f32 %v589, %v1101
        %v1614 = vmul.f32 %v590, %v1102
        %v1615 = vmul.f32 %v591, %v1103
        %v1616 = vmul.f32 %v592, %v1104
        %v1617 = vmul.f32 %v593, %v1105
        %v1618 = vmul.f32 %v594, %v1106
        %v1619 = vmul.f32 %v595, %v1107
        %v1620 = vmul.f32 %v596, %v1108
        %v1621 = vmul.f32 %v597, %v1109
        %v1622 = vmul.f32 %v598, %v1110
        %v1623 = vmul.f32 %v599, %v1111
        %v1624 = vmul.f32 %v600, %v1112
        %v1625 = vmul.f32 %v601, %v1113
        %v1626 = vmul.f32 %v602, %v1114
        %v1627 = vmul.f32 %v603, %v1115
        %v1628 = vmul.f32 %v604, %v1116
        %v1629 = vmul.f32 %v605, %v1117
        %v1630 = vmul.f32 %v606, %v1118
        %v1631 = vmul.f32 %v607, %v1119
        %v1632 = vmul.f32 %v608, %v1120
        %v1633 = vmul.f32 %v609, %v1121
        %v1634 = vmul.f32 %v610, %v1122
        %v1635 = vmul.f32 %v611, %v1123
        %v1636 = vmul.f32 %v612, %v1124
        %v1637 = vmul.f32 %v613, %v1125
        %v1638 = vmul.f32 %v614, %v1126
        %v1639 = vmul.f32 %v615, %v1127
        %v1640 = vmul.f32 %v616, %v1128
        %v1641 = vmul.f32 %v617, %v1129
        %v1642 = vmul.f32 %v618, %v1130
        %v1643 = vmul.f32 %v619, %v1131
        %v1644 = vmul.f32 %v620, %v1132
        %v1645 = vmul.f32 %v621, %v1133
        %v1646 = vmul.f32 %v622, %v1134
        %v1647 = vmul.f32 %v623, %v1135
        %v1648 = vmul.f32 %v624, %v1136
        %v1649 = vmul.f32 %v625, %v1137
        %v1650 = vmul.f32 %v626, %v1138
        %v1651 = vmul.f32 %v627, %v1139
        %v1652 = vmul.f32 %v628, %v1140
        %v1653 = vmul.f32 %v629, %v1141
        %v1654 = vmul.f32 %v630, %v1142
        %v1655 = vmul.f32 %v631, %v1143
        %v1656 = vmul.f32 %v632, %v1144
        %v1657 = vmul.f32 %v633, %v1145
        %v1658 = vmul.f32 %v634, %v1146
        %v1659 = vmul.f32 %v635, %v1147
        %v1660 = vmul.f32 %v636, %v1148
        %v1661 = vmul.f32 %v637, %v1149
        %v1662 = vmul.f32 %v638, %v1150
        %v1663 = vmul.f32 %v639, %v1151
        %v1664 = vmul.f32 %v640, %v1152
        %v1665 = vmul.f32 %v641, %v1153
        %v1666 = vmul.f32 %v642, %v1154
        %v1667 = vmul.f32 %v643, %v1155
        %v1668 = vmul.f32 %v644, %v1156
        %v1669 = vmul.f32 %v645, %v1157
        %v1670 = vmul.f32 %v646, %v1158
        %v1671 = vmul.f32 %v647, %v1159
        %v1672 = vmul.f32 %v648, %v1160
        %v1673 = vmul.f32 %v649, %v1161
        %v1674 = vmul.f32 %v650, %v1162
        %v1675 = vmul.f32 %v651, %v1163
        %v1676 = vmul.f32 %v652, %v1164
        %v1677 = vmul.f32 %v653, %v1165
        %v1678 = vmul.f32 %v654, %v1166
        %v1679 = vmul.f32 %v655, %v1167
        %v1680 = vmul.f32 %v656, %v1168
        %v1681 = vmul.f32 %v657, %v1169
        %v1682 = vmul.f32 %v658, %v1170
        %v1683 = vmul.f32 %v659, %v1171
        %v1684 = vmul.f32 %v660, %v1172
        %v1685 = vmul.f32 %v661, %v1173
        %v1686 = vmul.f32 %v662, %v1174
        %v1687 = vmul.f32 %v663, %v1175
        %v1688 = vmul.f32 %v664, %v1176
        %v1689 = vmul.f32 %v665, %v1177
        %v1690 = vmul.f32 %v666, %v1178
        %v1691 = vmul.f32 %v667, %v1179
        %v1692 = vmul.f32 %v668, %v1180
        %v1693 = vmul.f32 %v669, %v1181
        %v1694 = vmul.f32 %v670, %v1182
        %v1695 = vmul.f32 %v671, %v1183
        %v1696 = vmul.f32 %v672, %v1184
        %v1697 = vmul.f32 %v673, %v1185
        %v1698 = vmul.f32 %v674, %v1186
        %v1699 = vmul.f32 %v675, %v1187
        %v1700 = vmul.f32 %v676, %v1188
        %v1701 = vmul.f32 %v677, %v1189
        %v1702 = vmul.f32 %v678, %v1190
        %v1703 = vmul.f32 %v679, %v1191
        %v1704 = vmul.f32 %v680, %v1192
        %v1705 = vmul.f32 %v681, %v1193
        %v1706 = vmul.f32 %v682, %v1194
        %v1707 = vmul.f32 %v683, %v1195
        %v1708 = vmul.f32 %v684, %v1196
        %v1709 = vmul.f32 %v685, %v1197
        %v1710 = vmul.f32 %v686, %v1198
        %v1711 = vmul.f32 %v687, %v1199
        %v1712 = vmul.f32 %v688, %v1200
        %v1713 = vmul.f32 %v689, %v1201
        %v1714 = vmul.f32 %v690, %v1202
        %v1715 = vmul.f32 %v691, %v1203
        %v1716 = vmul.f32 %v692, %v1204
        %v1717 = vmul.f32 %v693, %v1205
        %v1718 = vmul.f32 %v694, %v1206
        %v1719 = vmul.f32 %v695, %v1207
        %v1720 = vmul.f32 %v696, %v1208
        %v1721 = vmul.f32 %v697, %v1209
        %v1722 = vmul.f32 %v698, %v1210
        %v1723 = vmul.f32 %v699, %v1211
        %v1724 = vmul.f32 %v700, %v1212
        %v1725 = vmul.f32 %v701, %v1213
        %v1726 = vmul.f32 %v702, %v1214
        %v1727 = vmul.f32 %v703, %v1215
        %v1728 = vmul.f32 %v704, %v1216
        %v1729 = vmul.f32 %v705, %v1217
        %v1730 = vmul.f32 %v706, %v1218
        %v1731 = vmul.f32 %v707, %v1219
        %v1732 = vmul.f32 %v708, %v1220
        %v1733 = vmul.f32 %v709, %v1221
        %v1734 = vmul.f32 %v710, %v1222
        %v1735 = vmul.f32 %v711, %v1223
        %v1736 = vmul.f32 %v712, %v1224
        %v1737 = vmul.f32 %v713, %v1225
        %v1738 = vmul.f32 %v714, %v1226
        %v1739 = vmul.f32 %v715, %v1227
        %v1740 = vmul.f32 %v716, %v1228
        %v1741 = vmul.f32 %v717, %v1229
        %v1742 = vmul.f32 %v718, %v1230
        %v1743 = vmul.f32 %v719, %v1231
        %v1744 = vmul.f32 %v720, %v1232
        %v1745 = vmul.f32 %v721, %v1233
        %v1746 = vmul.f32 %v722, %v1234
        %v1747 = vmul.f32 %v723, %v1235
        %v1748 = vmul.f32 %v724, %v1236
        %v1749 = vmul.f32 %v725, %v1237
        %v1750 = vmul.f32 %v726, %v1238
        %v1751 = vmul.f32 %v727, %v1239
        %v1752 = vmul.f32 %v728, %v1240
        %v1753 = vmul.f32 %v729, %v1241
        %v1754 = vmul.f32 %v730, %v1242
        %v1755 = vmul.f32 %v731, %v1243
        %v1756 = vmul.f32 %v732, %v1244
        %v1757 = vmul.f32 %v733, %v1245
        %v1758 = vmul.f32 %v734, %v1246
        %v1759 = vmul.f32 %v735, %v1247
        %v1760 = vmul.f32 %v736, %v1248
        %v1761 = vmul.f32 %v737, %v1249
        %v1762 = vmul.f32 %v738, %v1250
        %v1763 = vmul.f32 %v739, %v1251
        %v1764 = vmul.f32 %v740, %v1252
        %v1765 = vmul.f32 %v741, %v1253
        %v1766 = vmul.f32 %v742, %v1254
        %v1767 = vmul.f32 %v743, %v1255
        %v1768 = vmul.f32 %v744, %v1256
        %v1769 = vmul.f32 %v745, %v1257
        %v1770 = vmul.f32 %v746, %v1258
        %v1771 = vmul.f32 %v747, %v1259
        %v1772 = vmul.f32 %v748, %v1260
        %v1773 = vmul.f32 %v749, %v1261
        %v1774 = vmul.f32 %v750, %v1262
        %v1775 = vmul.f32 %v751, %v1263
        %v1776 = vmul.f32 %v752, %v1264
        %v1777 = vmul.f32 %v753, %v1265
        %v1778 = vmul.f32 %v754, %v1266
        %v1779 = vmul.f32 %v755, %v1267
        %v1780 = vmul.f32 %v756, %v1268
        %v1781 = vmul.f32 %v757, %v1269
        %v1782 = vmul.f32 %v758, %v1270
        %v1783 = vmul.f32 %v759, %v1271
        %v1784 = vmul.f32 %v760, %v1272
        %v1785 = vmul.f32 %v761, %v1273
        %v1786 = vmul.f32 %v762, %v1274
        %v1787 = vmul.f32 %v763, %v1275
        %v1788 = vmul.f32 %v764, %v1276
        %v1789 = vmul.f32 %v765, %v1277
        %v1790 = vmul.f32 %v766, %v1278
        %v1791 = vmul.f32 %v767, %v1279
        %v1792 = vmul.f32 %v768, %v1280
        %v1793 = vmul.f32 %v769, %v1281
        %v1794 = vmul.f32 %v770, %v1282
        %v1795 = vmul.f32 %v771, %v1283
        %v1796 = vmul.f32 %v772, %v1284
        %v1797 = vmul.f32 %v773, %v1285
        %v1798 = vmul.f32 %v774, %v1286
        %v1799 = vmul.f32 %v775, %v1287
        %v1800 = vmul.f32 %v776, %v1288
        %v1801 = vmul.f32 %v777, %v1289
        %v1802 = vmul.f32 %v778, %v1290
        %v1803 = vmul.f32 %v779, %v1291
        %v1804 = vmul.f32 %v780, %v1292
        %v1805 = vmul.f32 %v781, %v1293
        %v1806 = vmul.f32 %v782, %v1294
        %v1807 = vmul.f32 %v783, %v1295
        %v1808 = vmul.f32 %v784, %v1296
        %v1809 = vmul.f32 %v785, %v1297
        %v1810 = vmul.f32 %v786, %v1298
        %v1811 = vmul.f32 %v787, %v1299
        %v1812 = vmul.f32 %v788, %v1300
        %v1813 = vmul.f32 %v789, %v1301
        %v1814 = vmul.f32 %v790, %v1302
        %v1815 = vmul.f32 %v791, %v1303
        %v1816 = vmul.f32 %v792, %v1304
        %v1817 = vmul.f32 %v793, %v1305
        %v1818 = vmul.f32 %v794, %v1306
        %v1819 = vmul.f32 %v795, %v1307
        %v1820 = vmul.f32 %v796, %v1308
        %v1821 = vmul.f32 %v797, %v1309
        %v1822 = vmul.f32 %v798, %v1310
        %v1823 = vmul.f32 %v799, %v1311
        %v1824 = vmul.f32 %v800, %v1312
        %v1825 = vmul.f32 %v801, %v1313
        %v1826 = vmul.f32 %v802, %v1314
        %v1827 = vmul.f32 %v803, %v1315
        %v1828 = vmul.f32 %v804, %v1316
        %v1829 = vmul.f32 %v805, %v1317
        %v1830 = vmul.f32 %v806, %v1318
        %v1831 = vmul.f32 %v807, %v1319
        %v1832 = vmul.f32 %v808, %v1320
        %v1833 = vmul.f32 %v809, %v1321
        %v1834 = vmul.f32 %v810, %v1322
        %v1835 = vmul.f32 %v811, %v1323
        %v1836 = vmul.f32 %v812, %v1324
        %v1837 = vmul.f32 %v813, %v1325
        %v1838 = vmul.f32 %v814, %v1326
        %v1839 = vmul.f32 %v815, %v1327
        %v1840 = vmul.f32 %v816, %v1328
        %v1841 = vmul.f32 %v817, %v1329
        %v1842 = vmul.f32 %v818, %v1330
        %v1843 = vmul.f32 %v819, %v1331
        %v1844 = vmul.f32 %v820, %v1332
        %v1845 = vmul.f32 %v821, %v1333
        %v1846 = vmul.f32 %v822, %v1334
        %v1847 = vmul.f32 %v823, %v1335
        %v1848 = vmul.f32 %v824, %v1336
        %v1849 = vmul.f32 %v825, %v1337
        %v1850 = vmul.f32 %v826, %v1338
        %v1851 = vmul.f32 %v827, %v1339
        %v1852 = vmul.f32 %v828, %v1340
        %v1853 = vmul.f32 %v829, %v1341
        %v1854 = vmul.f32 %v830, %v1342
        %v1855 = vmul.f32 %v831, %v1343
        %v1856 = vmul.f32 %v832, %v1344
        %v1857 = vmul.f32 %v833, %v1345
        %v1858 = vmul.f32 %v834, %v1346
        %v1859 = vmul.f32 %v835, %v1347
        %v1860 = vmul.f32 %v836, %v1348
        %v1861 = vmul.f32 %v837, %v1349
        %v1862 = vmul.f32 %v838, %v1350
        %v1863 = vmul.f32 %v839, %v1351
        %v1864 = vmul.f32 %v840, %v1352
        %v1865 = vmul.f32 %v841, %v1353
        %v1866 = vmul.f32 %v842, %v1354
        %v1867 = vmul.f32 %v843, %v1355
        %v1868 = vmul.f32 %v844, %v1356
        %v1869 = vmul.f32 %v845, %v1357
        %v1870 = vmul.f32 %v846, %v1358
        %v1871 = vmul.f32 %v847, %v1359
        %v1872 = vmul.f32 %v848, %v1360
        %v1873 = vmul.f32 %v849, %v1361
        %v1874 = vmul.f32 %v850, %v1362
        %v1875 = vmul.f32 %v851, %v1363
        %v1876 = vmul.f32 %v852, %v1364
        %v1877 = vmul.f32 %v853, %v1365
        %v1878 = vmul.f32 %v854, %v1366
        %v1879 = vmul.f32 %v855, %v1367
        %v1880 = vmul.f32 %v856, %v1368
        %v1881 = vmul.f32 %v857, %v1369
        %v1882 = vmul.f32 %v858, %v1370
        %v1883 = vmul.f32 %v859, %v1371
        %v1884 = vmul.f32 %v860, %v1372
        %v1885 = vmul.f32 %v861, %v1373
        %v1886 = vmul.f32 %v862, %v1374
        %v1887 = vmul.f32 %v863, %v1375
        %v1888 = vmul.f32 %v864, %v1376
        %v1889 = vmul.f32 %v865, %v1377
        %v1890 = vmul.f32 %v866, %v1378
        %v1891 = vmul.f32 %v867, %v1379
        %v1892 = vmul.f32 %v868, %v1380
        %v1893 = vmul.f32 %v869, %v1381
        %v1894 = vmul.f32 %v870, %v1382
        %v1895 = vmul.f32 %v871, %v1383
        %v1896 = vmul.f32 %v872, %v1384
        %v1897 = vmul.f32 %v873, %v1385
        %v1898 = vmul.f32 %v874, %v1386
        %v1899 = vmul.f32 %v875, %v1387
        %v1900 = vmul.f32 %v876, %v1388
        %v1901 = vmul.f32 %v877, %v1389
        %v1902 = vmul.f32 %v878, %v1390
        %v1903 = vmul.f32 %v879, %v1391
        %v1904 = vmul.f32 %v880, %v1392
        %v1905 = vmul.f32 %v881, %v1393
        %v1906 = vmul.f32 %v882, %v1394
        %v1907 = vmul.f32 %v883, %v1395
        %v1908 = vmul.f32 %v884, %v1396
        %v1909 = vmul.f32 %v885, %v1397
        %v1910 = vmul.f32 %v886, %v1398
        %v1911 = vmul.f32 %v887, %v1399
        %v1912 = vmul.f32 %v888, %v1400
        %v1913 = vmul.f32 %v889, %v1401
        %v1914 = vmul.f32 %v890, %v1402
        %v1915 = vmul.f32 %v891, %v1403
        %v1916 = vmul.f32 %v892, %v1404
        %v1917 = vmul.f32 %v893, %v1405
        %v1918 = vmul.f32 %v894, %v1406
        %v1919 = vmul.f32 %v895, %v1407
        %v1920 = vmul.f32 %v896, %v1408
        %v1921 = vmul.f32 %v897, %v1409
        %v1922 = vmul.f32 %v898, %v1410
        %v1923 = vmul.f32 %v899, %v1411
        %v1924 = vmul.f32 %v900, %v1412
        %v1925 = vmul.f32 %v901, %v1413
        %v1926 = vmul.f32 %v902, %v1414
        %v1927 = vmul.f32 %v903, %v1415
        %v1928 = vmul.f32 %v904, %v1416
        %v1929 = vmul.f32 %v905, %v1417
        %v1930 = vmul.f32 %v906, %v1418
        %v1931 = vmul.f32 %v907, %v1419
        %v1932 = vmul.f32 %v908, %v1420
        %v1933 = vmul.f32 %v909, %v1421
        %v1934 = vmul.f32 %v910, %v1422
        %v1935 = vmul.f32 %v911, %v1423
        %v1936 = vmul.f32 %v912, %v1424
        %v1937 = vmul.f32 %v913, %v1425
        %v1938 = vmul.f32 %v914, %v1426
        %v1939 = vmul.f32 %v915, %v1427
        %v1940 = vmul.f32 %v916, %v1428
        %v1941 = vmul.f32 %v917, %v1429
        %v1942 = vmul.f32 %v918, %v1430
        %v1943 = vmul.f32 %v919, %v1431
        %v1944 = vmul.f32 %v920, %v1432
        %v1945 = vmul.f32 %v921, %v1433
        %v1946 = vmul.f32 %v922, %v1434
        %v1947 = vmul.f32 %v923, %v1435
        %v1948 = vmul.f32 %v924, %v1436
        %v1949 = vmul.f32 %v925, %v1437
        %v1950 = vmul.f32 %v926, %v1438
        %v1951 = vmul.f32 %v927, %v1439
        %v1952 = vmul.f32 %v928, %v1440
        %v1953 = vmul.f32 %v929, %v1441
        %v1954 = vmul.f32 %v930, %v1442
        %v1955 = vmul.f32 %v931, %v1443
        %v1956 = vmul.f32 %v932, %v1444
        %v1957 = vmul.f32 %v933, %v1445
        %v1958 = vmul.f32 %v934, %v1446
        %v1959 = vmul.f32 %v935, %v1447
        %v1960 = vmul.f32 %v936, %v1448
        %v1961 = vmul.f32 %v937, %v1449
        %v1962 = vmul.f32 %v938, %v1450
        %v1963 = vmul.f32 %v939, %v1451
        %v1964 = vmul.f32 %v940, %v1452
        %v1965 = vmul.f32 %v941, %v1453
        %v1966 = vmul.f32 %v942, %v1454
        %v1967 = vmul.f32 %v943, %v1455
        %v1968 = vmul.f32 %v944, %v1456
        %v1969 = vmul.f32 %v945, %v1457
        %v1970 = vmul.f32 %v946, %v1458
        %v1971 = vmul.f32 %v947, %v1459
        %v1972 = vmul.f32 %v948, %v1460
        %v1973 = vmul.f32 %v949, %v1461
        %v1974 = vmul.f32 %v950, %v1462
        %v1975 = vmul.f32 %v951, %v1463
        %v1976 = vmul.f32 %v952, %v1464
        %v1977 = vmul.f32 %v953, %v1465
        %v1978 = vmul.f32 %v954, %v1466
        %v1979 = vmul.f32 %v955, %v1467
        %v1980 = vmul.f32 %v956, %v1468
        %v1981 = vmul.f32 %v957, %v1469
        %v1982 = vmul.f32 %v958, %v1470
        %v1983 = vmul.f32 %v959, %v1471
        %v1984 = vmul.f32 %v960, %v1472
        %v1985 = vmul.f32 %v961, %v1473
        %v1986 = vmul.f32 %v962, %v1474
        %v1987 = vmul.f32 %v963, %v1475
        %v1988 = vmul.f32 %v964, %v1476
        %v1989 = vmul.f32 %v965, %v1477
        %v1990 = vmul.f32 %v966, %v1478
        %v1991 = vmul.f32 %v967, %v1479
        %v1992 = vmul.f32 %v968, %v1480
        %v1993 = vmul.f32 %v969, %v1481
        %v1994 = vmul.f32 %v970, %v1482
        %v1995 = vmul.f32 %v971, %v1483
        %v1996 = vmul.f32 %v972, %v1484
        %v1997 = vmul.f32 %v973, %v1485
        %v1998 = vmul.f32 %v974, %v1486
        %v1999 = vmul.f32 %v975, %v1487
        %v2000 = vmul.f32 %v976, %v1488
        %v2001 = vmul.f32 %v977, %v1489
        %v2002 = vmul.f32 %v978, %v1490
        %v2003 = vmul.f32 %v979, %v1491
        %v2004 = vmul.f32 %v980, %v1492
        %v2005 = vmul.f32 %v981, %v1493
        %v2006 = vmul.f32 %v982, %v1494
        %v2007 = vmul.f32 %v983, %v1495
        %v2008 = vmul.f32 %v984, %v1496
        %v2009 = vmul.f32 %v985, %v1497
        %v2010 = vmul.f32 %v986, %v1498
        %v2011 = vmul.f32 %v987, %v1499
        %v2012 = vmul.f32 %v988, %v1500
        %v2013 = vmul.f32 %v989, %v1501
        %v2014 = vmul.f32 %v990, %v1502
        %v2015 = vmul.f32 %v991, %v1503
        %v2016 = vmul.f32 %v992, %v1504
        %v2017 = vmul.f32 %v993, %v1505
        %v2018 = vmul.f32 %v994, %v1506
        %v2019 = vmul.f32 %v995, %v1507
        %v2020 = vmul.f32 %v996, %v1508
        %v2021 = vmul.f32 %v997, %v1509
        %v2022 = vmul.f32 %v998, %v1510
        %v2023 = vmul.f32 %v999, %v1511
        %v2024 = vmul.f32 %v1000, %v1512
        %v2025 = vmul.f32 %v1001, %v1513
        %v2026 = vmul.f32 %v1002, %v1514
        %v2027 = vmul.f32 %v1003, %v1515
        %v2028 = vmul.f32 %v1004, %v1516
        %v2029 = vmul.f32 %v1005, %v1517
        %v2030 = vmul.f32 %v1006, %v1518
        %v2031 = vmul.f32 %v1007, %v1519
        %v2032 = vmul.f32 %v1008, %v1520
        %v2033 = vmul.f32 %v1009, %v1521
        %v2034 = vmul.f32 %v1010, %v1522
        %v2035 = vmul.f32 %v1011, %v1523
        %v2036 = vmul.f32 %v1012, %v1524
        %v2037 = vmul.f32 %v1013, %v1525
        %v2038 = vmul.f32 %v1014, %v1526
        %v2039 = vmul.f32 %v1015, %v1527
        %v2040 = vmul.f32 %v1016, %v1528
        %v2041 = vmul.f32 %v1017, %v1529
        %v2042 = vmul.f32 %v1018, %v1530
        %v2043 = vmul.f32 %v1019, %v1531
        %v2044 = vmul.f32 %v1020, %v1532
        %v2045 = vmul.f32 %v1021, %v1533
        %v2046 = vmul.f32 %v1022, %v1534
        %v2047 = vmul.f32 %v1023, %v1535
        %v2048 = vmul.f32 %v1024, %v1536
        %v2049 = vmul.f32 %v1025, %v1537
        %v2050 = vmul.f32 %v1026, %v1538
        %v2051 = vld [vmem:[%s413] sm:$0xff]
        %v2052 = vld [vmem:[%s413 + $0x8] sm:$0xff]
        %v2053 = vld [vmem:[%s413 + $0x10] sm:$0xff]
        %v2054 = vld [vmem:[%s413 + $0x18] sm:$0xff]
        %v2055 = vld [vmem:[%s413 + $0x20] sm:$0xff]
        %v2056 = vld [vmem:[%s413 + $0x28] sm:$0xff]
        %v2057 = vld [vmem:[%s413 + $0x30] sm:$0xff]
        %v2058 = vld [vmem:[%s413 + $0x38] sm:$0xff]
        %v2059 = vld [vmem:[%s413 + $0x40] sm:$0xff]
        %v2060 = vld [vmem:[%s413 + $0x48] sm:$0xff]
        %v2061 = vld [vmem:[%s413 + $0x50] sm:$0xff]
        %v2062 = vld [vmem:[%s413 + $0x58] sm:$0xff]
        %v2063 = vld [vmem:[%s413 + $0x60] sm:$0xff]
        %v2064 = vld [vmem:[%s413 + $0x68] sm:$0xff]
        %v2065 = vld [vmem:[%s413 + $0x70] sm:$0xff]
        %v2066 = vld [vmem:[%s413 + $0x78] sm:$0xff]
        %v2067 = vld [vmem:[%s413 + $0x80] sm:$0xff]
        %v2068 = vld [vmem:[%s413 + $0x88] sm:$0xff]
        %v2069 = vld [vmem:[%s413 + $0x90] sm:$0xff]
        %v2070 = vld [vmem:[%s413 + $0x98] sm:$0xff]
        %v2071 = vld [vmem:[%s413 + $0xa0] sm:$0xff]
        %v2072 = vld [vmem:[%s413 + $0xa8] sm:$0xff]
        %v2073 = vld [vmem:[%s413 + $0xb0] sm:$0xff]
        %v2074 = vld [vmem:[%s413 + $0xb8] sm:$0xff]
        %v2075 = vld [vmem:[%s413 + $0xc0] sm:$0xff]
        %v2076 = vld [vmem:[%s413 + $0xc8] sm:$0xff]
        %v2077 = vld [vmem:[%s413 + $0xd0] sm:$0xff]
        %v2078 = vld [vmem:[%s413 + $0xd8] sm:$0xff]
        %v2079 = vld [vmem:[%s413 + $0xe0] sm:$0xff]
        %v2080 = vld [vmem:[%s413 + $0xe8] sm:$0xff]
        %v2081 = vld [vmem:[%s413 + $0xf0] sm:$0xff]
        %v2082 = vld [vmem:[%s413 + $0xf8] sm:$0xff]
        %v2083 = vld [vmem:[%s413 + $0x100] sm:$0xff]
        %v2084 = vld [vmem:[%s413 + $0x108] sm:$0xff]
        %v2085 = vld [vmem:[%s413 + $0x110] sm:$0xff]
        %v2086 = vld [vmem:[%s413 + $0x118] sm:$0xff]
        %v2087 = vld [vmem:[%s413 + $0x120] sm:$0xff]
        %v2088 = vld [vmem:[%s413 + $0x128] sm:$0xff]
        %v2089 = vld [vmem:[%s413 + $0x130] sm:$0xff]
        %v2090 = vld [vmem:[%s413 + $0x138] sm:$0xff]
        %v2091 = vld [vmem:[%s413 + $0x140] sm:$0xff]
        %v2092 = vld [vmem:[%s413 + $0x148] sm:$0xff]
        %v2093 = vld [vmem:[%s413 + $0x150] sm:$0xff]
        %v2094 = vld [vmem:[%s413 + $0x158] sm:$0xff]
        %v2095 = vld [vmem:[%s413 + $0x160] sm:$0xff]
        %v2096 = vld [vmem:[%s413 + $0x168] sm:$0xff]
        %v2097 = vld [vmem:[%s413 + $0x170] sm:$0xff]
        %v2098 = vld [vmem:[%s413 + $0x178] sm:$0xff]
        %v2099 = vld [vmem:[%s413 + $0x180] sm:$0xff]
        %v2100 = vld [vmem:[%s413 + $0x188] sm:$0xff]
        %v2101 = vld [vmem:[%s413 + $0x190] sm:$0xff]
        %v2102 = vld [vmem:[%s413 + $0x198] sm:$0xff]
        %v2103 = vld [vmem:[%s413 + $0x1a0] sm:$0xff]
        %v2104 = vld [vmem:[%s413 + $0x1a8] sm:$0xff]
        %v2105 = vld [vmem:[%s413 + $0x1b0] sm:$0xff]
        %v2106 = vld [vmem:[%s413 + $0x1b8] sm:$0xff]
        %v2107 = vld [vmem:[%s413 + $0x1c0] sm:$0xff]
        %v2108 = vld [vmem:[%s413 + $0x1c8] sm:$0xff]
        %v2109 = vld [vmem:[%s413 + $0x1d0] sm:$0xff]
        %v2110 = vld [vmem:[%s413 + $0x1d8] sm:$0xff]
        %v2111 = vld [vmem:[%s413 + $0x1e0] sm:$0xff]
        %v2112 = vld [vmem:[%s413 + $0x1e8] sm:$0xff]
        %v2113 = vld [vmem:[%s413 + $0x1f0] sm:$0xff]
        %v2114 = vld [vmem:[%s413 + $0x1f8] sm:$0xff]
        %v2115 = vld [vmem:[%s413 + $0x200] sm:$0xff]
        %v2116 = vld [vmem:[%s413 + $0x208] sm:$0xff]
        %v2117 = vld [vmem:[%s413 + $0x210] sm:$0xff]
        %v2118 = vld [vmem:[%s413 + $0x218] sm:$0xff]
        %v2119 = vld [vmem:[%s413 + $0x220] sm:$0xff]
        %v2120 = vld [vmem:[%s413 + $0x228] sm:$0xff]
        %v2121 = vld [vmem:[%s413 + $0x230] sm:$0xff]
        %v2122 = vld [vmem:[%s413 + $0x238] sm:$0xff]
        %v2123 = vld [vmem:[%s413 + $0x240] sm:$0xff]
        %v2124 = vld [vmem:[%s413 + $0x248] sm:$0xff]
        %v2125 = vld [vmem:[%s413 + $0x250] sm:$0xff]
        %v2126 = vld [vmem:[%s413 + $0x258] sm:$0xff]
        %v2127 = vld [vmem:[%s413 + $0x260] sm:$0xff]
        %v2128 = vld [vmem:[%s413 + $0x268] sm:$0xff]
        %v2129 = vld [vmem:[%s413 + $0x270] sm:$0xff]
        %v2130 = vld [vmem:[%s413 + $0x278] sm:$0xff]
        %v2131 = vld [vmem:[%s413 + $0x280] sm:$0xff]
        %v2132 = vld [vmem:[%s413 + $0x288] sm:$0xff]
        %v2133 = vld [vmem:[%s413 + $0x290] sm:$0xff]
        %v2134 = vld [vmem:[%s413 + $0x298] sm:$0xff]
        %v2135 = vld [vmem:[%s413 + $0x2a0] sm:$0xff]
        %v2136 = vld [vmem:[%s413 + $0x2a8] sm:$0xff]
        %v2137 = vld [vmem:[%s413 + $0x2b0] sm:$0xff]
        %v2138 = vld [vmem:[%s413 + $0x2b8] sm:$0xff]
        %v2139 = vld [vmem:[%s413 + $0x2c0] sm:$0xff]
        %v2140 = vld [vmem:[%s413 + $0x2c8] sm:$0xff]
        %v2141 = vld [vmem:[%s413 + $0x2d0] sm:$0xff]
        %v2142 = vld [vmem:[%s413 + $0x2d8] sm:$0xff]
        %v2143 = vld [vmem:[%s413 + $0x2e0] sm:$0xff]
        %v2144 = vld [vmem:[%s413 + $0x2e8] sm:$0xff]
        %v2145 = vld [vmem:[%s413 + $0x2f0] sm:$0xff]
        %v2146 = vld [vmem:[%s413 + $0x2f8] sm:$0xff]
        %v2147 = vld [vmem:[%s413 + $0x300] sm:$0xff]
        %v2148 = vld [vmem:[%s413 + $0x308] sm:$0xff]
        %v2149 = vld [vmem:[%s413 + $0x310] sm:$0xff]
        %v2150 = vld [vmem:[%s413 + $0x318] sm:$0xff]
        %v2151 = vld [vmem:[%s413 + $0x320] sm:$0xff]
        %v2152 = vld [vmem:[%s413 + $0x328] sm:$0xff]
        %v2153 = vld [vmem:[%s413 + $0x330] sm:$0xff]
        %v2154 = vld [vmem:[%s413 + $0x338] sm:$0xff]
        %v2155 = vld [vmem:[%s413 + $0x340] sm:$0xff]
        %v2156 = vld [vmem:[%s413 + $0x348] sm:$0xff]
        %v2157 = vld [vmem:[%s413 + $0x350] sm:$0xff]
        %v2158 = vld [vmem:[%s413 + $0x358] sm:$0xff]
        %v2159 = vld [vmem:[%s413 + $0x360] sm:$0xff]
        %v2160 = vld [vmem:[%s413 + $0x368] sm:$0xff]
        %v2161 = vld [vmem:[%s413 + $0x370] sm:$0xff]
        %v2162 = vld [vmem:[%s413 + $0x378] sm:$0xff]
        %v2163 = vld [vmem:[%s413 + $0x380] sm:$0xff]
        %v2164 = vld [vmem:[%s413 + $0x388] sm:$0xff]
        %v2165 = vld [vmem:[%s413 + $0x390] sm:$0xff]
        %v2166 = vld [vmem:[%s413 + $0x398] sm:$0xff]
        %v2167 = vld [vmem:[%s413 + $0x3a0] sm:$0xff]
        %v2168 = vld [vmem:[%s413 + $0x3a8] sm:$0xff]
        %v2169 = vld [vmem:[%s413 + $0x3b0] sm:$0xff]
        %v2170 = vld [vmem:[%s413 + $0x3b8] sm:$0xff]
        %v2171 = vld [vmem:[%s413 + $0x3c0] sm:$0xff]
        %v2172 = vld [vmem:[%s413 + $0x3c8] sm:$0xff]
        %v2173 = vld [vmem:[%s413 + $0x3d0] sm:$0xff]
        %v2174 = vld [vmem:[%s413 + $0x3d8] sm:$0xff]
        %v2175 = vld [vmem:[%s413 + $0x3e0] sm:$0xff]
        %v2176 = vld [vmem:[%s413 + $0x3e8] sm:$0xff]
        %v2177 = vld [vmem:[%s413 + $0x3f0] sm:$0xff]
        %v2178 = vld [vmem:[%s413 + $0x3f8] sm:$0xff]
        %v2179 = vld [vmem:[%s413 + $0x400] sm:$0xff]
        %v2180 = vld [vmem:[%s413 + $0x408] sm:$0xff]
        %v2181 = vld [vmem:[%s413 + $0x410] sm:$0xff]
        %v2182 = vld [vmem:[%s413 + $0x418] sm:$0xff]
        %v2183 = vld [vmem:[%s413 + $0x420] sm:$0xff]
        %v2184 = vld [vmem:[%s413 + $0x428] sm:$0xff]
        %v2185 = vld [vmem:[%s413 + $0x430] sm:$0xff]
        %v2186 = vld [vmem:[%s413 + $0x438] sm:$0xff]
        %v2187 = vld [vmem:[%s413 + $0x440] sm:$0xff]
        %v2188 = vld [vmem:[%s413 + $0x448] sm:$0xff]
        %v2189 = vld [vmem:[%s413 + $0x450] sm:$0xff]
        %v2190 = vld [vmem:[%s413 + $0x458] sm:$0xff]
        %v2191 = vld [vmem:[%s413 + $0x460] sm:$0xff]
        %v2192 = vld [vmem:[%s413 + $0x468] sm:$0xff]
        %v2193 = vld [vmem:[%s413 + $0x470] sm:$0xff]
        %v2194 = vld [vmem:[%s413 + $0x478] sm:$0xff]
        %v2195 = vld [vmem:[%s413 + $0x480] sm:$0xff]
        %v2196 = vld [vmem:[%s413 + $0x488] sm:$0xff]
        %v2197 = vld [vmem:[%s413 + $0x490] sm:$0xff]
        %v2198 = vld [vmem:[%s413 + $0x498] sm:$0xff]
        %v2199 = vld [vmem:[%s413 + $0x4a0] sm:$0xff]
        %v2200 = vld [vmem:[%s413 + $0x4a8] sm:$0xff]
        %v2201 = vld [vmem:[%s413 + $0x4b0] sm:$0xff]
        %v2202 = vld [vmem:[%s413 + $0x4b8] sm:$0xff]
        %v2203 = vld [vmem:[%s413 + $0x4c0] sm:$0xff]
        %v2204 = vld [vmem:[%s413 + $0x4c8] sm:$0xff]
        %v2205 = vld [vmem:[%s413 + $0x4d0] sm:$0xff]
        %v2206 = vld [vmem:[%s413 + $0x4d8] sm:$0xff]
        %v2207 = vld [vmem:[%s413 + $0x4e0] sm:$0xff]
        %v2208 = vld [vmem:[%s413 + $0x4e8] sm:$0xff]
        %v2209 = vld [vmem:[%s413 + $0x4f0] sm:$0xff]
        %v2210 = vld [vmem:[%s413 + $0x4f8] sm:$0xff]
        %v2211 = vld [vmem:[%s413 + $0x500] sm:$0xff]
        %v2212 = vld [vmem:[%s413 + $0x508] sm:$0xff]
        %v2213 = vld [vmem:[%s413 + $0x510] sm:$0xff]
        %v2214 = vld [vmem:[%s413 + $0x518] sm:$0xff]
        %v2215 = vld [vmem:[%s413 + $0x520] sm:$0xff]
        %v2216 = vld [vmem:[%s413 + $0x528] sm:$0xff]
        %v2217 = vld [vmem:[%s413 + $0x530] sm:$0xff]
        %v2218 = vld [vmem:[%s413 + $0x538] sm:$0xff]
        %v2219 = vld [vmem:[%s413 + $0x540] sm:$0xff]
        %v2220 = vld [vmem:[%s413 + $0x548] sm:$0xff]
        %v2221 = vld [vmem:[%s413 + $0x550] sm:$0xff]
        %v2222 = vld [vmem:[%s413 + $0x558] sm:$0xff]
        %v2223 = vld [vmem:[%s413 + $0x560] sm:$0xff]
        %v2224 = vld [vmem:[%s413 + $0x568] sm:$0xff]
        %v2225 = vld [vmem:[%s413 + $0x570] sm:$0xff]
        %v2226 = vld [vmem:[%s413 + $0x578] sm:$0xff]
        %v2227 = vld [vmem:[%s413 + $0x580] sm:$0xff]
        %v2228 = vld [vmem:[%s413 + $0x588] sm:$0xff]
        %v2229 = vld [vmem:[%s413 + $0x590] sm:$0xff]
        %v2230 = vld [vmem:[%s413 + $0x598] sm:$0xff]
        %v2231 = vld [vmem:[%s413 + $0x5a0] sm:$0xff]
        %v2232 = vld [vmem:[%s413 + $0x5a8] sm:$0xff]
        %v2233 = vld [vmem:[%s413 + $0x5b0] sm:$0xff]
        %v2234 = vld [vmem:[%s413 + $0x5b8] sm:$0xff]
        %v2235 = vld [vmem:[%s413 + $0x5c0] sm:$0xff]
        %v2236 = vld [vmem:[%s413 + $0x5c8] sm:$0xff]
        %v2237 = vld [vmem:[%s413 + $0x5d0] sm:$0xff]
        %v2238 = vld [vmem:[%s413 + $0x5d8] sm:$0xff]
        %v2239 = vld [vmem:[%s413 + $0x5e0] sm:$0xff]
        %v2240 = vld [vmem:[%s413 + $0x5e8] sm:$0xff]
        %v2241 = vld [vmem:[%s413 + $0x5f0] sm:$0xff]
        %v2242 = vld [vmem:[%s413 + $0x5f8] sm:$0xff]
        %v2243 = vld [vmem:[%s413 + $0x600] sm:$0xff]
        %v2244 = vld [vmem:[%s413 + $0x608] sm:$0xff]
        %v2245 = vld [vmem:[%s413 + $0x610] sm:$0xff]
        %v2246 = vld [vmem:[%s413 + $0x618] sm:$0xff]
        %v2247 = vld [vmem:[%s413 + $0x620] sm:$0xff]
        %v2248 = vld [vmem:[%s413 + $0x628] sm:$0xff]
        %v2249 = vld [vmem:[%s413 + $0x630] sm:$0xff]
        %v2250 = vld [vmem:[%s413 + $0x638] sm:$0xff]
        %v2251 = vld [vmem:[%s413 + $0x640] sm:$0xff]
        %v2252 = vld [vmem:[%s413 + $0x648] sm:$0xff]
        %v2253 = vld [vmem:[%s413 + $0x650] sm:$0xff]
        %v2254 = vld [vmem:[%s413 + $0x658] sm:$0xff]
        %v2255 = vld [vmem:[%s413 + $0x660] sm:$0xff]
        %v2256 = vld [vmem:[%s413 + $0x668] sm:$0xff]
        %v2257 = vld [vmem:[%s413 + $0x670] sm:$0xff]
        %v2258 = vld [vmem:[%s413 + $0x678] sm:$0xff]
        %v2259 = vld [vmem:[%s413 + $0x680] sm:$0xff]
        %v2260 = vld [vmem:[%s413 + $0x688] sm:$0xff]
        %v2261 = vld [vmem:[%s413 + $0x690] sm:$0xff]
        %v2262 = vld [vmem:[%s413 + $0x698] sm:$0xff]
        %v2263 = vld [vmem:[%s413 + $0x6a0] sm:$0xff]
        %v2264 = vld [vmem:[%s413 + $0x6a8] sm:$0xff]
        %v2265 = vld [vmem:[%s413 + $0x6b0] sm:$0xff]
        %v2266 = vld [vmem:[%s413 + $0x6b8] sm:$0xff]
        %v2267 = vld [vmem:[%s413 + $0x6c0] sm:$0xff]
        %v2268 = vld [vmem:[%s413 + $0x6c8] sm:$0xff]
        %v2269 = vld [vmem:[%s413 + $0x6d0] sm:$0xff]
        %v2270 = vld [vmem:[%s413 + $0x6d8] sm:$0xff]
        %v2271 = vld [vmem:[%s413 + $0x6e0] sm:$0xff]
        %v2272 = vld [vmem:[%s413 + $0x6e8] sm:$0xff]
        %v2273 = vld [vmem:[%s413 + $0x6f0] sm:$0xff]
        %v2274 = vld [vmem:[%s413 + $0x6f8] sm:$0xff]
        %v2275 = vld [vmem:[%s413 + $0x700] sm:$0xff]
        %v2276 = vld [vmem:[%s413 + $0x708] sm:$0xff]
        %v2277 = vld [vmem:[%s413 + $0x710] sm:$0xff]
        %v2278 = vld [vmem:[%s413 + $0x718] sm:$0xff]
        %v2279 = vld [vmem:[%s413 + $0x720] sm:$0xff]
        %v2280 = vld [vmem:[%s413 + $0x728] sm:$0xff]
        %v2281 = vld [vmem:[%s413 + $0x730] sm:$0xff]
        %v2282 = vld [vmem:[%s413 + $0x738] sm:$0xff]
        %v2283 = vld [vmem:[%s413 + $0x740] sm:$0xff]
        %v2284 = vld [vmem:[%s413 + $0x748] sm:$0xff]
        %v2285 = vld [vmem:[%s413 + $0x750] sm:$0xff]
        %v2286 = vld [vmem:[%s413 + $0x758] sm:$0xff]
        %v2287 = vld [vmem:[%s413 + $0x760] sm:$0xff]
        %v2288 = vld [vmem:[%s413 + $0x768] sm:$0xff]
        %v2289 = vld [vmem:[%s413 + $0x770] sm:$0xff]
        %v2290 = vld [vmem:[%s413 + $0x778] sm:$0xff]
        %v2291 = vld [vmem:[%s413 + $0x780] sm:$0xff]
        %v2292 = vld [vmem:[%s413 + $0x788] sm:$0xff]
        %v2293 = vld [vmem:[%s413 + $0x790] sm:$0xff]
        %v2294 = vld [vmem:[%s413 + $0x798] sm:$0xff]
        %v2295 = vld [vmem:[%s413 + $0x7a0] sm:$0xff]
        %v2296 = vld [vmem:[%s413 + $0x7a8] sm:$0xff]
        %v2297 = vld [vmem:[%s413 + $0x7b0] sm:$0xff]
        %v2298 = vld [vmem:[%s413 + $0x7b8] sm:$0xff]
        %v2299 = vld [vmem:[%s413 + $0x7c0] sm:$0xff]
        %v2300 = vld [vmem:[%s413 + $0x7c8] sm:$0xff]
        %v2301 = vld [vmem:[%s413 + $0x7d0] sm:$0xff]
        %v2302 = vld [vmem:[%s413 + $0x7d8] sm:$0xff]
        %v2303 = vld [vmem:[%s413 + $0x7e0] sm:$0xff]
        %v2304 = vld [vmem:[%s413 + $0x7e8] sm:$0xff]
        %v2305 = vld [vmem:[%s413 + $0x7f0] sm:$0xff]
        %v2306 = vld [vmem:[%s413 + $0x7f8] sm:$0xff]
        %v2307 = vld [vmem:[%s413 + $0x800] sm:$0xff]
        %v2308 = vld [vmem:[%s413 + $0x808] sm:$0xff]
        %v2309 = vld [vmem:[%s413 + $0x810] sm:$0xff]
        %v2310 = vld [vmem:[%s413 + $0x818] sm:$0xff]
        %v2311 = vld [vmem:[%s413 + $0x820] sm:$0xff]
        %v2312 = vld [vmem:[%s413 + $0x828] sm:$0xff]
        %v2313 = vld [vmem:[%s413 + $0x830] sm:$0xff]
        %v2314 = vld [vmem:[%s413 + $0x838] sm:$0xff]
        %v2315 = vld [vmem:[%s413 + $0x840] sm:$0xff]
        %v2316 = vld [vmem:[%s413 + $0x848] sm:$0xff]
        %v2317 = vld [vmem:[%s413 + $0x850] sm:$0xff]
        %v2318 = vld [vmem:[%s413 + $0x858] sm:$0xff]
        %v2319 = vld [vmem:[%s413 + $0x860] sm:$0xff]
        %v2320 = vld [vmem:[%s413 + $0x868] sm:$0xff]
        %v2321 = vld [vmem:[%s413 + $0x870] sm:$0xff]
        %v2322 = vld [vmem:[%s413 + $0x878] sm:$0xff]
        %v2323 = vld [vmem:[%s413 + $0x880] sm:$0xff]
        %v2324 = vld [vmem:[%s413 + $0x888] sm:$0xff]
        %v2325 = vld [vmem:[%s413 + $0x890] sm:$0xff]
        %v2326 = vld [vmem:[%s413 + $0x898] sm:$0xff]
        %v2327 = vld [vmem:[%s413 + $0x8a0] sm:$0xff]
        %v2328 = vld [vmem:[%s413 + $0x8a8] sm:$0xff]
        %v2329 = vld [vmem:[%s413 + $0x8b0] sm:$0xff]
        %v2330 = vld [vmem:[%s413 + $0x8b8] sm:$0xff]
        %v2331 = vld [vmem:[%s413 + $0x8c0] sm:$0xff]
        %v2332 = vld [vmem:[%s413 + $0x8c8] sm:$0xff]
        %v2333 = vld [vmem:[%s413 + $0x8d0] sm:$0xff]
        %v2334 = vld [vmem:[%s413 + $0x8d8] sm:$0xff]
        %v2335 = vld [vmem:[%s413 + $0x8e0] sm:$0xff]
        %v2336 = vld [vmem:[%s413 + $0x8e8] sm:$0xff]
        %v2337 = vld [vmem:[%s413 + $0x8f0] sm:$0xff]
        %v2338 = vld [vmem:[%s413 + $0x8f8] sm:$0xff]
        %v2339 = vld [vmem:[%s413 + $0x900] sm:$0xff]
        %v2340 = vld [vmem:[%s413 + $0x908] sm:$0xff]
        %v2341 = vld [vmem:[%s413 + $0x910] sm:$0xff]
        %v2342 = vld [vmem:[%s413 + $0x918] sm:$0xff]
        %v2343 = vld [vmem:[%s413 + $0x920] sm:$0xff]
        %v2344 = vld [vmem:[%s413 + $0x928] sm:$0xff]
        %v2345 = vld [vmem:[%s413 + $0x930] sm:$0xff]
        %v2346 = vld [vmem:[%s413 + $0x938] sm:$0xff]
        %v2347 = vld [vmem:[%s413 + $0x940] sm:$0xff]
        %v2348 = vld [vmem:[%s413 + $0x948] sm:$0xff]
        %v2349 = vld [vmem:[%s413 + $0x950] sm:$0xff]
        %v2350 = vld [vmem:[%s413 + $0x958] sm:$0xff]
        %v2351 = vld [vmem:[%s413 + $0x960] sm:$0xff]
        %v2352 = vld [vmem:[%s413 + $0x968] sm:$0xff]
        %v2353 = vld [vmem:[%s413 + $0x970] sm:$0xff]
        %v2354 = vld [vmem:[%s413 + $0x978] sm:$0xff]
        %v2355 = vld [vmem:[%s413 + $0x980] sm:$0xff]
        %v2356 = vld [vmem:[%s413 + $0x988] sm:$0xff]
        %v2357 = vld [vmem:[%s413 + $0x990] sm:$0xff]
        %v2358 = vld [vmem:[%s413 + $0x998] sm:$0xff]
        %v2359 = vld [vmem:[%s413 + $0x9a0] sm:$0xff]
        %v2360 = vld [vmem:[%s413 + $0x9a8] sm:$0xff]
        %v2361 = vld [vmem:[%s413 + $0x9b0] sm:$0xff]
        %v2362 = vld [vmem:[%s413 + $0x9b8] sm:$0xff]
        %v2363 = vld [vmem:[%s413 + $0x9c0] sm:$0xff]
        %v2364 = vld [vmem:[%s413 + $0x9c8] sm:$0xff]
        %v2365 = vld [vmem:[%s413 + $0x9d0] sm:$0xff]
        %v2366 = vld [vmem:[%s413 + $0x9d8] sm:$0xff]
        %v2367 = vld [vmem:[%s413 + $0x9e0] sm:$0xff]
        %v2368 = vld [vmem:[%s413 + $0x9e8] sm:$0xff]
        %v2369 = vld [vmem:[%s413 + $0x9f0] sm:$0xff]
        %v2370 = vld [vmem:[%s413 + $0x9f8] sm:$0xff]
        %v2371 = vld [vmem:[%s413 + $0xa00] sm:$0xff]
        %v2372 = vld [vmem:[%s413 + $0xa08] sm:$0xff]
        %v2373 = vld [vmem:[%s413 + $0xa10] sm:$0xff]
        %v2374 = vld [vmem:[%s413 + $0xa18] sm:$0xff]
        %v2375 = vld [vmem:[%s413 + $0xa20] sm:$0xff]
        %v2376 = vld [vmem:[%s413 + $0xa28] sm:$0xff]
        %v2377 = vld [vmem:[%s413 + $0xa30] sm:$0xff]
        %v2378 = vld [vmem:[%s413 + $0xa38] sm:$0xff]
        %v2379 = vld [vmem:[%s413 + $0xa40] sm:$0xff]
        %v2380 = vld [vmem:[%s413 + $0xa48] sm:$0xff]
        %v2381 = vld [vmem:[%s413 + $0xa50] sm:$0xff]
        %v2382 = vld [vmem:[%s413 + $0xa58] sm:$0xff]
        %v2383 = vld [vmem:[%s413 + $0xa60] sm:$0xff]
        %v2384 = vld [vmem:[%s413 + $0xa68] sm:$0xff]
        %v2385 = vld [vmem:[%s413 + $0xa70] sm:$0xff]
        %v2386 = vld [vmem:[%s413 + $0xa78] sm:$0xff]
        %v2387 = vld [vmem:[%s413 + $0xa80] sm:$0xff]
        %v2388 = vld [vmem:[%s413 + $0xa88] sm:$0xff]
        %v2389 = vld [vmem:[%s413 + $0xa90] sm:$0xff]
        %v2390 = vld [vmem:[%s413 + $0xa98] sm:$0xff]
        %v2391 = vld [vmem:[%s413 + $0xaa0] sm:$0xff]
        %v2392 = vld [vmem:[%s413 + $0xaa8] sm:$0xff]
        %v2393 = vld [vmem:[%s413 + $0xab0] sm:$0xff]
        %v2394 = vld [vmem:[%s413 + $0xab8] sm:$0xff]
        %v2395 = vld [vmem:[%s413 + $0xac0] sm:$0xff]
        %v2396 = vld [vmem:[%s413 + $0xac8] sm:$0xff]
        %v2397 = vld [vmem:[%s413 + $0xad0] sm:$0xff]
        %v2398 = vld [vmem:[%s413 + $0xad8] sm:$0xff]
        %v2399 = vld [vmem:[%s413 + $0xae0] sm:$0xff]
        %v2400 = vld [vmem:[%s413 + $0xae8] sm:$0xff]
        %v2401 = vld [vmem:[%s413 + $0xaf0] sm:$0xff]
        %v2402 = vld [vmem:[%s413 + $0xaf8] sm:$0xff]
        %v2403 = vld [vmem:[%s413 + $0xb00] sm:$0xff]
        %v2404 = vld [vmem:[%s413 + $0xb08] sm:$0xff]
        %v2405 = vld [vmem:[%s413 + $0xb10] sm:$0xff]
        %v2406 = vld [vmem:[%s413 + $0xb18] sm:$0xff]
        %v2407 = vld [vmem:[%s413 + $0xb20] sm:$0xff]
        %v2408 = vld [vmem:[%s413 + $0xb28] sm:$0xff]
        %v2409 = vld [vmem:[%s413 + $0xb30] sm:$0xff]
        %v2410 = vld [vmem:[%s413 + $0xb38] sm:$0xff]
        %v2411 = vld [vmem:[%s413 + $0xb40] sm:$0xff]
        %v2412 = vld [vmem:[%s413 + $0xb48] sm:$0xff]
        %v2413 = vld [vmem:[%s413 + $0xb50] sm:$0xff]
        %v2414 = vld [vmem:[%s413 + $0xb58] sm:$0xff]
        %v2415 = vld [vmem:[%s413 + $0xb60] sm:$0xff]
        %v2416 = vld [vmem:[%s413 + $0xb68] sm:$0xff]
        %v2417 = vld [vmem:[%s413 + $0xb70] sm:$0xff]
        %v2418 = vld [vmem:[%s413 + $0xb78] sm:$0xff]
        %v2419 = vld [vmem:[%s413 + $0xb80] sm:$0xff]
        %v2420 = vld [vmem:[%s413 + $0xb88] sm:$0xff]
        %v2421 = vld [vmem:[%s413 + $0xb90] sm:$0xff]
        %v2422 = vld [vmem:[%s413 + $0xb98] sm:$0xff]
        %v2423 = vld [vmem:[%s413 + $0xba0] sm:$0xff]
        %v2424 = vld [vmem:[%s413 + $0xba8] sm:$0xff]
        %v2425 = vld [vmem:[%s413 + $0xbb0] sm:$0xff]
        %v2426 = vld [vmem:[%s413 + $0xbb8] sm:$0xff]
        %v2427 = vld [vmem:[%s413 + $0xbc0] sm:$0xff]
        %v2428 = vld [vmem:[%s413 + $0xbc8] sm:$0xff]
        %v2429 = vld [vmem:[%s413 + $0xbd0] sm:$0xff]
        %v2430 = vld [vmem:[%s413 + $0xbd8] sm:$0xff]
        %v2431 = vld [vmem:[%s413 + $0xbe0] sm:$0xff]
        %v2432 = vld [vmem:[%s413 + $0xbe8] sm:$0xff]
        %v2433 = vld [vmem:[%s413 + $0xbf0] sm:$0xff]
        %v2434 = vld [vmem:[%s413 + $0xbf8] sm:$0xff]
        %v2435 = vld [vmem:[%s413 + $0xc00] sm:$0xff]
        %v2436 = vld [vmem:[%s413 + $0xc08] sm:$0xff]
        %v2437 = vld [vmem:[%s413 + $0xc10] sm:$0xff]
        %v2438 = vld [vmem:[%s413 + $0xc18] sm:$0xff]
        %v2439 = vld [vmem:[%s413 + $0xc20] sm:$0xff]
        %v2440 = vld [vmem:[%s413 + $0xc28] sm:$0xff]
        %v2441 = vld [vmem:[%s413 + $0xc30] sm:$0xff]
        %v2442 = vld [vmem:[%s413 + $0xc38] sm:$0xff]
        %v2443 = vld [vmem:[%s413 + $0xc40] sm:$0xff]
        %v2444 = vld [vmem:[%s413 + $0xc48] sm:$0xff]
        %v2445 = vld [vmem:[%s413 + $0xc50] sm:$0xff]
        %v2446 = vld [vmem:[%s413 + $0xc58] sm:$0xff]
        %v2447 = vld [vmem:[%s413 + $0xc60] sm:$0xff]
        %v2448 = vld [vmem:[%s413 + $0xc68] sm:$0xff]
        %v2449 = vld [vmem:[%s413 + $0xc70] sm:$0xff]
        %v2450 = vld [vmem:[%s413 + $0xc78] sm:$0xff]
        %v2451 = vld [vmem:[%s413 + $0xc80] sm:$0xff]
        %v2452 = vld [vmem:[%s413 + $0xc88] sm:$0xff]
        %v2453 = vld [vmem:[%s413 + $0xc90] sm:$0xff]
        %v2454 = vld [vmem:[%s413 + $0xc98] sm:$0xff]
        %v2455 = vld [vmem:[%s413 + $0xca0] sm:$0xff]
        %v2456 = vld [vmem:[%s413 + $0xca8] sm:$0xff]
        %v2457 = vld [vmem:[%s413 + $0xcb0] sm:$0xff]
        %v2458 = vld [vmem:[%s413 + $0xcb8] sm:$0xff]
        %v2459 = vld [vmem:[%s413 + $0xcc0] sm:$0xff]
        %v2460 = vld [vmem:[%s413 + $0xcc8] sm:$0xff]
        %v2461 = vld [vmem:[%s413 + $0xcd0] sm:$0xff]
        %v2462 = vld [vmem:[%s413 + $0xcd8] sm:$0xff]
        %v2463 = vld [vmem:[%s413 + $0xce0] sm:$0xff]
        %v2464 = vld [vmem:[%s413 + $0xce8] sm:$0xff]
        %v2465 = vld [vmem:[%s413 + $0xcf0] sm:$0xff]
        %v2466 = vld [vmem:[%s413 + $0xcf8] sm:$0xff]
        %v2467 = vld [vmem:[%s413 + $0xd00] sm:$0xff]
        %v2468 = vld [vmem:[%s413 + $0xd08] sm:$0xff]
        %v2469 = vld [vmem:[%s413 + $0xd10] sm:$0xff]
        %v2470 = vld [vmem:[%s413 + $0xd18] sm:$0xff]
        %v2471 = vld [vmem:[%s413 + $0xd20] sm:$0xff]
        %v2472 = vld [vmem:[%s413 + $0xd28] sm:$0xff]
        %v2473 = vld [vmem:[%s413 + $0xd30] sm:$0xff]
        %v2474 = vld [vmem:[%s413 + $0xd38] sm:$0xff]
        %v2475 = vld [vmem:[%s413 + $0xd40] sm:$0xff]
        %v2476 = vld [vmem:[%s413 + $0xd48] sm:$0xff]
        %v2477 = vld [vmem:[%s413 + $0xd50] sm:$0xff]
        %v2478 = vld [vmem:[%s413 + $0xd58] sm:$0xff]
        %v2479 = vld [vmem:[%s413 + $0xd60] sm:$0xff]
        %v2480 = vld [vmem:[%s413 + $0xd68] sm:$0xff]
        %v2481 = vld [vmem:[%s413 + $0xd70] sm:$0xff]
        %v2482 = vld [vmem:[%s413 + $0xd78] sm:$0xff]
        %v2483 = vld [vmem:[%s413 + $0xd80] sm:$0xff]
        %v2484 = vld [vmem:[%s413 + $0xd88] sm:$0xff]
        %v2485 = vld [vmem:[%s413 + $0xd90] sm:$0xff]
        %v2486 = vld [vmem:[%s413 + $0xd98] sm:$0xff]
        %v2487 = vld [vmem:[%s413 + $0xda0] sm:$0xff]
        %v2488 = vld [vmem:[%s413 + $0xda8] sm:$0xff]
        %v2489 = vld [vmem:[%s413 + $0xdb0] sm:$0xff]
        %v2490 = vld [vmem:[%s413 + $0xdb8] sm:$0xff]
        %v2491 = vld [vmem:[%s413 + $0xdc0] sm:$0xff]
        %v2492 = vld [vmem:[%s413 + $0xdc8] sm:$0xff]
        %v2493 = vld [vmem:[%s413 + $0xdd0] sm:$0xff]
        %v2494 = vld [vmem:[%s413 + $0xdd8] sm:$0xff]
        %v2495 = vld [vmem:[%s413 + $0xde0] sm:$0xff]
        %v2496 = vld [vmem:[%s413 + $0xde8] sm:$0xff]
        %v2497 = vld [vmem:[%s413 + $0xdf0] sm:$0xff]
        %v2498 = vld [vmem:[%s413 + $0xdf8] sm:$0xff]
        %v2499 = vld [vmem:[%s413 + $0xe00] sm:$0xff]
        %v2500 = vld [vmem:[%s413 + $0xe08] sm:$0xff]
        %v2501 = vld [vmem:[%s413 + $0xe10] sm:$0xff]
        %v2502 = vld [vmem:[%s413 + $0xe18] sm:$0xff]
        %v2503 = vld [vmem:[%s413 + $0xe20] sm:$0xff]
        %v2504 = vld [vmem:[%s413 + $0xe28] sm:$0xff]
        %v2505 = vld [vmem:[%s413 + $0xe30] sm:$0xff]
        %v2506 = vld [vmem:[%s413 + $0xe38] sm:$0xff]
        %v2507 = vld [vmem:[%s413 + $0xe40] sm:$0xff]
        %v2508 = vld [vmem:[%s413 + $0xe48] sm:$0xff]
        %v2509 = vld [vmem:[%s413 + $0xe50] sm:$0xff]
        %v2510 = vld [vmem:[%s413 + $0xe58] sm:$0xff]
        %v2511 = vld [vmem:[%s413 + $0xe60] sm:$0xff]
        %v2512 = vld [vmem:[%s413 + $0xe68] sm:$0xff]
        %v2513 = vld [vmem:[%s413 + $0xe70] sm:$0xff]
        %v2514 = vld [vmem:[%s413 + $0xe78] sm:$0xff]
        %v2515 = vld [vmem:[%s413 + $0xe80] sm:$0xff]
        %v2516 = vld [vmem:[%s413 + $0xe88] sm:$0xff]
        %v2517 = vld [vmem:[%s413 + $0xe90] sm:$0xff]
        %v2518 = vld [vmem:[%s413 + $0xe98] sm:$0xff]
        %v2519 = vld [vmem:[%s413 + $0xea0] sm:$0xff]
        %v2520 = vld [vmem:[%s413 + $0xea8] sm:$0xff]
        %v2521 = vld [vmem:[%s413 + $0xeb0] sm:$0xff]
        %v2522 = vld [vmem:[%s413 + $0xeb8] sm:$0xff]
        %v2523 = vld [vmem:[%s413 + $0xec0] sm:$0xff]
        %v2524 = vld [vmem:[%s413 + $0xec8] sm:$0xff]
        %v2525 = vld [vmem:[%s413 + $0xed0] sm:$0xff]
        %v2526 = vld [vmem:[%s413 + $0xed8] sm:$0xff]
        %v2527 = vld [vmem:[%s413 + $0xee0] sm:$0xff]
        %v2528 = vld [vmem:[%s413 + $0xee8] sm:$0xff]
        %v2529 = vld [vmem:[%s413 + $0xef0] sm:$0xff]
        %v2530 = vld [vmem:[%s413 + $0xef8] sm:$0xff]
        %v2531 = vld [vmem:[%s413 + $0xf00] sm:$0xff]
        %v2532 = vld [vmem:[%s413 + $0xf08] sm:$0xff]
        %v2533 = vld [vmem:[%s413 + $0xf10] sm:$0xff]
        %v2534 = vld [vmem:[%s413 + $0xf18] sm:$0xff]
        %v2535 = vld [vmem:[%s413 + $0xf20] sm:$0xff]
        %v2536 = vld [vmem:[%s413 + $0xf28] sm:$0xff]
        %v2537 = vld [vmem:[%s413 + $0xf30] sm:$0xff]
        %v2538 = vld [vmem:[%s413 + $0xf38] sm:$0xff]
        %v2539 = vld [vmem:[%s413 + $0xf40] sm:$0xff]
        %v2540 = vld [vmem:[%s413 + $0xf48] sm:$0xff]
        %v2541 = vld [vmem:[%s413 + $0xf50] sm:$0xff]
        %v2542 = vld [vmem:[%s413 + $0xf58] sm:$0xff]
        %v2543 = vld [vmem:[%s413 + $0xf60] sm:$0xff]
        %v2544 = vld [vmem:[%s413 + $0xf68] sm:$0xff]
        %v2545 = vld [vmem:[%s413 + $0xf70] sm:$0xff]
        %v2546 = vld [vmem:[%s413 + $0xf78] sm:$0xff]
        %v2547 = vld [vmem:[%s413 + $0xf80] sm:$0xff]
        %v2548 = vld [vmem:[%s413 + $0xf88] sm:$0xff]
        %v2549 = vld [vmem:[%s413 + $0xf90] sm:$0xff]
        %v2550 = vld [vmem:[%s413 + $0xf98] sm:$0xff]
        %v2551 = vld [vmem:[%s413 + $0xfa0] sm:$0xff]
        %v2552 = vld [vmem:[%s413 + $0xfa8] sm:$0xff]
        %v2553 = vld [vmem:[%s413 + $0xfb0] sm:$0xff]
        %v2554 = vld [vmem:[%s413 + $0xfb8] sm:$0xff]
        %v2555 = vld [vmem:[%s413 + $0xfc0] sm:$0xff]
        %v2556 = vld [vmem:[%s413 + $0xfc8] sm:$0xff]
        %v2557 = vld [vmem:[%s413 + $0xfd0] sm:$0xff]
        %v2558 = vld [vmem:[%s413 + $0xfd8] sm:$0xff]
        %v2559 = vld [vmem:[%s413 + $0xfe0] sm:$0xff]
        %v2560 = vld [vmem:[%s413 + $0xfe8] sm:$0xff]
        %v2561 = vld [vmem:[%s413 + $0xff0] sm:$0xff]
        %v2562 = vld [vmem:[%s413 + $0xff8] sm:$0xff]
        %v2563 = vld [vmem:[%s443] sm:$0xff]
        %v2564 = vld [vmem:[%s443 + $0x8] sm:$0xff]
        %v2565 = vld [vmem:[%s443 + $0x10] sm:$0xff]
        %v2566 = vld [vmem:[%s443 + $0x18] sm:$0xff]
        %v2567 = vld [vmem:[%s443 + $0x20] sm:$0xff]
        %v2568 = vld [vmem:[%s443 + $0x28] sm:$0xff]
        %v2569 = vld [vmem:[%s443 + $0x30] sm:$0xff]
        %v2570 = vld [vmem:[%s443 + $0x38] sm:$0xff]
        %v2571 = vld [vmem:[%s443 + $0x40] sm:$0xff]
        %v2572 = vld [vmem:[%s443 + $0x48] sm:$0xff]
        %v2573 = vld [vmem:[%s443 + $0x50] sm:$0xff]
        %v2574 = vld [vmem:[%s443 + $0x58] sm:$0xff]
        %v2575 = vld [vmem:[%s443 + $0x60] sm:$0xff]
        %v2576 = vld [vmem:[%s443 + $0x68] sm:$0xff]
        %v2577 = vld [vmem:[%s443 + $0x70] sm:$0xff]
        %v2578 = vld [vmem:[%s443 + $0x78] sm:$0xff]
        %v2579 = vld [vmem:[%s443 + $0x80] sm:$0xff]
        %v2580 = vld [vmem:[%s443 + $0x88] sm:$0xff]
        %v2581 = vld [vmem:[%s443 + $0x90] sm:$0xff]
        %v2582 = vld [vmem:[%s443 + $0x98] sm:$0xff]
        %v2583 = vld [vmem:[%s443 + $0xa0] sm:$0xff]
        %v2584 = vld [vmem:[%s443 + $0xa8] sm:$0xff]
        %v2585 = vld [vmem:[%s443 + $0xb0] sm:$0xff]
        %v2586 = vld [vmem:[%s443 + $0xb8] sm:$0xff]
        %v2587 = vld [vmem:[%s443 + $0xc0] sm:$0xff]
        %v2588 = vld [vmem:[%s443 + $0xc8] sm:$0xff]
        %v2589 = vld [vmem:[%s443 + $0xd0] sm:$0xff]
        %v2590 = vld [vmem:[%s443 + $0xd8] sm:$0xff]
        %v2591 = vld [vmem:[%s443 + $0xe0] sm:$0xff]
        %v2592 = vld [vmem:[%s443 + $0xe8] sm:$0xff]
        %v2593 = vld [vmem:[%s443 + $0xf0] sm:$0xff]
        %v2594 = vld [vmem:[%s443 + $0xf8] sm:$0xff]
        %v2595 = vld [vmem:[%s443 + $0x100] sm:$0xff]
        %v2596 = vld [vmem:[%s443 + $0x108] sm:$0xff]
        %v2597 = vld [vmem:[%s443 + $0x110] sm:$0xff]
        %v2598 = vld [vmem:[%s443 + $0x118] sm:$0xff]
        %v2599 = vld [vmem:[%s443 + $0x120] sm:$0xff]
        %v2600 = vld [vmem:[%s443 + $0x128] sm:$0xff]
        %v2601 = vld [vmem:[%s443 + $0x130] sm:$0xff]
        %v2602 = vld [vmem:[%s443 + $0x138] sm:$0xff]
        %v2603 = vld [vmem:[%s443 + $0x140] sm:$0xff]
        %v2604 = vld [vmem:[%s443 + $0x148] sm:$0xff]
        %v2605 = vld [vmem:[%s443 + $0x150] sm:$0xff]
        %v2606 = vld [vmem:[%s443 + $0x158] sm:$0xff]
        %v2607 = vld [vmem:[%s443 + $0x160] sm:$0xff]
        %v2608 = vld [vmem:[%s443 + $0x168] sm:$0xff]
        %v2609 = vld [vmem:[%s443 + $0x170] sm:$0xff]
        %v2610 = vld [vmem:[%s443 + $0x178] sm:$0xff]
        %v2611 = vld [vmem:[%s443 + $0x180] sm:$0xff]
        %v2612 = vld [vmem:[%s443 + $0x188] sm:$0xff]
        %v2613 = vld [vmem:[%s443 + $0x190] sm:$0xff]
        %v2614 = vld [vmem:[%s443 + $0x198] sm:$0xff]
        %v2615 = vld [vmem:[%s443 + $0x1a0] sm:$0xff]
        %v2616 = vld [vmem:[%s443 + $0x1a8] sm:$0xff]
        %v2617 = vld [vmem:[%s443 + $0x1b0] sm:$0xff]
        %v2618 = vld [vmem:[%s443 + $0x1b8] sm:$0xff]
        %v2619 = vld [vmem:[%s443 + $0x1c0] sm:$0xff]
        %v2620 = vld [vmem:[%s443 + $0x1c8] sm:$0xff]
        %v2621 = vld [vmem:[%s443 + $0x1d0] sm:$0xff]
        %v2622 = vld [vmem:[%s443 + $0x1d8] sm:$0xff]
        %v2623 = vld [vmem:[%s443 + $0x1e0] sm:$0xff]
        %v2624 = vld [vmem:[%s443 + $0x1e8] sm:$0xff]
        %v2625 = vld [vmem:[%s443 + $0x1f0] sm:$0xff]
        %v2626 = vld [vmem:[%s443 + $0x1f8] sm:$0xff]
        %v2627 = vld [vmem:[%s443 + $0x200] sm:$0xff]
        %v2628 = vld [vmem:[%s443 + $0x208] sm:$0xff]
        %v2629 = vld [vmem:[%s443 + $0x210] sm:$0xff]
        %v2630 = vld [vmem:[%s443 + $0x218] sm:$0xff]
        %v2631 = vld [vmem:[%s443 + $0x220] sm:$0xff]
        %v2632 = vld [vmem:[%s443 + $0x228] sm:$0xff]
        %v2633 = vld [vmem:[%s443 + $0x230] sm:$0xff]
        %v2634 = vld [vmem:[%s443 + $0x238] sm:$0xff]
        %v2635 = vld [vmem:[%s443 + $0x240] sm:$0xff]
        %v2636 = vld [vmem:[%s443 + $0x248] sm:$0xff]
        %v2637 = vld [vmem:[%s443 + $0x250] sm:$0xff]
        %v2638 = vld [vmem:[%s443 + $0x258] sm:$0xff]
        %v2639 = vld [vmem:[%s443 + $0x260] sm:$0xff]
        %v2640 = vld [vmem:[%s443 + $0x268] sm:$0xff]
        %v2641 = vld [vmem:[%s443 + $0x270] sm:$0xff]
        %v2642 = vld [vmem:[%s443 + $0x278] sm:$0xff]
        %v2643 = vld [vmem:[%s443 + $0x280] sm:$0xff]
        %v2644 = vld [vmem:[%s443 + $0x288] sm:$0xff]
        %v2645 = vld [vmem:[%s443 + $0x290] sm:$0xff]
        %v2646 = vld [vmem:[%s443 + $0x298] sm:$0xff]
        %v2647 = vld [vmem:[%s443 + $0x2a0] sm:$0xff]
        %v2648 = vld [vmem:[%s443 + $0x2a8] sm:$0xff]
        %v2649 = vld [vmem:[%s443 + $0x2b0] sm:$0xff]
        %v2650 = vld [vmem:[%s443 + $0x2b8] sm:$0xff]
        %v2651 = vld [vmem:[%s443 + $0x2c0] sm:$0xff]
        %v2652 = vld [vmem:[%s443 + $0x2c8] sm:$0xff]
        %v2653 = vld [vmem:[%s443 + $0x2d0] sm:$0xff]
        %v2654 = vld [vmem:[%s443 + $0x2d8] sm:$0xff]
        %v2655 = vld [vmem:[%s443 + $0x2e0] sm:$0xff]
        %v2656 = vld [vmem:[%s443 + $0x2e8] sm:$0xff]
        %v2657 = vld [vmem:[%s443 + $0x2f0] sm:$0xff]
        %v2658 = vld [vmem:[%s443 + $0x2f8] sm:$0xff]
        %v2659 = vld [vmem:[%s443 + $0x300] sm:$0xff]
        %v2660 = vld [vmem:[%s443 + $0x308] sm:$0xff]
        %v2661 = vld [vmem:[%s443 + $0x310] sm:$0xff]
        %v2662 = vld [vmem:[%s443 + $0x318] sm:$0xff]
        %v2663 = vld [vmem:[%s443 + $0x320] sm:$0xff]
        %v2664 = vld [vmem:[%s443 + $0x328] sm:$0xff]
        %v2665 = vld [vmem:[%s443 + $0x330] sm:$0xff]
        %v2666 = vld [vmem:[%s443 + $0x338] sm:$0xff]
        %v2667 = vld [vmem:[%s443 + $0x340] sm:$0xff]
        %v2668 = vld [vmem:[%s443 + $0x348] sm:$0xff]
        %v2669 = vld [vmem:[%s443 + $0x350] sm:$0xff]
        %v2670 = vld [vmem:[%s443 + $0x358] sm:$0xff]
        %v2671 = vld [vmem:[%s443 + $0x360] sm:$0xff]
        %v2672 = vld [vmem:[%s443 + $0x368] sm:$0xff]
        %v2673 = vld [vmem:[%s443 + $0x370] sm:$0xff]
        %v2674 = vld [vmem:[%s443 + $0x378] sm:$0xff]
        %v2675 = vld [vmem:[%s443 + $0x380] sm:$0xff]
        %v2676 = vld [vmem:[%s443 + $0x388] sm:$0xff]
        %v2677 = vld [vmem:[%s443 + $0x390] sm:$0xff]
        %v2678 = vld [vmem:[%s443 + $0x398] sm:$0xff]
        %v2679 = vld [vmem:[%s443 + $0x3a0] sm:$0xff]
        %v2680 = vld [vmem:[%s443 + $0x3a8] sm:$0xff]
        %v2681 = vld [vmem:[%s443 + $0x3b0] sm:$0xff]
        %v2682 = vld [vmem:[%s443 + $0x3b8] sm:$0xff]
        %v2683 = vld [vmem:[%s443 + $0x3c0] sm:$0xff]
        %v2684 = vld [vmem:[%s443 + $0x3c8] sm:$0xff]
        %v2685 = vld [vmem:[%s443 + $0x3d0] sm:$0xff]
        %v2686 = vld [vmem:[%s443 + $0x3d8] sm:$0xff]
        %v2687 = vld [vmem:[%s443 + $0x3e0] sm:$0xff]
        %v2688 = vld [vmem:[%s443 + $0x3e8] sm:$0xff]
        %v2689 = vld [vmem:[%s443 + $0x3f0] sm:$0xff]
        %v2690 = vld [vmem:[%s443 + $0x3f8] sm:$0xff]
        %v2691 = vld [vmem:[%s443 + $0x400] sm:$0xff]
        %v2692 = vld [vmem:[%s443 + $0x408] sm:$0xff]
        %v2693 = vld [vmem:[%s443 + $0x410] sm:$0xff]
        %v2694 = vld [vmem:[%s443 + $0x418] sm:$0xff]
        %v2695 = vld [vmem:[%s443 + $0x420] sm:$0xff]
        %v2696 = vld [vmem:[%s443 + $0x428] sm:$0xff]
        %v2697 = vld [vmem:[%s443 + $0x430] sm:$0xff]
        %v2698 = vld [vmem:[%s443 + $0x438] sm:$0xff]
        %v2699 = vld [vmem:[%s443 + $0x440] sm:$0xff]
        %v2700 = vld [vmem:[%s443 + $0x448] sm:$0xff]
        %v2701 = vld [vmem:[%s443 + $0x450] sm:$0xff]
        %v2702 = vld [vmem:[%s443 + $0x458] sm:$0xff]
        %v2703 = vld [vmem:[%s443 + $0x460] sm:$0xff]
        %v2704 = vld [vmem:[%s443 + $0x468] sm:$0xff]
        %v2705 = vld [vmem:[%s443 + $0x470] sm:$0xff]
        %v2706 = vld [vmem:[%s443 + $0x478] sm:$0xff]
        %v2707 = vld [vmem:[%s443 + $0x480] sm:$0xff]
        %v2708 = vld [vmem:[%s443 + $0x488] sm:$0xff]
        %v2709 = vld [vmem:[%s443 + $0x490] sm:$0xff]
        %v2710 = vld [vmem:[%s443 + $0x498] sm:$0xff]
        %v2711 = vld [vmem:[%s443 + $0x4a0] sm:$0xff]
        %v2712 = vld [vmem:[%s443 + $0x4a8] sm:$0xff]
        %v2713 = vld [vmem:[%s443 + $0x4b0] sm:$0xff]
        %v2714 = vld [vmem:[%s443 + $0x4b8] sm:$0xff]
        %v2715 = vld [vmem:[%s443 + $0x4c0] sm:$0xff]
        %v2716 = vld [vmem:[%s443 + $0x4c8] sm:$0xff]
        %v2717 = vld [vmem:[%s443 + $0x4d0] sm:$0xff]
        %v2718 = vld [vmem:[%s443 + $0x4d8] sm:$0xff]
        %v2719 = vld [vmem:[%s443 + $0x4e0] sm:$0xff]
        %v2720 = vld [vmem:[%s443 + $0x4e8] sm:$0xff]
        %v2721 = vld [vmem:[%s443 + $0x4f0] sm:$0xff]
        %v2722 = vld [vmem:[%s443 + $0x4f8] sm:$0xff]
        %v2723 = vld [vmem:[%s443 + $0x500] sm:$0xff]
        %v2724 = vld [vmem:[%s443 + $0x508] sm:$0xff]
        %v2725 = vld [vmem:[%s443 + $0x510] sm:$0xff]
        %v2726 = vld [vmem:[%s443 + $0x518] sm:$0xff]
        %v2727 = vld [vmem:[%s443 + $0x520] sm:$0xff]
        %v2728 = vld [vmem:[%s443 + $0x528] sm:$0xff]
        %v2729 = vld [vmem:[%s443 + $0x530] sm:$0xff]
        %v2730 = vld [vmem:[%s443 + $0x538] sm:$0xff]
        %v2731 = vld [vmem:[%s443 + $0x540] sm:$0xff]
        %v2732 = vld [vmem:[%s443 + $0x548] sm:$0xff]
        %v2733 = vld [vmem:[%s443 + $0x550] sm:$0xff]
        %v2734 = vld [vmem:[%s443 + $0x558] sm:$0xff]
        %v2735 = vld [vmem:[%s443 + $0x560] sm:$0xff]
        %v2736 = vld [vmem:[%s443 + $0x568] sm:$0xff]
        %v2737 = vld [vmem:[%s443 + $0x570] sm:$0xff]
        %v2738 = vld [vmem:[%s443 + $0x578] sm:$0xff]
        %v2739 = vld [vmem:[%s443 + $0x580] sm:$0xff]
        %v2740 = vld [vmem:[%s443 + $0x588] sm:$0xff]
        %v2741 = vld [vmem:[%s443 + $0x590] sm:$0xff]
        %v2742 = vld [vmem:[%s443 + $0x598] sm:$0xff]
        %v2743 = vld [vmem:[%s443 + $0x5a0] sm:$0xff]
        %v2744 = vld [vmem:[%s443 + $0x5a8] sm:$0xff]
        %v2745 = vld [vmem:[%s443 + $0x5b0] sm:$0xff]
        %v2746 = vld [vmem:[%s443 + $0x5b8] sm:$0xff]
        %v2747 = vld [vmem:[%s443 + $0x5c0] sm:$0xff]
        %v2748 = vld [vmem:[%s443 + $0x5c8] sm:$0xff]
        %v2749 = vld [vmem:[%s443 + $0x5d0] sm:$0xff]
        %v2750 = vld [vmem:[%s443 + $0x5d8] sm:$0xff]
        %v2751 = vld [vmem:[%s443 + $0x5e0] sm:$0xff]
        %v2752 = vld [vmem:[%s443 + $0x5e8] sm:$0xff]
        %v2753 = vld [vmem:[%s443 + $0x5f0] sm:$0xff]
        %v2754 = vld [vmem:[%s443 + $0x5f8] sm:$0xff]
        %v2755 = vld [vmem:[%s443 + $0x600] sm:$0xff]
        %v2756 = vld [vmem:[%s443 + $0x608] sm:$0xff]
        %v2757 = vld [vmem:[%s443 + $0x610] sm:$0xff]
        %v2758 = vld [vmem:[%s443 + $0x618] sm:$0xff]
        %v2759 = vld [vmem:[%s443 + $0x620] sm:$0xff]
        %v2760 = vld [vmem:[%s443 + $0x628] sm:$0xff]
        %v2761 = vld [vmem:[%s443 + $0x630] sm:$0xff]
        %v2762 = vld [vmem:[%s443 + $0x638] sm:$0xff]
        %v2763 = vld [vmem:[%s443 + $0x640] sm:$0xff]
        %v2764 = vld [vmem:[%s443 + $0x648] sm:$0xff]
        %v2765 = vld [vmem:[%s443 + $0x650] sm:$0xff]
        %v2766 = vld [vmem:[%s443 + $0x658] sm:$0xff]
        %v2767 = vld [vmem:[%s443 + $0x660] sm:$0xff]
        %v2768 = vld [vmem:[%s443 + $0x668] sm:$0xff]
        %v2769 = vld [vmem:[%s443 + $0x670] sm:$0xff]
        %v2770 = vld [vmem:[%s443 + $0x678] sm:$0xff]
        %v2771 = vld [vmem:[%s443 + $0x680] sm:$0xff]
        %v2772 = vld [vmem:[%s443 + $0x688] sm:$0xff]
        %v2773 = vld [vmem:[%s443 + $0x690] sm:$0xff]
        %v2774 = vld [vmem:[%s443 + $0x698] sm:$0xff]
        %v2775 = vld [vmem:[%s443 + $0x6a0] sm:$0xff]
        %v2776 = vld [vmem:[%s443 + $0x6a8] sm:$0xff]
        %v2777 = vld [vmem:[%s443 + $0x6b0] sm:$0xff]
        %v2778 = vld [vmem:[%s443 + $0x6b8] sm:$0xff]
        %v2779 = vld [vmem:[%s443 + $0x6c0] sm:$0xff]
        %v2780 = vld [vmem:[%s443 + $0x6c8] sm:$0xff]
        %v2781 = vld [vmem:[%s443 + $0x6d0] sm:$0xff]
        %v2782 = vld [vmem:[%s443 + $0x6d8] sm:$0xff]
        %v2783 = vld [vmem:[%s443 + $0x6e0] sm:$0xff]
        %v2784 = vld [vmem:[%s443 + $0x6e8] sm:$0xff]
        %v2785 = vld [vmem:[%s443 + $0x6f0] sm:$0xff]
        %v2786 = vld [vmem:[%s443 + $0x6f8] sm:$0xff]
        %v2787 = vld [vmem:[%s443 + $0x700] sm:$0xff]
        %v2788 = vld [vmem:[%s443 + $0x708] sm:$0xff]
        %v2789 = vld [vmem:[%s443 + $0x710] sm:$0xff]
        %v2790 = vld [vmem:[%s443 + $0x718] sm:$0xff]
        %v2791 = vld [vmem:[%s443 + $0x720] sm:$0xff]
        %v2792 = vld [vmem:[%s443 + $0x728] sm:$0xff]
        %v2793 = vld [vmem:[%s443 + $0x730] sm:$0xff]
        %v2794 = vld [vmem:[%s443 + $0x738] sm:$0xff]
        %v2795 = vld [vmem:[%s443 + $0x740] sm:$0xff]
        %v2796 = vld [vmem:[%s443 + $0x748] sm:$0xff]
        %v2797 = vld [vmem:[%s443 + $0x750] sm:$0xff]
        %v2798 = vld [vmem:[%s443 + $0x758] sm:$0xff]
        %v2799 = vld [vmem:[%s443 + $0x760] sm:$0xff]
        %v2800 = vld [vmem:[%s443 + $0x768] sm:$0xff]
        %v2801 = vld [vmem:[%s443 + $0x770] sm:$0xff]
        %v2802 = vld [vmem:[%s443 + $0x778] sm:$0xff]
        %v2803 = vld [vmem:[%s443 + $0x780] sm:$0xff]
        %v2804 = vld [vmem:[%s443 + $0x788] sm:$0xff]
        %v2805 = vld [vmem:[%s443 + $0x790] sm:$0xff]
        %v2806 = vld [vmem:[%s443 + $0x798] sm:$0xff]
        %v2807 = vld [vmem:[%s443 + $0x7a0] sm:$0xff]
        %v2808 = vld [vmem:[%s443 + $0x7a8] sm:$0xff]
        %v2809 = vld [vmem:[%s443 + $0x7b0] sm:$0xff]
        %v2810 = vld [vmem:[%s443 + $0x7b8] sm:$0xff]
        %v2811 = vld [vmem:[%s443 + $0x7c0] sm:$0xff]
        %v2812 = vld [vmem:[%s443 + $0x7c8] sm:$0xff]
        %v2813 = vld [vmem:[%s443 + $0x7d0] sm:$0xff]
        %v2814 = vld [vmem:[%s443 + $0x7d8] sm:$0xff]
        %v2815 = vld [vmem:[%s443 + $0x7e0] sm:$0xff]
        %v2816 = vld [vmem:[%s443 + $0x7e8] sm:$0xff]
        %v2817 = vld [vmem:[%s443 + $0x7f0] sm:$0xff]
        %v2818 = vld [vmem:[%s443 + $0x7f8] sm:$0xff]
        %v2819 = vld [vmem:[%s443 + $0x800] sm:$0xff]
        %v2820 = vld [vmem:[%s443 + $0x808] sm:$0xff]
        %v2821 = vld [vmem:[%s443 + $0x810] sm:$0xff]
        %v2822 = vld [vmem:[%s443 + $0x818] sm:$0xff]
        %v2823 = vld [vmem:[%s443 + $0x820] sm:$0xff]
        %v2824 = vld [vmem:[%s443 + $0x828] sm:$0xff]
        %v2825 = vld [vmem:[%s443 + $0x830] sm:$0xff]
        %v2826 = vld [vmem:[%s443 + $0x838] sm:$0xff]
        %v2827 = vld [vmem:[%s443 + $0x840] sm:$0xff]
        %v2828 = vld [vmem:[%s443 + $0x848] sm:$0xff]
        %v2829 = vld [vmem:[%s443 + $0x850] sm:$0xff]
        %v2830 = vld [vmem:[%s443 + $0x858] sm:$0xff]
        %v2831 = vld [vmem:[%s443 + $0x860] sm:$0xff]
        %v2832 = vld [vmem:[%s443 + $0x868] sm:$0xff]
        %v2833 = vld [vmem:[%s443 + $0x870] sm:$0xff]
        %v2834 = vld [vmem:[%s443 + $0x878] sm:$0xff]
        %v2835 = vld [vmem:[%s443 + $0x880] sm:$0xff]
        %v2836 = vld [vmem:[%s443 + $0x888] sm:$0xff]
        %v2837 = vld [vmem:[%s443 + $0x890] sm:$0xff]
        %v2838 = vld [vmem:[%s443 + $0x898] sm:$0xff]
        %v2839 = vld [vmem:[%s443 + $0x8a0] sm:$0xff]
        %v2840 = vld [vmem:[%s443 + $0x8a8] sm:$0xff]
        %v2841 = vld [vmem:[%s443 + $0x8b0] sm:$0xff]
        %v2842 = vld [vmem:[%s443 + $0x8b8] sm:$0xff]
        %v2843 = vld [vmem:[%s443 + $0x8c0] sm:$0xff]
        %v2844 = vld [vmem:[%s443 + $0x8c8] sm:$0xff]
        %v2845 = vld [vmem:[%s443 + $0x8d0] sm:$0xff]
        %v2846 = vld [vmem:[%s443 + $0x8d8] sm:$0xff]
        %v2847 = vld [vmem:[%s443 + $0x8e0] sm:$0xff]
        %v2848 = vld [vmem:[%s443 + $0x8e8] sm:$0xff]
        %v2849 = vld [vmem:[%s443 + $0x8f0] sm:$0xff]
        %v2850 = vld [vmem:[%s443 + $0x8f8] sm:$0xff]
        %v2851 = vld [vmem:[%s443 + $0x900] sm:$0xff]
        %v2852 = vld [vmem:[%s443 + $0x908] sm:$0xff]
        %v2853 = vld [vmem:[%s443 + $0x910] sm:$0xff]
        %v2854 = vld [vmem:[%s443 + $0x918] sm:$0xff]
        %v2855 = vld [vmem:[%s443 + $0x920] sm:$0xff]
        %v2856 = vld [vmem:[%s443 + $0x928] sm:$0xff]
        %v2857 = vld [vmem:[%s443 + $0x930] sm:$0xff]
        %v2858 = vld [vmem:[%s443 + $0x938] sm:$0xff]
        %v2859 = vld [vmem:[%s443 + $0x940] sm:$0xff]
        %v2860 = vld [vmem:[%s443 + $0x948] sm:$0xff]
        %v2861 = vld [vmem:[%s443 + $0x950] sm:$0xff]
        %v2862 = vld [vmem:[%s443 + $0x958] sm:$0xff]
        %v2863 = vld [vmem:[%s443 + $0x960] sm:$0xff]
        %v2864 = vld [vmem:[%s443 + $0x968] sm:$0xff]
        %v2865 = vld [vmem:[%s443 + $0x970] sm:$0xff]
        %v2866 = vld [vmem:[%s443 + $0x978] sm:$0xff]
        %v2867 = vld [vmem:[%s443 + $0x980] sm:$0xff]
        %v2868 = vld [vmem:[%s443 + $0x988] sm:$0xff]
        %v2869 = vld [vmem:[%s443 + $0x990] sm:$0xff]
        %v2870 = vld [vmem:[%s443 + $0x998] sm:$0xff]
        %v2871 = vld [vmem:[%s443 + $0x9a0] sm:$0xff]
        %v2872 = vld [vmem:[%s443 + $0x9a8] sm:$0xff]
        %v2873 = vld [vmem:[%s443 + $0x9b0] sm:$0xff]
        %v2874 = vld [vmem:[%s443 + $0x9b8] sm:$0xff]
        %v2875 = vld [vmem:[%s443 + $0x9c0] sm:$0xff]
        %v2876 = vld [vmem:[%s443 + $0x9c8] sm:$0xff]
        %v2877 = vld [vmem:[%s443 + $0x9d0] sm:$0xff]
        %v2878 = vld [vmem:[%s443 + $0x9d8] sm:$0xff]
        %v2879 = vld [vmem:[%s443 + $0x9e0] sm:$0xff]
        %v2880 = vld [vmem:[%s443 + $0x9e8] sm:$0xff]
        %v2881 = vld [vmem:[%s443 + $0x9f0] sm:$0xff]
        %v2882 = vld [vmem:[%s443 + $0x9f8] sm:$0xff]
        %v2883 = vld [vmem:[%s443 + $0xa00] sm:$0xff]
        %v2884 = vld [vmem:[%s443 + $0xa08] sm:$0xff]
        %v2885 = vld [vmem:[%s443 + $0xa10] sm:$0xff]
        %v2886 = vld [vmem:[%s443 + $0xa18] sm:$0xff]
        %v2887 = vld [vmem:[%s443 + $0xa20] sm:$0xff]
        %v2888 = vld [vmem:[%s443 + $0xa28] sm:$0xff]
        %v2889 = vld [vmem:[%s443 + $0xa30] sm:$0xff]
        %v2890 = vld [vmem:[%s443 + $0xa38] sm:$0xff]
        %v2891 = vld [vmem:[%s443 + $0xa40] sm:$0xff]
        %v2892 = vld [vmem:[%s443 + $0xa48] sm:$0xff]
        %v2893 = vld [vmem:[%s443 + $0xa50] sm:$0xff]
        %v2894 = vld [vmem:[%s443 + $0xa58] sm:$0xff]
        %v2895 = vld [vmem:[%s443 + $0xa60] sm:$0xff]
        %v2896 = vld [vmem:[%s443 + $0xa68] sm:$0xff]
        %v2897 = vld [vmem:[%s443 + $0xa70] sm:$0xff]
        %v2898 = vld [vmem:[%s443 + $0xa78] sm:$0xff]
        %v2899 = vld [vmem:[%s443 + $0xa80] sm:$0xff]
        %v2900 = vld [vmem:[%s443 + $0xa88] sm:$0xff]
        %v2901 = vld [vmem:[%s443 + $0xa90] sm:$0xff]
        %v2902 = vld [vmem:[%s443 + $0xa98] sm:$0xff]
        %v2903 = vld [vmem:[%s443 + $0xaa0] sm:$0xff]
        %v2904 = vld [vmem:[%s443 + $0xaa8] sm:$0xff]
        %v2905 = vld [vmem:[%s443 + $0xab0] sm:$0xff]
        %v2906 = vld [vmem:[%s443 + $0xab8] sm:$0xff]
        %v2907 = vld [vmem:[%s443 + $0xac0] sm:$0xff]
        %v2908 = vld [vmem:[%s443 + $0xac8] sm:$0xff]
        %v2909 = vld [vmem:[%s443 + $0xad0] sm:$0xff]
        %v2910 = vld [vmem:[%s443 + $0xad8] sm:$0xff]
        %v2911 = vld [vmem:[%s443 + $0xae0] sm:$0xff]
        %v2912 = vld [vmem:[%s443 + $0xae8] sm:$0xff]
        %v2913 = vld [vmem:[%s443 + $0xaf0] sm:$0xff]
        %v2914 = vld [vmem:[%s443 + $0xaf8] sm:$0xff]
        %v2915 = vld [vmem:[%s443 + $0xb00] sm:$0xff]
        %v2916 = vld [vmem:[%s443 + $0xb08] sm:$0xff]
        %v2917 = vld [vmem:[%s443 + $0xb10] sm:$0xff]
        %v2918 = vld [vmem:[%s443 + $0xb18] sm:$0xff]
        %v2919 = vld [vmem:[%s443 + $0xb20] sm:$0xff]
        %v2920 = vld [vmem:[%s443 + $0xb28] sm:$0xff]
        %v2921 = vld [vmem:[%s443 + $0xb30] sm:$0xff]
        %v2922 = vld [vmem:[%s443 + $0xb38] sm:$0xff]
        %v2923 = vld [vmem:[%s443 + $0xb40] sm:$0xff]
        %v2924 = vld [vmem:[%s443 + $0xb48] sm:$0xff]
        %v2925 = vld [vmem:[%s443 + $0xb50] sm:$0xff]
        %v2926 = vld [vmem:[%s443 + $0xb58] sm:$0xff]
        %v2927 = vld [vmem:[%s443 + $0xb60] sm:$0xff]
        %v2928 = vld [vmem:[%s443 + $0xb68] sm:$0xff]
        %v2929 = vld [vmem:[%s443 + $0xb70] sm:$0xff]
        %v2930 = vld [vmem:[%s443 + $0xb78] sm:$0xff]
        %v2931 = vld [vmem:[%s443 + $0xb80] sm:$0xff]
        %v2932 = vld [vmem:[%s443 + $0xb88] sm:$0xff]
        %v2933 = vld [vmem:[%s443 + $0xb90] sm:$0xff]
        %v2934 = vld [vmem:[%s443 + $0xb98] sm:$0xff]
        %v2935 = vld [vmem:[%s443 + $0xba0] sm:$0xff]
        %v2936 = vld [vmem:[%s443 + $0xba8] sm:$0xff]
        %v2937 = vld [vmem:[%s443 + $0xbb0] sm:$0xff]
        %v2938 = vld [vmem:[%s443 + $0xbb8] sm:$0xff]
        %v2939 = vld [vmem:[%s443 + $0xbc0] sm:$0xff]
        %v2940 = vld [vmem:[%s443 + $0xbc8] sm:$0xff]
        %v2941 = vld [vmem:[%s443 + $0xbd0] sm:$0xff]
        %v2942 = vld [vmem:[%s443 + $0xbd8] sm:$0xff]
        %v2943 = vld [vmem:[%s443 + $0xbe0] sm:$0xff]
        %v2944 = vld [vmem:[%s443 + $0xbe8] sm:$0xff]
        %v2945 = vld [vmem:[%s443 + $0xbf0] sm:$0xff]
        %v2946 = vld [vmem:[%s443 + $0xbf8] sm:$0xff]
        %v2947 = vld [vmem:[%s443 + $0xc00] sm:$0xff]
        %v2948 = vld [vmem:[%s443 + $0xc08] sm:$0xff]
        %v2949 = vld [vmem:[%s443 + $0xc10] sm:$0xff]
        %v2950 = vld [vmem:[%s443 + $0xc18] sm:$0xff]
        %v2951 = vld [vmem:[%s443 + $0xc20] sm:$0xff]
        %v2952 = vld [vmem:[%s443 + $0xc28] sm:$0xff]
        %v2953 = vld [vmem:[%s443 + $0xc30] sm:$0xff]
        %v2954 = vld [vmem:[%s443 + $0xc38] sm:$0xff]
        %v2955 = vld [vmem:[%s443 + $0xc40] sm:$0xff]
        %v2956 = vld [vmem:[%s443 + $0xc48] sm:$0xff]
        %v2957 = vld [vmem:[%s443 + $0xc50] sm:$0xff]
        %v2958 = vld [vmem:[%s443 + $0xc58] sm:$0xff]
        %v2959 = vld [vmem:[%s443 + $0xc60] sm:$0xff]
        %v2960 = vld [vmem:[%s443 + $0xc68] sm:$0xff]
        %v2961 = vld [vmem:[%s443 + $0xc70] sm:$0xff]
        %v2962 = vld [vmem:[%s443 + $0xc78] sm:$0xff]
        %v2963 = vld [vmem:[%s443 + $0xc80] sm:$0xff]
        %v2964 = vld [vmem:[%s443 + $0xc88] sm:$0xff]
        %v2965 = vld [vmem:[%s443 + $0xc90] sm:$0xff]
        %v2966 = vld [vmem:[%s443 + $0xc98] sm:$0xff]
        %v2967 = vld [vmem:[%s443 + $0xca0] sm:$0xff]
        %v2968 = vld [vmem:[%s443 + $0xca8] sm:$0xff]
        %v2969 = vld [vmem:[%s443 + $0xcb0] sm:$0xff]
        %v2970 = vld [vmem:[%s443 + $0xcb8] sm:$0xff]
        %v2971 = vld [vmem:[%s443 + $0xcc0] sm:$0xff]
        %v2972 = vld [vmem:[%s443 + $0xcc8] sm:$0xff]
        %v2973 = vld [vmem:[%s443 + $0xcd0] sm:$0xff]
        %v2974 = vld [vmem:[%s443 + $0xcd8] sm:$0xff]
        %v2975 = vld [vmem:[%s443 + $0xce0] sm:$0xff]
        %v2976 = vld [vmem:[%s443 + $0xce8] sm:$0xff]
        %v2977 = vld [vmem:[%s443 + $0xcf0] sm:$0xff]
        %v2978 = vld [vmem:[%s443 + $0xcf8] sm:$0xff]
        %v2979 = vld [vmem:[%s443 + $0xd00] sm:$0xff]
        %v2980 = vld [vmem:[%s443 + $0xd08] sm:$0xff]
        %v2981 = vld [vmem:[%s443 + $0xd10] sm:$0xff]
        %v2982 = vld [vmem:[%s443 + $0xd18] sm:$0xff]
        %v2983 = vld [vmem:[%s443 + $0xd20] sm:$0xff]
        %v2984 = vld [vmem:[%s443 + $0xd28] sm:$0xff]
        %v2985 = vld [vmem:[%s443 + $0xd30] sm:$0xff]
        %v2986 = vld [vmem:[%s443 + $0xd38] sm:$0xff]
        %v2987 = vld [vmem:[%s443 + $0xd40] sm:$0xff]
        %v2988 = vld [vmem:[%s443 + $0xd48] sm:$0xff]
        %v2989 = vld [vmem:[%s443 + $0xd50] sm:$0xff]
        %v2990 = vld [vmem:[%s443 + $0xd58] sm:$0xff]
        %v2991 = vld [vmem:[%s443 + $0xd60] sm:$0xff]
        %v2992 = vld [vmem:[%s443 + $0xd68] sm:$0xff]
        %v2993 = vld [vmem:[%s443 + $0xd70] sm:$0xff]
        %v2994 = vld [vmem:[%s443 + $0xd78] sm:$0xff]
        %v2995 = vld [vmem:[%s443 + $0xd80] sm:$0xff]
        %v2996 = vld [vmem:[%s443 + $0xd88] sm:$0xff]
        %v2997 = vld [vmem:[%s443 + $0xd90] sm:$0xff]
        %v2998 = vld [vmem:[%s443 + $0xd98] sm:$0xff]
        %v2999 = vld [vmem:[%s443 + $0xda0] sm:$0xff]
        %v3000 = vld [vmem:[%s443 + $0xda8] sm:$0xff]
        %v3001 = vld [vmem:[%s443 + $0xdb0] sm:$0xff]
        %v3002 = vld [vmem:[%s443 + $0xdb8] sm:$0xff]
        %v3003 = vld [vmem:[%s443 + $0xdc0] sm:$0xff]
        %v3004 = vld [vmem:[%s443 + $0xdc8] sm:$0xff]
        %v3005 = vld [vmem:[%s443 + $0xdd0] sm:$0xff]
        %v3006 = vld [vmem:[%s443 + $0xdd8] sm:$0xff]
        %v3007 = vld [vmem:[%s443 + $0xde0] sm:$0xff]
        %v3008 = vld [vmem:[%s443 + $0xde8] sm:$0xff]
        %v3009 = vld [vmem:[%s443 + $0xdf0] sm:$0xff]
        %v3010 = vld [vmem:[%s443 + $0xdf8] sm:$0xff]
        %v3011 = vld [vmem:[%s443 + $0xe00] sm:$0xff]
        %v3012 = vld [vmem:[%s443 + $0xe08] sm:$0xff]
        %v3013 = vld [vmem:[%s443 + $0xe10] sm:$0xff]
        %v3014 = vld [vmem:[%s443 + $0xe18] sm:$0xff]
        %v3015 = vld [vmem:[%s443 + $0xe20] sm:$0xff]
        %v3016 = vld [vmem:[%s443 + $0xe28] sm:$0xff]
        %v3017 = vld [vmem:[%s443 + $0xe30] sm:$0xff]
        %v3018 = vld [vmem:[%s443 + $0xe38] sm:$0xff]
        %v3019 = vld [vmem:[%s443 + $0xe40] sm:$0xff]
        %v3020 = vld [vmem:[%s443 + $0xe48] sm:$0xff]
        %v3021 = vld [vmem:[%s443 + $0xe50] sm:$0xff]
        %v3022 = vld [vmem:[%s443 + $0xe58] sm:$0xff]
        %v3023 = vld [vmem:[%s443 + $0xe60] sm:$0xff]
        %v3024 = vld [vmem:[%s443 + $0xe68] sm:$0xff]
        %v3025 = vld [vmem:[%s443 + $0xe70] sm:$0xff]
        %v3026 = vld [vmem:[%s443 + $0xe78] sm:$0xff]
        %v3027 = vld [vmem:[%s443 + $0xe80] sm:$0xff]
        %v3028 = vld [vmem:[%s443 + $0xe88] sm:$0xff]
        %v3029 = vld [vmem:[%s443 + $0xe90] sm:$0xff]
        %v3030 = vld [vmem:[%s443 + $0xe98] sm:$0xff]
        %v3031 = vld [vmem:[%s443 + $0xea0] sm:$0xff]
        %v3032 = vld [vmem:[%s443 + $0xea8] sm:$0xff]
        %v3033 = vld [vmem:[%s443 + $0xeb0] sm:$0xff]
        %v3034 = vld [vmem:[%s443 + $0xeb8] sm:$0xff]
        %v3035 = vld [vmem:[%s443 + $0xec0] sm:$0xff]
        %v3036 = vld [vmem:[%s443 + $0xec8] sm:$0xff]
        %v3037 = vld [vmem:[%s443 + $0xed0] sm:$0xff]
        %v3038 = vld [vmem:[%s443 + $0xed8] sm:$0xff]
        %v3039 = vld [vmem:[%s443 + $0xee0] sm:$0xff]
        %v3040 = vld [vmem:[%s443 + $0xee8] sm:$0xff]
        %v3041 = vld [vmem:[%s443 + $0xef0] sm:$0xff]
        %v3042 = vld [vmem:[%s443 + $0xef8] sm:$0xff]
        %v3043 = vld [vmem:[%s443 + $0xf00] sm:$0xff]
        %v3044 = vld [vmem:[%s443 + $0xf08] sm:$0xff]
        %v3045 = vld [vmem:[%s443 + $0xf10] sm:$0xff]
        %v3046 = vld [vmem:[%s443 + $0xf18] sm:$0xff]
        %v3047 = vld [vmem:[%s443 + $0xf20] sm:$0xff]
        %v3048 = vld [vmem:[%s443 + $0xf28] sm:$0xff]
        %v3049 = vld [vmem:[%s443 + $0xf30] sm:$0xff]
        %v3050 = vld [vmem:[%s443 + $0xf38] sm:$0xff]
        %v3051 = vld [vmem:[%s443 + $0xf40] sm:$0xff]
        %v3052 = vld [vmem:[%s443 + $0xf48] sm:$0xff]
        %v3053 = vld [vmem:[%s443 + $0xf50] sm:$0xff]
        %v3054 = vld [vmem:[%s443 + $0xf58] sm:$0xff]
        %v3055 = vld [vmem:[%s443 + $0xf60] sm:$0xff]
        %v3056 = vld [vmem:[%s443 + $0xf68] sm:$0xff]
        %v3057 = vld [vmem:[%s443 + $0xf70] sm:$0xff]
        %v3058 = vld [vmem:[%s443 + $0xf78] sm:$0xff]
        %v3059 = vld [vmem:[%s443 + $0xf80] sm:$0xff]
        %v3060 = vld [vmem:[%s443 + $0xf88] sm:$0xff]
        %v3061 = vld [vmem:[%s443 + $0xf90] sm:$0xff]
        %v3062 = vld [vmem:[%s443 + $0xf98] sm:$0xff]
        %v3063 = vld [vmem:[%s443 + $0xfa0] sm:$0xff]
        %v3064 = vld [vmem:[%s443 + $0xfa8] sm:$0xff]
        %v3065 = vld [vmem:[%s443 + $0xfb0] sm:$0xff]
        %v3066 = vld [vmem:[%s443 + $0xfb8] sm:$0xff]
        %v3067 = vld [vmem:[%s443 + $0xfc0] sm:$0xff]
        %v3068 = vld [vmem:[%s443 + $0xfc8] sm:$0xff]
        %v3069 = vld [vmem:[%s443 + $0xfd0] sm:$0xff]
        %v3070 = vld [vmem:[%s443 + $0xfd8] sm:$0xff]
        %v3071 = vld [vmem:[%s443 + $0xfe0] sm:$0xff]
        %v3072 = vld [vmem:[%s443 + $0xfe8] sm:$0xff]
        %v3073 = vld [vmem:[%s443 + $0xff0] sm:$0xff]
        %v3074 = vld [vmem:[%s443 + $0xff8] sm:$0xff]
        %v3075 = vmul.f32 %v2051, %v2563
        %v3076 = vmul.f32 %v2052, %v2564
        %v3077 = vmul.f32 %v2053, %v2565
        %v3078 = vmul.f32 %v2054, %v2566
        %v3079 = vmul.f32 %v2055, %v2567
        %v3080 = vmul.f32 %v2056, %v2568
        %v3081 = vmul.f32 %v2057, %v2569
        %v3082 = vmul.f32 %v2058, %v2570
        %v3083 = vmul.f32 %v2059, %v2571
        %v3084 = vmul.f32 %v2060, %v2572
        %v3085 = vmul.f32 %v2061, %v2573
        %v3086 = vmul.f32 %v2062, %v2574
        %v3087 = vmul.f32 %v2063, %v2575
        %v3088 = vmul.f32 %v2064, %v2576
        %v3089 = vmul.f32 %v2065, %v2577
        %v3090 = vmul.f32 %v2066, %v2578
        %v3091 = vmul.f32 %v2067, %v2579
        %v3092 = vmul.f32 %v2068, %v2580
        %v3093 = vmul.f32 %v2069, %v2581
        %v3094 = vmul.f32 %v2070, %v2582
        %v3095 = vmul.f32 %v2071, %v2583
        %v3096 = vmul.f32 %v2072, %v2584
        %v3097 = vmul.f32 %v2073, %v2585
        %v3098 = vmul.f32 %v2074, %v2586
        %v3099 = vmul.f32 %v2075, %v2587
        %v3100 = vmul.f32 %v2076, %v2588
        %v3101 = vmul.f32 %v2077, %v2589
        %v3102 = vmul.f32 %v2078, %v2590
        %v3103 = vmul.f32 %v2079, %v2591
        %v3104 = vmul.f32 %v2080, %v2592
        %v3105 = vmul.f32 %v2081, %v2593
        %v3106 = vmul.f32 %v2082, %v2594
        %v3107 = vmul.f32 %v2083, %v2595
        %v3108 = vmul.f32 %v2084, %v2596
        %v3109 = vmul.f32 %v2085, %v2597
        %v3110 = vmul.f32 %v2086, %v2598
        %v3111 = vmul.f32 %v2087, %v2599
        %v3112 = vmul.f32 %v2088, %v2600
        %v3113 = vmul.f32 %v2089, %v2601
        %v3114 = vmul.f32 %v2090, %v2602
        %v3115 = vmul.f32 %v2091, %v2603
        %v3116 = vmul.f32 %v2092, %v2604
        %v3117 = vmul.f32 %v2093, %v2605
        %v3118 = vmul.f32 %v2094, %v2606
        %v3119 = vmul.f32 %v2095, %v2607
        %v3120 = vmul.f32 %v2096, %v2608
        %v3121 = vmul.f32 %v2097, %v2609
        %v3122 = vmul.f32 %v2098, %v2610
        %v3123 = vmul.f32 %v2099, %v2611
        %v3124 = vmul.f32 %v2100, %v2612
        %v3125 = vmul.f32 %v2101, %v2613
        %v3126 = vmul.f32 %v2102, %v2614
        %v3127 = vmul.f32 %v2103, %v2615
        %v3128 = vmul.f32 %v2104, %v2616
        %v3129 = vmul.f32 %v2105, %v2617
        %v3130 = vmul.f32 %v2106, %v2618
        %v3131 = vmul.f32 %v2107, %v2619
        %v3132 = vmul.f32 %v2108, %v2620
        %v3133 = vmul.f32 %v2109, %v2621
        %v3134 = vmul.f32 %v2110, %v2622
        %v3135 = vmul.f32 %v2111, %v2623
        %v3136 = vmul.f32 %v2112, %v2624
        %v3137 = vmul.f32 %v2113, %v2625
        %v3138 = vmul.f32 %v2114, %v2626
        %v3139 = vmul.f32 %v2115, %v2627
        %v3140 = vmul.f32 %v2116, %v2628
        %v3141 = vmul.f32 %v2117, %v2629
        %v3142 = vmul.f32 %v2118, %v2630
        %v3143 = vmul.f32 %v2119, %v2631
        %v3144 = vmul.f32 %v2120, %v2632
        %v3145 = vmul.f32 %v2121, %v2633
        %v3146 = vmul.f32 %v2122, %v2634
        %v3147 = vmul.f32 %v2123, %v2635
        %v3148 = vmul.f32 %v2124, %v2636
        %v3149 = vmul.f32 %v2125, %v2637
        %v3150 = vmul.f32 %v2126, %v2638
        %v3151 = vmul.f32 %v2127, %v2639
        %v3152 = vmul.f32 %v2128, %v2640
        %v3153 = vmul.f32 %v2129, %v2641
        %v3154 = vmul.f32 %v2130, %v2642
        %v3155 = vmul.f32 %v2131, %v2643
        %v3156 = vmul.f32 %v2132, %v2644
        %v3157 = vmul.f32 %v2133, %v2645
        %v3158 = vmul.f32 %v2134, %v2646
        %v3159 = vmul.f32 %v2135, %v2647
        %v3160 = vmul.f32 %v2136, %v2648
        %v3161 = vmul.f32 %v2137, %v2649
        %v3162 = vmul.f32 %v2138, %v2650
        %v3163 = vmul.f32 %v2139, %v2651
        %v3164 = vmul.f32 %v2140, %v2652
        %v3165 = vmul.f32 %v2141, %v2653
        %v3166 = vmul.f32 %v2142, %v2654
        %v3167 = vmul.f32 %v2143, %v2655
        %v3168 = vmul.f32 %v2144, %v2656
        %v3169 = vmul.f32 %v2145, %v2657
        %v3170 = vmul.f32 %v2146, %v2658
        %v3171 = vmul.f32 %v2147, %v2659
        %v3172 = vmul.f32 %v2148, %v2660
        %v3173 = vmul.f32 %v2149, %v2661
        %v3174 = vmul.f32 %v2150, %v2662
        %v3175 = vmul.f32 %v2151, %v2663
        %v3176 = vmul.f32 %v2152, %v2664
        %v3177 = vmul.f32 %v2153, %v2665
        %v3178 = vmul.f32 %v2154, %v2666
        %v3179 = vmul.f32 %v2155, %v2667
        %v3180 = vmul.f32 %v2156, %v2668
        %v3181 = vmul.f32 %v2157, %v2669
        %v3182 = vmul.f32 %v2158, %v2670
        %v3183 = vmul.f32 %v2159, %v2671
        %v3184 = vmul.f32 %v2160, %v2672
        %v3185 = vmul.f32 %v2161, %v2673
        %v3186 = vmul.f32 %v2162, %v2674
        %v3187 = vmul.f32 %v2163, %v2675
        %v3188 = vmul.f32 %v2164, %v2676
        %v3189 = vmul.f32 %v2165, %v2677
        %v3190 = vmul.f32 %v2166, %v2678
        %v3191 = vmul.f32 %v2167, %v2679
        %v3192 = vmul.f32 %v2168, %v2680
        %v3193 = vmul.f32 %v2169, %v2681
        %v3194 = vmul.f32 %v2170, %v2682
        %v3195 = vmul.f32 %v2171, %v2683
        %v3196 = vmul.f32 %v2172, %v2684
        %v3197 = vmul.f32 %v2173, %v2685
        %v3198 = vmul.f32 %v2174, %v2686
        %v3199 = vmul.f32 %v2175, %v2687
        %v3200 = vmul.f32 %v2176, %v2688
        %v3201 = vmul.f32 %v2177, %v2689
        %v3202 = vmul.f32 %v2178, %v2690
        %v3203 = vmul.f32 %v2179, %v2691
        %v3204 = vmul.f32 %v2180, %v2692
        %v3205 = vmul.f32 %v2181, %v2693
        %v3206 = vmul.f32 %v2182, %v2694
        %v3207 = vmul.f32 %v2183, %v2695
        %v3208 = vmul.f32 %v2184, %v2696
        %v3209 = vmul.f32 %v2185, %v2697
        %v3210 = vmul.f32 %v2186, %v2698
        %v3211 = vmul.f32 %v2187, %v2699
        %v3212 = vmul.f32 %v2188, %v2700
        %v3213 = vmul.f32 %v2189, %v2701
        %v3214 = vmul.f32 %v2190, %v2702
        %v3215 = vmul.f32 %v2191, %v2703
        %v3216 = vmul.f32 %v2192, %v2704
        %v3217 = vmul.f32 %v2193, %v2705
        %v3218 = vmul.f32 %v2194, %v2706
        %v3219 = vmul.f32 %v2195, %v2707
        %v3220 = vmul.f32 %v2196, %v2708
        %v3221 = vmul.f32 %v2197, %v2709
        %v3222 = vmul.f32 %v2198, %v2710
        %v3223 = vmul.f32 %v2199, %v2711
        %v3224 = vmul.f32 %v2200, %v2712
        %v3225 = vmul.f32 %v2201, %v2713
        %v3226 = vmul.f32 %v2202, %v2714
        %v3227 = vmul.f32 %v2203, %v2715
        %v3228 = vmul.f32 %v2204, %v2716
        %v3229 = vmul.f32 %v2205, %v2717
        %v3230 = vmul.f32 %v2206, %v2718
        %v3231 = vmul.f32 %v2207, %v2719
        %v3232 = vmul.f32 %v2208, %v2720
        %v3233 = vmul.f32 %v2209, %v2721
        %v3234 = vmul.f32 %v2210, %v2722
        %v3235 = vmul.f32 %v2211, %v2723
        %v3236 = vmul.f32 %v2212, %v2724
        %v3237 = vmul.f32 %v2213, %v2725
        %v3238 = vmul.f32 %v2214, %v2726
        %v3239 = vmul.f32 %v2215, %v2727
        %v3240 = vmul.f32 %v2216, %v2728
        %v3241 = vmul.f32 %v2217, %v2729
        %v3242 = vmul.f32 %v2218, %v2730
        %v3243 = vmul.f32 %v2219, %v2731
        %v3244 = vmul.f32 %v2220, %v2732
        %v3245 = vmul.f32 %v2221, %v2733
        %v3246 = vmul.f32 %v2222, %v2734
        %v3247 = vmul.f32 %v2223, %v2735
        %v3248 = vmul.f32 %v2224, %v2736
        %v3249 = vmul.f32 %v2225, %v2737
        %v3250 = vmul.f32 %v2226, %v2738
        %v3251 = vmul.f32 %v2227, %v2739
        %v3252 = vmul.f32 %v2228, %v2740
        %v3253 = vmul.f32 %v2229, %v2741
        %v3254 = vmul.f32 %v2230, %v2742
        %v3255 = vmul.f32 %v2231, %v2743
        %v3256 = vmul.f32 %v2232, %v2744
        %v3257 = vmul.f32 %v2233, %v2745
        %v3258 = vmul.f32 %v2234, %v2746
        %v3259 = vmul.f32 %v2235, %v2747
        %v3260 = vmul.f32 %v2236, %v2748
        %v3261 = vmul.f32 %v2237, %v2749
        %v3262 = vmul.f32 %v2238, %v2750
        %v3263 = vmul.f32 %v2239, %v2751
        %v3264 = vmul.f32 %v2240, %v2752
        %v3265 = vmul.f32 %v2241, %v2753
        %v3266 = vmul.f32 %v2242, %v2754
        %v3267 = vmul.f32 %v2243, %v2755
        %v3268 = vmul.f32 %v2244, %v2756
        %v3269 = vmul.f32 %v2245, %v2757
        %v3270 = vmul.f32 %v2246, %v2758
        %v3271 = vmul.f32 %v2247, %v2759
        %v3272 = vmul.f32 %v2248, %v2760
        %v3273 = vmul.f32 %v2249, %v2761
        %v3274 = vmul.f32 %v2250, %v2762
        %v3275 = vmul.f32 %v2251, %v2763
        %v3276 = vmul.f32 %v2252, %v2764
        %v3277 = vmul.f32 %v2253, %v2765
        %v3278 = vmul.f32 %v2254, %v2766
        %v3279 = vmul.f32 %v2255, %v2767
        %v3280 = vmul.f32 %v2256, %v2768
        %v3281 = vmul.f32 %v2257, %v2769
        %v3282 = vmul.f32 %v2258, %v2770
        %v3283 = vmul.f32 %v2259, %v2771
        %v3284 = vmul.f32 %v2260, %v2772
        %v3285 = vmul.f32 %v2261, %v2773
        %v3286 = vmul.f32 %v2262, %v2774
        %v3287 = vmul.f32 %v2263, %v2775
        %v3288 = vmul.f32 %v2264, %v2776
        %v3289 = vmul.f32 %v2265, %v2777
        %v3290 = vmul.f32 %v2266, %v2778
        %v3291 = vmul.f32 %v2267, %v2779
        %v3292 = vmul.f32 %v2268, %v2780
        %v3293 = vmul.f32 %v2269, %v2781
        %v3294 = vmul.f32 %v2270, %v2782
        %v3295 = vmul.f32 %v2271, %v2783
        %v3296 = vmul.f32 %v2272, %v2784
        %v3297 = vmul.f32 %v2273, %v2785
        %v3298 = vmul.f32 %v2274, %v2786
        %v3299 = vmul.f32 %v2275, %v2787
        %v3300 = vmul.f32 %v2276, %v2788
        %v3301 = vmul.f32 %v2277, %v2789
        %v3302 = vmul.f32 %v2278, %v2790
        %v3303 = vmul.f32 %v2279, %v2791
        %v3304 = vmul.f32 %v2280, %v2792
        %v3305 = vmul.f32 %v2281, %v2793
        %v3306 = vmul.f32 %v2282, %v2794
        %v3307 = vmul.f32 %v2283, %v2795
        %v3308 = vmul.f32 %v2284, %v2796
        %v3309 = vmul.f32 %v2285, %v2797
        %v3310 = vmul.f32 %v2286, %v2798
        %v3311 = vmul.f32 %v2287, %v2799
        %v3312 = vmul.f32 %v2288, %v2800
        %v3313 = vmul.f32 %v2289, %v2801
        %v3314 = vmul.f32 %v2290, %v2802
        %v3315 = vmul.f32 %v2291, %v2803
        %v3316 = vmul.f32 %v2292, %v2804
        %v3317 = vmul.f32 %v2293, %v2805
        %v3318 = vmul.f32 %v2294, %v2806
        %v3319 = vmul.f32 %v2295, %v2807
        %v3320 = vmul.f32 %v2296, %v2808
        %v3321 = vmul.f32 %v2297, %v2809
        %v3322 = vmul.f32 %v2298, %v2810
        %v3323 = vmul.f32 %v2299, %v2811
        %v3324 = vmul.f32 %v2300, %v2812
        %v3325 = vmul.f32 %v2301, %v2813
        %v3326 = vmul.f32 %v2302, %v2814
        %v3327 = vmul.f32 %v2303, %v2815
        %v3328 = vmul.f32 %v2304, %v2816
        %v3329 = vmul.f32 %v2305, %v2817
        %v3330 = vmul.f32 %v2306, %v2818
        %v3331 = vmul.f32 %v2307, %v2819
        %v3332 = vmul.f32 %v2308, %v2820
        %v3333 = vmul.f32 %v2309, %v2821
        %v3334 = vmul.f32 %v2310, %v2822
        %v3335 = vmul.f32 %v2311, %v2823
        %v3336 = vmul.f32 %v2312, %v2824
        %v3337 = vmul.f32 %v2313, %v2825
        %v3338 = vmul.f32 %v2314, %v2826
        %v3339 = vmul.f32 %v2315, %v2827
        %v3340 = vmul.f32 %v2316, %v2828
        %v3341 = vmul.f32 %v2317, %v2829
        %v3342 = vmul.f32 %v2318, %v2830
        %v3343 = vmul.f32 %v2319, %v2831
        %v3344 = vmul.f32 %v2320, %v2832
        %v3345 = vmul.f32 %v2321, %v2833
        %v3346 = vmul.f32 %v2322, %v2834
        %v3347 = vmul.f32 %v2323, %v2835
        %v3348 = vmul.f32 %v2324, %v2836
        %v3349 = vmul.f32 %v2325, %v2837
        %v3350 = vmul.f32 %v2326, %v2838
        %v3351 = vmul.f32 %v2327, %v2839
        %v3352 = vmul.f32 %v2328, %v2840
        %v3353 = vmul.f32 %v2329, %v2841
        %v3354 = vmul.f32 %v2330, %v2842
        %v3355 = vmul.f32 %v2331, %v2843
        %v3356 = vmul.f32 %v2332, %v2844
        %v3357 = vmul.f32 %v2333, %v2845
        %v3358 = vmul.f32 %v2334, %v2846
        %v3359 = vmul.f32 %v2335, %v2847
        %v3360 = vmul.f32 %v2336, %v2848
        %v3361 = vmul.f32 %v2337, %v2849
        %v3362 = vmul.f32 %v2338, %v2850
        %v3363 = vmul.f32 %v2339, %v2851
        %v3364 = vmul.f32 %v2340, %v2852
        %v3365 = vmul.f32 %v2341, %v2853
        %v3366 = vmul.f32 %v2342, %v2854
        %v3367 = vmul.f32 %v2343, %v2855
        %v3368 = vmul.f32 %v2344, %v2856
        %v3369 = vmul.f32 %v2345, %v2857
        %v3370 = vmul.f32 %v2346, %v2858
        %v3371 = vmul.f32 %v2347, %v2859
        %v3372 = vmul.f32 %v2348, %v2860
        %v3373 = vmul.f32 %v2349, %v2861
        %v3374 = vmul.f32 %v2350, %v2862
        %v3375 = vmul.f32 %v2351, %v2863
        %v3376 = vmul.f32 %v2352, %v2864
        %v3377 = vmul.f32 %v2353, %v2865
        %v3378 = vmul.f32 %v2354, %v2866
        %v3379 = vmul.f32 %v2355, %v2867
        %v3380 = vmul.f32 %v2356, %v2868
        %v3381 = vmul.f32 %v2357, %v2869
        %v3382 = vmul.f32 %v2358, %v2870
        %v3383 = vmul.f32 %v2359, %v2871
        %v3384 = vmul.f32 %v2360, %v2872
        %v3385 = vmul.f32 %v2361, %v2873
        %v3386 = vmul.f32 %v2362, %v2874
        %v3387 = vmul.f32 %v2363, %v2875
        %v3388 = vmul.f32 %v2364, %v2876
        %v3389 = vmul.f32 %v2365, %v2877
        %v3390 = vmul.f32 %v2366, %v2878
        %v3391 = vmul.f32 %v2367, %v2879
        %v3392 = vmul.f32 %v2368, %v2880
        %v3393 = vmul.f32 %v2369, %v2881
        %v3394 = vmul.f32 %v2370, %v2882
        %v3395 = vmul.f32 %v2371, %v2883
        %v3396 = vmul.f32 %v2372, %v2884
        %v3397 = vmul.f32 %v2373, %v2885
        %v3398 = vmul.f32 %v2374, %v2886
        %v3399 = vmul.f32 %v2375, %v2887
        %v3400 = vmul.f32 %v2376, %v2888
        %v3401 = vmul.f32 %v2377, %v2889
        %v3402 = vmul.f32 %v2378, %v2890
        %v3403 = vmul.f32 %v2379, %v2891
        %v3404 = vmul.f32 %v2380, %v2892
        %v3405 = vmul.f32 %v2381, %v2893
        %v3406 = vmul.f32 %v2382, %v2894
        %v3407 = vmul.f32 %v2383, %v2895
        %v3408 = vmul.f32 %v2384, %v2896
        %v3409 = vmul.f32 %v2385, %v2897
        %v3410 = vmul.f32 %v2386, %v2898
        %v3411 = vmul.f32 %v2387, %v2899
        %v3412 = vmul.f32 %v2388, %v2900
        %v3413 = vmul.f32 %v2389, %v2901
        %v3414 = vmul.f32 %v2390, %v2902
        %v3415 = vmul.f32 %v2391, %v2903
        %v3416 = vmul.f32 %v2392, %v2904
        %v3417 = vmul.f32 %v2393, %v2905
        %v3418 = vmul.f32 %v2394, %v2906
        %v3419 = vmul.f32 %v2395, %v2907
        %v3420 = vmul.f32 %v2396, %v2908
        %v3421 = vmul.f32 %v2397, %v2909
        %v3422 = vmul.f32 %v2398, %v2910
        %v3423 = vmul.f32 %v2399, %v2911
        %v3424 = vmul.f32 %v2400, %v2912
        %v3425 = vmul.f32 %v2401, %v2913
        %v3426 = vmul.f32 %v2402, %v2914
        %v3427 = vmul.f32 %v2403, %v2915
        %v3428 = vmul.f32 %v2404, %v2916
        %v3429 = vmul.f32 %v2405, %v2917
        %v3430 = vmul.f32 %v2406, %v2918
        %v3431 = vmul.f32 %v2407, %v2919
        %v3432 = vmul.f32 %v2408, %v2920
        %v3433 = vmul.f32 %v2409, %v2921
        %v3434 = vmul.f32 %v2410, %v2922
        %v3435 = vmul.f32 %v2411, %v2923
        %v3436 = vmul.f32 %v2412, %v2924
        %v3437 = vmul.f32 %v2413, %v2925
        %v3438 = vmul.f32 %v2414, %v2926
        %v3439 = vmul.f32 %v2415, %v2927
        %v3440 = vmul.f32 %v2416, %v2928
        %v3441 = vmul.f32 %v2417, %v2929
        %v3442 = vmul.f32 %v2418, %v2930
        %v3443 = vmul.f32 %v2419, %v2931
        %v3444 = vmul.f32 %v2420, %v2932
        %v3445 = vmul.f32 %v2421, %v2933
        %v3446 = vmul.f32 %v2422, %v2934
        %v3447 = vmul.f32 %v2423, %v2935
        %v3448 = vmul.f32 %v2424, %v2936
        %v3449 = vmul.f32 %v2425, %v2937
        %v3450 = vmul.f32 %v2426, %v2938
        %v3451 = vmul.f32 %v2427, %v2939
        %v3452 = vmul.f32 %v2428, %v2940
        %v3453 = vmul.f32 %v2429, %v2941
        %v3454 = vmul.f32 %v2430, %v2942
        %v3455 = vmul.f32 %v2431, %v2943
        %v3456 = vmul.f32 %v2432, %v2944
        %v3457 = vmul.f32 %v2433, %v2945
        %v3458 = vmul.f32 %v2434, %v2946
        %v3459 = vmul.f32 %v2435, %v2947
        %v3460 = vmul.f32 %v2436, %v2948
        %v3461 = vmul.f32 %v2437, %v2949
        %v3462 = vmul.f32 %v2438, %v2950
        %v3463 = vmul.f32 %v2439, %v2951
        %v3464 = vmul.f32 %v2440, %v2952
        %v3465 = vmul.f32 %v2441, %v2953
        %v3466 = vmul.f32 %v2442, %v2954
        %v3467 = vmul.f32 %v2443, %v2955
        %v3468 = vmul.f32 %v2444, %v2956
        %v3469 = vmul.f32 %v2445, %v2957
        %v3470 = vmul.f32 %v2446, %v2958
        %v3471 = vmul.f32 %v2447, %v2959
        %v3472 = vmul.f32 %v2448, %v2960
        %v3473 = vmul.f32 %v2449, %v2961
        %v3474 = vmul.f32 %v2450, %v2962
        %v3475 = vmul.f32 %v2451, %v2963
        %v3476 = vmul.f32 %v2452, %v2964
        %v3477 = vmul.f32 %v2453, %v2965
        %v3478 = vmul.f32 %v2454, %v2966
        %v3479 = vmul.f32 %v2455, %v2967
        %v3480 = vmul.f32 %v2456, %v2968
        %v3481 = vmul.f32 %v2457, %v2969
        %v3482 = vmul.f32 %v2458, %v2970
        %v3483 = vmul.f32 %v2459, %v2971
        %v3484 = vmul.f32 %v2460, %v2972
        %v3485 = vmul.f32 %v2461, %v2973
        %v3486 = vmul.f32 %v2462, %v2974
        %v3487 = vmul.f32 %v2463, %v2975
        %v3488 = vmul.f32 %v2464, %v2976
        %v3489 = vmul.f32 %v2465, %v2977
        %v3490 = vmul.f32 %v2466, %v2978
        %v3491 = vmul.f32 %v2467, %v2979
        %v3492 = vmul.f32 %v2468, %v2980
        %v3493 = vmul.f32 %v2469, %v2981
        %v3494 = vmul.f32 %v2470, %v2982
        %v3495 = vmul.f32 %v2471, %v2983
        %v3496 = vmul.f32 %v2472, %v2984
        %v3497 = vmul.f32 %v2473, %v2985
        %v3498 = vmul.f32 %v2474, %v2986
        %v3499 = vmul.f32 %v2475, %v2987
        %v3500 = vmul.f32 %v2476, %v2988
        %v3501 = vmul.f32 %v2477, %v2989
        %v3502 = vmul.f32 %v2478, %v2990
        %v3503 = vmul.f32 %v2479, %v2991
        %v3504 = vmul.f32 %v2480, %v2992
        %v3505 = vmul.f32 %v2481, %v2993
        %v3506 = vmul.f32 %v2482, %v2994
        %v3507 = vmul.f32 %v2483, %v2995
        %v3508 = vmul.f32 %v2484, %v2996
        %v3509 = vmul.f32 %v2485, %v2997
        %v3510 = vmul.f32 %v2486, %v2998
        %v3511 = vmul.f32 %v2487, %v2999
        %v3512 = vmul.f32 %v2488, %v3000
        %v3513 = vmul.f32 %v2489, %v3001
        %v3514 = vmul.f32 %v2490, %v3002
        %v3515 = vmul.f32 %v2491, %v3003
        %v3516 = vmul.f32 %v2492, %v3004
        %v3517 = vmul.f32 %v2493, %v3005
        %v3518 = vmul.f32 %v2494, %v3006
        %v3519 = vmul.f32 %v2495, %v3007
        %v3520 = vmul.f32 %v2496, %v3008
        %v3521 = vmul.f32 %v2497, %v3009
        %v3522 = vmul.f32 %v2498, %v3010
        %v3523 = vmul.f32 %v2499, %v3011
        %v3524 = vmul.f32 %v2500, %v3012
        %v3525 = vmul.f32 %v2501, %v3013
        %v3526 = vmul.f32 %v2502, %v3014
        %v3527 = vmul.f32 %v2503, %v3015
        %v3528 = vmul.f32 %v2504, %v3016
        %v3529 = vmul.f32 %v2505, %v3017
        %v3530 = vmul.f32 %v2506, %v3018
        %v3531 = vmul.f32 %v2507, %v3019
        %v3532 = vmul.f32 %v2508, %v3020
        %v3533 = vmul.f32 %v2509, %v3021
        %v3534 = vmul.f32 %v2510, %v3022
        %v3535 = vmul.f32 %v2511, %v3023
        %v3536 = vmul.f32 %v2512, %v3024
        %v3537 = vmul.f32 %v2513, %v3025
        %v3538 = vmul.f32 %v2514, %v3026
        %v3539 = vmul.f32 %v2515, %v3027
        %v3540 = vmul.f32 %v2516, %v3028
        %v3541 = vmul.f32 %v2517, %v3029
        %v3542 = vmul.f32 %v2518, %v3030
        %v3543 = vmul.f32 %v2519, %v3031
        %v3544 = vmul.f32 %v2520, %v3032
        %v3545 = vmul.f32 %v2521, %v3033
        %v3546 = vmul.f32 %v2522, %v3034
        %v3547 = vmul.f32 %v2523, %v3035
        %v3548 = vmul.f32 %v2524, %v3036
        %v3549 = vmul.f32 %v2525, %v3037
        %v3550 = vmul.f32 %v2526, %v3038
        %v3551 = vmul.f32 %v2527, %v3039
        %v3552 = vmul.f32 %v2528, %v3040
        %v3553 = vmul.f32 %v2529, %v3041
        %v3554 = vmul.f32 %v2530, %v3042
        %v3555 = vmul.f32 %v2531, %v3043
        %v3556 = vmul.f32 %v2532, %v3044
        %v3557 = vmul.f32 %v2533, %v3045
        %v3558 = vmul.f32 %v2534, %v3046
        %v3559 = vmul.f32 %v2535, %v3047
        %v3560 = vmul.f32 %v2536, %v3048
        %v3561 = vmul.f32 %v2537, %v3049
        %v3562 = vmul.f32 %v2538, %v3050
        %v3563 = vmul.f32 %v2539, %v3051
        %v3564 = vmul.f32 %v2540, %v3052
        %v3565 = vmul.f32 %v2541, %v3053
        %v3566 = vmul.f32 %v2542, %v3054
        %v3567 = vmul.f32 %v2543, %v3055
        %v3568 = vmul.f32 %v2544, %v3056
        %v3569 = vmul.f32 %v2545, %v3057
        %v3570 = vmul.f32 %v2546, %v3058
        %v3571 = vmul.f32 %v2547, %v3059
        %v3572 = vmul.f32 %v2548, %v3060
        %v3573 = vmul.f32 %v2549, %v3061
        %v3574 = vmul.f32 %v2550, %v3062
        %v3575 = vmul.f32 %v2551, %v3063
        %v3576 = vmul.f32 %v2552, %v3064
        %v3577 = vmul.f32 %v2553, %v3065
        %v3578 = vmul.f32 %v2554, %v3066
        %v3579 = vmul.f32 %v2555, %v3067
        %v3580 = vmul.f32 %v2556, %v3068
        %v3581 = vmul.f32 %v2557, %v3069
        %v3582 = vmul.f32 %v2558, %v3070
        %v3583 = vmul.f32 %v2559, %v3071
        %v3584 = vmul.f32 %v2560, %v3072
        %v3585 = vmul.f32 %v2561, %v3073
        %v3586 = vmul.f32 %v2562, %v3074
        %v3587 = vadd.f32 %v1539, %v3075
        %v3588 = vadd.f32 %v1540, %v3076
        %v3589 = vadd.f32 %v1541, %v3077
        %v3590 = vadd.f32 %v1542, %v3078
        %v3591 = vadd.f32 %v1543, %v3079
        %v3592 = vadd.f32 %v1544, %v3080
        %v3593 = vadd.f32 %v1545, %v3081
        %v3594 = vadd.f32 %v1546, %v3082
        %v3595 = vadd.f32 %v1547, %v3083
        %v3596 = vadd.f32 %v1548, %v3084
        %v3597 = vadd.f32 %v1549, %v3085
        %v3598 = vadd.f32 %v1550, %v3086
        %v3599 = vadd.f32 %v1551, %v3087
        %v3600 = vadd.f32 %v1552, %v3088
        %v3601 = vadd.f32 %v1553, %v3089
        %v3602 = vadd.f32 %v1554, %v3090
        %v3603 = vadd.f32 %v1555, %v3091
        %v3604 = vadd.f32 %v1556, %v3092
        %v3605 = vadd.f32 %v1557, %v3093
        %v3606 = vadd.f32 %v1558, %v3094
        %v3607 = vadd.f32 %v1559, %v3095
        %v3608 = vadd.f32 %v1560, %v3096
        %v3609 = vadd.f32 %v1561, %v3097
        %v3610 = vadd.f32 %v1562, %v3098
        %v3611 = vadd.f32 %v1563, %v3099
        %v3612 = vadd.f32 %v1564, %v3100
        %v3613 = vadd.f32 %v1565, %v3101
        %v3614 = vadd.f32 %v1566, %v3102
        %v3615 = vadd.f32 %v1567, %v3103
        %v3616 = vadd.f32 %v1568, %v3104
        %v3617 = vadd.f32 %v1569, %v3105
        %v3618 = vadd.f32 %v1570, %v3106
        %v3619 = vadd.f32 %v1571, %v3107
        %v3620 = vadd.f32 %v1572, %v3108
        %v3621 = vadd.f32 %v1573, %v3109
        %v3622 = vadd.f32 %v1574, %v3110
        %v3623 = vadd.f32 %v1575, %v3111
        %v3624 = vadd.f32 %v1576, %v3112
        %v3625 = vadd.f32 %v1577, %v3113
        %v3626 = vadd.f32 %v1578, %v3114
        %v3627 = vadd.f32 %v1579, %v3115
        %v3628 = vadd.f32 %v1580, %v3116
        %v3629 = vadd.f32 %v1581, %v3117
        %v3630 = vadd.f32 %v1582, %v3118
        %v3631 = vadd.f32 %v1583, %v3119
        %v3632 = vadd.f32 %v1584, %v3120
        %v3633 = vadd.f32 %v1585, %v3121
        %v3634 = vadd.f32 %v1586, %v3122
        %v3635 = vadd.f32 %v1587, %v3123
        %v3636 = vadd.f32 %v1588, %v3124
        %v3637 = vadd.f32 %v1589, %v3125
        %v3638 = vadd.f32 %v1590, %v3126
        %v3639 = vadd.f32 %v1591, %v3127
        %v3640 = vadd.f32 %v1592, %v3128
        %v3641 = vadd.f32 %v1593, %v3129
        %v3642 = vadd.f32 %v1594, %v3130
        %v3643 = vadd.f32 %v1595, %v3131
        %v3644 = vadd.f32 %v1596, %v3132
        %v3645 = vadd.f32 %v1597, %v3133
        %v3646 = vadd.f32 %v1598, %v3134
        %v3647 = vadd.f32 %v1599, %v3135
        %v3648 = vadd.f32 %v1600, %v3136
        %v3649 = vadd.f32 %v1601, %v3137
        %v3650 = vadd.f32 %v1602, %v3138
        %v3651 = vadd.f32 %v1603, %v3139
        %v3652 = vadd.f32 %v1604, %v3140
        %v3653 = vadd.f32 %v1605, %v3141
        %v3654 = vadd.f32 %v1606, %v3142
        %v3655 = vadd.f32 %v1607, %v3143
        %v3656 = vadd.f32 %v1608, %v3144
        %v3657 = vadd.f32 %v1609, %v3145
        %v3658 = vadd.f32 %v1610, %v3146
        %v3659 = vadd.f32 %v1611, %v3147
        %v3660 = vadd.f32 %v1612, %v3148
        %v3661 = vadd.f32 %v1613, %v3149
        %v3662 = vadd.f32 %v1614, %v3150
        %v3663 = vadd.f32 %v1615, %v3151
        %v3664 = vadd.f32 %v1616, %v3152
        %v3665 = vadd.f32 %v1617, %v3153
        %v3666 = vadd.f32 %v1618, %v3154
        %v3667 = vadd.f32 %v1619, %v3155
        %v3668 = vadd.f32 %v1620, %v3156
        %v3669 = vadd.f32 %v1621, %v3157
        %v3670 = vadd.f32 %v1622, %v3158
        %v3671 = vadd.f32 %v1623, %v3159
        %v3672 = vadd.f32 %v1624, %v3160
        %v3673 = vadd.f32 %v1625, %v3161
        %v3674 = vadd.f32 %v1626, %v3162
        %v3675 = vadd.f32 %v1627, %v3163
        %v3676 = vadd.f32 %v1628, %v3164
        %v3677 = vadd.f32 %v1629, %v3165
        %v3678 = vadd.f32 %v1630, %v3166
        %v3679 = vadd.f32 %v1631, %v3167
        %v3680 = vadd.f32 %v1632, %v3168
        %v3681 = vadd.f32 %v1633, %v3169
        %v3682 = vadd.f32 %v1634, %v3170
        %v3683 = vadd.f32 %v1635, %v3171
        %v3684 = vadd.f32 %v1636, %v3172
        %v3685 = vadd.f32 %v1637, %v3173
        %v3686 = vadd.f32 %v1638, %v3174
        %v3687 = vadd.f32 %v1639, %v3175
        %v3688 = vadd.f32 %v1640, %v3176
        %v3689 = vadd.f32 %v1641, %v3177
        %v3690 = vadd.f32 %v1642, %v3178
        %v3691 = vadd.f32 %v1643, %v3179
        %v3692 = vadd.f32 %v1644, %v3180
        %v3693 = vadd.f32 %v1645, %v3181
        %v3694 = vadd.f32 %v1646, %v3182
        %v3695 = vadd.f32 %v1647, %v3183
        %v3696 = vadd.f32 %v1648, %v3184
        %v3697 = vadd.f32 %v1649, %v3185
        %v3698 = vadd.f32 %v1650, %v3186
        %v3699 = vadd.f32 %v1651, %v3187
        %v3700 = vadd.f32 %v1652, %v3188
        %v3701 = vadd.f32 %v1653, %v3189
        %v3702 = vadd.f32 %v1654, %v3190
        %v3703 = vadd.f32 %v1655, %v3191
        %v3704 = vadd.f32 %v1656, %v3192
        %v3705 = vadd.f32 %v1657, %v3193
        %v3706 = vadd.f32 %v1658, %v3194
        %v3707 = vadd.f32 %v1659, %v3195
        %v3708 = vadd.f32 %v1660, %v3196
        %v3709 = vadd.f32 %v1661, %v3197
        %v3710 = vadd.f32 %v1662, %v3198
        %v3711 = vadd.f32 %v1663, %v3199
        %v3712 = vadd.f32 %v1664, %v3200
        %v3713 = vadd.f32 %v1665, %v3201
        %v3714 = vadd.f32 %v1666, %v3202
        %v3715 = vadd.f32 %v1667, %v3203
        %v3716 = vadd.f32 %v1668, %v3204
        %v3717 = vadd.f32 %v1669, %v3205
        %v3718 = vadd.f32 %v1670, %v3206
        %v3719 = vadd.f32 %v1671, %v3207
        %v3720 = vadd.f32 %v1672, %v3208
        %v3721 = vadd.f32 %v1673, %v3209
        %v3722 = vadd.f32 %v1674, %v3210
        %v3723 = vadd.f32 %v1675, %v3211
        %v3724 = vadd.f32 %v1676, %v3212
        %v3725 = vadd.f32 %v1677, %v3213
        %v3726 = vadd.f32 %v1678, %v3214
        %v3727 = vadd.f32 %v1679, %v3215
        %v3728 = vadd.f32 %v1680, %v3216
        %v3729 = vadd.f32 %v1681, %v3217
        %v3730 = vadd.f32 %v1682, %v3218
        %v3731 = vadd.f32 %v1683, %v3219
        %v3732 = vadd.f32 %v1684, %v3220
        %v3733 = vadd.f32 %v1685, %v3221
        %v3734 = vadd.f32 %v1686, %v3222
        %v3735 = vadd.f32 %v1687, %v3223
        %v3736 = vadd.f32 %v1688, %v3224
        %v3737 = vadd.f32 %v1689, %v3225
        %v3738 = vadd.f32 %v1690, %v3226
        %v3739 = vadd.f32 %v1691, %v3227
        %v3740 = vadd.f32 %v1692, %v3228
        %v3741 = vadd.f32 %v1693, %v3229
        %v3742 = vadd.f32 %v1694, %v3230
        %v3743 = vadd.f32 %v1695, %v3231
        %v3744 = vadd.f32 %v1696, %v3232
        %v3745 = vadd.f32 %v1697, %v3233
        %v3746 = vadd.f32 %v1698, %v3234
        %v3747 = vadd.f32 %v1699, %v3235
        %v3748 = vadd.f32 %v1700, %v3236
        %v3749 = vadd.f32 %v1701, %v3237
        %v3750 = vadd.f32 %v1702, %v3238
        %v3751 = vadd.f32 %v1703, %v3239
        %v3752 = vadd.f32 %v1704, %v3240
        %v3753 = vadd.f32 %v1705, %v3241
        %v3754 = vadd.f32 %v1706, %v3242
        %v3755 = vadd.f32 %v1707, %v3243
        %v3756 = vadd.f32 %v1708, %v3244
        %v3757 = vadd.f32 %v1709, %v3245
        %v3758 = vadd.f32 %v1710, %v3246
        %v3759 = vadd.f32 %v1711, %v3247
        %v3760 = vadd.f32 %v1712, %v3248
        %v3761 = vadd.f32 %v1713, %v3249
        %v3762 = vadd.f32 %v1714, %v3250
        %v3763 = vadd.f32 %v1715, %v3251
        %v3764 = vadd.f32 %v1716, %v3252
        %v3765 = vadd.f32 %v1717, %v3253
        %v3766 = vadd.f32 %v1718, %v3254
        %v3767 = vadd.f32 %v1719, %v3255
        %v3768 = vadd.f32 %v1720, %v3256
        %v3769 = vadd.f32 %v1721, %v3257
        %v3770 = vadd.f32 %v1722, %v3258
        %v3771 = vadd.f32 %v1723, %v3259
        %v3772 = vadd.f32 %v1724, %v3260
        %v3773 = vadd.f32 %v1725, %v3261
        %v3774 = vadd.f32 %v1726, %v3262
        %v3775 = vadd.f32 %v1727, %v3263
        %v3776 = vadd.f32 %v1728, %v3264
        %v3777 = vadd.f32 %v1729, %v3265
        %v3778 = vadd.f32 %v1730, %v3266
        %v3779 = vadd.f32 %v1731, %v3267
        %v3780 = vadd.f32 %v1732, %v3268
        %v3781 = vadd.f32 %v1733, %v3269
        %v3782 = vadd.f32 %v1734, %v3270
        %v3783 = vadd.f32 %v1735, %v3271
        %v3784 = vadd.f32 %v1736, %v3272
        %v3785 = vadd.f32 %v1737, %v3273
        %v3786 = vadd.f32 %v1738, %v3274
        %v3787 = vadd.f32 %v1739, %v3275
        %v3788 = vadd.f32 %v1740, %v3276
        %v3789 = vadd.f32 %v1741, %v3277
        %v3790 = vadd.f32 %v1742, %v3278
        %v3791 = vadd.f32 %v1743, %v3279
        %v3792 = vadd.f32 %v1744, %v3280
        %v3793 = vadd.f32 %v1745, %v3281
        %v3794 = vadd.f32 %v1746, %v3282
        %v3795 = vadd.f32 %v1747, %v3283
        %v3796 = vadd.f32 %v1748, %v3284
        %v3797 = vadd.f32 %v1749, %v3285
        %v3798 = vadd.f32 %v1750, %v3286
        %v3799 = vadd.f32 %v1751, %v3287
        %v3800 = vadd.f32 %v1752, %v3288
        %v3801 = vadd.f32 %v1753, %v3289
        %v3802 = vadd.f32 %v1754, %v3290
        %v3803 = vadd.f32 %v1755, %v3291
        %v3804 = vadd.f32 %v1756, %v3292
        %v3805 = vadd.f32 %v1757, %v3293
        %v3806 = vadd.f32 %v1758, %v3294
        %v3807 = vadd.f32 %v1759, %v3295
        %v3808 = vadd.f32 %v1760, %v3296
        %v3809 = vadd.f32 %v1761, %v3297
        %v3810 = vadd.f32 %v1762, %v3298
        %v3811 = vadd.f32 %v1763, %v3299
        %v3812 = vadd.f32 %v1764, %v3300
        %v3813 = vadd.f32 %v1765, %v3301
        %v3814 = vadd.f32 %v1766, %v3302
        %v3815 = vadd.f32 %v1767, %v3303
        %v3816 = vadd.f32 %v1768, %v3304
        %v3817 = vadd.f32 %v1769, %v3305
        %v3818 = vadd.f32 %v1770, %v3306
        %v3819 = vadd.f32 %v1771, %v3307
        %v3820 = vadd.f32 %v1772, %v3308
        %v3821 = vadd.f32 %v1773, %v3309
        %v3822 = vadd.f32 %v1774, %v3310
        %v3823 = vadd.f32 %v1775, %v3311
        %v3824 = vadd.f32 %v1776, %v3312
        %v3825 = vadd.f32 %v1777, %v3313
        %v3826 = vadd.f32 %v1778, %v3314
        %v3827 = vadd.f32 %v1779, %v3315
        %v3828 = vadd.f32 %v1780, %v3316
        %v3829 = vadd.f32 %v1781, %v3317
        %v3830 = vadd.f32 %v1782, %v3318
        %v3831 = vadd.f32 %v1783, %v3319
        %v3832 = vadd.f32 %v1784, %v3320
        %v3833 = vadd.f32 %v1785, %v3321
        %v3834 = vadd.f32 %v1786, %v3322
        %v3835 = vadd.f32 %v1787, %v3323
        %v3836 = vadd.f32 %v1788, %v3324
        %v3837 = vadd.f32 %v1789, %v3325
        %v3838 = vadd.f32 %v1790, %v3326
        %v3839 = vadd.f32 %v1791, %v3327
        %v3840 = vadd.f32 %v1792, %v3328
        %v3841 = vadd.f32 %v1793, %v3329
        %v3842 = vadd.f32 %v1794, %v3330
        %v3843 = vadd.f32 %v1795, %v3331
        %v3844 = vadd.f32 %v1796, %v3332
        %v3845 = vadd.f32 %v1797, %v3333
        %v3846 = vadd.f32 %v1798, %v3334
        %v3847 = vadd.f32 %v1799, %v3335
        %v3848 = vadd.f32 %v1800, %v3336
        %v3849 = vadd.f32 %v1801, %v3337
        %v3850 = vadd.f32 %v1802, %v3338
        %v3851 = vadd.f32 %v1803, %v3339
        %v3852 = vadd.f32 %v1804, %v3340
        %v3853 = vadd.f32 %v1805, %v3341
        %v3854 = vadd.f32 %v1806, %v3342
        %v3855 = vadd.f32 %v1807, %v3343
        %v3856 = vadd.f32 %v1808, %v3344
        %v3857 = vadd.f32 %v1809, %v3345
        %v3858 = vadd.f32 %v1810, %v3346
        %v3859 = vadd.f32 %v1811, %v3347
        %v3860 = vadd.f32 %v1812, %v3348
        %v3861 = vadd.f32 %v1813, %v3349
        %v3862 = vadd.f32 %v1814, %v3350
        %v3863 = vadd.f32 %v1815, %v3351
        %v3864 = vadd.f32 %v1816, %v3352
        %v3865 = vadd.f32 %v1817, %v3353
        %v3866 = vadd.f32 %v1818, %v3354
        %v3867 = vadd.f32 %v1819, %v3355
        %v3868 = vadd.f32 %v1820, %v3356
        %v3869 = vadd.f32 %v1821, %v3357
        %v3870 = vadd.f32 %v1822, %v3358
        %v3871 = vadd.f32 %v1823, %v3359
        %v3872 = vadd.f32 %v1824, %v3360
        %v3873 = vadd.f32 %v1825, %v3361
        %v3874 = vadd.f32 %v1826, %v3362
        %v3875 = vadd.f32 %v1827, %v3363
        %v3876 = vadd.f32 %v1828, %v3364
        %v3877 = vadd.f32 %v1829, %v3365
        %v3878 = vadd.f32 %v1830, %v3366
        %v3879 = vadd.f32 %v1831, %v3367
        %v3880 = vadd.f32 %v1832, %v3368
        %v3881 = vadd.f32 %v1833, %v3369
        %v3882 = vadd.f32 %v1834, %v3370
        %v3883 = vadd.f32 %v1835, %v3371
        %v3884 = vadd.f32 %v1836, %v3372
        %v3885 = vadd.f32 %v1837, %v3373
        %v3886 = vadd.f32 %v1838, %v3374
        %v3887 = vadd.f32 %v1839, %v3375
        %v3888 = vadd.f32 %v1840, %v3376
        %v3889 = vadd.f32 %v1841, %v3377
        %v3890 = vadd.f32 %v1842, %v3378
        %v3891 = vadd.f32 %v1843, %v3379
        %v3892 = vadd.f32 %v1844, %v3380
        %v3893 = vadd.f32 %v1845, %v3381
        %v3894 = vadd.f32 %v1846, %v3382
        %v3895 = vadd.f32 %v1847, %v3383
        %v3896 = vadd.f32 %v1848, %v3384
        %v3897 = vadd.f32 %v1849, %v3385
        %v3898 = vadd.f32 %v1850, %v3386
        %v3899 = vadd.f32 %v1851, %v3387
        %v3900 = vadd.f32 %v1852, %v3388
        %v3901 = vadd.f32 %v1853, %v3389
        %v3902 = vadd.f32 %v1854, %v3390
        %v3903 = vadd.f32 %v1855, %v3391
        %v3904 = vadd.f32 %v1856, %v3392
        %v3905 = vadd.f32 %v1857, %v3393
        %v3906 = vadd.f32 %v1858, %v3394
        %v3907 = vadd.f32 %v1859, %v3395
        %v3908 = vadd.f32 %v1860, %v3396
        %v3909 = vadd.f32 %v1861, %v3397
        %v3910 = vadd.f32 %v1862, %v3398
        %v3911 = vadd.f32 %v1863, %v3399
        %v3912 = vadd.f32 %v1864, %v3400
        %v3913 = vadd.f32 %v1865, %v3401
        %v3914 = vadd.f32 %v1866, %v3402
        %v3915 = vadd.f32 %v1867, %v3403
        %v3916 = vadd.f32 %v1868, %v3404
        %v3917 = vadd.f32 %v1869, %v3405
        %v3918 = vadd.f32 %v1870, %v3406
        %v3919 = vadd.f32 %v1871, %v3407
        %v3920 = vadd.f32 %v1872, %v3408
        %v3921 = vadd.f32 %v1873, %v3409
        %v3922 = vadd.f32 %v1874, %v3410
        %v3923 = vadd.f32 %v1875, %v3411
        %v3924 = vadd.f32 %v1876, %v3412
        %v3925 = vadd.f32 %v1877, %v3413
        %v3926 = vadd.f32 %v1878, %v3414
        %v3927 = vadd.f32 %v1879, %v3415
        %v3928 = vadd.f32 %v1880, %v3416
        %v3929 = vadd.f32 %v1881, %v3417
        %v3930 = vadd.f32 %v1882, %v3418
        %v3931 = vadd.f32 %v1883, %v3419
        %v3932 = vadd.f32 %v1884, %v3420
        %v3933 = vadd.f32 %v1885, %v3421
        %v3934 = vadd.f32 %v1886, %v3422
        %v3935 = vadd.f32 %v1887, %v3423
        %v3936 = vadd.f32 %v1888, %v3424
        %v3937 = vadd.f32 %v1889, %v3425
        %v3938 = vadd.f32 %v1890, %v3426
        %v3939 = vadd.f32 %v1891, %v3427
        %v3940 = vadd.f32 %v1892, %v3428
        %v3941 = vadd.f32 %v1893, %v3429
        %v3942 = vadd.f32 %v1894, %v3430
        %v3943 = vadd.f32 %v1895, %v3431
        %v3944 = vadd.f32 %v1896, %v3432
        %v3945 = vadd.f32 %v1897, %v3433
        %v3946 = vadd.f32 %v1898, %v3434
        %v3947 = vadd.f32 %v1899, %v3435
        %v3948 = vadd.f32 %v1900, %v3436
        %v3949 = vadd.f32 %v1901, %v3437
        %v3950 = vadd.f32 %v1902, %v3438
        %v3951 = vadd.f32 %v1903, %v3439
        %v3952 = vadd.f32 %v1904, %v3440
        %v3953 = vadd.f32 %v1905, %v3441
        %v3954 = vadd.f32 %v1906, %v3442
        %v3955 = vadd.f32 %v1907, %v3443
        %v3956 = vadd.f32 %v1908, %v3444
        %v3957 = vadd.f32 %v1909, %v3445
        %v3958 = vadd.f32 %v1910, %v3446
        %v3959 = vadd.f32 %v1911, %v3447
        %v3960 = vadd.f32 %v1912, %v3448
        %v3961 = vadd.f32 %v1913, %v3449
        %v3962 = vadd.f32 %v1914, %v3450
        %v3963 = vadd.f32 %v1915, %v3451
        %v3964 = vadd.f32 %v1916, %v3452
        %v3965 = vadd.f32 %v1917, %v3453
        %v3966 = vadd.f32 %v1918, %v3454
        %v3967 = vadd.f32 %v1919, %v3455
        %v3968 = vadd.f32 %v1920, %v3456
        %v3969 = vadd.f32 %v1921, %v3457
        %v3970 = vadd.f32 %v1922, %v3458
        %v3971 = vadd.f32 %v1923, %v3459
        %v3972 = vadd.f32 %v1924, %v3460
        %v3973 = vadd.f32 %v1925, %v3461
        %v3974 = vadd.f32 %v1926, %v3462
        %v3975 = vadd.f32 %v1927, %v3463
        %v3976 = vadd.f32 %v1928, %v3464
        %v3977 = vadd.f32 %v1929, %v3465
        %v3978 = vadd.f32 %v1930, %v3466
        %v3979 = vadd.f32 %v1931, %v3467
        %v3980 = vadd.f32 %v1932, %v3468
        %v3981 = vadd.f32 %v1933, %v3469
        %v3982 = vadd.f32 %v1934, %v3470
        %v3983 = vadd.f32 %v1935, %v3471
        %v3984 = vadd.f32 %v1936, %v3472
        %v3985 = vadd.f32 %v1937, %v3473
        %v3986 = vadd.f32 %v1938, %v3474
        %v3987 = vadd.f32 %v1939, %v3475
        %v3988 = vadd.f32 %v1940, %v3476
        %v3989 = vadd.f32 %v1941, %v3477
        %v3990 = vadd.f32 %v1942, %v3478
        %v3991 = vadd.f32 %v1943, %v3479
        %v3992 = vadd.f32 %v1944, %v3480
        %v3993 = vadd.f32 %v1945, %v3481
        %v3994 = vadd.f32 %v1946, %v3482
        %v3995 = vadd.f32 %v1947, %v3483
        %v3996 = vadd.f32 %v1948, %v3484
        %v3997 = vadd.f32 %v1949, %v3485
        %v3998 = vadd.f32 %v1950, %v3486
        %v3999 = vadd.f32 %v1951, %v3487
        %v4000 = vadd.f32 %v1952, %v3488
        %v4001 = vadd.f32 %v1953, %v3489
        %v4002 = vadd.f32 %v1954, %v3490
        %v4003 = vadd.f32 %v1955, %v3491
        %v4004 = vadd.f32 %v1956, %v3492
        %v4005 = vadd.f32 %v1957, %v3493
        %v4006 = vadd.f32 %v1958, %v3494
        %v4007 = vadd.f32 %v1959, %v3495
        %v4008 = vadd.f32 %v1960, %v3496
        %v4009 = vadd.f32 %v1961, %v3497
        %v4010 = vadd.f32 %v1962, %v3498
        %v4011 = vadd.f32 %v1963, %v3499
        %v4012 = vadd.f32 %v1964, %v3500
        %v4013 = vadd.f32 %v1965, %v3501
        %v4014 = vadd.f32 %v1966, %v3502
        %v4015 = vadd.f32 %v1967, %v3503
        %v4016 = vadd.f32 %v1968, %v3504
        %v4017 = vadd.f32 %v1969, %v3505
        %v4018 = vadd.f32 %v1970, %v3506
        %v4019 = vadd.f32 %v1971, %v3507
        %v4020 = vadd.f32 %v1972, %v3508
        %v4021 = vadd.f32 %v1973, %v3509
        %v4022 = vadd.f32 %v1974, %v3510
        %v4023 = vadd.f32 %v1975, %v3511
        %v4024 = vadd.f32 %v1976, %v3512
        %v4025 = vadd.f32 %v1977, %v3513
        %v4026 = vadd.f32 %v1978, %v3514
        %v4027 = vadd.f32 %v1979, %v3515
        %v4028 = vadd.f32 %v1980, %v3516
        %v4029 = vadd.f32 %v1981, %v3517
        %v4030 = vadd.f32 %v1982, %v3518
        %v4031 = vadd.f32 %v1983, %v3519
        %v4032 = vadd.f32 %v1984, %v3520
        %v4033 = vadd.f32 %v1985, %v3521
        %v4034 = vadd.f32 %v1986, %v3522
        %v4035 = vadd.f32 %v1987, %v3523
        %v4036 = vadd.f32 %v1988, %v3524
        %v4037 = vadd.f32 %v1989, %v3525
        %v4038 = vadd.f32 %v1990, %v3526
        %v4039 = vadd.f32 %v1991, %v3527
        %v4040 = vadd.f32 %v1992, %v3528
        %v4041 = vadd.f32 %v1993, %v3529
        %v4042 = vadd.f32 %v1994, %v3530
        %v4043 = vadd.f32 %v1995, %v3531
        %v4044 = vadd.f32 %v1996, %v3532
        %v4045 = vadd.f32 %v1997, %v3533
        %v4046 = vadd.f32 %v1998, %v3534
        %v4047 = vadd.f32 %v1999, %v3535
        %v4048 = vadd.f32 %v2000, %v3536
        %v4049 = vadd.f32 %v2001, %v3537
        %v4050 = vadd.f32 %v2002, %v3538
        %v4051 = vadd.f32 %v2003, %v3539
        %v4052 = vadd.f32 %v2004, %v3540
        %v4053 = vadd.f32 %v2005, %v3541
        %v4054 = vadd.f32 %v2006, %v3542
        %v4055 = vadd.f32 %v2007, %v3543
        %v4056 = vadd.f32 %v2008, %v3544
        %v4057 = vadd.f32 %v2009, %v3545
        %v4058 = vadd.f32 %v2010, %v3546
        %v4059 = vadd.f32 %v2011, %v3547
        %v4060 = vadd.f32 %v2012, %v3548
        %v4061 = vadd.f32 %v2013, %v3549
        %v4062 = vadd.f32 %v2014, %v3550
        %v4063 = vadd.f32 %v2015, %v3551
        %v4064 = vadd.f32 %v2016, %v3552
        %v4065 = vadd.f32 %v2017, %v3553
        %v4066 = vadd.f32 %v2018, %v3554
        %v4067 = vadd.f32 %v2019, %v3555
        %v4068 = vadd.f32 %v2020, %v3556
        %v4069 = vadd.f32 %v2021, %v3557
        %v4070 = vadd.f32 %v2022, %v3558
        %v4071 = vadd.f32 %v2023, %v3559
        %v4072 = vadd.f32 %v2024, %v3560
        %v4073 = vadd.f32 %v2025, %v3561
        %v4074 = vadd.f32 %v2026, %v3562
        %v4075 = vadd.f32 %v2027, %v3563
        %v4076 = vadd.f32 %v2028, %v3564
        %v4077 = vadd.f32 %v2029, %v3565
        %v4078 = vadd.f32 %v2030, %v3566
        %v4079 = vadd.f32 %v2031, %v3567
        %v4080 = vadd.f32 %v2032, %v3568
        %v4081 = vadd.f32 %v2033, %v3569
        %v4082 = vadd.f32 %v2034, %v3570
        %v4083 = vadd.f32 %v2035, %v3571
        %v4084 = vadd.f32 %v2036, %v3572
        %v4085 = vadd.f32 %v2037, %v3573
        %v4086 = vadd.f32 %v2038, %v3574
        %v4087 = vadd.f32 %v2039, %v3575
        %v4088 = vadd.f32 %v2040, %v3576
        %v4089 = vadd.f32 %v2041, %v3577
        %v4090 = vadd.f32 %v2042, %v3578
        %v4091 = vadd.f32 %v2043, %v3579
        %v4092 = vadd.f32 %v2044, %v3580
        %v4093 = vadd.f32 %v2045, %v3581
        %v4094 = vadd.f32 %v2046, %v3582
        %v4095 = vadd.f32 %v2047, %v3583
        %v4096 = vadd.f32 %v2048, %v3584
        %v4097 = vadd.f32 %v2049, %v3585
        %v4098 = vadd.f32 %v2050, %v3586
        %v4099 = vld [vmem:[%s423] sm:$0xff]
        %v4100 = vld [vmem:[%s423 + $0x8] sm:$0xff]
        %v4101 = vld [vmem:[%s423 + $0x10] sm:$0xff]
        %v4102 = vld [vmem:[%s423 + $0x18] sm:$0xff]
        %v4103 = vld [vmem:[%s423 + $0x20] sm:$0xff]
        %v4104 = vld [vmem:[%s423 + $0x28] sm:$0xff]
        %v4105 = vld [vmem:[%s423 + $0x30] sm:$0xff]
        %v4106 = vld [vmem:[%s423 + $0x38] sm:$0xff]
        %v4107 = vld [vmem:[%s423 + $0x40] sm:$0xff]
        %v4108 = vld [vmem:[%s423 + $0x48] sm:$0xff]
        %v4109 = vld [vmem:[%s423 + $0x50] sm:$0xff]
        %v4110 = vld [vmem:[%s423 + $0x58] sm:$0xff]
        %v4111 = vld [vmem:[%s423 + $0x60] sm:$0xff]
        %v4112 = vld [vmem:[%s423 + $0x68] sm:$0xff]
        %v4113 = vld [vmem:[%s423 + $0x70] sm:$0xff]
        %v4114 = vld [vmem:[%s423 + $0x78] sm:$0xff]
        %v4115 = vld [vmem:[%s423 + $0x80] sm:$0xff]
        %v4116 = vld [vmem:[%s423 + $0x88] sm:$0xff]
        %v4117 = vld [vmem:[%s423 + $0x90] sm:$0xff]
        %v4118 = vld [vmem:[%s423 + $0x98] sm:$0xff]
        %v4119 = vld [vmem:[%s423 + $0xa0] sm:$0xff]
        %v4120 = vld [vmem:[%s423 + $0xa8] sm:$0xff]
        %v4121 = vld [vmem:[%s423 + $0xb0] sm:$0xff]
        %v4122 = vld [vmem:[%s423 + $0xb8] sm:$0xff]
        %v4123 = vld [vmem:[%s423 + $0xc0] sm:$0xff]
        %v4124 = vld [vmem:[%s423 + $0xc8] sm:$0xff]
        %v4125 = vld [vmem:[%s423 + $0xd0] sm:$0xff]
        %v4126 = vld [vmem:[%s423 + $0xd8] sm:$0xff]
        %v4127 = vld [vmem:[%s423 + $0xe0] sm:$0xff]
        %v4128 = vld [vmem:[%s423 + $0xe8] sm:$0xff]
        %v4129 = vld [vmem:[%s423 + $0xf0] sm:$0xff]
        %v4130 = vld [vmem:[%s423 + $0xf8] sm:$0xff]
        %v4131 = vld [vmem:[%s423 + $0x100] sm:$0xff]
        %v4132 = vld [vmem:[%s423 + $0x108] sm:$0xff]
        %v4133 = vld [vmem:[%s423 + $0x110] sm:$0xff]
        %v4134 = vld [vmem:[%s423 + $0x118] sm:$0xff]
        %v4135 = vld [vmem:[%s423 + $0x120] sm:$0xff]
        %v4136 = vld [vmem:[%s423 + $0x128] sm:$0xff]
        %v4137 = vld [vmem:[%s423 + $0x130] sm:$0xff]
        %v4138 = vld [vmem:[%s423 + $0x138] sm:$0xff]
        %v4139 = vld [vmem:[%s423 + $0x140] sm:$0xff]
        %v4140 = vld [vmem:[%s423 + $0x148] sm:$0xff]
        %v4141 = vld [vmem:[%s423 + $0x150] sm:$0xff]
        %v4142 = vld [vmem:[%s423 + $0x158] sm:$0xff]
        %v4143 = vld [vmem:[%s423 + $0x160] sm:$0xff]
        %v4144 = vld [vmem:[%s423 + $0x168] sm:$0xff]
        %v4145 = vld [vmem:[%s423 + $0x170] sm:$0xff]
        %v4146 = vld [vmem:[%s423 + $0x178] sm:$0xff]
        %v4147 = vld [vmem:[%s423 + $0x180] sm:$0xff]
        %v4148 = vld [vmem:[%s423 + $0x188] sm:$0xff]
        %v4149 = vld [vmem:[%s423 + $0x190] sm:$0xff]
        %v4150 = vld [vmem:[%s423 + $0x198] sm:$0xff]
        %v4151 = vld [vmem:[%s423 + $0x1a0] sm:$0xff]
        %v4152 = vld [vmem:[%s423 + $0x1a8] sm:$0xff]
        %v4153 = vld [vmem:[%s423 + $0x1b0] sm:$0xff]
        %v4154 = vld [vmem:[%s423 + $0x1b8] sm:$0xff]
        %v4155 = vld [vmem:[%s423 + $0x1c0] sm:$0xff]
        %v4156 = vld [vmem:[%s423 + $0x1c8] sm:$0xff]
        %v4157 = vld [vmem:[%s423 + $0x1d0] sm:$0xff]
        %v4158 = vld [vmem:[%s423 + $0x1d8] sm:$0xff]
        %v4159 = vld [vmem:[%s423 + $0x1e0] sm:$0xff]
        %v4160 = vld [vmem:[%s423 + $0x1e8] sm:$0xff]
        %v4161 = vld [vmem:[%s423 + $0x1f0] sm:$0xff]
        %v4162 = vld [vmem:[%s423 + $0x1f8] sm:$0xff]
        %v4163 = vld [vmem:[%s423 + $0x200] sm:$0xff]
        %v4164 = vld [vmem:[%s423 + $0x208] sm:$0xff]
        %v4165 = vld [vmem:[%s423 + $0x210] sm:$0xff]
        %v4166 = vld [vmem:[%s423 + $0x218] sm:$0xff]
        %v4167 = vld [vmem:[%s423 + $0x220] sm:$0xff]
        %v4168 = vld [vmem:[%s423 + $0x228] sm:$0xff]
        %v4169 = vld [vmem:[%s423 + $0x230] sm:$0xff]
        %v4170 = vld [vmem:[%s423 + $0x238] sm:$0xff]
        %v4171 = vld [vmem:[%s423 + $0x240] sm:$0xff]
        %v4172 = vld [vmem:[%s423 + $0x248] sm:$0xff]
        %v4173 = vld [vmem:[%s423 + $0x250] sm:$0xff]
        %v4174 = vld [vmem:[%s423 + $0x258] sm:$0xff]
        %v4175 = vld [vmem:[%s423 + $0x260] sm:$0xff]
        %v4176 = vld [vmem:[%s423 + $0x268] sm:$0xff]
        %v4177 = vld [vmem:[%s423 + $0x270] sm:$0xff]
        %v4178 = vld [vmem:[%s423 + $0x278] sm:$0xff]
        %v4179 = vld [vmem:[%s423 + $0x280] sm:$0xff]
        %v4180 = vld [vmem:[%s423 + $0x288] sm:$0xff]
        %v4181 = vld [vmem:[%s423 + $0x290] sm:$0xff]
        %v4182 = vld [vmem:[%s423 + $0x298] sm:$0xff]
        %v4183 = vld [vmem:[%s423 + $0x2a0] sm:$0xff]
        %v4184 = vld [vmem:[%s423 + $0x2a8] sm:$0xff]
        %v4185 = vld [vmem:[%s423 + $0x2b0] sm:$0xff]
        %v4186 = vld [vmem:[%s423 + $0x2b8] sm:$0xff]
        %v4187 = vld [vmem:[%s423 + $0x2c0] sm:$0xff]
        %v4188 = vld [vmem:[%s423 + $0x2c8] sm:$0xff]
        %v4189 = vld [vmem:[%s423 + $0x2d0] sm:$0xff]
        %v4190 = vld [vmem:[%s423 + $0x2d8] sm:$0xff]
        %v4191 = vld [vmem:[%s423 + $0x2e0] sm:$0xff]
        %v4192 = vld [vmem:[%s423 + $0x2e8] sm:$0xff]
        %v4193 = vld [vmem:[%s423 + $0x2f0] sm:$0xff]
        %v4194 = vld [vmem:[%s423 + $0x2f8] sm:$0xff]
        %v4195 = vld [vmem:[%s423 + $0x300] sm:$0xff]
        %v4196 = vld [vmem:[%s423 + $0x308] sm:$0xff]
        %v4197 = vld [vmem:[%s423 + $0x310] sm:$0xff]
        %v4198 = vld [vmem:[%s423 + $0x318] sm:$0xff]
        %v4199 = vld [vmem:[%s423 + $0x320] sm:$0xff]
        %v4200 = vld [vmem:[%s423 + $0x328] sm:$0xff]
        %v4201 = vld [vmem:[%s423 + $0x330] sm:$0xff]
        %v4202 = vld [vmem:[%s423 + $0x338] sm:$0xff]
        %v4203 = vld [vmem:[%s423 + $0x340] sm:$0xff]
        %v4204 = vld [vmem:[%s423 + $0x348] sm:$0xff]
        %v4205 = vld [vmem:[%s423 + $0x350] sm:$0xff]
        %v4206 = vld [vmem:[%s423 + $0x358] sm:$0xff]
        %v4207 = vld [vmem:[%s423 + $0x360] sm:$0xff]
        %v4208 = vld [vmem:[%s423 + $0x368] sm:$0xff]
        %v4209 = vld [vmem:[%s423 + $0x370] sm:$0xff]
        %v4210 = vld [vmem:[%s423 + $0x378] sm:$0xff]
        %v4211 = vld [vmem:[%s423 + $0x380] sm:$0xff]
        %v4212 = vld [vmem:[%s423 + $0x388] sm:$0xff]
        %v4213 = vld [vmem:[%s423 + $0x390] sm:$0xff]
        %v4214 = vld [vmem:[%s423 + $0x398] sm:$0xff]
        %v4215 = vld [vmem:[%s423 + $0x3a0] sm:$0xff]
        %v4216 = vld [vmem:[%s423 + $0x3a8] sm:$0xff]
        %v4217 = vld [vmem:[%s423 + $0x3b0] sm:$0xff]
        %v4218 = vld [vmem:[%s423 + $0x3b8] sm:$0xff]
        %v4219 = vld [vmem:[%s423 + $0x3c0] sm:$0xff]
        %v4220 = vld [vmem:[%s423 + $0x3c8] sm:$0xff]
        %v4221 = vld [vmem:[%s423 + $0x3d0] sm:$0xff]
        %v4222 = vld [vmem:[%s423 + $0x3d8] sm:$0xff]
        %v4223 = vld [vmem:[%s423 + $0x3e0] sm:$0xff]
        %v4224 = vld [vmem:[%s423 + $0x3e8] sm:$0xff]
        %v4225 = vld [vmem:[%s423 + $0x3f0] sm:$0xff]
        %v4226 = vld [vmem:[%s423 + $0x3f8] sm:$0xff]
        %v4227 = vld [vmem:[%s423 + $0x400] sm:$0xff]
        %v4228 = vld [vmem:[%s423 + $0x408] sm:$0xff]
        %v4229 = vld [vmem:[%s423 + $0x410] sm:$0xff]
        %v4230 = vld [vmem:[%s423 + $0x418] sm:$0xff]
        %v4231 = vld [vmem:[%s423 + $0x420] sm:$0xff]
        %v4232 = vld [vmem:[%s423 + $0x428] sm:$0xff]
        %v4233 = vld [vmem:[%s423 + $0x430] sm:$0xff]
        %v4234 = vld [vmem:[%s423 + $0x438] sm:$0xff]
        %v4235 = vld [vmem:[%s423 + $0x440] sm:$0xff]
        %v4236 = vld [vmem:[%s423 + $0x448] sm:$0xff]
        %v4237 = vld [vmem:[%s423 + $0x450] sm:$0xff]
        %v4238 = vld [vmem:[%s423 + $0x458] sm:$0xff]
        %v4239 = vld [vmem:[%s423 + $0x460] sm:$0xff]
        %v4240 = vld [vmem:[%s423 + $0x468] sm:$0xff]
        %v4241 = vld [vmem:[%s423 + $0x470] sm:$0xff]
        %v4242 = vld [vmem:[%s423 + $0x478] sm:$0xff]
        %v4243 = vld [vmem:[%s423 + $0x480] sm:$0xff]
        %v4244 = vld [vmem:[%s423 + $0x488] sm:$0xff]
        %v4245 = vld [vmem:[%s423 + $0x490] sm:$0xff]
        %v4246 = vld [vmem:[%s423 + $0x498] sm:$0xff]
        %v4247 = vld [vmem:[%s423 + $0x4a0] sm:$0xff]
        %v4248 = vld [vmem:[%s423 + $0x4a8] sm:$0xff]
        %v4249 = vld [vmem:[%s423 + $0x4b0] sm:$0xff]
        %v4250 = vld [vmem:[%s423 + $0x4b8] sm:$0xff]
        %v4251 = vld [vmem:[%s423 + $0x4c0] sm:$0xff]
        %v4252 = vld [vmem:[%s423 + $0x4c8] sm:$0xff]
        %v4253 = vld [vmem:[%s423 + $0x4d0] sm:$0xff]
        %v4254 = vld [vmem:[%s423 + $0x4d8] sm:$0xff]
        %v4255 = vld [vmem:[%s423 + $0x4e0] sm:$0xff]
        %v4256 = vld [vmem:[%s423 + $0x4e8] sm:$0xff]
        %v4257 = vld [vmem:[%s423 + $0x4f0] sm:$0xff]
        %v4258 = vld [vmem:[%s423 + $0x4f8] sm:$0xff]
        %v4259 = vld [vmem:[%s423 + $0x500] sm:$0xff]
        %v4260 = vld [vmem:[%s423 + $0x508] sm:$0xff]
        %v4261 = vld [vmem:[%s423 + $0x510] sm:$0xff]
        %v4262 = vld [vmem:[%s423 + $0x518] sm:$0xff]
        %v4263 = vld [vmem:[%s423 + $0x520] sm:$0xff]
        %v4264 = vld [vmem:[%s423 + $0x528] sm:$0xff]
        %v4265 = vld [vmem:[%s423 + $0x530] sm:$0xff]
        %v4266 = vld [vmem:[%s423 + $0x538] sm:$0xff]
        %v4267 = vld [vmem:[%s423 + $0x540] sm:$0xff]
        %v4268 = vld [vmem:[%s423 + $0x548] sm:$0xff]
        %v4269 = vld [vmem:[%s423 + $0x550] sm:$0xff]
        %v4270 = vld [vmem:[%s423 + $0x558] sm:$0xff]
        %v4271 = vld [vmem:[%s423 + $0x560] sm:$0xff]
        %v4272 = vld [vmem:[%s423 + $0x568] sm:$0xff]
        %v4273 = vld [vmem:[%s423 + $0x570] sm:$0xff]
        %v4274 = vld [vmem:[%s423 + $0x578] sm:$0xff]
        %v4275 = vld [vmem:[%s423 + $0x580] sm:$0xff]
        %v4276 = vld [vmem:[%s423 + $0x588] sm:$0xff]
        %v4277 = vld [vmem:[%s423 + $0x590] sm:$0xff]
        %v4278 = vld [vmem:[%s423 + $0x598] sm:$0xff]
        %v4279 = vld [vmem:[%s423 + $0x5a0] sm:$0xff]
        %v4280 = vld [vmem:[%s423 + $0x5a8] sm:$0xff]
        %v4281 = vld [vmem:[%s423 + $0x5b0] sm:$0xff]
        %v4282 = vld [vmem:[%s423 + $0x5b8] sm:$0xff]
        %v4283 = vld [vmem:[%s423 + $0x5c0] sm:$0xff]
        %v4284 = vld [vmem:[%s423 + $0x5c8] sm:$0xff]
        %v4285 = vld [vmem:[%s423 + $0x5d0] sm:$0xff]
        %v4286 = vld [vmem:[%s423 + $0x5d8] sm:$0xff]
        %v4287 = vld [vmem:[%s423 + $0x5e0] sm:$0xff]
        %v4288 = vld [vmem:[%s423 + $0x5e8] sm:$0xff]
        %v4289 = vld [vmem:[%s423 + $0x5f0] sm:$0xff]
        %v4290 = vld [vmem:[%s423 + $0x5f8] sm:$0xff]
        %v4291 = vld [vmem:[%s423 + $0x600] sm:$0xff]
        %v4292 = vld [vmem:[%s423 + $0x608] sm:$0xff]
        %v4293 = vld [vmem:[%s423 + $0x610] sm:$0xff]
        %v4294 = vld [vmem:[%s423 + $0x618] sm:$0xff]
        %v4295 = vld [vmem:[%s423 + $0x620] sm:$0xff]
        %v4296 = vld [vmem:[%s423 + $0x628] sm:$0xff]
        %v4297 = vld [vmem:[%s423 + $0x630] sm:$0xff]
        %v4298 = vld [vmem:[%s423 + $0x638] sm:$0xff]
        %v4299 = vld [vmem:[%s423 + $0x640] sm:$0xff]
        %v4300 = vld [vmem:[%s423 + $0x648] sm:$0xff]
        %v4301 = vld [vmem:[%s423 + $0x650] sm:$0xff]
        %v4302 = vld [vmem:[%s423 + $0x658] sm:$0xff]
        %v4303 = vld [vmem:[%s423 + $0x660] sm:$0xff]
        %v4304 = vld [vmem:[%s423 + $0x668] sm:$0xff]
        %v4305 = vld [vmem:[%s423 + $0x670] sm:$0xff]
        %v4306 = vld [vmem:[%s423 + $0x678] sm:$0xff]
        %v4307 = vld [vmem:[%s423 + $0x680] sm:$0xff]
        %v4308 = vld [vmem:[%s423 + $0x688] sm:$0xff]
        %v4309 = vld [vmem:[%s423 + $0x690] sm:$0xff]
        %v4310 = vld [vmem:[%s423 + $0x698] sm:$0xff]
        %v4311 = vld [vmem:[%s423 + $0x6a0] sm:$0xff]
        %v4312 = vld [vmem:[%s423 + $0x6a8] sm:$0xff]
        %v4313 = vld [vmem:[%s423 + $0x6b0] sm:$0xff]
        %v4314 = vld [vmem:[%s423 + $0x6b8] sm:$0xff]
        %v4315 = vld [vmem:[%s423 + $0x6c0] sm:$0xff]
        %v4316 = vld [vmem:[%s423 + $0x6c8] sm:$0xff]
        %v4317 = vld [vmem:[%s423 + $0x6d0] sm:$0xff]
        %v4318 = vld [vmem:[%s423 + $0x6d8] sm:$0xff]
        %v4319 = vld [vmem:[%s423 + $0x6e0] sm:$0xff]
        %v4320 = vld [vmem:[%s423 + $0x6e8] sm:$0xff]
        %v4321 = vld [vmem:[%s423 + $0x6f0] sm:$0xff]
        %v4322 = vld [vmem:[%s423 + $0x6f8] sm:$0xff]
        %v4323 = vld [vmem:[%s423 + $0x700] sm:$0xff]
        %v4324 = vld [vmem:[%s423 + $0x708] sm:$0xff]
        %v4325 = vld [vmem:[%s423 + $0x710] sm:$0xff]
        %v4326 = vld [vmem:[%s423 + $0x718] sm:$0xff]
        %v4327 = vld [vmem:[%s423 + $0x720] sm:$0xff]
        %v4328 = vld [vmem:[%s423 + $0x728] sm:$0xff]
        %v4329 = vld [vmem:[%s423 + $0x730] sm:$0xff]
        %v4330 = vld [vmem:[%s423 + $0x738] sm:$0xff]
        %v4331 = vld [vmem:[%s423 + $0x740] sm:$0xff]
        %v4332 = vld [vmem:[%s423 + $0x748] sm:$0xff]
        %v4333 = vld [vmem:[%s423 + $0x750] sm:$0xff]
        %v4334 = vld [vmem:[%s423 + $0x758] sm:$0xff]
        %v4335 = vld [vmem:[%s423 + $0x760] sm:$0xff]
        %v4336 = vld [vmem:[%s423 + $0x768] sm:$0xff]
        %v4337 = vld [vmem:[%s423 + $0x770] sm:$0xff]
        %v4338 = vld [vmem:[%s423 + $0x778] sm:$0xff]
        %v4339 = vld [vmem:[%s423 + $0x780] sm:$0xff]
        %v4340 = vld [vmem:[%s423 + $0x788] sm:$0xff]
        %v4341 = vld [vmem:[%s423 + $0x790] sm:$0xff]
        %v4342 = vld [vmem:[%s423 + $0x798] sm:$0xff]
        %v4343 = vld [vmem:[%s423 + $0x7a0] sm:$0xff]
        %v4344 = vld [vmem:[%s423 + $0x7a8] sm:$0xff]
        %v4345 = vld [vmem:[%s423 + $0x7b0] sm:$0xff]
        %v4346 = vld [vmem:[%s423 + $0x7b8] sm:$0xff]
        %v4347 = vld [vmem:[%s423 + $0x7c0] sm:$0xff]
        %v4348 = vld [vmem:[%s423 + $0x7c8] sm:$0xff]
        %v4349 = vld [vmem:[%s423 + $0x7d0] sm:$0xff]
        %v4350 = vld [vmem:[%s423 + $0x7d8] sm:$0xff]
        %v4351 = vld [vmem:[%s423 + $0x7e0] sm:$0xff]
        %v4352 = vld [vmem:[%s423 + $0x7e8] sm:$0xff]
        %v4353 = vld [vmem:[%s423 + $0x7f0] sm:$0xff]
        %v4354 = vld [vmem:[%s423 + $0x7f8] sm:$0xff]
        %v4355 = vld [vmem:[%s423 + $0x800] sm:$0xff]
        %v4356 = vld [vmem:[%s423 + $0x808] sm:$0xff]
        %v4357 = vld [vmem:[%s423 + $0x810] sm:$0xff]
        %v4358 = vld [vmem:[%s423 + $0x818] sm:$0xff]
        %v4359 = vld [vmem:[%s423 + $0x820] sm:$0xff]
        %v4360 = vld [vmem:[%s423 + $0x828] sm:$0xff]
        %v4361 = vld [vmem:[%s423 + $0x830] sm:$0xff]
        %v4362 = vld [vmem:[%s423 + $0x838] sm:$0xff]
        %v4363 = vld [vmem:[%s423 + $0x840] sm:$0xff]
        %v4364 = vld [vmem:[%s423 + $0x848] sm:$0xff]
        %v4365 = vld [vmem:[%s423 + $0x850] sm:$0xff]
        %v4366 = vld [vmem:[%s423 + $0x858] sm:$0xff]
        %v4367 = vld [vmem:[%s423 + $0x860] sm:$0xff]
        %v4368 = vld [vmem:[%s423 + $0x868] sm:$0xff]
        %v4369 = vld [vmem:[%s423 + $0x870] sm:$0xff]
        %v4370 = vld [vmem:[%s423 + $0x878] sm:$0xff]
        %v4371 = vld [vmem:[%s423 + $0x880] sm:$0xff]
        %v4372 = vld [vmem:[%s423 + $0x888] sm:$0xff]
        %v4373 = vld [vmem:[%s423 + $0x890] sm:$0xff]
        %v4374 = vld [vmem:[%s423 + $0x898] sm:$0xff]
        %v4375 = vld [vmem:[%s423 + $0x8a0] sm:$0xff]
        %v4376 = vld [vmem:[%s423 + $0x8a8] sm:$0xff]
        %v4377 = vld [vmem:[%s423 + $0x8b0] sm:$0xff]
        %v4378 = vld [vmem:[%s423 + $0x8b8] sm:$0xff]
        %v4379 = vld [vmem:[%s423 + $0x8c0] sm:$0xff]
        %v4380 = vld [vmem:[%s423 + $0x8c8] sm:$0xff]
        %v4381 = vld [vmem:[%s423 + $0x8d0] sm:$0xff]
        %v4382 = vld [vmem:[%s423 + $0x8d8] sm:$0xff]
        %v4383 = vld [vmem:[%s423 + $0x8e0] sm:$0xff]
        %v4384 = vld [vmem:[%s423 + $0x8e8] sm:$0xff]
        %v4385 = vld [vmem:[%s423 + $0x8f0] sm:$0xff]
        %v4386 = vld [vmem:[%s423 + $0x8f8] sm:$0xff]
        %v4387 = vld [vmem:[%s423 + $0x900] sm:$0xff]
        %v4388 = vld [vmem:[%s423 + $0x908] sm:$0xff]
        %v4389 = vld [vmem:[%s423 + $0x910] sm:$0xff]
        %v4390 = vld [vmem:[%s423 + $0x918] sm:$0xff]
        %v4391 = vld [vmem:[%s423 + $0x920] sm:$0xff]
        %v4392 = vld [vmem:[%s423 + $0x928] sm:$0xff]
        %v4393 = vld [vmem:[%s423 + $0x930] sm:$0xff]
        %v4394 = vld [vmem:[%s423 + $0x938] sm:$0xff]
        %v4395 = vld [vmem:[%s423 + $0x940] sm:$0xff]
        %v4396 = vld [vmem:[%s423 + $0x948] sm:$0xff]
        %v4397 = vld [vmem:[%s423 + $0x950] sm:$0xff]
        %v4398 = vld [vmem:[%s423 + $0x958] sm:$0xff]
        %v4399 = vld [vmem:[%s423 + $0x960] sm:$0xff]
        %v4400 = vld [vmem:[%s423 + $0x968] sm:$0xff]
        %v4401 = vld [vmem:[%s423 + $0x970] sm:$0xff]
        %v4402 = vld [vmem:[%s423 + $0x978] sm:$0xff]
        %v4403 = vld [vmem:[%s423 + $0x980] sm:$0xff]
        %v4404 = vld [vmem:[%s423 + $0x988] sm:$0xff]
        %v4405 = vld [vmem:[%s423 + $0x990] sm:$0xff]
        %v4406 = vld [vmem:[%s423 + $0x998] sm:$0xff]
        %v4407 = vld [vmem:[%s423 + $0x9a0] sm:$0xff]
        %v4408 = vld [vmem:[%s423 + $0x9a8] sm:$0xff]
        %v4409 = vld [vmem:[%s423 + $0x9b0] sm:$0xff]
        %v4410 = vld [vmem:[%s423 + $0x9b8] sm:$0xff]
        %v4411 = vld [vmem:[%s423 + $0x9c0] sm:$0xff]
        %v4412 = vld [vmem:[%s423 + $0x9c8] sm:$0xff]
        %v4413 = vld [vmem:[%s423 + $0x9d0] sm:$0xff]
        %v4414 = vld [vmem:[%s423 + $0x9d8] sm:$0xff]
        %v4415 = vld [vmem:[%s423 + $0x9e0] sm:$0xff]
        %v4416 = vld [vmem:[%s423 + $0x9e8] sm:$0xff]
        %v4417 = vld [vmem:[%s423 + $0x9f0] sm:$0xff]
        %v4418 = vld [vmem:[%s423 + $0x9f8] sm:$0xff]
        %v4419 = vld [vmem:[%s423 + $0xa00] sm:$0xff]
        %v4420 = vld [vmem:[%s423 + $0xa08] sm:$0xff]
        %v4421 = vld [vmem:[%s423 + $0xa10] sm:$0xff]
        %v4422 = vld [vmem:[%s423 + $0xa18] sm:$0xff]
        %v4423 = vld [vmem:[%s423 + $0xa20] sm:$0xff]
        %v4424 = vld [vmem:[%s423 + $0xa28] sm:$0xff]
        %v4425 = vld [vmem:[%s423 + $0xa30] sm:$0xff]
        %v4426 = vld [vmem:[%s423 + $0xa38] sm:$0xff]
        %v4427 = vld [vmem:[%s423 + $0xa40] sm:$0xff]
        %v4428 = vld [vmem:[%s423 + $0xa48] sm:$0xff]
        %v4429 = vld [vmem:[%s423 + $0xa50] sm:$0xff]
        %v4430 = vld [vmem:[%s423 + $0xa58] sm:$0xff]
        %v4431 = vld [vmem:[%s423 + $0xa60] sm:$0xff]
        %v4432 = vld [vmem:[%s423 + $0xa68] sm:$0xff]
        %v4433 = vld [vmem:[%s423 + $0xa70] sm:$0xff]
        %v4434 = vld [vmem:[%s423 + $0xa78] sm:$0xff]
        %v4435 = vld [vmem:[%s423 + $0xa80] sm:$0xff]
        %v4436 = vld [vmem:[%s423 + $0xa88] sm:$0xff]
        %v4437 = vld [vmem:[%s423 + $0xa90] sm:$0xff]
        %v4438 = vld [vmem:[%s423 + $0xa98] sm:$0xff]
        %v4439 = vld [vmem:[%s423 + $0xaa0] sm:$0xff]
        %v4440 = vld [vmem:[%s423 + $0xaa8] sm:$0xff]
        %v4441 = vld [vmem:[%s423 + $0xab0] sm:$0xff]
        %v4442 = vld [vmem:[%s423 + $0xab8] sm:$0xff]
        %v4443 = vld [vmem:[%s423 + $0xac0] sm:$0xff]
        %v4444 = vld [vmem:[%s423 + $0xac8] sm:$0xff]
        %v4445 = vld [vmem:[%s423 + $0xad0] sm:$0xff]
        %v4446 = vld [vmem:[%s423 + $0xad8] sm:$0xff]
        %v4447 = vld [vmem:[%s423 + $0xae0] sm:$0xff]
        %v4448 = vld [vmem:[%s423 + $0xae8] sm:$0xff]
        %v4449 = vld [vmem:[%s423 + $0xaf0] sm:$0xff]
        %v4450 = vld [vmem:[%s423 + $0xaf8] sm:$0xff]
        %v4451 = vld [vmem:[%s423 + $0xb00] sm:$0xff]
        %v4452 = vld [vmem:[%s423 + $0xb08] sm:$0xff]
        %v4453 = vld [vmem:[%s423 + $0xb10] sm:$0xff]
        %v4454 = vld [vmem:[%s423 + $0xb18] sm:$0xff]
        %v4455 = vld [vmem:[%s423 + $0xb20] sm:$0xff]
        %v4456 = vld [vmem:[%s423 + $0xb28] sm:$0xff]
        %v4457 = vld [vmem:[%s423 + $0xb30] sm:$0xff]
        %v4458 = vld [vmem:[%s423 + $0xb38] sm:$0xff]
        %v4459 = vld [vmem:[%s423 + $0xb40] sm:$0xff]
        %v4460 = vld [vmem:[%s423 + $0xb48] sm:$0xff]
        %v4461 = vld [vmem:[%s423 + $0xb50] sm:$0xff]
        %v4462 = vld [vmem:[%s423 + $0xb58] sm:$0xff]
        %v4463 = vld [vmem:[%s423 + $0xb60] sm:$0xff]
        %v4464 = vld [vmem:[%s423 + $0xb68] sm:$0xff]
        %v4465 = vld [vmem:[%s423 + $0xb70] sm:$0xff]
        %v4466 = vld [vmem:[%s423 + $0xb78] sm:$0xff]
        %v4467 = vld [vmem:[%s423 + $0xb80] sm:$0xff]
        %v4468 = vld [vmem:[%s423 + $0xb88] sm:$0xff]
        %v4469 = vld [vmem:[%s423 + $0xb90] sm:$0xff]
        %v4470 = vld [vmem:[%s423 + $0xb98] sm:$0xff]
        %v4471 = vld [vmem:[%s423 + $0xba0] sm:$0xff]
        %v4472 = vld [vmem:[%s423 + $0xba8] sm:$0xff]
        %v4473 = vld [vmem:[%s423 + $0xbb0] sm:$0xff]
        %v4474 = vld [vmem:[%s423 + $0xbb8] sm:$0xff]
        %v4475 = vld [vmem:[%s423 + $0xbc0] sm:$0xff]
        %v4476 = vld [vmem:[%s423 + $0xbc8] sm:$0xff]
        %v4477 = vld [vmem:[%s423 + $0xbd0] sm:$0xff]
        %v4478 = vld [vmem:[%s423 + $0xbd8] sm:$0xff]
        %v4479 = vld [vmem:[%s423 + $0xbe0] sm:$0xff]
        %v4480 = vld [vmem:[%s423 + $0xbe8] sm:$0xff]
        %v4481 = vld [vmem:[%s423 + $0xbf0] sm:$0xff]
        %v4482 = vld [vmem:[%s423 + $0xbf8] sm:$0xff]
        %v4483 = vld [vmem:[%s423 + $0xc00] sm:$0xff]
        %v4484 = vld [vmem:[%s423 + $0xc08] sm:$0xff]
        %v4485 = vld [vmem:[%s423 + $0xc10] sm:$0xff]
        %v4486 = vld [vmem:[%s423 + $0xc18] sm:$0xff]
        %v4487 = vld [vmem:[%s423 + $0xc20] sm:$0xff]
        %v4488 = vld [vmem:[%s423 + $0xc28] sm:$0xff]
        %v4489 = vld [vmem:[%s423 + $0xc30] sm:$0xff]
        %v4490 = vld [vmem:[%s423 + $0xc38] sm:$0xff]
        %v4491 = vld [vmem:[%s423 + $0xc40] sm:$0xff]
        %v4492 = vld [vmem:[%s423 + $0xc48] sm:$0xff]
        %v4493 = vld [vmem:[%s423 + $0xc50] sm:$0xff]
        %v4494 = vld [vmem:[%s423 + $0xc58] sm:$0xff]
        %v4495 = vld [vmem:[%s423 + $0xc60] sm:$0xff]
        %v4496 = vld [vmem:[%s423 + $0xc68] sm:$0xff]
        %v4497 = vld [vmem:[%s423 + $0xc70] sm:$0xff]
        %v4498 = vld [vmem:[%s423 + $0xc78] sm:$0xff]
        %v4499 = vld [vmem:[%s423 + $0xc80] sm:$0xff]
        %v4500 = vld [vmem:[%s423 + $0xc88] sm:$0xff]
        %v4501 = vld [vmem:[%s423 + $0xc90] sm:$0xff]
        %v4502 = vld [vmem:[%s423 + $0xc98] sm:$0xff]
        %v4503 = vld [vmem:[%s423 + $0xca0] sm:$0xff]
        %v4504 = vld [vmem:[%s423 + $0xca8] sm:$0xff]
        %v4505 = vld [vmem:[%s423 + $0xcb0] sm:$0xff]
        %v4506 = vld [vmem:[%s423 + $0xcb8] sm:$0xff]
        %v4507 = vld [vmem:[%s423 + $0xcc0] sm:$0xff]
        %v4508 = vld [vmem:[%s423 + $0xcc8] sm:$0xff]
        %v4509 = vld [vmem:[%s423 + $0xcd0] sm:$0xff]
        %v4510 = vld [vmem:[%s423 + $0xcd8] sm:$0xff]
        %v4511 = vld [vmem:[%s423 + $0xce0] sm:$0xff]
        %v4512 = vld [vmem:[%s423 + $0xce8] sm:$0xff]
        %v4513 = vld [vmem:[%s423 + $0xcf0] sm:$0xff]
        %v4514 = vld [vmem:[%s423 + $0xcf8] sm:$0xff]
        %v4515 = vld [vmem:[%s423 + $0xd00] sm:$0xff]
        %v4516 = vld [vmem:[%s423 + $0xd08] sm:$0xff]
        %v4517 = vld [vmem:[%s423 + $0xd10] sm:$0xff]
        %v4518 = vld [vmem:[%s423 + $0xd18] sm:$0xff]
        %v4519 = vld [vmem:[%s423 + $0xd20] sm:$0xff]
        %v4520 = vld [vmem:[%s423 + $0xd28] sm:$0xff]
        %v4521 = vld [vmem:[%s423 + $0xd30] sm:$0xff]
        %v4522 = vld [vmem:[%s423 + $0xd38] sm:$0xff]
        %v4523 = vld [vmem:[%s423 + $0xd40] sm:$0xff]
        %v4524 = vld [vmem:[%s423 + $0xd48] sm:$0xff]
        %v4525 = vld [vmem:[%s423 + $0xd50] sm:$0xff]
        %v4526 = vld [vmem:[%s423 + $0xd58] sm:$0xff]
        %v4527 = vld [vmem:[%s423 + $0xd60] sm:$0xff]
        %v4528 = vld [vmem:[%s423 + $0xd68] sm:$0xff]
        %v4529 = vld [vmem:[%s423 + $0xd70] sm:$0xff]
        %v4530 = vld [vmem:[%s423 + $0xd78] sm:$0xff]
        %v4531 = vld [vmem:[%s423 + $0xd80] sm:$0xff]
        %v4532 = vld [vmem:[%s423 + $0xd88] sm:$0xff]
        %v4533 = vld [vmem:[%s423 + $0xd90] sm:$0xff]
        %v4534 = vld [vmem:[%s423 + $0xd98] sm:$0xff]
        %v4535 = vld [vmem:[%s423 + $0xda0] sm:$0xff]
        %v4536 = vld [vmem:[%s423 + $0xda8] sm:$0xff]
        %v4537 = vld [vmem:[%s423 + $0xdb0] sm:$0xff]
        %v4538 = vld [vmem:[%s423 + $0xdb8] sm:$0xff]
        %v4539 = vld [vmem:[%s423 + $0xdc0] sm:$0xff]
        %v4540 = vld [vmem:[%s423 + $0xdc8] sm:$0xff]
        %v4541 = vld [vmem:[%s423 + $0xdd0] sm:$0xff]
        %v4542 = vld [vmem:[%s423 + $0xdd8] sm:$0xff]
        %v4543 = vld [vmem:[%s423 + $0xde0] sm:$0xff]
        %v4544 = vld [vmem:[%s423 + $0xde8] sm:$0xff]
        %v4545 = vld [vmem:[%s423 + $0xdf0] sm:$0xff]
        %v4546 = vld [vmem:[%s423 + $0xdf8] sm:$0xff]
        %v4547 = vld [vmem:[%s423 + $0xe00] sm:$0xff]
        %v4548 = vld [vmem:[%s423 + $0xe08] sm:$0xff]
        %v4549 = vld [vmem:[%s423 + $0xe10] sm:$0xff]
        %v4550 = vld [vmem:[%s423 + $0xe18] sm:$0xff]
        %v4551 = vld [vmem:[%s423 + $0xe20] sm:$0xff]
        %v4552 = vld [vmem:[%s423 + $0xe28] sm:$0xff]
        %v4553 = vld [vmem:[%s423 + $0xe30] sm:$0xff]
        %v4554 = vld [vmem:[%s423 + $0xe38] sm:$0xff]
        %v4555 = vld [vmem:[%s423 + $0xe40] sm:$0xff]
        %v4556 = vld [vmem:[%s423 + $0xe48] sm:$0xff]
        %v4557 = vld [vmem:[%s423 + $0xe50] sm:$0xff]
        %v4558 = vld [vmem:[%s423 + $0xe58] sm:$0xff]
        %v4559 = vld [vmem:[%s423 + $0xe60] sm:$0xff]
        %v4560 = vld [vmem:[%s423 + $0xe68] sm:$0xff]
        %v4561 = vld [vmem:[%s423 + $0xe70] sm:$0xff]
        %v4562 = vld [vmem:[%s423 + $0xe78] sm:$0xff]
        %v4563 = vld [vmem:[%s423 + $0xe80] sm:$0xff]
        %v4564 = vld [vmem:[%s423 + $0xe88] sm:$0xff]
        %v4565 = vld [vmem:[%s423 + $0xe90] sm:$0xff]
        %v4566 = vld [vmem:[%s423 + $0xe98] sm:$0xff]
        %v4567 = vld [vmem:[%s423 + $0xea0] sm:$0xff]
        %v4568 = vld [vmem:[%s423 + $0xea8] sm:$0xff]
        %v4569 = vld [vmem:[%s423 + $0xeb0] sm:$0xff]
        %v4570 = vld [vmem:[%s423 + $0xeb8] sm:$0xff]
        %v4571 = vld [vmem:[%s423 + $0xec0] sm:$0xff]
        %v4572 = vld [vmem:[%s423 + $0xec8] sm:$0xff]
        %v4573 = vld [vmem:[%s423 + $0xed0] sm:$0xff]
        %v4574 = vld [vmem:[%s423 + $0xed8] sm:$0xff]
        %v4575 = vld [vmem:[%s423 + $0xee0] sm:$0xff]
        %v4576 = vld [vmem:[%s423 + $0xee8] sm:$0xff]
        %v4577 = vld [vmem:[%s423 + $0xef0] sm:$0xff]
        %v4578 = vld [vmem:[%s423 + $0xef8] sm:$0xff]
        %v4579 = vld [vmem:[%s423 + $0xf00] sm:$0xff]
        %v4580 = vld [vmem:[%s423 + $0xf08] sm:$0xff]
        %v4581 = vld [vmem:[%s423 + $0xf10] sm:$0xff]
        %v4582 = vld [vmem:[%s423 + $0xf18] sm:$0xff]
        %v4583 = vld [vmem:[%s423 + $0xf20] sm:$0xff]
        %v4584 = vld [vmem:[%s423 + $0xf28] sm:$0xff]
        %v4585 = vld [vmem:[%s423 + $0xf30] sm:$0xff]
        %v4586 = vld [vmem:[%s423 + $0xf38] sm:$0xff]
        %v4587 = vld [vmem:[%s423 + $0xf40] sm:$0xff]
        %v4588 = vld [vmem:[%s423 + $0xf48] sm:$0xff]
        %v4589 = vld [vmem:[%s423 + $0xf50] sm:$0xff]
        %v4590 = vld [vmem:[%s423 + $0xf58] sm:$0xff]
        %v4591 = vld [vmem:[%s423 + $0xf60] sm:$0xff]
        %v4592 = vld [vmem:[%s423 + $0xf68] sm:$0xff]
        %v4593 = vld [vmem:[%s423 + $0xf70] sm:$0xff]
        %v4594 = vld [vmem:[%s423 + $0xf78] sm:$0xff]
        %v4595 = vld [vmem:[%s423 + $0xf80] sm:$0xff]
        %v4596 = vld [vmem:[%s423 + $0xf88] sm:$0xff]
        %v4597 = vld [vmem:[%s423 + $0xf90] sm:$0xff]
        %v4598 = vld [vmem:[%s423 + $0xf98] sm:$0xff]
        %v4599 = vld [vmem:[%s423 + $0xfa0] sm:$0xff]
        %v4600 = vld [vmem:[%s423 + $0xfa8] sm:$0xff]
        %v4601 = vld [vmem:[%s423 + $0xfb0] sm:$0xff]
        %v4602 = vld [vmem:[%s423 + $0xfb8] sm:$0xff]
        %v4603 = vld [vmem:[%s423 + $0xfc0] sm:$0xff]
        %v4604 = vld [vmem:[%s423 + $0xfc8] sm:$0xff]
        %v4605 = vld [vmem:[%s423 + $0xfd0] sm:$0xff]
        %v4606 = vld [vmem:[%s423 + $0xfd8] sm:$0xff]
        %v4607 = vld [vmem:[%s423 + $0xfe0] sm:$0xff]
        %v4608 = vld [vmem:[%s423 + $0xfe8] sm:$0xff]
        %v4609 = vld [vmem:[%s423 + $0xff0] sm:$0xff]
        %v4610 = vld [vmem:[%s423 + $0xff8] sm:$0xff]
        %v4611 = vld [vmem:[%s453] sm:$0xff]
        %v4612 = vld [vmem:[%s453 + $0x8] sm:$0xff]
        %v4613 = vld [vmem:[%s453 + $0x10] sm:$0xff]
        %v4614 = vld [vmem:[%s453 + $0x18] sm:$0xff]
        %v4615 = vld [vmem:[%s453 + $0x20] sm:$0xff]
        %v4616 = vld [vmem:[%s453 + $0x28] sm:$0xff]
        %v4617 = vld [vmem:[%s453 + $0x30] sm:$0xff]
        %v4618 = vld [vmem:[%s453 + $0x38] sm:$0xff]
        %v4619 = vld [vmem:[%s453 + $0x40] sm:$0xff]
        %v4620 = vld [vmem:[%s453 + $0x48] sm:$0xff]
        %v4621 = vld [vmem:[%s453 + $0x50] sm:$0xff]
        %v4622 = vld [vmem:[%s453 + $0x58] sm:$0xff]
        %v4623 = vld [vmem:[%s453 + $0x60] sm:$0xff]
        %v4624 = vld [vmem:[%s453 + $0x68] sm:$0xff]
        %v4625 = vld [vmem:[%s453 + $0x70] sm:$0xff]
        %v4626 = vld [vmem:[%s453 + $0x78] sm:$0xff]
        %v4627 = vld [vmem:[%s453 + $0x80] sm:$0xff]
        %v4628 = vld [vmem:[%s453 + $0x88] sm:$0xff]
        %v4629 = vld [vmem:[%s453 + $0x90] sm:$0xff]
        %v4630 = vld [vmem:[%s453 + $0x98] sm:$0xff]
        %v4631 = vld [vmem:[%s453 + $0xa0] sm:$0xff]
        %v4632 = vld [vmem:[%s453 + $0xa8] sm:$0xff]
        %v4633 = vld [vmem:[%s453 + $0xb0] sm:$0xff]
        %v4634 = vld [vmem:[%s453 + $0xb8] sm:$0xff]
        %v4635 = vld [vmem:[%s453 + $0xc0] sm:$0xff]
        %v4636 = vld [vmem:[%s453 + $0xc8] sm:$0xff]
        %v4637 = vld [vmem:[%s453 + $0xd0] sm:$0xff]
        %v4638 = vld [vmem:[%s453 + $0xd8] sm:$0xff]
        %v4639 = vld [vmem:[%s453 + $0xe0] sm:$0xff]
        %v4640 = vld [vmem:[%s453 + $0xe8] sm:$0xff]
        %v4641 = vld [vmem:[%s453 + $0xf0] sm:$0xff]
        %v4642 = vld [vmem:[%s453 + $0xf8] sm:$0xff]
        %v4643 = vld [vmem:[%s453 + $0x100] sm:$0xff]
        %v4644 = vld [vmem:[%s453 + $0x108] sm:$0xff]
        %v4645 = vld [vmem:[%s453 + $0x110] sm:$0xff]
        %v4646 = vld [vmem:[%s453 + $0x118] sm:$0xff]
        %v4647 = vld [vmem:[%s453 + $0x120] sm:$0xff]
        %v4648 = vld [vmem:[%s453 + $0x128] sm:$0xff]
        %v4649 = vld [vmem:[%s453 + $0x130] sm:$0xff]
        %v4650 = vld [vmem:[%s453 + $0x138] sm:$0xff]
        %v4651 = vld [vmem:[%s453 + $0x140] sm:$0xff]
        %v4652 = vld [vmem:[%s453 + $0x148] sm:$0xff]
        %v4653 = vld [vmem:[%s453 + $0x150] sm:$0xff]
        %v4654 = vld [vmem:[%s453 + $0x158] sm:$0xff]
        %v4655 = vld [vmem:[%s453 + $0x160] sm:$0xff]
        %v4656 = vld [vmem:[%s453 + $0x168] sm:$0xff]
        %v4657 = vld [vmem:[%s453 + $0x170] sm:$0xff]
        %v4658 = vld [vmem:[%s453 + $0x178] sm:$0xff]
        %v4659 = vld [vmem:[%s453 + $0x180] sm:$0xff]
        %v4660 = vld [vmem:[%s453 + $0x188] sm:$0xff]
        %v4661 = vld [vmem:[%s453 + $0x190] sm:$0xff]
        %v4662 = vld [vmem:[%s453 + $0x198] sm:$0xff]
        %v4663 = vld [vmem:[%s453 + $0x1a0] sm:$0xff]
        %v4664 = vld [vmem:[%s453 + $0x1a8] sm:$0xff]
        %v4665 = vld [vmem:[%s453 + $0x1b0] sm:$0xff]
        %v4666 = vld [vmem:[%s453 + $0x1b8] sm:$0xff]
        %v4667 = vld [vmem:[%s453 + $0x1c0] sm:$0xff]
        %v4668 = vld [vmem:[%s453 + $0x1c8] sm:$0xff]
        %v4669 = vld [vmem:[%s453 + $0x1d0] sm:$0xff]
        %v4670 = vld [vmem:[%s453 + $0x1d8] sm:$0xff]
        %v4671 = vld [vmem:[%s453 + $0x1e0] sm:$0xff]
        %v4672 = vld [vmem:[%s453 + $0x1e8] sm:$0xff]
        %v4673 = vld [vmem:[%s453 + $0x1f0] sm:$0xff]
        %v4674 = vld [vmem:[%s453 + $0x1f8] sm:$0xff]
        %v4675 = vld [vmem:[%s453 + $0x200] sm:$0xff]
        %v4676 = vld [vmem:[%s453 + $0x208] sm:$0xff]
        %v4677 = vld [vmem:[%s453 + $0x210] sm:$0xff]
        %v4678 = vld [vmem:[%s453 + $0x218] sm:$0xff]
        %v4679 = vld [vmem:[%s453 + $0x220] sm:$0xff]
        %v4680 = vld [vmem:[%s453 + $0x228] sm:$0xff]
        %v4681 = vld [vmem:[%s453 + $0x230] sm:$0xff]
        %v4682 = vld [vmem:[%s453 + $0x238] sm:$0xff]
        %v4683 = vld [vmem:[%s453 + $0x240] sm:$0xff]
        %v4684 = vld [vmem:[%s453 + $0x248] sm:$0xff]
        %v4685 = vld [vmem:[%s453 + $0x250] sm:$0xff]
        %v4686 = vld [vmem:[%s453 + $0x258] sm:$0xff]
        %v4687 = vld [vmem:[%s453 + $0x260] sm:$0xff]
        %v4688 = vld [vmem:[%s453 + $0x268] sm:$0xff]
        %v4689 = vld [vmem:[%s453 + $0x270] sm:$0xff]
        %v4690 = vld [vmem:[%s453 + $0x278] sm:$0xff]
        %v4691 = vld [vmem:[%s453 + $0x280] sm:$0xff]
        %v4692 = vld [vmem:[%s453 + $0x288] sm:$0xff]
        %v4693 = vld [vmem:[%s453 + $0x290] sm:$0xff]
        %v4694 = vld [vmem:[%s453 + $0x298] sm:$0xff]
        %v4695 = vld [vmem:[%s453 + $0x2a0] sm:$0xff]
        %v4696 = vld [vmem:[%s453 + $0x2a8] sm:$0xff]
        %v4697 = vld [vmem:[%s453 + $0x2b0] sm:$0xff]
        %v4698 = vld [vmem:[%s453 + $0x2b8] sm:$0xff]
        %v4699 = vld [vmem:[%s453 + $0x2c0] sm:$0xff]
        %v4700 = vld [vmem:[%s453 + $0x2c8] sm:$0xff]
        %v4701 = vld [vmem:[%s453 + $0x2d0] sm:$0xff]
        %v4702 = vld [vmem:[%s453 + $0x2d8] sm:$0xff]
        %v4703 = vld [vmem:[%s453 + $0x2e0] sm:$0xff]
        %v4704 = vld [vmem:[%s453 + $0x2e8] sm:$0xff]
        %v4705 = vld [vmem:[%s453 + $0x2f0] sm:$0xff]
        %v4706 = vld [vmem:[%s453 + $0x2f8] sm:$0xff]
        %v4707 = vld [vmem:[%s453 + $0x300] sm:$0xff]
        %v4708 = vld [vmem:[%s453 + $0x308] sm:$0xff]
        %v4709 = vld [vmem:[%s453 + $0x310] sm:$0xff]
        %v4710 = vld [vmem:[%s453 + $0x318] sm:$0xff]
        %v4711 = vld [vmem:[%s453 + $0x320] sm:$0xff]
        %v4712 = vld [vmem:[%s453 + $0x328] sm:$0xff]
        %v4713 = vld [vmem:[%s453 + $0x330] sm:$0xff]
        %v4714 = vld [vmem:[%s453 + $0x338] sm:$0xff]
        %v4715 = vld [vmem:[%s453 + $0x340] sm:$0xff]
        %v4716 = vld [vmem:[%s453 + $0x348] sm:$0xff]
        %v4717 = vld [vmem:[%s453 + $0x350] sm:$0xff]
        %v4718 = vld [vmem:[%s453 + $0x358] sm:$0xff]
        %v4719 = vld [vmem:[%s453 + $0x360] sm:$0xff]
        %v4720 = vld [vmem:[%s453 + $0x368] sm:$0xff]
        %v4721 = vld [vmem:[%s453 + $0x370] sm:$0xff]
        %v4722 = vld [vmem:[%s453 + $0x378] sm:$0xff]
        %v4723 = vld [vmem:[%s453 + $0x380] sm:$0xff]
        %v4724 = vld [vmem:[%s453 + $0x388] sm:$0xff]
        %v4725 = vld [vmem:[%s453 + $0x390] sm:$0xff]
        %v4726 = vld [vmem:[%s453 + $0x398] sm:$0xff]
        %v4727 = vld [vmem:[%s453 + $0x3a0] sm:$0xff]
        %v4728 = vld [vmem:[%s453 + $0x3a8] sm:$0xff]
        %v4729 = vld [vmem:[%s453 + $0x3b0] sm:$0xff]
        %v4730 = vld [vmem:[%s453 + $0x3b8] sm:$0xff]
        %v4731 = vld [vmem:[%s453 + $0x3c0] sm:$0xff]
        %v4732 = vld [vmem:[%s453 + $0x3c8] sm:$0xff]
        %v4733 = vld [vmem:[%s453 + $0x3d0] sm:$0xff]
        %v4734 = vld [vmem:[%s453 + $0x3d8] sm:$0xff]
        %v4735 = vld [vmem:[%s453 + $0x3e0] sm:$0xff]
        %v4736 = vld [vmem:[%s453 + $0x3e8] sm:$0xff]
        %v4737 = vld [vmem:[%s453 + $0x3f0] sm:$0xff]
        %v4738 = vld [vmem:[%s453 + $0x3f8] sm:$0xff]
        %v4739 = vld [vmem:[%s453 + $0x400] sm:$0xff]
        %v4740 = vld [vmem:[%s453 + $0x408] sm:$0xff]
        %v4741 = vld [vmem:[%s453 + $0x410] sm:$0xff]
        %v4742 = vld [vmem:[%s453 + $0x418] sm:$0xff]
        %v4743 = vld [vmem:[%s453 + $0x420] sm:$0xff]
        %v4744 = vld [vmem:[%s453 + $0x428] sm:$0xff]
        %v4745 = vld [vmem:[%s453 + $0x430] sm:$0xff]
        %v4746 = vld [vmem:[%s453 + $0x438] sm:$0xff]
        %v4747 = vld [vmem:[%s453 + $0x440] sm:$0xff]
        %v4748 = vld [vmem:[%s453 + $0x448] sm:$0xff]
        %v4749 = vld [vmem:[%s453 + $0x450] sm:$0xff]
        %v4750 = vld [vmem:[%s453 + $0x458] sm:$0xff]
        %v4751 = vld [vmem:[%s453 + $0x460] sm:$0xff]
        %v4752 = vld [vmem:[%s453 + $0x468] sm:$0xff]
        %v4753 = vld [vmem:[%s453 + $0x470] sm:$0xff]
        %v4754 = vld [vmem:[%s453 + $0x478] sm:$0xff]
        %v4755 = vld [vmem:[%s453 + $0x480] sm:$0xff]
        %v4756 = vld [vmem:[%s453 + $0x488] sm:$0xff]
        %v4757 = vld [vmem:[%s453 + $0x490] sm:$0xff]
        %v4758 = vld [vmem:[%s453 + $0x498] sm:$0xff]
        %v4759 = vld [vmem:[%s453 + $0x4a0] sm:$0xff]
        %v4760 = vld [vmem:[%s453 + $0x4a8] sm:$0xff]
        %v4761 = vld [vmem:[%s453 + $0x4b0] sm:$0xff]
        %v4762 = vld [vmem:[%s453 + $0x4b8] sm:$0xff]
        %v4763 = vld [vmem:[%s453 + $0x4c0] sm:$0xff]
        %v4764 = vld [vmem:[%s453 + $0x4c8] sm:$0xff]
        %v4765 = vld [vmem:[%s453 + $0x4d0] sm:$0xff]
        %v4766 = vld [vmem:[%s453 + $0x4d8] sm:$0xff]
        %v4767 = vld [vmem:[%s453 + $0x4e0] sm:$0xff]
        %v4768 = vld [vmem:[%s453 + $0x4e8] sm:$0xff]
        %v4769 = vld [vmem:[%s453 + $0x4f0] sm:$0xff]
        %v4770 = vld [vmem:[%s453 + $0x4f8] sm:$0xff]
        %v4771 = vld [vmem:[%s453 + $0x500] sm:$0xff]
        %v4772 = vld [vmem:[%s453 + $0x508] sm:$0xff]
        %v4773 = vld [vmem:[%s453 + $0x510] sm:$0xff]
        %v4774 = vld [vmem:[%s453 + $0x518] sm:$0xff]
        %v4775 = vld [vmem:[%s453 + $0x520] sm:$0xff]
        %v4776 = vld [vmem:[%s453 + $0x528] sm:$0xff]
        %v4777 = vld [vmem:[%s453 + $0x530] sm:$0xff]
        %v4778 = vld [vmem:[%s453 + $0x538] sm:$0xff]
        %v4779 = vld [vmem:[%s453 + $0x540] sm:$0xff]
        %v4780 = vld [vmem:[%s453 + $0x548] sm:$0xff]
        %v4781 = vld [vmem:[%s453 + $0x550] sm:$0xff]
        %v4782 = vld [vmem:[%s453 + $0x558] sm:$0xff]
        %v4783 = vld [vmem:[%s453 + $0x560] sm:$0xff]
        %v4784 = vld [vmem:[%s453 + $0x568] sm:$0xff]
        %v4785 = vld [vmem:[%s453 + $0x570] sm:$0xff]
        %v4786 = vld [vmem:[%s453 + $0x578] sm:$0xff]
        %v4787 = vld [vmem:[%s453 + $0x580] sm:$0xff]
        %v4788 = vld [vmem:[%s453 + $0x588] sm:$0xff]
        %v4789 = vld [vmem:[%s453 + $0x590] sm:$0xff]
        %v4790 = vld [vmem:[%s453 + $0x598] sm:$0xff]
        %v4791 = vld [vmem:[%s453 + $0x5a0] sm:$0xff]
        %v4792 = vld [vmem:[%s453 + $0x5a8] sm:$0xff]
        %v4793 = vld [vmem:[%s453 + $0x5b0] sm:$0xff]
        %v4794 = vld [vmem:[%s453 + $0x5b8] sm:$0xff]
        %v4795 = vld [vmem:[%s453 + $0x5c0] sm:$0xff]
        %v4796 = vld [vmem:[%s453 + $0x5c8] sm:$0xff]
        %v4797 = vld [vmem:[%s453 + $0x5d0] sm:$0xff]
        %v4798 = vld [vmem:[%s453 + $0x5d8] sm:$0xff]
        %v4799 = vld [vmem:[%s453 + $0x5e0] sm:$0xff]
        %v4800 = vld [vmem:[%s453 + $0x5e8] sm:$0xff]
        %v4801 = vld [vmem:[%s453 + $0x5f0] sm:$0xff]
        %v4802 = vld [vmem:[%s453 + $0x5f8] sm:$0xff]
        %v4803 = vld [vmem:[%s453 + $0x600] sm:$0xff]
        %v4804 = vld [vmem:[%s453 + $0x608] sm:$0xff]
        %v4805 = vld [vmem:[%s453 + $0x610] sm:$0xff]
        %v4806 = vld [vmem:[%s453 + $0x618] sm:$0xff]
        %v4807 = vld [vmem:[%s453 + $0x620] sm:$0xff]
        %v4808 = vld [vmem:[%s453 + $0x628] sm:$0xff]
        %v4809 = vld [vmem:[%s453 + $0x630] sm:$0xff]
        %v4810 = vld [vmem:[%s453 + $0x638] sm:$0xff]
        %v4811 = vld [vmem:[%s453 + $0x640] sm:$0xff]
        %v4812 = vld [vmem:[%s453 + $0x648] sm:$0xff]
        %v4813 = vld [vmem:[%s453 + $0x650] sm:$0xff]
        %v4814 = vld [vmem:[%s453 + $0x658] sm:$0xff]
        %v4815 = vld [vmem:[%s453 + $0x660] sm:$0xff]
        %v4816 = vld [vmem:[%s453 + $0x668] sm:$0xff]
        %v4817 = vld [vmem:[%s453 + $0x670] sm:$0xff]
        %v4818 = vld [vmem:[%s453 + $0x678] sm:$0xff]
        %v4819 = vld [vmem:[%s453 + $0x680] sm:$0xff]
        %v4820 = vld [vmem:[%s453 + $0x688] sm:$0xff]
        %v4821 = vld [vmem:[%s453 + $0x690] sm:$0xff]
        %v4822 = vld [vmem:[%s453 + $0x698] sm:$0xff]
        %v4823 = vld [vmem:[%s453 + $0x6a0] sm:$0xff]
        %v4824 = vld [vmem:[%s453 + $0x6a8] sm:$0xff]
        %v4825 = vld [vmem:[%s453 + $0x6b0] sm:$0xff]
        %v4826 = vld [vmem:[%s453 + $0x6b8] sm:$0xff]
        %v4827 = vld [vmem:[%s453 + $0x6c0] sm:$0xff]
        %v4828 = vld [vmem:[%s453 + $0x6c8] sm:$0xff]
        %v4829 = vld [vmem:[%s453 + $0x6d0] sm:$0xff]
        %v4830 = vld [vmem:[%s453 + $0x6d8] sm:$0xff]
        %v4831 = vld [vmem:[%s453 + $0x6e0] sm:$0xff]
        %v4832 = vld [vmem:[%s453 + $0x6e8] sm:$0xff]
        %v4833 = vld [vmem:[%s453 + $0x6f0] sm:$0xff]
        %v4834 = vld [vmem:[%s453 + $0x6f8] sm:$0xff]
        %v4835 = vld [vmem:[%s453 + $0x700] sm:$0xff]
        %v4836 = vld [vmem:[%s453 + $0x708] sm:$0xff]
        %v4837 = vld [vmem:[%s453 + $0x710] sm:$0xff]
        %v4838 = vld [vmem:[%s453 + $0x718] sm:$0xff]
        %v4839 = vld [vmem:[%s453 + $0x720] sm:$0xff]
        %v4840 = vld [vmem:[%s453 + $0x728] sm:$0xff]
        %v4841 = vld [vmem:[%s453 + $0x730] sm:$0xff]
        %v4842 = vld [vmem:[%s453 + $0x738] sm:$0xff]
        %v4843 = vld [vmem:[%s453 + $0x740] sm:$0xff]
        %v4844 = vld [vmem:[%s453 + $0x748] sm:$0xff]
        %v4845 = vld [vmem:[%s453 + $0x750] sm:$0xff]
        %v4846 = vld [vmem:[%s453 + $0x758] sm:$0xff]
        %v4847 = vld [vmem:[%s453 + $0x760] sm:$0xff]
        %v4848 = vld [vmem:[%s453 + $0x768] sm:$0xff]
        %v4849 = vld [vmem:[%s453 + $0x770] sm:$0xff]
        %v4850 = vld [vmem:[%s453 + $0x778] sm:$0xff]
        %v4851 = vld [vmem:[%s453 + $0x780] sm:$0xff]
        %v4852 = vld [vmem:[%s453 + $0x788] sm:$0xff]
        %v4853 = vld [vmem:[%s453 + $0x790] sm:$0xff]
        %v4854 = vld [vmem:[%s453 + $0x798] sm:$0xff]
        %v4855 = vld [vmem:[%s453 + $0x7a0] sm:$0xff]
        %v4856 = vld [vmem:[%s453 + $0x7a8] sm:$0xff]
        %v4857 = vld [vmem:[%s453 + $0x7b0] sm:$0xff]
        %v4858 = vld [vmem:[%s453 + $0x7b8] sm:$0xff]
        %v4859 = vld [vmem:[%s453 + $0x7c0] sm:$0xff]
        %v4860 = vld [vmem:[%s453 + $0x7c8] sm:$0xff]
        %v4861 = vld [vmem:[%s453 + $0x7d0] sm:$0xff]
        %v4862 = vld [vmem:[%s453 + $0x7d8] sm:$0xff]
        %v4863 = vld [vmem:[%s453 + $0x7e0] sm:$0xff]
        %v4864 = vld [vmem:[%s453 + $0x7e8] sm:$0xff]
        %v4865 = vld [vmem:[%s453 + $0x7f0] sm:$0xff]
        %v4866 = vld [vmem:[%s453 + $0x7f8] sm:$0xff]
        %v4867 = vld [vmem:[%s453 + $0x800] sm:$0xff]
        %v4868 = vld [vmem:[%s453 + $0x808] sm:$0xff]
        %v4869 = vld [vmem:[%s453 + $0x810] sm:$0xff]
        %v4870 = vld [vmem:[%s453 + $0x818] sm:$0xff]
        %v4871 = vld [vmem:[%s453 + $0x820] sm:$0xff]
        %v4872 = vld [vmem:[%s453 + $0x828] sm:$0xff]
        %v4873 = vld [vmem:[%s453 + $0x830] sm:$0xff]
        %v4874 = vld [vmem:[%s453 + $0x838] sm:$0xff]
        %v4875 = vld [vmem:[%s453 + $0x840] sm:$0xff]
        %v4876 = vld [vmem:[%s453 + $0x848] sm:$0xff]
        %v4877 = vld [vmem:[%s453 + $0x850] sm:$0xff]
        %v4878 = vld [vmem:[%s453 + $0x858] sm:$0xff]
        %v4879 = vld [vmem:[%s453 + $0x860] sm:$0xff]
        %v4880 = vld [vmem:[%s453 + $0x868] sm:$0xff]
        %v4881 = vld [vmem:[%s453 + $0x870] sm:$0xff]
        %v4882 = vld [vmem:[%s453 + $0x878] sm:$0xff]
        %v4883 = vld [vmem:[%s453 + $0x880] sm:$0xff]
        %v4884 = vld [vmem:[%s453 + $0x888] sm:$0xff]
        %v4885 = vld [vmem:[%s453 + $0x890] sm:$0xff]
        %v4886 = vld [vmem:[%s453 + $0x898] sm:$0xff]
        %v4887 = vld [vmem:[%s453 + $0x8a0] sm:$0xff]
        %v4888 = vld [vmem:[%s453 + $0x8a8] sm:$0xff]
        %v4889 = vld [vmem:[%s453 + $0x8b0] sm:$0xff]
        %v4890 = vld [vmem:[%s453 + $0x8b8] sm:$0xff]
        %v4891 = vld [vmem:[%s453 + $0x8c0] sm:$0xff]
        %v4892 = vld [vmem:[%s453 + $0x8c8] sm:$0xff]
        %v4893 = vld [vmem:[%s453 + $0x8d0] sm:$0xff]
        %v4894 = vld [vmem:[%s453 + $0x8d8] sm:$0xff]
        %v4895 = vld [vmem:[%s453 + $0x8e0] sm:$0xff]
        %v4896 = vld [vmem:[%s453 + $0x8e8] sm:$0xff]
        %v4897 = vld [vmem:[%s453 + $0x8f0] sm:$0xff]
        %v4898 = vld [vmem:[%s453 + $0x8f8] sm:$0xff]
        %v4899 = vld [vmem:[%s453 + $0x900] sm:$0xff]
        %v4900 = vld [vmem:[%s453 + $0x908] sm:$0xff]
        %v4901 = vld [vmem:[%s453 + $0x910] sm:$0xff]
        %v4902 = vld [vmem:[%s453 + $0x918] sm:$0xff]
        %v4903 = vld [vmem:[%s453 + $0x920] sm:$0xff]
        %v4904 = vld [vmem:[%s453 + $0x928] sm:$0xff]
        %v4905 = vld [vmem:[%s453 + $0x930] sm:$0xff]
        %v4906 = vld [vmem:[%s453 + $0x938] sm:$0xff]
        %v4907 = vld [vmem:[%s453 + $0x940] sm:$0xff]
        %v4908 = vld [vmem:[%s453 + $0x948] sm:$0xff]
        %v4909 = vld [vmem:[%s453 + $0x950] sm:$0xff]
        %v4910 = vld [vmem:[%s453 + $0x958] sm:$0xff]
        %v4911 = vld [vmem:[%s453 + $0x960] sm:$0xff]
        %v4912 = vld [vmem:[%s453 + $0x968] sm:$0xff]
        %v4913 = vld [vmem:[%s453 + $0x970] sm:$0xff]
        %v4914 = vld [vmem:[%s453 + $0x978] sm:$0xff]
        %v4915 = vld [vmem:[%s453 + $0x980] sm:$0xff]
        %v4916 = vld [vmem:[%s453 + $0x988] sm:$0xff]
        %v4917 = vld [vmem:[%s453 + $0x990] sm:$0xff]
        %v4918 = vld [vmem:[%s453 + $0x998] sm:$0xff]
        %v4919 = vld [vmem:[%s453 + $0x9a0] sm:$0xff]
        %v4920 = vld [vmem:[%s453 + $0x9a8] sm:$0xff]
        %v4921 = vld [vmem:[%s453 + $0x9b0] sm:$0xff]
        %v4922 = vld [vmem:[%s453 + $0x9b8] sm:$0xff]
        %v4923 = vld [vmem:[%s453 + $0x9c0] sm:$0xff]
        %v4924 = vld [vmem:[%s453 + $0x9c8] sm:$0xff]
        %v4925 = vld [vmem:[%s453 + $0x9d0] sm:$0xff]
        %v4926 = vld [vmem:[%s453 + $0x9d8] sm:$0xff]
        %v4927 = vld [vmem:[%s453 + $0x9e0] sm:$0xff]
        %v4928 = vld [vmem:[%s453 + $0x9e8] sm:$0xff]
        %v4929 = vld [vmem:[%s453 + $0x9f0] sm:$0xff]
        %v4930 = vld [vmem:[%s453 + $0x9f8] sm:$0xff]
        %v4931 = vld [vmem:[%s453 + $0xa00] sm:$0xff]
        %v4932 = vld [vmem:[%s453 + $0xa08] sm:$0xff]
        %v4933 = vld [vmem:[%s453 + $0xa10] sm:$0xff]
        %v4934 = vld [vmem:[%s453 + $0xa18] sm:$0xff]
        %v4935 = vld [vmem:[%s453 + $0xa20] sm:$0xff]
        %v4936 = vld [vmem:[%s453 + $0xa28] sm:$0xff]
        %v4937 = vld [vmem:[%s453 + $0xa30] sm:$0xff]
        %v4938 = vld [vmem:[%s453 + $0xa38] sm:$0xff]
        %v4939 = vld [vmem:[%s453 + $0xa40] sm:$0xff]
        %v4940 = vld [vmem:[%s453 + $0xa48] sm:$0xff]
        %v4941 = vld [vmem:[%s453 + $0xa50] sm:$0xff]
        %v4942 = vld [vmem:[%s453 + $0xa58] sm:$0xff]
        %v4943 = vld [vmem:[%s453 + $0xa60] sm:$0xff]
        %v4944 = vld [vmem:[%s453 + $0xa68] sm:$0xff]
        %v4945 = vld [vmem:[%s453 + $0xa70] sm:$0xff]
        %v4946 = vld [vmem:[%s453 + $0xa78] sm:$0xff]
        %v4947 = vld [vmem:[%s453 + $0xa80] sm:$0xff]
        %v4948 = vld [vmem:[%s453 + $0xa88] sm:$0xff]
        %v4949 = vld [vmem:[%s453 + $0xa90] sm:$0xff]
        %v4950 = vld [vmem:[%s453 + $0xa98] sm:$0xff]
        %v4951 = vld [vmem:[%s453 + $0xaa0] sm:$0xff]
        %v4952 = vld [vmem:[%s453 + $0xaa8] sm:$0xff]
        %v4953 = vld [vmem:[%s453 + $0xab0] sm:$0xff]
        %v4954 = vld [vmem:[%s453 + $0xab8] sm:$0xff]
        %v4955 = vld [vmem:[%s453 + $0xac0] sm:$0xff]
        %v4956 = vld [vmem:[%s453 + $0xac8] sm:$0xff]
        %v4957 = vld [vmem:[%s453 + $0xad0] sm:$0xff]
        %v4958 = vld [vmem:[%s453 + $0xad8] sm:$0xff]
        %v4959 = vld [vmem:[%s453 + $0xae0] sm:$0xff]
        %v4960 = vld [vmem:[%s453 + $0xae8] sm:$0xff]
        %v4961 = vld [vmem:[%s453 + $0xaf0] sm:$0xff]
        %v4962 = vld [vmem:[%s453 + $0xaf8] sm:$0xff]
        %v4963 = vld [vmem:[%s453 + $0xb00] sm:$0xff]
        %v4964 = vld [vmem:[%s453 + $0xb08] sm:$0xff]
        %v4965 = vld [vmem:[%s453 + $0xb10] sm:$0xff]
        %v4966 = vld [vmem:[%s453 + $0xb18] sm:$0xff]
        %v4967 = vld [vmem:[%s453 + $0xb20] sm:$0xff]
        %v4968 = vld [vmem:[%s453 + $0xb28] sm:$0xff]
        %v4969 = vld [vmem:[%s453 + $0xb30] sm:$0xff]
        %v4970 = vld [vmem:[%s453 + $0xb38] sm:$0xff]
        %v4971 = vld [vmem:[%s453 + $0xb40] sm:$0xff]
        %v4972 = vld [vmem:[%s453 + $0xb48] sm:$0xff]
        %v4973 = vld [vmem:[%s453 + $0xb50] sm:$0xff]
        %v4974 = vld [vmem:[%s453 + $0xb58] sm:$0xff]
        %v4975 = vld [vmem:[%s453 + $0xb60] sm:$0xff]
        %v4976 = vld [vmem:[%s453 + $0xb68] sm:$0xff]
        %v4977 = vld [vmem:[%s453 + $0xb70] sm:$0xff]
        %v4978 = vld [vmem:[%s453 + $0xb78] sm:$0xff]
        %v4979 = vld [vmem:[%s453 + $0xb80] sm:$0xff]
        %v4980 = vld [vmem:[%s453 + $0xb88] sm:$0xff]
        %v4981 = vld [vmem:[%s453 + $0xb90] sm:$0xff]
        %v4982 = vld [vmem:[%s453 + $0xb98] sm:$0xff]
        %v4983 = vld [vmem:[%s453 + $0xba0] sm:$0xff]
        %v4984 = vld [vmem:[%s453 + $0xba8] sm:$0xff]
        %v4985 = vld [vmem:[%s453 + $0xbb0] sm:$0xff]
        %v4986 = vld [vmem:[%s453 + $0xbb8] sm:$0xff]
        %v4987 = vld [vmem:[%s453 + $0xbc0] sm:$0xff]
        %v4988 = vld [vmem:[%s453 + $0xbc8] sm:$0xff]
        %v4989 = vld [vmem:[%s453 + $0xbd0] sm:$0xff]
        %v4990 = vld [vmem:[%s453 + $0xbd8] sm:$0xff]
        %v4991 = vld [vmem:[%s453 + $0xbe0] sm:$0xff]
        %v4992 = vld [vmem:[%s453 + $0xbe8] sm:$0xff]
        %v4993 = vld [vmem:[%s453 + $0xbf0] sm:$0xff]
        %v4994 = vld [vmem:[%s453 + $0xbf8] sm:$0xff]
        %v4995 = vld [vmem:[%s453 + $0xc00] sm:$0xff]
        %v4996 = vld [vmem:[%s453 + $0xc08] sm:$0xff]
        %v4997 = vld [vmem:[%s453 + $0xc10] sm:$0xff]
        %v4998 = vld [vmem:[%s453 + $0xc18] sm:$0xff]
        %v4999 = vld [vmem:[%s453 + $0xc20] sm:$0xff]
        %v5000 = vld [vmem:[%s453 + $0xc28] sm:$0xff]
        %v5001 = vld [vmem:[%s453 + $0xc30] sm:$0xff]
        %v5002 = vld [vmem:[%s453 + $0xc38] sm:$0xff]
        %v5003 = vld [vmem:[%s453 + $0xc40] sm:$0xff]
        %v5004 = vld [vmem:[%s453 + $0xc48] sm:$0xff]
        %v5005 = vld [vmem:[%s453 + $0xc50] sm:$0xff]
        %v5006 = vld [vmem:[%s453 + $0xc58] sm:$0xff]
        %v5007 = vld [vmem:[%s453 + $0xc60] sm:$0xff]
        %v5008 = vld [vmem:[%s453 + $0xc68] sm:$0xff]
        %v5009 = vld [vmem:[%s453 + $0xc70] sm:$0xff]
        %v5010 = vld [vmem:[%s453 + $0xc78] sm:$0xff]
        %v5011 = vld [vmem:[%s453 + $0xc80] sm:$0xff]
        %v5012 = vld [vmem:[%s453 + $0xc88] sm:$0xff]
        %v5013 = vld [vmem:[%s453 + $0xc90] sm:$0xff]
        %v5014 = vld [vmem:[%s453 + $0xc98] sm:$0xff]
        %v5015 = vld [vmem:[%s453 + $0xca0] sm:$0xff]
        %v5016 = vld [vmem:[%s453 + $0xca8] sm:$0xff]
        %v5017 = vld [vmem:[%s453 + $0xcb0] sm:$0xff]
        %v5018 = vld [vmem:[%s453 + $0xcb8] sm:$0xff]
        %v5019 = vld [vmem:[%s453 + $0xcc0] sm:$0xff]
        %v5020 = vld [vmem:[%s453 + $0xcc8] sm:$0xff]
        %v5021 = vld [vmem:[%s453 + $0xcd0] sm:$0xff]
        %v5022 = vld [vmem:[%s453 + $0xcd8] sm:$0xff]
        %v5023 = vld [vmem:[%s453 + $0xce0] sm:$0xff]
        %v5024 = vld [vmem:[%s453 + $0xce8] sm:$0xff]
        %v5025 = vld [vmem:[%s453 + $0xcf0] sm:$0xff]
        %v5026 = vld [vmem:[%s453 + $0xcf8] sm:$0xff]
        %v5027 = vld [vmem:[%s453 + $0xd00] sm:$0xff]
        %v5028 = vld [vmem:[%s453 + $0xd08] sm:$0xff]
        %v5029 = vld [vmem:[%s453 + $0xd10] sm:$0xff]
        %v5030 = vld [vmem:[%s453 + $0xd18] sm:$0xff]
        %v5031 = vld [vmem:[%s453 + $0xd20] sm:$0xff]
        %v5032 = vld [vmem:[%s453 + $0xd28] sm:$0xff]
        %v5033 = vld [vmem:[%s453 + $0xd30] sm:$0xff]
        %v5034 = vld [vmem:[%s453 + $0xd38] sm:$0xff]
        %v5035 = vld [vmem:[%s453 + $0xd40] sm:$0xff]
        %v5036 = vld [vmem:[%s453 + $0xd48] sm:$0xff]
        %v5037 = vld [vmem:[%s453 + $0xd50] sm:$0xff]
        %v5038 = vld [vmem:[%s453 + $0xd58] sm:$0xff]
        %v5039 = vld [vmem:[%s453 + $0xd60] sm:$0xff]
        %v5040 = vld [vmem:[%s453 + $0xd68] sm:$0xff]
        %v5041 = vld [vmem:[%s453 + $0xd70] sm:$0xff]
        %v5042 = vld [vmem:[%s453 + $0xd78] sm:$0xff]
        %v5043 = vld [vmem:[%s453 + $0xd80] sm:$0xff]
        %v5044 = vld [vmem:[%s453 + $0xd88] sm:$0xff]
        %v5045 = vld [vmem:[%s453 + $0xd90] sm:$0xff]
        %v5046 = vld [vmem:[%s453 + $0xd98] sm:$0xff]
        %v5047 = vld [vmem:[%s453 + $0xda0] sm:$0xff]
        %v5048 = vld [vmem:[%s453 + $0xda8] sm:$0xff]
        %v5049 = vld [vmem:[%s453 + $0xdb0] sm:$0xff]
        %v5050 = vld [vmem:[%s453 + $0xdb8] sm:$0xff]
        %v5051 = vld [vmem:[%s453 + $0xdc0] sm:$0xff]
        %v5052 = vld [vmem:[%s453 + $0xdc8] sm:$0xff]
        %v5053 = vld [vmem:[%s453 + $0xdd0] sm:$0xff]
        %v5054 = vld [vmem:[%s453 + $0xdd8] sm:$0xff]
        %v5055 = vld [vmem:[%s453 + $0xde0] sm:$0xff]
        %v5056 = vld [vmem:[%s453 + $0xde8] sm:$0xff]
        %v5057 = vld [vmem:[%s453 + $0xdf0] sm:$0xff]
        %v5058 = vld [vmem:[%s453 + $0xdf8] sm:$0xff]
        %v5059 = vld [vmem:[%s453 + $0xe00] sm:$0xff]
        %v5060 = vld [vmem:[%s453 + $0xe08] sm:$0xff]
        %v5061 = vld [vmem:[%s453 + $0xe10] sm:$0xff]
        %v5062 = vld [vmem:[%s453 + $0xe18] sm:$0xff]
        %v5063 = vld [vmem:[%s453 + $0xe20] sm:$0xff]
        %v5064 = vld [vmem:[%s453 + $0xe28] sm:$0xff]
        %v5065 = vld [vmem:[%s453 + $0xe30] sm:$0xff]
        %v5066 = vld [vmem:[%s453 + $0xe38] sm:$0xff]
        %v5067 = vld [vmem:[%s453 + $0xe40] sm:$0xff]
        %v5068 = vld [vmem:[%s453 + $0xe48] sm:$0xff]
        %v5069 = vld [vmem:[%s453 + $0xe50] sm:$0xff]
        %v5070 = vld [vmem:[%s453 + $0xe58] sm:$0xff]
        %v5071 = vld [vmem:[%s453 + $0xe60] sm:$0xff]
        %v5072 = vld [vmem:[%s453 + $0xe68] sm:$0xff]
        %v5073 = vld [vmem:[%s453 + $0xe70] sm:$0xff]
        %v5074 = vld [vmem:[%s453 + $0xe78] sm:$0xff]
        %v5075 = vld [vmem:[%s453 + $0xe80] sm:$0xff]
        %v5076 = vld [vmem:[%s453 + $0xe88] sm:$0xff]
        %v5077 = vld [vmem:[%s453 + $0xe90] sm:$0xff]
        %v5078 = vld [vmem:[%s453 + $0xe98] sm:$0xff]
        %v5079 = vld [vmem:[%s453 + $0xea0] sm:$0xff]
        %v5080 = vld [vmem:[%s453 + $0xea8] sm:$0xff]
        %v5081 = vld [vmem:[%s453 + $0xeb0] sm:$0xff]
        %v5082 = vld [vmem:[%s453 + $0xeb8] sm:$0xff]
        %v5083 = vld [vmem:[%s453 + $0xec0] sm:$0xff]
        %v5084 = vld [vmem:[%s453 + $0xec8] sm:$0xff]
        %v5085 = vld [vmem:[%s453 + $0xed0] sm:$0xff]
        %v5086 = vld [vmem:[%s453 + $0xed8] sm:$0xff]
        %v5087 = vld [vmem:[%s453 + $0xee0] sm:$0xff]
        %v5088 = vld [vmem:[%s453 + $0xee8] sm:$0xff]
        %v5089 = vld [vmem:[%s453 + $0xef0] sm:$0xff]
        %v5090 = vld [vmem:[%s453 + $0xef8] sm:$0xff]
        %v5091 = vld [vmem:[%s453 + $0xf00] sm:$0xff]
        %v5092 = vld [vmem:[%s453 + $0xf08] sm:$0xff]
        %v5093 = vld [vmem:[%s453 + $0xf10] sm:$0xff]
        %v5094 = vld [vmem:[%s453 + $0xf18] sm:$0xff]
        %v5095 = vld [vmem:[%s453 + $0xf20] sm:$0xff]
        %v5096 = vld [vmem:[%s453 + $0xf28] sm:$0xff]
        %v5097 = vld [vmem:[%s453 + $0xf30] sm:$0xff]
        %v5098 = vld [vmem:[%s453 + $0xf38] sm:$0xff]
        %v5099 = vld [vmem:[%s453 + $0xf40] sm:$0xff]
        %v5100 = vld [vmem:[%s453 + $0xf48] sm:$0xff]
        %v5101 = vld [vmem:[%s453 + $0xf50] sm:$0xff]
        %v5102 = vld [vmem:[%s453 + $0xf58] sm:$0xff]
        %v5103 = vld [vmem:[%s453 + $0xf60] sm:$0xff]
        %v5104 = vld [vmem:[%s453 + $0xf68] sm:$0xff]
        %v5105 = vld [vmem:[%s453 + $0xf70] sm:$0xff]
        %v5106 = vld [vmem:[%s453 + $0xf78] sm:$0xff]
        %v5107 = vld [vmem:[%s453 + $0xf80] sm:$0xff]
        %v5108 = vld [vmem:[%s453 + $0xf88] sm:$0xff]
        %v5109 = vld [vmem:[%s453 + $0xf90] sm:$0xff]
        %v5110 = vld [vmem:[%s453 + $0xf98] sm:$0xff]
        %v5111 = vld [vmem:[%s453 + $0xfa0] sm:$0xff]
        %v5112 = vld [vmem:[%s453 + $0xfa8] sm:$0xff]
        %v5113 = vld [vmem:[%s453 + $0xfb0] sm:$0xff]
        %v5114 = vld [vmem:[%s453 + $0xfb8] sm:$0xff]
        %v5115 = vld [vmem:[%s453 + $0xfc0] sm:$0xff]
        %v5116 = vld [vmem:[%s453 + $0xfc8] sm:$0xff]
        %v5117 = vld [vmem:[%s453 + $0xfd0] sm:$0xff]
        %v5118 = vld [vmem:[%s453 + $0xfd8] sm:$0xff]
        %v5119 = vld [vmem:[%s453 + $0xfe0] sm:$0xff]
        %v5120 = vld [vmem:[%s453 + $0xfe8] sm:$0xff]
        %v5121 = vld [vmem:[%s453 + $0xff0] sm:$0xff]
        %v5122 = vld [vmem:[%s453 + $0xff8] sm:$0xff]
        %v5123 = vmul.f32 %v4099, %v4611
        %v5124 = vmul.f32 %v4100, %v4612
        %v5125 = vmul.f32 %v4101, %v4613
        %v5126 = vmul.f32 %v4102, %v4614
        %v5127 = vmul.f32 %v4103, %v4615
        %v5128 = vmul.f32 %v4104, %v4616
        %v5129 = vmul.f32 %v4105, %v4617
        %v5130 = vmul.f32 %v4106, %v4618
        %v5131 = vmul.f32 %v4107, %v4619
        %v5132 = vmul.f32 %v4108, %v4620
        %v5133 = vmul.f32 %v4109, %v4621
        %v5134 = vmul.f32 %v4110, %v4622
        %v5135 = vmul.f32 %v4111, %v4623
        %v5136 = vmul.f32 %v4112, %v4624
        %v5137 = vmul.f32 %v4113, %v4625
        %v5138 = vmul.f32 %v4114, %v4626
        %v5139 = vmul.f32 %v4115, %v4627
        %v5140 = vmul.f32 %v4116, %v4628
        %v5141 = vmul.f32 %v4117, %v4629
        %v5142 = vmul.f32 %v4118, %v4630
        %v5143 = vmul.f32 %v4119, %v4631
        %v5144 = vmul.f32 %v4120, %v4632
        %v5145 = vmul.f32 %v4121, %v4633
        %v5146 = vmul.f32 %v4122, %v4634
        %v5147 = vmul.f32 %v4123, %v4635
        %v5148 = vmul.f32 %v4124, %v4636
        %v5149 = vmul.f32 %v4125, %v4637
        %v5150 = vmul.f32 %v4126, %v4638
        %v5151 = vmul.f32 %v4127, %v4639
        %v5152 = vmul.f32 %v4128, %v4640
        %v5153 = vmul.f32 %v4129, %v4641
        %v5154 = vmul.f32 %v4130, %v4642
        %v5155 = vmul.f32 %v4131, %v4643
        %v5156 = vmul.f32 %v4132, %v4644
        %v5157 = vmul.f32 %v4133, %v4645
        %v5158 = vmul.f32 %v4134, %v4646
        %v5159 = vmul.f32 %v4135, %v4647
        %v5160 = vmul.f32 %v4136, %v4648
        %v5161 = vmul.f32 %v4137, %v4649
        %v5162 = vmul.f32 %v4138, %v4650
        %v5163 = vmul.f32 %v4139, %v4651
        %v5164 = vmul.f32 %v4140, %v4652
        %v5165 = vmul.f32 %v4141, %v4653
        %v5166 = vmul.f32 %v4142, %v4654
        %v5167 = vmul.f32 %v4143, %v4655
        %v5168 = vmul.f32 %v4144, %v4656
        %v5169 = vmul.f32 %v4145, %v4657
        %v5170 = vmul.f32 %v4146, %v4658
        %v5171 = vmul.f32 %v4147, %v4659
        %v5172 = vmul.f32 %v4148, %v4660
        %v5173 = vmul.f32 %v4149, %v4661
        %v5174 = vmul.f32 %v4150, %v4662
        %v5175 = vmul.f32 %v4151, %v4663
        %v5176 = vmul.f32 %v4152, %v4664
        %v5177 = vmul.f32 %v4153, %v4665
        %v5178 = vmul.f32 %v4154, %v4666
        %v5179 = vmul.f32 %v4155, %v4667
        %v5180 = vmul.f32 %v4156, %v4668
        %v5181 = vmul.f32 %v4157, %v4669
        %v5182 = vmul.f32 %v4158, %v4670
        %v5183 = vmul.f32 %v4159, %v4671
        %v5184 = vmul.f32 %v4160, %v4672
        %v5185 = vmul.f32 %v4161, %v4673
        %v5186 = vmul.f32 %v4162, %v4674
        %v5187 = vmul.f32 %v4163, %v4675
        %v5188 = vmul.f32 %v4164, %v4676
        %v5189 = vmul.f32 %v4165, %v4677
        %v5190 = vmul.f32 %v4166, %v4678
        %v5191 = vmul.f32 %v4167, %v4679
        %v5192 = vmul.f32 %v4168, %v4680
        %v5193 = vmul.f32 %v4169, %v4681
        %v5194 = vmul.f32 %v4170, %v4682
        %v5195 = vmul.f32 %v4171, %v4683
        %v5196 = vmul.f32 %v4172, %v4684
        %v5197 = vmul.f32 %v4173, %v4685
        %v5198 = vmul.f32 %v4174, %v4686
        %v5199 = vmul.f32 %v4175, %v4687
        %v5200 = vmul.f32 %v4176, %v4688
        %v5201 = vmul.f32 %v4177, %v4689
        %v5202 = vmul.f32 %v4178, %v4690
        %v5203 = vmul.f32 %v4179, %v4691
        %v5204 = vmul.f32 %v4180, %v4692
        %v5205 = vmul.f32 %v4181, %v4693
        %v5206 = vmul.f32 %v4182, %v4694
        %v5207 = vmul.f32 %v4183, %v4695
        %v5208 = vmul.f32 %v4184, %v4696
        %v5209 = vmul.f32 %v4185, %v4697
        %v5210 = vmul.f32 %v4186, %v4698
        %v5211 = vmul.f32 %v4187, %v4699
        %v5212 = vmul.f32 %v4188, %v4700
        %v5213 = vmul.f32 %v4189, %v4701
        %v5214 = vmul.f32 %v4190, %v4702
        %v5215 = vmul.f32 %v4191, %v4703
        %v5216 = vmul.f32 %v4192, %v4704
        %v5217 = vmul.f32 %v4193, %v4705
        %v5218 = vmul.f32 %v4194, %v4706
        %v5219 = vmul.f32 %v4195, %v4707
        %v5220 = vmul.f32 %v4196, %v4708
        %v5221 = vmul.f32 %v4197, %v4709
        %v5222 = vmul.f32 %v4198, %v4710
        %v5223 = vmul.f32 %v4199, %v4711
        %v5224 = vmul.f32 %v4200, %v4712
        %v5225 = vmul.f32 %v4201, %v4713
        %v5226 = vmul.f32 %v4202, %v4714
        %v5227 = vmul.f32 %v4203, %v4715
        %v5228 = vmul.f32 %v4204, %v4716
        %v5229 = vmul.f32 %v4205, %v4717
        %v5230 = vmul.f32 %v4206, %v4718
        %v5231 = vmul.f32 %v4207, %v4719
        %v5232 = vmul.f32 %v4208, %v4720
        %v5233 = vmul.f32 %v4209, %v4721
        %v5234 = vmul.f32 %v4210, %v4722
        %v5235 = vmul.f32 %v4211, %v4723
        %v5236 = vmul.f32 %v4212, %v4724
        %v5237 = vmul.f32 %v4213, %v4725
        %v5238 = vmul.f32 %v4214, %v4726
        %v5239 = vmul.f32 %v4215, %v4727
        %v5240 = vmul.f32 %v4216, %v4728
        %v5241 = vmul.f32 %v4217, %v4729
        %v5242 = vmul.f32 %v4218, %v4730
        %v5243 = vmul.f32 %v4219, %v4731
        %v5244 = vmul.f32 %v4220, %v4732
        %v5245 = vmul.f32 %v4221, %v4733
        %v5246 = vmul.f32 %v4222, %v4734
        %v5247 = vmul.f32 %v4223, %v4735
        %v5248 = vmul.f32 %v4224, %v4736
        %v5249 = vmul.f32 %v4225, %v4737
        %v5250 = vmul.f32 %v4226, %v4738
        %v5251 = vmul.f32 %v4227, %v4739
        %v5252 = vmul.f32 %v4228, %v4740
        %v5253 = vmul.f32 %v4229, %v4741
        %v5254 = vmul.f32 %v4230, %v4742
        %v5255 = vmul.f32 %v4231, %v4743
        %v5256 = vmul.f32 %v4232, %v4744
        %v5257 = vmul.f32 %v4233, %v4745
        %v5258 = vmul.f32 %v4234, %v4746
        %v5259 = vmul.f32 %v4235, %v4747
        %v5260 = vmul.f32 %v4236, %v4748
        %v5261 = vmul.f32 %v4237, %v4749
        %v5262 = vmul.f32 %v4238, %v4750
        %v5263 = vmul.f32 %v4239, %v4751
        %v5264 = vmul.f32 %v4240, %v4752
        %v5265 = vmul.f32 %v4241, %v4753
        %v5266 = vmul.f32 %v4242, %v4754
        %v5267 = vmul.f32 %v4243, %v4755
        %v5268 = vmul.f32 %v4244, %v4756
        %v5269 = vmul.f32 %v4245, %v4757
        %v5270 = vmul.f32 %v4246, %v4758
        %v5271 = vmul.f32 %v4247, %v4759
        %v5272 = vmul.f32 %v4248, %v4760
        %v5273 = vmul.f32 %v4249, %v4761
        %v5274 = vmul.f32 %v4250, %v4762
        %v5275 = vmul.f32 %v4251, %v4763
        %v5276 = vmul.f32 %v4252, %v4764
        %v5277 = vmul.f32 %v4253, %v4765
        %v5278 = vmul.f32 %v4254, %v4766
        %v5279 = vmul.f32 %v4255, %v4767
        %v5280 = vmul.f32 %v4256, %v4768
        %v5281 = vmul.f32 %v4257, %v4769
        %v5282 = vmul.f32 %v4258, %v4770
        %v5283 = vmul.f32 %v4259, %v4771
        %v5284 = vmul.f32 %v4260, %v4772
        %v5285 = vmul.f32 %v4261, %v4773
        %v5286 = vmul.f32 %v4262, %v4774
        %v5287 = vmul.f32 %v4263, %v4775
        %v5288 = vmul.f32 %v4264, %v4776
        %v5289 = vmul.f32 %v4265, %v4777
        %v5290 = vmul.f32 %v4266, %v4778
        %v5291 = vmul.f32 %v4267, %v4779
        %v5292 = vmul.f32 %v4268, %v4780
        %v5293 = vmul.f32 %v4269, %v4781
        %v5294 = vmul.f32 %v4270, %v4782
        %v5295 = vmul.f32 %v4271, %v4783
        %v5296 = vmul.f32 %v4272, %v4784
        %v5297 = vmul.f32 %v4273, %v4785
        %v5298 = vmul.f32 %v4274, %v4786
        %v5299 = vmul.f32 %v4275, %v4787
        %v5300 = vmul.f32 %v4276, %v4788
        %v5301 = vmul.f32 %v4277, %v4789
        %v5302 = vmul.f32 %v4278, %v4790
        %v5303 = vmul.f32 %v4279, %v4791
        %v5304 = vmul.f32 %v4280, %v4792
        %v5305 = vmul.f32 %v4281, %v4793
        %v5306 = vmul.f32 %v4282, %v4794
        %v5307 = vmul.f32 %v4283, %v4795
        %v5308 = vmul.f32 %v4284, %v4796
        %v5309 = vmul.f32 %v4285, %v4797
        %v5310 = vmul.f32 %v4286, %v4798
        %v5311 = vmul.f32 %v4287, %v4799
        %v5312 = vmul.f32 %v4288, %v4800
        %v5313 = vmul.f32 %v4289, %v4801
        %v5314 = vmul.f32 %v4290, %v4802
        %v5315 = vmul.f32 %v4291, %v4803
        %v5316 = vmul.f32 %v4292, %v4804
        %v5317 = vmul.f32 %v4293, %v4805
        %v5318 = vmul.f32 %v4294, %v4806
        %v5319 = vmul.f32 %v4295, %v4807
        %v5320 = vmul.f32 %v4296, %v4808
        %v5321 = vmul.f32 %v4297, %v4809
        %v5322 = vmul.f32 %v4298, %v4810
        %v5323 = vmul.f32 %v4299, %v4811
        %v5324 = vmul.f32 %v4300, %v4812
        %v5325 = vmul.f32 %v4301, %v4813
        %v5326 = vmul.f32 %v4302, %v4814
        %v5327 = vmul.f32 %v4303, %v4815
        %v5328 = vmul.f32 %v4304, %v4816
        %v5329 = vmul.f32 %v4305, %v4817
        %v5330 = vmul.f32 %v4306, %v4818
        %v5331 = vmul.f32 %v4307, %v4819
        %v5332 = vmul.f32 %v4308, %v4820
        %v5333 = vmul.f32 %v4309, %v4821
        %v5334 = vmul.f32 %v4310, %v4822
        %v5335 = vmul.f32 %v4311, %v4823
        %v5336 = vmul.f32 %v4312, %v4824
        %v5337 = vmul.f32 %v4313, %v4825
        %v5338 = vmul.f32 %v4314, %v4826
        %v5339 = vmul.f32 %v4315, %v4827
        %v5340 = vmul.f32 %v4316, %v4828
        %v5341 = vmul.f32 %v4317, %v4829
        %v5342 = vmul.f32 %v4318, %v4830
        %v5343 = vmul.f32 %v4319, %v4831
        %v5344 = vmul.f32 %v4320, %v4832
        %v5345 = vmul.f32 %v4321, %v4833
        %v5346 = vmul.f32 %v4322, %v4834
        %v5347 = vmul.f32 %v4323, %v4835
        %v5348 = vmul.f32 %v4324, %v4836
        %v5349 = vmul.f32 %v4325, %v4837
        %v5350 = vmul.f32 %v4326, %v4838
        %v5351 = vmul.f32 %v4327, %v4839
        %v5352 = vmul.f32 %v4328, %v4840
        %v5353 = vmul.f32 %v4329, %v4841
        %v5354 = vmul.f32 %v4330, %v4842
        %v5355 = vmul.f32 %v4331, %v4843
        %v5356 = vmul.f32 %v4332, %v4844
        %v5357 = vmul.f32 %v4333, %v4845
        %v5358 = vmul.f32 %v4334, %v4846
        %v5359 = vmul.f32 %v4335, %v4847
        %v5360 = vmul.f32 %v4336, %v4848
        %v5361 = vmul.f32 %v4337, %v4849
        %v5362 = vmul.f32 %v4338, %v4850
        %v5363 = vmul.f32 %v4339, %v4851
        %v5364 = vmul.f32 %v4340, %v4852
        %v5365 = vmul.f32 %v4341, %v4853
        %v5366 = vmul.f32 %v4342, %v4854
        %v5367 = vmul.f32 %v4343, %v4855
        %v5368 = vmul.f32 %v4344, %v4856
        %v5369 = vmul.f32 %v4345, %v4857
        %v5370 = vmul.f32 %v4346, %v4858
        %v5371 = vmul.f32 %v4347, %v4859
        %v5372 = vmul.f32 %v4348, %v4860
        %v5373 = vmul.f32 %v4349, %v4861
        %v5374 = vmul.f32 %v4350, %v4862
        %v5375 = vmul.f32 %v4351, %v4863
        %v5376 = vmul.f32 %v4352, %v4864
        %v5377 = vmul.f32 %v4353, %v4865
        %v5378 = vmul.f32 %v4354, %v4866
        %v5379 = vmul.f32 %v4355, %v4867
        %v5380 = vmul.f32 %v4356, %v4868
        %v5381 = vmul.f32 %v4357, %v4869
        %v5382 = vmul.f32 %v4358, %v4870
        %v5383 = vmul.f32 %v4359, %v4871
        %v5384 = vmul.f32 %v4360, %v4872
        %v5385 = vmul.f32 %v4361, %v4873
        %v5386 = vmul.f32 %v4362, %v4874
        %v5387 = vmul.f32 %v4363, %v4875
        %v5388 = vmul.f32 %v4364, %v4876
        %v5389 = vmul.f32 %v4365, %v4877
        %v5390 = vmul.f32 %v4366, %v4878
        %v5391 = vmul.f32 %v4367, %v4879
        %v5392 = vmul.f32 %v4368, %v4880
        %v5393 = vmul.f32 %v4369, %v4881
        %v5394 = vmul.f32 %v4370, %v4882
        %v5395 = vmul.f32 %v4371, %v4883
        %v5396 = vmul.f32 %v4372, %v4884
        %v5397 = vmul.f32 %v4373, %v4885
        %v5398 = vmul.f32 %v4374, %v4886
        %v5399 = vmul.f32 %v4375, %v4887
        %v5400 = vmul.f32 %v4376, %v4888
        %v5401 = vmul.f32 %v4377, %v4889
        %v5402 = vmul.f32 %v4378, %v4890
        %v5403 = vmul.f32 %v4379, %v4891
        %v5404 = vmul.f32 %v4380, %v4892
        %v5405 = vmul.f32 %v4381, %v4893
        %v5406 = vmul.f32 %v4382, %v4894
        %v5407 = vmul.f32 %v4383, %v4895
        %v5408 = vmul.f32 %v4384, %v4896
        %v5409 = vmul.f32 %v4385, %v4897
        %v5410 = vmul.f32 %v4386, %v4898
        %v5411 = vmul.f32 %v4387, %v4899
        %v5412 = vmul.f32 %v4388, %v4900
        %v5413 = vmul.f32 %v4389, %v4901
        %v5414 = vmul.f32 %v4390, %v4902
        %v5415 = vmul.f32 %v4391, %v4903
        %v5416 = vmul.f32 %v4392, %v4904
        %v5417 = vmul.f32 %v4393, %v4905
        %v5418 = vmul.f32 %v4394, %v4906
        %v5419 = vmul.f32 %v4395, %v4907
        %v5420 = vmul.f32 %v4396, %v4908
        %v5421 = vmul.f32 %v4397, %v4909
        %v5422 = vmul.f32 %v4398, %v4910
        %v5423 = vmul.f32 %v4399, %v4911
        %v5424 = vmul.f32 %v4400, %v4912
        %v5425 = vmul.f32 %v4401, %v4913
        %v5426 = vmul.f32 %v4402, %v4914
        %v5427 = vmul.f32 %v4403, %v4915
        %v5428 = vmul.f32 %v4404, %v4916
        %v5429 = vmul.f32 %v4405, %v4917
        %v5430 = vmul.f32 %v4406, %v4918
        %v5431 = vmul.f32 %v4407, %v4919
        %v5432 = vmul.f32 %v4408, %v4920
        %v5433 = vmul.f32 %v4409, %v4921
        %v5434 = vmul.f32 %v4410, %v4922
        %v5435 = vmul.f32 %v4411, %v4923
        %v5436 = vmul.f32 %v4412, %v4924
        %v5437 = vmul.f32 %v4413, %v4925
        %v5438 = vmul.f32 %v4414, %v4926
        %v5439 = vmul.f32 %v4415, %v4927
        %v5440 = vmul.f32 %v4416, %v4928
        %v5441 = vmul.f32 %v4417, %v4929
        %v5442 = vmul.f32 %v4418, %v4930
        %v5443 = vmul.f32 %v4419, %v4931
        %v5444 = vmul.f32 %v4420, %v4932
        %v5445 = vmul.f32 %v4421, %v4933
        %v5446 = vmul.f32 %v4422, %v4934
        %v5447 = vmul.f32 %v4423, %v4935
        %v5448 = vmul.f32 %v4424, %v4936
        %v5449 = vmul.f32 %v4425, %v4937
        %v5450 = vmul.f32 %v4426, %v4938
        %v5451 = vmul.f32 %v4427, %v4939
        %v5452 = vmul.f32 %v4428, %v4940
        %v5453 = vmul.f32 %v4429, %v4941
        %v5454 = vmul.f32 %v4430, %v4942
        %v5455 = vmul.f32 %v4431, %v4943
        %v5456 = vmul.f32 %v4432, %v4944
        %v5457 = vmul.f32 %v4433, %v4945
        %v5458 = vmul.f32 %v4434, %v4946
        %v5459 = vmul.f32 %v4435, %v4947
        %v5460 = vmul.f32 %v4436, %v4948
        %v5461 = vmul.f32 %v4437, %v4949
        %v5462 = vmul.f32 %v4438, %v4950
        %v5463 = vmul.f32 %v4439, %v4951
        %v5464 = vmul.f32 %v4440, %v4952
        %v5465 = vmul.f32 %v4441, %v4953
        %v5466 = vmul.f32 %v4442, %v4954
        %v5467 = vmul.f32 %v4443, %v4955
        %v5468 = vmul.f32 %v4444, %v4956
        %v5469 = vmul.f32 %v4445, %v4957
        %v5470 = vmul.f32 %v4446, %v4958
        %v5471 = vmul.f32 %v4447, %v4959
        %v5472 = vmul.f32 %v4448, %v4960
        %v5473 = vmul.f32 %v4449, %v4961
        %v5474 = vmul.f32 %v4450, %v4962
        %v5475 = vmul.f32 %v4451, %v4963
        %v5476 = vmul.f32 %v4452, %v4964
        %v5477 = vmul.f32 %v4453, %v4965
        %v5478 = vmul.f32 %v4454, %v4966
        %v5479 = vmul.f32 %v4455, %v4967
        %v5480 = vmul.f32 %v4456, %v4968
        %v5481 = vmul.f32 %v4457, %v4969
        %v5482 = vmul.f32 %v4458, %v4970
        %v5483 = vmul.f32 %v4459, %v4971
        %v5484 = vmul.f32 %v4460, %v4972
        %v5485 = vmul.f32 %v4461, %v4973
        %v5486 = vmul.f32 %v4462, %v4974
        %v5487 = vmul.f32 %v4463, %v4975
        %v5488 = vmul.f32 %v4464, %v4976
        %v5489 = vmul.f32 %v4465, %v4977
        %v5490 = vmul.f32 %v4466, %v4978
        %v5491 = vmul.f32 %v4467, %v4979
        %v5492 = vmul.f32 %v4468, %v4980
        %v5493 = vmul.f32 %v4469, %v4981
        %v5494 = vmul.f32 %v4470, %v4982
        %v5495 = vmul.f32 %v4471, %v4983
        %v5496 = vmul.f32 %v4472, %v4984
        %v5497 = vmul.f32 %v4473, %v4985
        %v5498 = vmul.f32 %v4474, %v4986
        %v5499 = vmul.f32 %v4475, %v4987
        %v5500 = vmul.f32 %v4476, %v4988
        %v5501 = vmul.f32 %v4477, %v4989
        %v5502 = vmul.f32 %v4478, %v4990
        %v5503 = vmul.f32 %v4479, %v4991
        %v5504 = vmul.f32 %v4480, %v4992
        %v5505 = vmul.f32 %v4481, %v4993
        %v5506 = vmul.f32 %v4482, %v4994
        %v5507 = vmul.f32 %v4483, %v4995
        %v5508 = vmul.f32 %v4484, %v4996
        %v5509 = vmul.f32 %v4485, %v4997
        %v5510 = vmul.f32 %v4486, %v4998
        %v5511 = vmul.f32 %v4487, %v4999
        %v5512 = vmul.f32 %v4488, %v5000
        %v5513 = vmul.f32 %v4489, %v5001
        %v5514 = vmul.f32 %v4490, %v5002
        %v5515 = vmul.f32 %v4491, %v5003
        %v5516 = vmul.f32 %v4492, %v5004
        %v5517 = vmul.f32 %v4493, %v5005
        %v5518 = vmul.f32 %v4494, %v5006
        %v5519 = vmul.f32 %v4495, %v5007
        %v5520 = vmul.f32 %v4496, %v5008
        %v5521 = vmul.f32 %v4497, %v5009
        %v5522 = vmul.f32 %v4498, %v5010
        %v5523 = vmul.f32 %v4499, %v5011
        %v5524 = vmul.f32 %v4500, %v5012
        %v5525 = vmul.f32 %v4501, %v5013
        %v5526 = vmul.f32 %v4502, %v5014
        %v5527 = vmul.f32 %v4503, %v5015
        %v5528 = vmul.f32 %v4504, %v5016
        %v5529 = vmul.f32 %v4505, %v5017
        %v5530 = vmul.f32 %v4506, %v5018
        %v5531 = vmul.f32 %v4507, %v5019
        %v5532 = vmul.f32 %v4508, %v5020
        %v5533 = vmul.f32 %v4509, %v5021
        %v5534 = vmul.f32 %v4510, %v5022
        %v5535 = vmul.f32 %v4511, %v5023
        %v5536 = vmul.f32 %v4512, %v5024
        %v5537 = vmul.f32 %v4513, %v5025
        %v5538 = vmul.f32 %v4514, %v5026
        %v5539 = vmul.f32 %v4515, %v5027
        %v5540 = vmul.f32 %v4516, %v5028
        %v5541 = vmul.f32 %v4517, %v5029
        %v5542 = vmul.f32 %v4518, %v5030
        %v5543 = vmul.f32 %v4519, %v5031
        %v5544 = vmul.f32 %v4520, %v5032
        %v5545 = vmul.f32 %v4521, %v5033
        %v5546 = vmul.f32 %v4522, %v5034
        %v5547 = vmul.f32 %v4523, %v5035
        %v5548 = vmul.f32 %v4524, %v5036
        %v5549 = vmul.f32 %v4525, %v5037
        %v5550 = vmul.f32 %v4526, %v5038
        %v5551 = vmul.f32 %v4527, %v5039
        %v5552 = vmul.f32 %v4528, %v5040
        %v5553 = vmul.f32 %v4529, %v5041
        %v5554 = vmul.f32 %v4530, %v5042
        %v5555 = vmul.f32 %v4531, %v5043
        %v5556 = vmul.f32 %v4532, %v5044
        %v5557 = vmul.f32 %v4533, %v5045
        %v5558 = vmul.f32 %v4534, %v5046
        %v5559 = vmul.f32 %v4535, %v5047
        %v5560 = vmul.f32 %v4536, %v5048
        %v5561 = vmul.f32 %v4537, %v5049
        %v5562 = vmul.f32 %v4538, %v5050
        %v5563 = vmul.f32 %v4539, %v5051
        %v5564 = vmul.f32 %v4540, %v5052
        %v5565 = vmul.f32 %v4541, %v5053
        %v5566 = vmul.f32 %v4542, %v5054
        %v5567 = vmul.f32 %v4543, %v5055
        %v5568 = vmul.f32 %v4544, %v5056
        %v5569 = vmul.f32 %v4545, %v5057
        %v5570 = vmul.f32 %v4546, %v5058
        %v5571 = vmul.f32 %v4547, %v5059
        %v5572 = vmul.f32 %v4548, %v5060
        %v5573 = vmul.f32 %v4549, %v5061
        %v5574 = vmul.f32 %v4550, %v5062
        %v5575 = vmul.f32 %v4551, %v5063
        %v5576 = vmul.f32 %v4552, %v5064
        %v5577 = vmul.f32 %v4553, %v5065
        %v5578 = vmul.f32 %v4554, %v5066
        %v5579 = vmul.f32 %v4555, %v5067
        %v5580 = vmul.f32 %v4556, %v5068
        %v5581 = vmul.f32 %v4557, %v5069
        %v5582 = vmul.f32 %v4558, %v5070
        %v5583 = vmul.f32 %v4559, %v5071
        %v5584 = vmul.f32 %v4560, %v5072
        %v5585 = vmul.f32 %v4561, %v5073
        %v5586 = vmul.f32 %v4562, %v5074
        %v5587 = vmul.f32 %v4563, %v5075
        %v5588 = vmul.f32 %v4564, %v5076
        %v5589 = vmul.f32 %v4565, %v5077
        %v5590 = vmul.f32 %v4566, %v5078
        %v5591 = vmul.f32 %v4567, %v5079
        %v5592 = vmul.f32 %v4568, %v5080
        %v5593 = vmul.f32 %v4569, %v5081
        %v5594 = vmul.f32 %v4570, %v5082
        %v5595 = vmul.f32 %v4571, %v5083
        %v5596 = vmul.f32 %v4572, %v5084
        %v5597 = vmul.f32 %v4573, %v5085
        %v5598 = vmul.f32 %v4574, %v5086
        %v5599 = vmul.f32 %v4575, %v5087
        %v5600 = vmul.f32 %v4576, %v5088
        %v5601 = vmul.f32 %v4577, %v5089
        %v5602 = vmul.f32 %v4578, %v5090
        %v5603 = vmul.f32 %v4579, %v5091
        %v5604 = vmul.f32 %v4580, %v5092
        %v5605 = vmul.f32 %v4581, %v5093
        %v5606 = vmul.f32 %v4582, %v5094
        %v5607 = vmul.f32 %v4583, %v5095
        %v5608 = vmul.f32 %v4584, %v5096
        %v5609 = vmul.f32 %v4585, %v5097
        %v5610 = vmul.f32 %v4586, %v5098
        %v5611 = vmul.f32 %v4587, %v5099
        %v5612 = vmul.f32 %v4588, %v5100
        %v5613 = vmul.f32 %v4589, %v5101
        %v5614 = vmul.f32 %v4590, %v5102
        %v5615 = vmul.f32 %v4591, %v5103
        %v5616 = vmul.f32 %v4592, %v5104
        %v5617 = vmul.f32 %v4593, %v5105
        %v5618 = vmul.f32 %v4594, %v5106
        %v5619 = vmul.f32 %v4595, %v5107
        %v5620 = vmul.f32 %v4596, %v5108
        %v5621 = vmul.f32 %v4597, %v5109
        %v5622 = vmul.f32 %v4598, %v5110
        %v5623 = vmul.f32 %v4599, %v5111
        %v5624 = vmul.f32 %v4600, %v5112
        %v5625 = vmul.f32 %v4601, %v5113
        %v5626 = vmul.f32 %v4602, %v5114
        %v5627 = vmul.f32 %v4603, %v5115
        %v5628 = vmul.f32 %v4604, %v5116
        %v5629 = vmul.f32 %v4605, %v5117
        %v5630 = vmul.f32 %v4606, %v5118
        %v5631 = vmul.f32 %v4607, %v5119
        %v5632 = vmul.f32 %v4608, %v5120
        %v5633 = vmul.f32 %v4609, %v5121
        %v5634 = vmul.f32 %v4610, %v5122
        %v5635 = vadd.f32 %v3587, %v5123
        %v5636 = vadd.f32 %v3588, %v5124
        %v5637 = vadd.f32 %v3589, %v5125
        %v5638 = vadd.f32 %v3590, %v5126
        %v5639 = vadd.f32 %v3591, %v5127
        %v5640 = vadd.f32 %v3592, %v5128
        %v5641 = vadd.f32 %v3593, %v5129
        %v5642 = vadd.f32 %v3594, %v5130
        %v5643 = vadd.f32 %v3595, %v5131
        %v5644 = vadd.f32 %v3596, %v5132
        %v5645 = vadd.f32 %v3597, %v5133
        %v5646 = vadd.f32 %v3598, %v5134
        %v5647 = vadd.f32 %v3599, %v5135
        %v5648 = vadd.f32 %v3600, %v5136
        %v5649 = vadd.f32 %v3601, %v5137
        %v5650 = vadd.f32 %v3602, %v5138
        %v5651 = vadd.f32 %v3603, %v5139
        %v5652 = vadd.f32 %v3604, %v5140
        %v5653 = vadd.f32 %v3605, %v5141
        %v5654 = vadd.f32 %v3606, %v5142
        %v5655 = vadd.f32 %v3607, %v5143
        %v5656 = vadd.f32 %v3608, %v5144
        %v5657 = vadd.f32 %v3609, %v5145
        %v5658 = vadd.f32 %v3610, %v5146
        %v5659 = vadd.f32 %v3611, %v5147
        %v5660 = vadd.f32 %v3612, %v5148
        %v5661 = vadd.f32 %v3613, %v5149
        %v5662 = vadd.f32 %v3614, %v5150
        %v5663 = vadd.f32 %v3615, %v5151
        %v5664 = vadd.f32 %v3616, %v5152
        %v5665 = vadd.f32 %v3617, %v5153
        %v5666 = vadd.f32 %v3618, %v5154
        %v5667 = vadd.f32 %v3619, %v5155
        %v5668 = vadd.f32 %v3620, %v5156
        %v5669 = vadd.f32 %v3621, %v5157
        %v5670 = vadd.f32 %v3622, %v5158
        %v5671 = vadd.f32 %v3623, %v5159
        %v5672 = vadd.f32 %v3624, %v5160
        %v5673 = vadd.f32 %v3625, %v5161
        %v5674 = vadd.f32 %v3626, %v5162
        %v5675 = vadd.f32 %v3627, %v5163
        %v5676 = vadd.f32 %v3628, %v5164
        %v5677 = vadd.f32 %v3629, %v5165
        %v5678 = vadd.f32 %v3630, %v5166
        %v5679 = vadd.f32 %v3631, %v5167
        %v5680 = vadd.f32 %v3632, %v5168
        %v5681 = vadd.f32 %v3633, %v5169
        %v5682 = vadd.f32 %v3634, %v5170
        %v5683 = vadd.f32 %v3635, %v5171
        %v5684 = vadd.f32 %v3636, %v5172
        %v5685 = vadd.f32 %v3637, %v5173
        %v5686 = vadd.f32 %v3638, %v5174
        %v5687 = vadd.f32 %v3639, %v5175
        %v5688 = vadd.f32 %v3640, %v5176
        %v5689 = vadd.f32 %v3641, %v5177
        %v5690 = vadd.f32 %v3642, %v5178
        %v5691 = vadd.f32 %v3643, %v5179
        %v5692 = vadd.f32 %v3644, %v5180
        %v5693 = vadd.f32 %v3645, %v5181
        %v5694 = vadd.f32 %v3646, %v5182
        %v5695 = vadd.f32 %v3647, %v5183
        %v5696 = vadd.f32 %v3648, %v5184
        %v5697 = vadd.f32 %v3649, %v5185
        %v5698 = vadd.f32 %v3650, %v5186
        %v5699 = vadd.f32 %v3651, %v5187
        %v5700 = vadd.f32 %v3652, %v5188
        %v5701 = vadd.f32 %v3653, %v5189
        %v5702 = vadd.f32 %v3654, %v5190
        %v5703 = vadd.f32 %v3655, %v5191
        %v5704 = vadd.f32 %v3656, %v5192
        %v5705 = vadd.f32 %v3657, %v5193
        %v5706 = vadd.f32 %v3658, %v5194
        %v5707 = vadd.f32 %v3659, %v5195
        %v5708 = vadd.f32 %v3660, %v5196
        %v5709 = vadd.f32 %v3661, %v5197
        %v5710 = vadd.f32 %v3662, %v5198
        %v5711 = vadd.f32 %v3663, %v5199
        %v5712 = vadd.f32 %v3664, %v5200
        %v5713 = vadd.f32 %v3665, %v5201
        %v5714 = vadd.f32 %v3666, %v5202
        %v5715 = vadd.f32 %v3667, %v5203
        %v5716 = vadd.f32 %v3668, %v5204
        %v5717 = vadd.f32 %v3669, %v5205
        %v5718 = vadd.f32 %v3670, %v5206
        %v5719 = vadd.f32 %v3671, %v5207
        %v5720 = vadd.f32 %v3672, %v5208
        %v5721 = vadd.f32 %v3673, %v5209
        %v5722 = vadd.f32 %v3674, %v5210
        %v5723 = vadd.f32 %v3675, %v5211
        %v5724 = vadd.f32 %v3676, %v5212
        %v5725 = vadd.f32 %v3677, %v5213
        %v5726 = vadd.f32 %v3678, %v5214
        %v5727 = vadd.f32 %v3679, %v5215
        %v5728 = vadd.f32 %v3680, %v5216
        %v5729 = vadd.f32 %v3681, %v5217
        %v5730 = vadd.f32 %v3682, %v5218
        %v5731 = vadd.f32 %v3683, %v5219
        %v5732 = vadd.f32 %v3684, %v5220
        %v5733 = vadd.f32 %v3685, %v5221
        %v5734 = vadd.f32 %v3686, %v5222
        %v5735 = vadd.f32 %v3687, %v5223
        %v5736 = vadd.f32 %v3688, %v5224
        %v5737 = vadd.f32 %v3689, %v5225
        %v5738 = vadd.f32 %v3690, %v5226
        %v5739 = vadd.f32 %v3691, %v5227
        %v5740 = vadd.f32 %v3692, %v5228
        %v5741 = vadd.f32 %v3693, %v5229
        %v5742 = vadd.f32 %v3694, %v5230
        %v5743 = vadd.f32 %v3695, %v5231
        %v5744 = vadd.f32 %v3696, %v5232
        %v5745 = vadd.f32 %v3697, %v5233
        %v5746 = vadd.f32 %v3698, %v5234
        %v5747 = vadd.f32 %v3699, %v5235
        %v5748 = vadd.f32 %v3700, %v5236
        %v5749 = vadd.f32 %v3701, %v5237
        %v5750 = vadd.f32 %v3702, %v5238
        %v5751 = vadd.f32 %v3703, %v5239
        %v5752 = vadd.f32 %v3704, %v5240
        %v5753 = vadd.f32 %v3705, %v5241
        %v5754 = vadd.f32 %v3706, %v5242
        %v5755 = vadd.f32 %v3707, %v5243
        %v5756 = vadd.f32 %v3708, %v5244
        %v5757 = vadd.f32 %v3709, %v5245
        %v5758 = vadd.f32 %v3710, %v5246
        %v5759 = vadd.f32 %v3711, %v5247
        %v5760 = vadd.f32 %v3712, %v5248
        %v5761 = vadd.f32 %v3713, %v5249
        %v5762 = vadd.f32 %v3714, %v5250
        %v5763 = vadd.f32 %v3715, %v5251
        %v5764 = vadd.f32 %v3716, %v5252
        %v5765 = vadd.f32 %v3717, %v5253
        %v5766 = vadd.f32 %v3718, %v5254
        %v5767 = vadd.f32 %v3719, %v5255
        %v5768 = vadd.f32 %v3720, %v5256
        %v5769 = vadd.f32 %v3721, %v5257
        %v5770 = vadd.f32 %v3722, %v5258
        %v5771 = vadd.f32 %v3723, %v5259
        %v5772 = vadd.f32 %v3724, %v5260
        %v5773 = vadd.f32 %v3725, %v5261
        %v5774 = vadd.f32 %v3726, %v5262
        %v5775 = vadd.f32 %v3727, %v5263
        %v5776 = vadd.f32 %v3728, %v5264
        %v5777 = vadd.f32 %v3729, %v5265
        %v5778 = vadd.f32 %v3730, %v5266
        %v5779 = vadd.f32 %v3731, %v5267
        %v5780 = vadd.f32 %v3732, %v5268
        %v5781 = vadd.f32 %v3733, %v5269
        %v5782 = vadd.f32 %v3734, %v5270
        %v5783 = vadd.f32 %v3735, %v5271
        %v5784 = vadd.f32 %v3736, %v5272
        %v5785 = vadd.f32 %v3737, %v5273
        %v5786 = vadd.f32 %v3738, %v5274
        %v5787 = vadd.f32 %v3739, %v5275
        %v5788 = vadd.f32 %v3740, %v5276
        %v5789 = vadd.f32 %v3741, %v5277
        %v5790 = vadd.f32 %v3742, %v5278
        %v5791 = vadd.f32 %v3743, %v5279
        %v5792 = vadd.f32 %v3744, %v5280
        %v5793 = vadd.f32 %v3745, %v5281
        %v5794 = vadd.f32 %v3746, %v5282
        %v5795 = vadd.f32 %v3747, %v5283
        %v5796 = vadd.f32 %v3748, %v5284
        %v5797 = vadd.f32 %v3749, %v5285
        %v5798 = vadd.f32 %v3750, %v5286
        %v5799 = vadd.f32 %v3751, %v5287
        %v5800 = vadd.f32 %v3752, %v5288
        %v5801 = vadd.f32 %v3753, %v5289
        %v5802 = vadd.f32 %v3754, %v5290
        %v5803 = vadd.f32 %v3755, %v5291
        %v5804 = vadd.f32 %v3756, %v5292
        %v5805 = vadd.f32 %v3757, %v5293
        %v5806 = vadd.f32 %v3758, %v5294
        %v5807 = vadd.f32 %v3759, %v5295
        %v5808 = vadd.f32 %v3760, %v5296
        %v5809 = vadd.f32 %v3761, %v5297
        %v5810 = vadd.f32 %v3762, %v5298
        %v5811 = vadd.f32 %v3763, %v5299
        %v5812 = vadd.f32 %v3764, %v5300
        %v5813 = vadd.f32 %v3765, %v5301
        %v5814 = vadd.f32 %v3766, %v5302
        %v5815 = vadd.f32 %v3767, %v5303
        %v5816 = vadd.f32 %v3768, %v5304
        %v5817 = vadd.f32 %v3769, %v5305
        %v5818 = vadd.f32 %v3770, %v5306
        %v5819 = vadd.f32 %v3771, %v5307
        %v5820 = vadd.f32 %v3772, %v5308
        %v5821 = vadd.f32 %v3773, %v5309
        %v5822 = vadd.f32 %v3774, %v5310
        %v5823 = vadd.f32 %v3775, %v5311
        %v5824 = vadd.f32 %v3776, %v5312
        %v5825 = vadd.f32 %v3777, %v5313
        %v5826 = vadd.f32 %v3778, %v5314
        %v5827 = vadd.f32 %v3779, %v5315
        %v5828 = vadd.f32 %v3780, %v5316
        %v5829 = vadd.f32 %v3781, %v5317
        %v5830 = vadd.f32 %v3782, %v5318
        %v5831 = vadd.f32 %v3783, %v5319
        %v5832 = vadd.f32 %v3784, %v5320
        %v5833 = vadd.f32 %v3785, %v5321
        %v5834 = vadd.f32 %v3786, %v5322
        %v5835 = vadd.f32 %v3787, %v5323
        %v5836 = vadd.f32 %v3788, %v5324
        %v5837 = vadd.f32 %v3789, %v5325
        %v5838 = vadd.f32 %v3790, %v5326
        %v5839 = vadd.f32 %v3791, %v5327
        %v5840 = vadd.f32 %v3792, %v5328
        %v5841 = vadd.f32 %v3793, %v5329
        %v5842 = vadd.f32 %v3794, %v5330
        %v5843 = vadd.f32 %v3795, %v5331
        %v5844 = vadd.f32 %v3796, %v5332
        %v5845 = vadd.f32 %v3797, %v5333
        %v5846 = vadd.f32 %v3798, %v5334
        %v5847 = vadd.f32 %v3799, %v5335
        %v5848 = vadd.f32 %v3800, %v5336
        %v5849 = vadd.f32 %v3801, %v5337
        %v5850 = vadd.f32 %v3802, %v5338
        %v5851 = vadd.f32 %v3803, %v5339
        %v5852 = vadd.f32 %v3804, %v5340
        %v5853 = vadd.f32 %v3805, %v5341
        %v5854 = vadd.f32 %v3806, %v5342
        %v5855 = vadd.f32 %v3807, %v5343
        %v5856 = vadd.f32 %v3808, %v5344
        %v5857 = vadd.f32 %v3809, %v5345
        %v5858 = vadd.f32 %v3810, %v5346
        %v5859 = vadd.f32 %v3811, %v5347
        %v5860 = vadd.f32 %v3812, %v5348
        %v5861 = vadd.f32 %v3813, %v5349
        %v5862 = vadd.f32 %v3814, %v5350
        %v5863 = vadd.f32 %v3815, %v5351
        %v5864 = vadd.f32 %v3816, %v5352
        %v5865 = vadd.f32 %v3817, %v5353
        %v5866 = vadd.f32 %v3818, %v5354
        %v5867 = vadd.f32 %v3819, %v5355
        %v5868 = vadd.f32 %v3820, %v5356
        %v5869 = vadd.f32 %v3821, %v5357
        %v5870 = vadd.f32 %v3822, %v5358
        %v5871 = vadd.f32 %v3823, %v5359
        %v5872 = vadd.f32 %v3824, %v5360
        %v5873 = vadd.f32 %v3825, %v5361
        %v5874 = vadd.f32 %v3826, %v5362
        %v5875 = vadd.f32 %v3827, %v5363
        %v5876 = vadd.f32 %v3828, %v5364
        %v5877 = vadd.f32 %v3829, %v5365
        %v5878 = vadd.f32 %v3830, %v5366
        %v5879 = vadd.f32 %v3831, %v5367
        %v5880 = vadd.f32 %v3832, %v5368
        %v5881 = vadd.f32 %v3833, %v5369
        %v5882 = vadd.f32 %v3834, %v5370
        %v5883 = vadd.f32 %v3835, %v5371
        %v5884 = vadd.f32 %v3836, %v5372
        %v5885 = vadd.f32 %v3837, %v5373
        %v5886 = vadd.f32 %v3838, %v5374
        %v5887 = vadd.f32 %v3839, %v5375
        %v5888 = vadd.f32 %v3840, %v5376
        %v5889 = vadd.f32 %v3841, %v5377
        %v5890 = vadd.f32 %v3842, %v5378
        %v5891 = vadd.f32 %v3843, %v5379
        %v5892 = vadd.f32 %v3844, %v5380
        %v5893 = vadd.f32 %v3845, %v5381
        %v5894 = vadd.f32 %v3846, %v5382
        %v5895 = vadd.f32 %v3847, %v5383
        %v5896 = vadd.f32 %v3848, %v5384
        %v5897 = vadd.f32 %v3849, %v5385
        %v5898 = vadd.f32 %v3850, %v5386
        %v5899 = vadd.f32 %v3851, %v5387
        %v5900 = vadd.f32 %v3852, %v5388
        %v5901 = vadd.f32 %v3853, %v5389
        %v5902 = vadd.f32 %v3854, %v5390
        %v5903 = vadd.f32 %v3855, %v5391
        %v5904 = vadd.f32 %v3856, %v5392
        %v5905 = vadd.f32 %v3857, %v5393
        %v5906 = vadd.f32 %v3858, %v5394
        %v5907 = vadd.f32 %v3859, %v5395
        %v5908 = vadd.f32 %v3860, %v5396
        %v5909 = vadd.f32 %v3861, %v5397
        %v5910 = vadd.f32 %v3862, %v5398
        %v5911 = vadd.f32 %v3863, %v5399
        %v5912 = vadd.f32 %v3864, %v5400
        %v5913 = vadd.f32 %v3865, %v5401
        %v5914 = vadd.f32 %v3866, %v5402
        %v5915 = vadd.f32 %v3867, %v5403
        %v5916 = vadd.f32 %v3868, %v5404
        %v5917 = vadd.f32 %v3869, %v5405
        %v5918 = vadd.f32 %v3870, %v5406
        %v5919 = vadd.f32 %v3871, %v5407
        %v5920 = vadd.f32 %v3872, %v5408
        %v5921 = vadd.f32 %v3873, %v5409
        %v5922 = vadd.f32 %v3874, %v5410
        %v5923 = vadd.f32 %v3875, %v5411
        %v5924 = vadd.f32 %v3876, %v5412
        %v5925 = vadd.f32 %v3877, %v5413
        %v5926 = vadd.f32 %v3878, %v5414
        %v5927 = vadd.f32 %v3879, %v5415
        %v5928 = vadd.f32 %v3880, %v5416
        %v5929 = vadd.f32 %v3881, %v5417
        %v5930 = vadd.f32 %v3882, %v5418
        %v5931 = vadd.f32 %v3883, %v5419
        %v5932 = vadd.f32 %v3884, %v5420
        %v5933 = vadd.f32 %v3885, %v5421
        %v5934 = vadd.f32 %v3886, %v5422
        %v5935 = vadd.f32 %v3887, %v5423
        %v5936 = vadd.f32 %v3888, %v5424
        %v5937 = vadd.f32 %v3889, %v5425
        %v5938 = vadd.f32 %v3890, %v5426
        %v5939 = vadd.f32 %v3891, %v5427
        %v5940 = vadd.f32 %v3892, %v5428
        %v5941 = vadd.f32 %v3893, %v5429
        %v5942 = vadd.f32 %v3894, %v5430
        %v5943 = vadd.f32 %v3895, %v5431
        %v5944 = vadd.f32 %v3896, %v5432
        %v5945 = vadd.f32 %v3897, %v5433
        %v5946 = vadd.f32 %v3898, %v5434
        %v5947 = vadd.f32 %v3899, %v5435
        %v5948 = vadd.f32 %v3900, %v5436
        %v5949 = vadd.f32 %v3901, %v5437
        %v5950 = vadd.f32 %v3902, %v5438
        %v5951 = vadd.f32 %v3903, %v5439
        %v5952 = vadd.f32 %v3904, %v5440
        %v5953 = vadd.f32 %v3905, %v5441
        %v5954 = vadd.f32 %v3906, %v5442
        %v5955 = vadd.f32 %v3907, %v5443
        %v5956 = vadd.f32 %v3908, %v5444
        %v5957 = vadd.f32 %v3909, %v5445
        %v5958 = vadd.f32 %v3910, %v5446
        %v5959 = vadd.f32 %v3911, %v5447
        %v5960 = vadd.f32 %v3912, %v5448
        %v5961 = vadd.f32 %v3913, %v5449
        %v5962 = vadd.f32 %v3914, %v5450
        %v5963 = vadd.f32 %v3915, %v5451
        %v5964 = vadd.f32 %v3916, %v5452
        %v5965 = vadd.f32 %v3917, %v5453
        %v5966 = vadd.f32 %v3918, %v5454
        %v5967 = vadd.f32 %v3919, %v5455
        %v5968 = vadd.f32 %v3920, %v5456
        %v5969 = vadd.f32 %v3921, %v5457
        %v5970 = vadd.f32 %v3922, %v5458
        %v5971 = vadd.f32 %v3923, %v5459
        %v5972 = vadd.f32 %v3924, %v5460
        %v5973 = vadd.f32 %v3925, %v5461
        %v5974 = vadd.f32 %v3926, %v5462
        %v5975 = vadd.f32 %v3927, %v5463
        %v5976 = vadd.f32 %v3928, %v5464
        %v5977 = vadd.f32 %v3929, %v5465
        %v5978 = vadd.f32 %v3930, %v5466
        %v5979 = vadd.f32 %v3931, %v5467
        %v5980 = vadd.f32 %v3932, %v5468
        %v5981 = vadd.f32 %v3933, %v5469
        %v5982 = vadd.f32 %v3934, %v5470
        %v5983 = vadd.f32 %v3935, %v5471
        %v5984 = vadd.f32 %v3936, %v5472
        %v5985 = vadd.f32 %v3937, %v5473
        %v5986 = vadd.f32 %v3938, %v5474
        %v5987 = vadd.f32 %v3939, %v5475
        %v5988 = vadd.f32 %v3940, %v5476
        %v5989 = vadd.f32 %v3941, %v5477
        %v5990 = vadd.f32 %v3942, %v5478
        %v5991 = vadd.f32 %v3943, %v5479
        %v5992 = vadd.f32 %v3944, %v5480
        %v5993 = vadd.f32 %v3945, %v5481
        %v5994 = vadd.f32 %v3946, %v5482
        %v5995 = vadd.f32 %v3947, %v5483
        %v5996 = vadd.f32 %v3948, %v5484
        %v5997 = vadd.f32 %v3949, %v5485
        %v5998 = vadd.f32 %v3950, %v5486
        %v5999 = vadd.f32 %v3951, %v5487
        %v6000 = vadd.f32 %v3952, %v5488
        %v6001 = vadd.f32 %v3953, %v5489
        %v6002 = vadd.f32 %v3954, %v5490
        %v6003 = vadd.f32 %v3955, %v5491
        %v6004 = vadd.f32 %v3956, %v5492
        %v6005 = vadd.f32 %v3957, %v5493
        %v6006 = vadd.f32 %v3958, %v5494
        %v6007 = vadd.f32 %v3959, %v5495
        %v6008 = vadd.f32 %v3960, %v5496
        %v6009 = vadd.f32 %v3961, %v5497
        %v6010 = vadd.f32 %v3962, %v5498
        %v6011 = vadd.f32 %v3963, %v5499
        %v6012 = vadd.f32 %v3964, %v5500
        %v6013 = vadd.f32 %v3965, %v5501
        %v6014 = vadd.f32 %v3966, %v5502
        %v6015 = vadd.f32 %v3967, %v5503
        %v6016 = vadd.f32 %v3968, %v5504
        %v6017 = vadd.f32 %v3969, %v5505
        %v6018 = vadd.f32 %v3970, %v5506
        %v6019 = vadd.f32 %v3971, %v5507
        %v6020 = vadd.f32 %v3972, %v5508
        %v6021 = vadd.f32 %v3973, %v5509
        %v6022 = vadd.f32 %v3974, %v5510
        %v6023 = vadd.f32 %v3975, %v5511
        %v6024 = vadd.f32 %v3976, %v5512
        %v6025 = vadd.f32 %v3977, %v5513
        %v6026 = vadd.f32 %v3978, %v5514
        %v6027 = vadd.f32 %v3979, %v5515
        %v6028 = vadd.f32 %v3980, %v5516
        %v6029 = vadd.f32 %v3981, %v5517
        %v6030 = vadd.f32 %v3982, %v5518
        %v6031 = vadd.f32 %v3983, %v5519
        %v6032 = vadd.f32 %v3984, %v5520
        %v6033 = vadd.f32 %v3985, %v5521
        %v6034 = vadd.f32 %v3986, %v5522
        %v6035 = vadd.f32 %v3987, %v5523
        %v6036 = vadd.f32 %v3988, %v5524
        %v6037 = vadd.f32 %v3989, %v5525
        %v6038 = vadd.f32 %v3990, %v5526
        %v6039 = vadd.f32 %v3991, %v5527
        %v6040 = vadd.f32 %v3992, %v5528
        %v6041 = vadd.f32 %v3993, %v5529
        %v6042 = vadd.f32 %v3994, %v5530
        %v6043 = vadd.f32 %v3995, %v5531
        %v6044 = vadd.f32 %v3996, %v5532
        %v6045 = vadd.f32 %v3997, %v5533
        %v6046 = vadd.f32 %v3998, %v5534
        %v6047 = vadd.f32 %v3999, %v5535
        %v6048 = vadd.f32 %v4000, %v5536
        %v6049 = vadd.f32 %v4001, %v5537
        %v6050 = vadd.f32 %v4002, %v5538
        %v6051 = vadd.f32 %v4003, %v5539
        %v6052 = vadd.f32 %v4004, %v5540
        %v6053 = vadd.f32 %v4005, %v5541
        %v6054 = vadd.f32 %v4006, %v5542
        %v6055 = vadd.f32 %v4007, %v5543
        %v6056 = vadd.f32 %v4008, %v5544
        %v6057 = vadd.f32 %v4009, %v5545
        %v6058 = vadd.f32 %v4010, %v5546
        %v6059 = vadd.f32 %v4011, %v5547
        %v6060 = vadd.f32 %v4012, %v5548
        %v6061 = vadd.f32 %v4013, %v5549
        %v6062 = vadd.f32 %v4014, %v5550
        %v6063 = vadd.f32 %v4015, %v5551
        %v6064 = vadd.f32 %v4016, %v5552
        %v6065 = vadd.f32 %v4017, %v5553
        %v6066 = vadd.f32 %v4018, %v5554
        %v6067 = vadd.f32 %v4019, %v5555
        %v6068 = vadd.f32 %v4020, %v5556
        %v6069 = vadd.f32 %v4021, %v5557
        %v6070 = vadd.f32 %v4022, %v5558
        %v6071 = vadd.f32 %v4023, %v5559
        %v6072 = vadd.f32 %v4024, %v5560
        %v6073 = vadd.f32 %v4025, %v5561
        %v6074 = vadd.f32 %v4026, %v5562
        %v6075 = vadd.f32 %v4027, %v5563
        %v6076 = vadd.f32 %v4028, %v5564
        %v6077 = vadd.f32 %v4029, %v5565
        %v6078 = vadd.f32 %v4030, %v5566
        %v6079 = vadd.f32 %v4031, %v5567
        %v6080 = vadd.f32 %v4032, %v5568
        %v6081 = vadd.f32 %v4033, %v5569
        %v6082 = vadd.f32 %v4034, %v5570
        %v6083 = vadd.f32 %v4035, %v5571
        %v6084 = vadd.f32 %v4036, %v5572
        %v6085 = vadd.f32 %v4037, %v5573
        %v6086 = vadd.f32 %v4038, %v5574
        %v6087 = vadd.f32 %v4039, %v5575
        %v6088 = vadd.f32 %v4040, %v5576
        %v6089 = vadd.f32 %v4041, %v5577
        %v6090 = vadd.f32 %v4042, %v5578
        %v6091 = vadd.f32 %v4043, %v5579
        %v6092 = vadd.f32 %v4044, %v5580
        %v6093 = vadd.f32 %v4045, %v5581
        %v6094 = vadd.f32 %v4046, %v5582
        %v6095 = vadd.f32 %v4047, %v5583
        %v6096 = vadd.f32 %v4048, %v5584
        %v6097 = vadd.f32 %v4049, %v5585
        %v6098 = vadd.f32 %v4050, %v5586
        %v6099 = vadd.f32 %v4051, %v5587
        %v6100 = vadd.f32 %v4052, %v5588
        %v6101 = vadd.f32 %v4053, %v5589
        %v6102 = vadd.f32 %v4054, %v5590
        %v6103 = vadd.f32 %v4055, %v5591
        %v6104 = vadd.f32 %v4056, %v5592
        %v6105 = vadd.f32 %v4057, %v5593
        %v6106 = vadd.f32 %v4058, %v5594
        %v6107 = vadd.f32 %v4059, %v5595
        %v6108 = vadd.f32 %v4060, %v5596
        %v6109 = vadd.f32 %v4061, %v5597
        %v6110 = vadd.f32 %v4062, %v5598
        %v6111 = vadd.f32 %v4063, %v5599
        %v6112 = vadd.f32 %v4064, %v5600
        %v6113 = vadd.f32 %v4065, %v5601
        %v6114 = vadd.f32 %v4066, %v5602
        %v6115 = vadd.f32 %v4067, %v5603
        %v6116 = vadd.f32 %v4068, %v5604
        %v6117 = vadd.f32 %v4069, %v5605
        %v6118 = vadd.f32 %v4070, %v5606
        %v6119 = vadd.f32 %v4071, %v5607
        %v6120 = vadd.f32 %v4072, %v5608
        %v6121 = vadd.f32 %v4073, %v5609
        %v6122 = vadd.f32 %v4074, %v5610
        %v6123 = vadd.f32 %v4075, %v5611
        %v6124 = vadd.f32 %v4076, %v5612
        %v6125 = vadd.f32 %v4077, %v5613
        %v6126 = vadd.f32 %v4078, %v5614
        %v6127 = vadd.f32 %v4079, %v5615
        %v6128 = vadd.f32 %v4080, %v5616
        %v6129 = vadd.f32 %v4081, %v5617
        %v6130 = vadd.f32 %v4082, %v5618
        %v6131 = vadd.f32 %v4083, %v5619
        %v6132 = vadd.f32 %v4084, %v5620
        %v6133 = vadd.f32 %v4085, %v5621
        %v6134 = vadd.f32 %v4086, %v5622
        %v6135 = vadd.f32 %v4087, %v5623
        %v6136 = vadd.f32 %v4088, %v5624
        %v6137 = vadd.f32 %v4089, %v5625
        %v6138 = vadd.f32 %v4090, %v5626
        %v6139 = vadd.f32 %v4091, %v5627
        %v6140 = vadd.f32 %v4092, %v5628
        %v6141 = vadd.f32 %v4093, %v5629
        %v6142 = vadd.f32 %v4094, %v5630
        %v6143 = vadd.f32 %v4095, %v5631
        %v6144 = vadd.f32 %v4096, %v5632
        %v6145 = vadd.f32 %v4097, %v5633
        %v6146 = vadd.f32 %v4098, %v5634
        %6147 = vst [vmem:[%s507] sm:$0xff] %v5635
        %6148 = vst [vmem:[%s507 + $0x8] sm:$0xff] %v5636
        %6149 = vst [vmem:[%s507 + $0x10] sm:$0xff] %v5637
        %6150 = vst [vmem:[%s507 + $0x18] sm:$0xff] %v5638
        %6151 = vst [vmem:[%s507 + $0x20] sm:$0xff] %v5639
        %6152 = vst [vmem:[%s507 + $0x28] sm:$0xff] %v5640
        %6153 = vst [vmem:[%s507 + $0x30] sm:$0xff] %v5641
        %6154 = vst [vmem:[%s507 + $0x38] sm:$0xff] %v5642
        %6155 = vst [vmem:[%s507 + $0x40] sm:$0xff] %v5643
        %6156 = vst [vmem:[%s507 + $0x48] sm:$0xff] %v5644
        %6157 = vst [vmem:[%s507 + $0x50] sm:$0xff] %v5645
        %6158 = vst [vmem:[%s507 + $0x58] sm:$0xff] %v5646
        %6159 = vst [vmem:[%s507 + $0x60] sm:$0xff] %v5647
        %6160 = vst [vmem:[%s507 + $0x68] sm:$0xff] %v5648
        %6161 = vst [vmem:[%s507 + $0x70] sm:$0xff] %v5649
        %6162 = vst [vmem:[%s507 + $0x78] sm:$0xff] %v5650
        %6163 = vst [vmem:[%s507 + $0x80] sm:$0xff] %v5651
        %6164 = vst [vmem:[%s507 + $0x88] sm:$0xff] %v5652
        %6165 = vst [vmem:[%s507 + $0x90] sm:$0xff] %v5653
        %6166 = vst [vmem:[%s507 + $0x98] sm:$0xff] %v5654
        %6167 = vst [vmem:[%s507 + $0xa0] sm:$0xff] %v5655
        %6168 = vst [vmem:[%s507 + $0xa8] sm:$0xff] %v5656
        %6169 = vst [vmem:[%s507 + $0xb0] sm:$0xff] %v5657
        %6170 = vst [vmem:[%s507 + $0xb8] sm:$0xff] %v5658
        %6171 = vst [vmem:[%s507 + $0xc0] sm:$0xff] %v5659
        %6172 = vst [vmem:[%s507 + $0xc8] sm:$0xff] %v5660
        %6173 = vst [vmem:[%s507 + $0xd0] sm:$0xff] %v5661
        %6174 = vst [vmem:[%s507 + $0xd8] sm:$0xff] %v5662
        %6175 = vst [vmem:[%s507 + $0xe0] sm:$0xff] %v5663
        %6176 = vst [vmem:[%s507 + $0xe8] sm:$0xff] %v5664
        %6177 = vst [vmem:[%s507 + $0xf0] sm:$0xff] %v5665
        %6178 = vst [vmem:[%s507 + $0xf8] sm:$0xff] %v5666
        %6179 = vst [vmem:[%s507 + $0x100] sm:$0xff] %v5667
        %6180 = vst [vmem:[%s507 + $0x108] sm:$0xff] %v5668
        %6181 = vst [vmem:[%s507 + $0x110] sm:$0xff] %v5669
        %6182 = vst [vmem:[%s507 + $0x118] sm:$0xff] %v5670
        %6183 = vst [vmem:[%s507 + $0x120] sm:$0xff] %v5671
        %6184 = vst [vmem:[%s507 + $0x128] sm:$0xff] %v5672
        %6185 = vst [vmem:[%s507 + $0x130] sm:$0xff] %v5673
        %6186 = vst [vmem:[%s507 + $0x138] sm:$0xff] %v5674
        %6187 = vst [vmem:[%s507 + $0x140] sm:$0xff] %v5675
        %6188 = vst [vmem:[%s507 + $0x148] sm:$0xff] %v5676
        %6189 = vst [vmem:[%s507 + $0x150] sm:$0xff] %v5677
        %6190 = vst [vmem:[%s507 + $0x158] sm:$0xff] %v5678
        %6191 = vst [vmem:[%s507 + $0x160] sm:$0xff] %v5679
        %6192 = vst [vmem:[%s507 + $0x168] sm:$0xff] %v5680
        %6193 = vst [vmem:[%s507 + $0x170] sm:$0xff] %v5681
        %6194 = vst [vmem:[%s507 + $0x178] sm:$0xff] %v5682
        %6195 = vst [vmem:[%s507 + $0x180] sm:$0xff] %v5683
        %6196 = vst [vmem:[%s507 + $0x188] sm:$0xff] %v5684
        %6197 = vst [vmem:[%s507 + $0x190] sm:$0xff] %v5685
        %6198 = vst [vmem:[%s507 + $0x198] sm:$0xff] %v5686
        %6199 = vst [vmem:[%s507 + $0x1a0] sm:$0xff] %v5687
        %6200 = vst [vmem:[%s507 + $0x1a8] sm:$0xff] %v5688
        %6201 = vst [vmem:[%s507 + $0x1b0] sm:$0xff] %v5689
        %6202 = vst [vmem:[%s507 + $0x1b8] sm:$0xff] %v5690
        %6203 = vst [vmem:[%s507 + $0x1c0] sm:$0xff] %v5691
        %6204 = vst [vmem:[%s507 + $0x1c8] sm:$0xff] %v5692
        %6205 = vst [vmem:[%s507 + $0x1d0] sm:$0xff] %v5693
        %6206 = vst [vmem:[%s507 + $0x1d8] sm:$0xff] %v5694
        %6207 = vst [vmem:[%s507 + $0x1e0] sm:$0xff] %v5695
        %6208 = vst [vmem:[%s507 + $0x1e8] sm:$0xff] %v5696
        %6209 = vst [vmem:[%s507 + $0x1f0] sm:$0xff] %v5697
        %6210 = vst [vmem:[%s507 + $0x1f8] sm:$0xff] %v5698
        %6211 = vst [vmem:[%s507 + $0x200] sm:$0xff] %v5699
        %6212 = vst [vmem:[%s507 + $0x208] sm:$0xff] %v5700
        %6213 = vst [vmem:[%s507 + $0x210] sm:$0xff] %v5701
        %6214 = vst [vmem:[%s507 + $0x218] sm:$0xff] %v5702
        %6215 = vst [vmem:[%s507 + $0x220] sm:$0xff] %v5703
        %6216 = vst [vmem:[%s507 + $0x228] sm:$0xff] %v5704
        %6217 = vst [vmem:[%s507 + $0x230] sm:$0xff] %v5705
        %6218 = vst [vmem:[%s507 + $0x238] sm:$0xff] %v5706
        %6219 = vst [vmem:[%s507 + $0x240] sm:$0xff] %v5707
        %6220 = vst [vmem:[%s507 + $0x248] sm:$0xff] %v5708
        %6221 = vst [vmem:[%s507 + $0x250] sm:$0xff] %v5709
        %6222 = vst [vmem:[%s507 + $0x258] sm:$0xff] %v5710
        %6223 = vst [vmem:[%s507 + $0x260] sm:$0xff] %v5711
        %6224 = vst [vmem:[%s507 + $0x268] sm:$0xff] %v5712
        %6225 = vst [vmem:[%s507 + $0x270] sm:$0xff] %v5713
        %6226 = vst [vmem:[%s507 + $0x278] sm:$0xff] %v5714
        %6227 = vst [vmem:[%s507 + $0x280] sm:$0xff] %v5715
        %6228 = vst [vmem:[%s507 + $0x288] sm:$0xff] %v5716
        %6229 = vst [vmem:[%s507 + $0x290] sm:$0xff] %v5717
        %6230 = vst [vmem:[%s507 + $0x298] sm:$0xff] %v5718
        %6231 = vst [vmem:[%s507 + $0x2a0] sm:$0xff] %v5719
        %6232 = vst [vmem:[%s507 + $0x2a8] sm:$0xff] %v5720
        %6233 = vst [vmem:[%s507 + $0x2b0] sm:$0xff] %v5721
        %6234 = vst [vmem:[%s507 + $0x2b8] sm:$0xff] %v5722
        %6235 = vst [vmem:[%s507 + $0x2c0] sm:$0xff] %v5723
        %6236 = vst [vmem:[%s507 + $0x2c8] sm:$0xff] %v5724
        %6237 = vst [vmem:[%s507 + $0x2d0] sm:$0xff] %v5725
        %6238 = vst [vmem:[%s507 + $0x2d8] sm:$0xff] %v5726
        %6239 = vst [vmem:[%s507 + $0x2e0] sm:$0xff] %v5727
        %6240 = vst [vmem:[%s507 + $0x2e8] sm:$0xff] %v5728
        %6241 = vst [vmem:[%s507 + $0x2f0] sm:$0xff] %v5729
        %6242 = vst [vmem:[%s507 + $0x2f8] sm:$0xff] %v5730
        %6243 = vst [vmem:[%s507 + $0x300] sm:$0xff] %v5731
        %6244 = vst [vmem:[%s507 + $0x308] sm:$0xff] %v5732
        %6245 = vst [vmem:[%s507 + $0x310] sm:$0xff] %v5733
        %6246 = vst [vmem:[%s507 + $0x318] sm:$0xff] %v5734
        %6247 = vst [vmem:[%s507 + $0x320] sm:$0xff] %v5735
        %6248 = vst [vmem:[%s507 + $0x328] sm:$0xff] %v5736
        %6249 = vst [vmem:[%s507 + $0x330] sm:$0xff] %v5737
        %6250 = vst [vmem:[%s507 + $0x338] sm:$0xff] %v5738
        %6251 = vst [vmem:[%s507 + $0x340] sm:$0xff] %v5739
        %6252 = vst [vmem:[%s507 + $0x348] sm:$0xff] %v5740
        %6253 = vst [vmem:[%s507 + $0x350] sm:$0xff] %v5741
        %6254 = vst [vmem:[%s507 + $0x358] sm:$0xff] %v5742
        %6255 = vst [vmem:[%s507 + $0x360] sm:$0xff] %v5743
        %6256 = vst [vmem:[%s507 + $0x368] sm:$0xff] %v5744
        %6257 = vst [vmem:[%s507 + $0x370] sm:$0xff] %v5745
        %6258 = vst [vmem:[%s507 + $0x378] sm:$0xff] %v5746
        %6259 = vst [vmem:[%s507 + $0x380] sm:$0xff] %v5747
        %6260 = vst [vmem:[%s507 + $0x388] sm:$0xff] %v5748
        %6261 = vst [vmem:[%s507 + $0x390] sm:$0xff] %v5749
        %6262 = vst [vmem:[%s507 + $0x398] sm:$0xff] %v5750
        %6263 = vst [vmem:[%s507 + $0x3a0] sm:$0xff] %v5751
        %6264 = vst [vmem:[%s507 + $0x3a8] sm:$0xff] %v5752
        %6265 = vst [vmem:[%s507 + $0x3b0] sm:$0xff] %v5753
        %6266 = vst [vmem:[%s507 + $0x3b8] sm:$0xff] %v5754
        %6267 = vst [vmem:[%s507 + $0x3c0] sm:$0xff] %v5755
        %6268 = vst [vmem:[%s507 + $0x3c8] sm:$0xff] %v5756
        %6269 = vst [vmem:[%s507 + $0x3d0] sm:$0xff] %v5757
        %6270 = vst [vmem:[%s507 + $0x3d8] sm:$0xff] %v5758
        %6271 = vst [vmem:[%s507 + $0x3e0] sm:$0xff] %v5759
        %6272 = vst [vmem:[%s507 + $0x3e8] sm:$0xff] %v5760
        %6273 = vst [vmem:[%s507 + $0x3f0] sm:$0xff] %v5761
        %6274 = vst [vmem:[%s507 + $0x3f8] sm:$0xff] %v5762
        %6275 = vst [vmem:[%s507 + $0x400] sm:$0xff] %v5763
        %6276 = vst [vmem:[%s507 + $0x408] sm:$0xff] %v5764
        %6277 = vst [vmem:[%s507 + $0x410] sm:$0xff] %v5765
        %6278 = vst [vmem:[%s507 + $0x418] sm:$0xff] %v5766
        %6279 = vst [vmem:[%s507 + $0x420] sm:$0xff] %v5767
        %6280 = vst [vmem:[%s507 + $0x428] sm:$0xff] %v5768
        %6281 = vst [vmem:[%s507 + $0x430] sm:$0xff] %v5769
        %6282 = vst [vmem:[%s507 + $0x438] sm:$0xff] %v5770
        %6283 = vst [vmem:[%s507 + $0x440] sm:$0xff] %v5771
        %6284 = vst [vmem:[%s507 + $0x448] sm:$0xff] %v5772
        %6285 = vst [vmem:[%s507 + $0x450] sm:$0xff] %v5773
        %6286 = vst [vmem:[%s507 + $0x458] sm:$0xff] %v5774
        %6287 = vst [vmem:[%s507 + $0x460] sm:$0xff] %v5775
        %6288 = vst [vmem:[%s507 + $0x468] sm:$0xff] %v5776
        %6289 = vst [vmem:[%s507 + $0x470] sm:$0xff] %v5777
        %6290 = vst [vmem:[%s507 + $0x478] sm:$0xff] %v5778
        %6291 = vst [vmem:[%s507 + $0x480] sm:$0xff] %v5779
        %6292 = vst [vmem:[%s507 + $0x488] sm:$0xff] %v5780
        %6293 = vst [vmem:[%s507 + $0x490] sm:$0xff] %v5781
        %6294 = vst [vmem:[%s507 + $0x498] sm:$0xff] %v5782
        %6295 = vst [vmem:[%s507 + $0x4a0] sm:$0xff] %v5783
        %6296 = vst [vmem:[%s507 + $0x4a8] sm:$0xff] %v5784
        %6297 = vst [vmem:[%s507 + $0x4b0] sm:$0xff] %v5785
        %6298 = vst [vmem:[%s507 + $0x4b8] sm:$0xff] %v5786
        %6299 = vst [vmem:[%s507 + $0x4c0] sm:$0xff] %v5787
        %6300 = vst [vmem:[%s507 + $0x4c8] sm:$0xff] %v5788
        %6301 = vst [vmem:[%s507 + $0x4d0] sm:$0xff] %v5789
        %6302 = vst [vmem:[%s507 + $0x4d8] sm:$0xff] %v5790
        %6303 = vst [vmem:[%s507 + $0x4e0] sm:$0xff] %v5791
        %6304 = vst [vmem:[%s507 + $0x4e8] sm:$0xff] %v5792
        %6305 = vst [vmem:[%s507 + $0x4f0] sm:$0xff] %v5793
        %6306 = vst [vmem:[%s507 + $0x4f8] sm:$0xff] %v5794
        %6307 = vst [vmem:[%s507 + $0x500] sm:$0xff] %v5795
        %6308 = vst [vmem:[%s507 + $0x508] sm:$0xff] %v5796
        %6309 = vst [vmem:[%s507 + $0x510] sm:$0xff] %v5797
        %6310 = vst [vmem:[%s507 + $0x518] sm:$0xff] %v5798
        %6311 = vst [vmem:[%s507 + $0x520] sm:$0xff] %v5799
        %6312 = vst [vmem:[%s507 + $0x528] sm:$0xff] %v5800
        %6313 = vst [vmem:[%s507 + $0x530] sm:$0xff] %v5801
        %6314 = vst [vmem:[%s507 + $0x538] sm:$0xff] %v5802
        %6315 = vst [vmem:[%s507 + $0x540] sm:$0xff] %v5803
        %6316 = vst [vmem:[%s507 + $0x548] sm:$0xff] %v5804
        %6317 = vst [vmem:[%s507 + $0x550] sm:$0xff] %v5805
        %6318 = vst [vmem:[%s507 + $0x558] sm:$0xff] %v5806
        %6319 = vst [vmem:[%s507 + $0x560] sm:$0xff] %v5807
        %6320 = vst [vmem:[%s507 + $0x568] sm:$0xff] %v5808
        %6321 = vst [vmem:[%s507 + $0x570] sm:$0xff] %v5809
        %6322 = vst [vmem:[%s507 + $0x578] sm:$0xff] %v5810
        %6323 = vst [vmem:[%s507 + $0x580] sm:$0xff] %v5811
        %6324 = vst [vmem:[%s507 + $0x588] sm:$0xff] %v5812
        %6325 = vst [vmem:[%s507 + $0x590] sm:$0xff] %v5813
        %6326 = vst [vmem:[%s507 + $0x598] sm:$0xff] %v5814
        %6327 = vst [vmem:[%s507 + $0x5a0] sm:$0xff] %v5815
        %6328 = vst [vmem:[%s507 + $0x5a8] sm:$0xff] %v5816
        %6329 = vst [vmem:[%s507 + $0x5b0] sm:$0xff] %v5817
        %6330 = vst [vmem:[%s507 + $0x5b8] sm:$0xff] %v5818
        %6331 = vst [vmem:[%s507 + $0x5c0] sm:$0xff] %v5819
        %6332 = vst [vmem:[%s507 + $0x5c8] sm:$0xff] %v5820
        %6333 = vst [vmem:[%s507 + $0x5d0] sm:$0xff] %v5821
        %6334 = vst [vmem:[%s507 + $0x5d8] sm:$0xff] %v5822
        %6335 = vst [vmem:[%s507 + $0x5e0] sm:$0xff] %v5823
        %6336 = vst [vmem:[%s507 + $0x5e8] sm:$0xff] %v5824
        %6337 = vst [vmem:[%s507 + $0x5f0] sm:$0xff] %v5825
        %6338 = vst [vmem:[%s507 + $0x5f8] sm:$0xff] %v5826
        %6339 = vst [vmem:[%s507 + $0x600] sm:$0xff] %v5827
        %6340 = vst [vmem:[%s507 + $0x608] sm:$0xff] %v5828
        %6341 = vst [vmem:[%s507 + $0x610] sm:$0xff] %v5829
        %6342 = vst [vmem:[%s507 + $0x618] sm:$0xff] %v5830
        %6343 = vst [vmem:[%s507 + $0x620] sm:$0xff] %v5831
        %6344 = vst [vmem:[%s507 + $0x628] sm:$0xff] %v5832
        %6345 = vst [vmem:[%s507 + $0x630] sm:$0xff] %v5833
        %6346 = vst [vmem:[%s507 + $0x638] sm:$0xff] %v5834
        %6347 = vst [vmem:[%s507 + $0x640] sm:$0xff] %v5835
        %6348 = vst [vmem:[%s507 + $0x648] sm:$0xff] %v5836
        %6349 = vst [vmem:[%s507 + $0x650] sm:$0xff] %v5837
        %6350 = vst [vmem:[%s507 + $0x658] sm:$0xff] %v5838
        %6351 = vst [vmem:[%s507 + $0x660] sm:$0xff] %v5839
        %6352 = vst [vmem:[%s507 + $0x668] sm:$0xff] %v5840
        %6353 = vst [vmem:[%s507 + $0x670] sm:$0xff] %v5841
        %6354 = vst [vmem:[%s507 + $0x678] sm:$0xff] %v5842
        %6355 = vst [vmem:[%s507 + $0x680] sm:$0xff] %v5843
        %6356 = vst [vmem:[%s507 + $0x688] sm:$0xff] %v5844
        %6357 = vst [vmem:[%s507 + $0x690] sm:$0xff] %v5845
        %6358 = vst [vmem:[%s507 + $0x698] sm:$0xff] %v5846
        %6359 = vst [vmem:[%s507 + $0x6a0] sm:$0xff] %v5847
        %6360 = vst [vmem:[%s507 + $0x6a8] sm:$0xff] %v5848
        %6361 = vst [vmem:[%s507 + $0x6b0] sm:$0xff] %v5849
        %6362 = vst [vmem:[%s507 + $0x6b8] sm:$0xff] %v5850
        %6363 = vst [vmem:[%s507 + $0x6c0] sm:$0xff] %v5851
        %6364 = vst [vmem:[%s507 + $0x6c8] sm:$0xff] %v5852
        %6365 = vst [vmem:[%s507 + $0x6d0] sm:$0xff] %v5853
        %6366 = vst [vmem:[%s507 + $0x6d8] sm:$0xff] %v5854
        %6367 = vst [vmem:[%s507 + $0x6e0] sm:$0xff] %v5855
        %6368 = vst [vmem:[%s507 + $0x6e8] sm:$0xff] %v5856
        %6369 = vst [vmem:[%s507 + $0x6f0] sm:$0xff] %v5857
        %6370 = vst [vmem:[%s507 + $0x6f8] sm:$0xff] %v5858
        %6371 = vst [vmem:[%s507 + $0x700] sm:$0xff] %v5859
        %6372 = vst [vmem:[%s507 + $0x708] sm:$0xff] %v5860
        %6373 = vst [vmem:[%s507 + $0x710] sm:$0xff] %v5861
        %6374 = vst [vmem:[%s507 + $0x718] sm:$0xff] %v5862
        %6375 = vst [vmem:[%s507 + $0x720] sm:$0xff] %v5863
        %6376 = vst [vmem:[%s507 + $0x728] sm:$0xff] %v5864
        %6377 = vst [vmem:[%s507 + $0x730] sm:$0xff] %v5865
        %6378 = vst [vmem:[%s507 + $0x738] sm:$0xff] %v5866
        %6379 = vst [vmem:[%s507 + $0x740] sm:$0xff] %v5867
        %6380 = vst [vmem:[%s507 + $0x748] sm:$0xff] %v5868
        %6381 = vst [vmem:[%s507 + $0x750] sm:$0xff] %v5869
        %6382 = vst [vmem:[%s507 + $0x758] sm:$0xff] %v5870
        %6383 = vst [vmem:[%s507 + $0x760] sm:$0xff] %v5871
        %6384 = vst [vmem:[%s507 + $0x768] sm:$0xff] %v5872
        %6385 = vst [vmem:[%s507 + $0x770] sm:$0xff] %v5873
        %6386 = vst [vmem:[%s507 + $0x778] sm:$0xff] %v5874
        %6387 = vst [vmem:[%s507 + $0x780] sm:$0xff] %v5875
        %6388 = vst [vmem:[%s507 + $0x788] sm:$0xff] %v5876
        %6389 = vst [vmem:[%s507 + $0x790] sm:$0xff] %v5877
        %6390 = vst [vmem:[%s507 + $0x798] sm:$0xff] %v5878
        %6391 = vst [vmem:[%s507 + $0x7a0] sm:$0xff] %v5879
        %6392 = vst [vmem:[%s507 + $0x7a8] sm:$0xff] %v5880
        %6393 = vst [vmem:[%s507 + $0x7b0] sm:$0xff] %v5881
        %6394 = vst [vmem:[%s507 + $0x7b8] sm:$0xff] %v5882
        %6395 = vst [vmem:[%s507 + $0x7c0] sm:$0xff] %v5883
        %6396 = vst [vmem:[%s507 + $0x7c8] sm:$0xff] %v5884
        %6397 = vst [vmem:[%s507 + $0x7d0] sm:$0xff] %v5885
        %6398 = vst [vmem:[%s507 + $0x7d8] sm:$0xff] %v5886
        %6399 = vst [vmem:[%s507 + $0x7e0] sm:$0xff] %v5887
        %6400 = vst [vmem:[%s507 + $0x7e8] sm:$0xff] %v5888
        %6401 = vst [vmem:[%s507 + $0x7f0] sm:$0xff] %v5889
        %6402 = vst [vmem:[%s507 + $0x7f8] sm:$0xff] %v5890
        %6403 = vst [vmem:[%s507 + $0x800] sm:$0xff] %v5891
        %6404 = vst [vmem:[%s507 + $0x808] sm:$0xff] %v5892
        %6405 = vst [vmem:[%s507 + $0x810] sm:$0xff] %v5893
        %6406 = vst [vmem:[%s507 + $0x818] sm:$0xff] %v5894
        %6407 = vst [vmem:[%s507 + $0x820] sm:$0xff] %v5895
        %6408 = vst [vmem:[%s507 + $0x828] sm:$0xff] %v5896
        %6409 = vst [vmem:[%s507 + $0x830] sm:$0xff] %v5897
        %6410 = vst [vmem:[%s507 + $0x838] sm:$0xff] %v5898
        %6411 = vst [vmem:[%s507 + $0x840] sm:$0xff] %v5899
        %6412 = vst [vmem:[%s507 + $0x848] sm:$0xff] %v5900
        %6413 = vst [vmem:[%s507 + $0x850] sm:$0xff] %v5901
        %6414 = vst [vmem:[%s507 + $0x858] sm:$0xff] %v5902
        %6415 = vst [vmem:[%s507 + $0x860] sm:$0xff] %v5903
        %6416 = vst [vmem:[%s507 + $0x868] sm:$0xff] %v5904
        %6417 = vst [vmem:[%s507 + $0x870] sm:$0xff] %v5905
        %6418 = vst [vmem:[%s507 + $0x878] sm:$0xff] %v5906
        %6419 = vst [vmem:[%s507 + $0x880] sm:$0xff] %v5907
        %6420 = vst [vmem:[%s507 + $0x888] sm:$0xff] %v5908
        %6421 = vst [vmem:[%s507 + $0x890] sm:$0xff] %v5909
        %6422 = vst [vmem:[%s507 + $0x898] sm:$0xff] %v5910
        %6423 = vst [vmem:[%s507 + $0x8a0] sm:$0xff] %v5911
        %6424 = vst [vmem:[%s507 + $0x8a8] sm:$0xff] %v5912
        %6425 = vst [vmem:[%s507 + $0x8b0] sm:$0xff] %v5913
        %6426 = vst [vmem:[%s507 + $0x8b8] sm:$0xff] %v5914
        %6427 = vst [vmem:[%s507 + $0x8c0] sm:$0xff] %v5915
        %6428 = vst [vmem:[%s507 + $0x8c8] sm:$0xff] %v5916
        %6429 = vst [vmem:[%s507 + $0x8d0] sm:$0xff] %v5917
        %6430 = vst [vmem:[%s507 + $0x8d8] sm:$0xff] %v5918
        %6431 = vst [vmem:[%s507 + $0x8e0] sm:$0xff] %v5919
        %6432 = vst [vmem:[%s507 + $0x8e8] sm:$0xff] %v5920
        %6433 = vst [vmem:[%s507 + $0x8f0] sm:$0xff] %v5921
        %6434 = vst [vmem:[%s507 + $0x8f8] sm:$0xff] %v5922
        %6435 = vst [vmem:[%s507 + $0x900] sm:$0xff] %v5923
        %6436 = vst [vmem:[%s507 + $0x908] sm:$0xff] %v5924
        %6437 = vst [vmem:[%s507 + $0x910] sm:$0xff] %v5925
        %6438 = vst [vmem:[%s507 + $0x918] sm:$0xff] %v5926
        %6439 = vst [vmem:[%s507 + $0x920] sm:$0xff] %v5927
        %6440 = vst [vmem:[%s507 + $0x928] sm:$0xff] %v5928
        %6441 = vst [vmem:[%s507 + $0x930] sm:$0xff] %v5929
        %6442 = vst [vmem:[%s507 + $0x938] sm:$0xff] %v5930
        %6443 = vst [vmem:[%s507 + $0x940] sm:$0xff] %v5931
        %6444 = vst [vmem:[%s507 + $0x948] sm:$0xff] %v5932
        %6445 = vst [vmem:[%s507 + $0x950] sm:$0xff] %v5933
        %6446 = vst [vmem:[%s507 + $0x958] sm:$0xff] %v5934
        %6447 = vst [vmem:[%s507 + $0x960] sm:$0xff] %v5935
        %6448 = vst [vmem:[%s507 + $0x968] sm:$0xff] %v5936
        %6449 = vst [vmem:[%s507 + $0x970] sm:$0xff] %v5937
        %6450 = vst [vmem:[%s507 + $0x978] sm:$0xff] %v5938
        %6451 = vst [vmem:[%s507 + $0x980] sm:$0xff] %v5939
        %6452 = vst [vmem:[%s507 + $0x988] sm:$0xff] %v5940
        %6453 = vst [vmem:[%s507 + $0x990] sm:$0xff] %v5941
        %6454 = vst [vmem:[%s507 + $0x998] sm:$0xff] %v5942
        %6455 = vst [vmem:[%s507 + $0x9a0] sm:$0xff] %v5943
        %6456 = vst [vmem:[%s507 + $0x9a8] sm:$0xff] %v5944
        %6457 = vst [vmem:[%s507 + $0x9b0] sm:$0xff] %v5945
        %6458 = vst [vmem:[%s507 + $0x9b8] sm:$0xff] %v5946
        %6459 = vst [vmem:[%s507 + $0x9c0] sm:$0xff] %v5947
        %6460 = vst [vmem:[%s507 + $0x9c8] sm:$0xff] %v5948
        %6461 = vst [vmem:[%s507 + $0x9d0] sm:$0xff] %v5949
        %6462 = vst [vmem:[%s507 + $0x9d8] sm:$0xff] %v5950
        %6463 = vst [vmem:[%s507 + $0x9e0] sm:$0xff] %v5951
        %6464 = vst [vmem:[%s507 + $0x9e8] sm:$0xff] %v5952
        %6465 = vst [vmem:[%s507 + $0x9f0] sm:$0xff] %v5953
        %6466 = vst [vmem:[%s507 + $0x9f8] sm:$0xff] %v5954
        %6467 = vst [vmem:[%s507 + $0xa00] sm:$0xff] %v5955
        %6468 = vst [vmem:[%s507 + $0xa08] sm:$0xff] %v5956
        %6469 = vst [vmem:[%s507 + $0xa10] sm:$0xff] %v5957
        %6470 = vst [vmem:[%s507 + $0xa18] sm:$0xff] %v5958
        %6471 = vst [vmem:[%s507 + $0xa20] sm:$0xff] %v5959
        %6472 = vst [vmem:[%s507 + $0xa28] sm:$0xff] %v5960
        %6473 = vst [vmem:[%s507 + $0xa30] sm:$0xff] %v5961
        %6474 = vst [vmem:[%s507 + $0xa38] sm:$0xff] %v5962
        %6475 = vst [vmem:[%s507 + $0xa40] sm:$0xff] %v5963
        %6476 = vst [vmem:[%s507 + $0xa48] sm:$0xff] %v5964
        %6477 = vst [vmem:[%s507 + $0xa50] sm:$0xff] %v5965
        %6478 = vst [vmem:[%s507 + $0xa58] sm:$0xff] %v5966
        %6479 = vst [vmem:[%s507 + $0xa60] sm:$0xff] %v5967
        %6480 = vst [vmem:[%s507 + $0xa68] sm:$0xff] %v5968
        %6481 = vst [vmem:[%s507 + $0xa70] sm:$0xff] %v5969
        %6482 = vst [vmem:[%s507 + $0xa78] sm:$0xff] %v5970
        %6483 = vst [vmem:[%s507 + $0xa80] sm:$0xff] %v5971
        %6484 = vst [vmem:[%s507 + $0xa88] sm:$0xff] %v5972
        %6485 = vst [vmem:[%s507 + $0xa90] sm:$0xff] %v5973
        %6486 = vst [vmem:[%s507 + $0xa98] sm:$0xff] %v5974
        %6487 = vst [vmem:[%s507 + $0xaa0] sm:$0xff] %v5975
        %6488 = vst [vmem:[%s507 + $0xaa8] sm:$0xff] %v5976
        %6489 = vst [vmem:[%s507 + $0xab0] sm:$0xff] %v5977
        %6490 = vst [vmem:[%s507 + $0xab8] sm:$0xff] %v5978
        %6491 = vst [vmem:[%s507 + $0xac0] sm:$0xff] %v5979
        %6492 = vst [vmem:[%s507 + $0xac8] sm:$0xff] %v5980
        %6493 = vst [vmem:[%s507 + $0xad0] sm:$0xff] %v5981
        %6494 = vst [vmem:[%s507 + $0xad8] sm:$0xff] %v5982
        %6495 = vst [vmem:[%s507 + $0xae0] sm:$0xff] %v5983
        %6496 = vst [vmem:[%s507 + $0xae8] sm:$0xff] %v5984
        %6497 = vst [vmem:[%s507 + $0xaf0] sm:$0xff] %v5985
        %6498 = vst [vmem:[%s507 + $0xaf8] sm:$0xff] %v5986
        %6499 = vst [vmem:[%s507 + $0xb00] sm:$0xff] %v5987
        %6500 = vst [vmem:[%s507 + $0xb08] sm:$0xff] %v5988
        %6501 = vst [vmem:[%s507 + $0xb10] sm:$0xff] %v5989
        %6502 = vst [vmem:[%s507 + $0xb18] sm:$0xff] %v5990
        %6503 = vst [vmem:[%s507 + $0xb20] sm:$0xff] %v5991
        %6504 = vst [vmem:[%s507 + $0xb28] sm:$0xff] %v5992
        %6505 = vst [vmem:[%s507 + $0xb30] sm:$0xff] %v5993
        %6506 = vst [vmem:[%s507 + $0xb38] sm:$0xff] %v5994
        %6507 = vst [vmem:[%s507 + $0xb40] sm:$0xff] %v5995
        %6508 = vst [vmem:[%s507 + $0xb48] sm:$0xff] %v5996
        %6509 = vst [vmem:[%s507 + $0xb50] sm:$0xff] %v5997
        %6510 = vst [vmem:[%s507 + $0xb58] sm:$0xff] %v5998
        %6511 = vst [vmem:[%s507 + $0xb60] sm:$0xff] %v5999
        %6512 = vst [vmem:[%s507 + $0xb68] sm:$0xff] %v6000
        %6513 = vst [vmem:[%s507 + $0xb70] sm:$0xff] %v6001
        %6514 = vst [vmem:[%s507 + $0xb78] sm:$0xff] %v6002
        %6515 = vst [vmem:[%s507 + $0xb80] sm:$0xff] %v6003
        %6516 = vst [vmem:[%s507 + $0xb88] sm:$0xff] %v6004
        %6517 = vst [vmem:[%s507 + $0xb90] sm:$0xff] %v6005
        %6518 = vst [vmem:[%s507 + $0xb98] sm:$0xff] %v6006
        %6519 = vst [vmem:[%s507 + $0xba0] sm:$0xff] %v6007
        %6520 = vst [vmem:[%s507 + $0xba8] sm:$0xff] %v6008
        %6521 = vst [vmem:[%s507 + $0xbb0] sm:$0xff] %v6009
        %6522 = vst [vmem:[%s507 + $0xbb8] sm:$0xff] %v6010
        %6523 = vst [vmem:[%s507 + $0xbc0] sm:$0xff] %v6011
        %6524 = vst [vmem:[%s507 + $0xbc8] sm:$0xff] %v6012
        %6525 = vst [vmem:[%s507 + $0xbd0] sm:$0xff] %v6013
        %6526 = vst [vmem:[%s507 + $0xbd8] sm:$0xff] %v6014
        %6527 = vst [vmem:[%s507 + $0xbe0] sm:$0xff] %v6015
        %6528 = vst [vmem:[%s507 + $0xbe8] sm:$0xff] %v6016
        %6529 = vst [vmem:[%s507 + $0xbf0] sm:$0xff] %v6017
        %6530 = vst [vmem:[%s507 + $0xbf8] sm:$0xff] %v6018
        %6531 = vst [vmem:[%s507 + $0xc00] sm:$0xff] %v6019
        %6532 = vst [vmem:[%s507 + $0xc08] sm:$0xff] %v6020
        %6533 = vst [vmem:[%s507 + $0xc10] sm:$0xff] %v6021
        %6534 = vst [vmem:[%s507 + $0xc18] sm:$0xff] %v6022
        %6535 = vst [vmem:[%s507 + $0xc20] sm:$0xff] %v6023
        %6536 = vst [vmem:[%s507 + $0xc28] sm:$0xff] %v6024
        %6537 = vst [vmem:[%s507 + $0xc30] sm:$0xff] %v6025
        %6538 = vst [vmem:[%s507 + $0xc38] sm:$0xff] %v6026
        %6539 = vst [vmem:[%s507 + $0xc40] sm:$0xff] %v6027
        %6540 = vst [vmem:[%s507 + $0xc48] sm:$0xff] %v6028
        %6541 = vst [vmem:[%s507 + $0xc50] sm:$0xff] %v6029
        %6542 = vst [vmem:[%s507 + $0xc58] sm:$0xff] %v6030
        %6543 = vst [vmem:[%s507 + $0xc60] sm:$0xff] %v6031
        %6544 = vst [vmem:[%s507 + $0xc68] sm:$0xff] %v6032
        %6545 = vst [vmem:[%s507 + $0xc70] sm:$0xff] %v6033
        %6546 = vst [vmem:[%s507 + $0xc78] sm:$0xff] %v6034
        %6547 = vst [vmem:[%s507 + $0xc80] sm:$0xff] %v6035
        %6548 = vst [vmem:[%s507 + $0xc88] sm:$0xff] %v6036
        %6549 = vst [vmem:[%s507 + $0xc90] sm:$0xff] %v6037
        %6550 = vst [vmem:[%s507 + $0xc98] sm:$0xff] %v6038
        %6551 = vst [vmem:[%s507 + $0xca0] sm:$0xff] %v6039
        %6552 = vst [vmem:[%s507 + $0xca8] sm:$0xff] %v6040
        %6553 = vst [vmem:[%s507 + $0xcb0] sm:$0xff] %v6041
        %6554 = vst [vmem:[%s507 + $0xcb8] sm:$0xff] %v6042
        %6555 = vst [vmem:[%s507 + $0xcc0] sm:$0xff] %v6043
        %6556 = vst [vmem:[%s507 + $0xcc8] sm:$0xff] %v6044
        %6557 = vst [vmem:[%s507 + $0xcd0] sm:$0xff] %v6045
        %6558 = vst [vmem:[%s507 + $0xcd8] sm:$0xff] %v6046
        %6559 = vst [vmem:[%s507 + $0xce0] sm:$0xff] %v6047
        %6560 = vst [vmem:[%s507 + $0xce8] sm:$0xff] %v6048
        %6561 = vst [vmem:[%s507 + $0xcf0] sm:$0xff] %v6049
        %6562 = vst [vmem:[%s507 + $0xcf8] sm:$0xff] %v6050
        %6563 = vst [vmem:[%s507 + $0xd00] sm:$0xff] %v6051
        %6564 = vst [vmem:[%s507 + $0xd08] sm:$0xff] %v6052
        %6565 = vst [vmem:[%s507 + $0xd10] sm:$0xff] %v6053
        %6566 = vst [vmem:[%s507 + $0xd18] sm:$0xff] %v6054
        %6567 = vst [vmem:[%s507 + $0xd20] sm:$0xff] %v6055
        %6568 = vst [vmem:[%s507 + $0xd28] sm:$0xff] %v6056
        %6569 = vst [vmem:[%s507 + $0xd30] sm:$0xff] %v6057
        %6570 = vst [vmem:[%s507 + $0xd38] sm:$0xff] %v6058
        %6571 = vst [vmem:[%s507 + $0xd40] sm:$0xff] %v6059
        %6572 = vst [vmem:[%s507 + $0xd48] sm:$0xff] %v6060
        %6573 = vst [vmem:[%s507 + $0xd50] sm:$0xff] %v6061
        %6574 = vst [vmem:[%s507 + $0xd58] sm:$0xff] %v6062
        %6575 = vst [vmem:[%s507 + $0xd60] sm:$0xff] %v6063
        %6576 = vst [vmem:[%s507 + $0xd68] sm:$0xff] %v6064
        %6577 = vst [vmem:[%s507 + $0xd70] sm:$0xff] %v6065
        %6578 = vst [vmem:[%s507 + $0xd78] sm:$0xff] %v6066
        %6579 = vst [vmem:[%s507 + $0xd80] sm:$0xff] %v6067
        %6580 = vst [vmem:[%s507 + $0xd88] sm:$0xff] %v6068
        %6581 = vst [vmem:[%s507 + $0xd90] sm:$0xff] %v6069
        %6582 = vst [vmem:[%s507 + $0xd98] sm:$0xff] %v6070
        %6583 = vst [vmem:[%s507 + $0xda0] sm:$0xff] %v6071
        %6584 = vst [vmem:[%s507 + $0xda8] sm:$0xff] %v6072
        %6585 = vst [vmem:[%s507 + $0xdb0] sm:$0xff] %v6073
        %6586 = vst [vmem:[%s507 + $0xdb8] sm:$0xff] %v6074
        %6587 = vst [vmem:[%s507 + $0xdc0] sm:$0xff] %v6075
        %6588 = vst [vmem:[%s507 + $0xdc8] sm:$0xff] %v6076
        %6589 = vst [vmem:[%s507 + $0xdd0] sm:$0xff] %v6077
        %6590 = vst [vmem:[%s507 + $0xdd8] sm:$0xff] %v6078
        %6591 = vst [vmem:[%s507 + $0xde0] sm:$0xff] %v6079
        %6592 = vst [vmem:[%s507 + $0xde8] sm:$0xff] %v6080
        %6593 = vst [vmem:[%s507 + $0xdf0] sm:$0xff] %v6081
        %6594 = vst [vmem:[%s507 + $0xdf8] sm:$0xff] %v6082
        %6595 = vst [vmem:[%s507 + $0xe00] sm:$0xff] %v6083
        %6596 = vst [vmem:[%s507 + $0xe08] sm:$0xff] %v6084
        %6597 = vst [vmem:[%s507 + $0xe10] sm:$0xff] %v6085
        %6598 = vst [vmem:[%s507 + $0xe18] sm:$0xff] %v6086
        %6599 = vst [vmem:[%s507 + $0xe20] sm:$0xff] %v6087
        %6600 = vst [vmem:[%s507 + $0xe28] sm:$0xff] %v6088
        %6601 = vst [vmem:[%s507 + $0xe30] sm:$0xff] %v6089
        %6602 = vst [vmem:[%s507 + $0xe38] sm:$0xff] %v6090
        %6603 = vst [vmem:[%s507 + $0xe40] sm:$0xff] %v6091
        %6604 = vst [vmem:[%s507 + $0xe48] sm:$0xff] %v6092
        %6605 = vst [vmem:[%s507 + $0xe50] sm:$0xff] %v6093
        %6606 = vst [vmem:[%s507 + $0xe58] sm:$0xff] %v6094
        %6607 = vst [vmem:[%s507 + $0xe60] sm:$0xff] %v6095
        %6608 = vst [vmem:[%s507 + $0xe68] sm:$0xff] %v6096
        %6609 = vst [vmem:[%s507 + $0xe70] sm:$0xff] %v6097
        %6610 = vst [vmem:[%s507 + $0xe78] sm:$0xff] %v6098
        %6611 = vst [vmem:[%s507 + $0xe80] sm:$0xff] %v6099
        %6612 = vst [vmem:[%s507 + $0xe88] sm:$0xff] %v6100
        %6613 = vst [vmem:[%s507 + $0xe90] sm:$0xff] %v6101
        %6614 = vst [vmem:[%s507 + $0xe98] sm:$0xff] %v6102
        %6615 = vst [vmem:[%s507 + $0xea0] sm:$0xff] %v6103
        %6616 = vst [vmem:[%s507 + $0xea8] sm:$0xff] %v6104
        %6617 = vst [vmem:[%s507 + $0xeb0] sm:$0xff] %v6105
        %6618 = vst [vmem:[%s507 + $0xeb8] sm:$0xff] %v6106
        %6619 = vst [vmem:[%s507 + $0xec0] sm:$0xff] %v6107
        %6620 = vst [vmem:[%s507 + $0xec8] sm:$0xff] %v6108
        %6621 = vst [vmem:[%s507 + $0xed0] sm:$0xff] %v6109
        %6622 = vst [vmem:[%s507 + $0xed8] sm:$0xff] %v6110
        %6623 = vst [vmem:[%s507 + $0xee0] sm:$0xff] %v6111
        %6624 = vst [vmem:[%s507 + $0xee8] sm:$0xff] %v6112
        %6625 = vst [vmem:[%s507 + $0xef0] sm:$0xff] %v6113
        %6626 = vst [vmem:[%s507 + $0xef8] sm:$0xff] %v6114
        %6627 = vst [vmem:[%s507 + $0xf00] sm:$0xff] %v6115
        %6628 = vst [vmem:[%s507 + $0xf08] sm:$0xff] %v6116
        %6629 = vst [vmem:[%s507 + $0xf10] sm:$0xff] %v6117
        %6630 = vst [vmem:[%s507 + $0xf18] sm:$0xff] %v6118
        %6631 = vst [vmem:[%s507 + $0xf20] sm:$0xff] %v6119
        %6632 = vst [vmem:[%s507 + $0xf28] sm:$0xff] %v6120
        %6633 = vst [vmem:[%s507 + $0xf30] sm:$0xff] %v6121
        %6634 = vst [vmem:[%s507 + $0xf38] sm:$0xff] %v6122
        %6635 = vst [vmem:[%s507 + $0xf40] sm:$0xff] %v6123
        %6636 = vst [vmem:[%s507 + $0xf48] sm:$0xff] %v6124
        %6637 = vst [vmem:[%s507 + $0xf50] sm:$0xff] %v6125
        %6638 = vst [vmem:[%s507 + $0xf58] sm:$0xff] %v6126
        %6639 = vst [vmem:[%s507 + $0xf60] sm:$0xff] %v6127
        %6640 = vst [vmem:[%s507 + $0xf68] sm:$0xff] %v6128
        %6641 = vst [vmem:[%s507 + $0xf70] sm:$0xff] %v6129
        %6642 = vst [vmem:[%s507 + $0xf78] sm:$0xff] %v6130
        %6643 = vst [vmem:[%s507 + $0xf80] sm:$0xff] %v6131
        %6644 = vst [vmem:[%s507 + $0xf88] sm:$0xff] %v6132
        %6645 = vst [vmem:[%s507 + $0xf90] sm:$0xff] %v6133
        %6646 = vst [vmem:[%s507 + $0xf98] sm:$0xff] %v6134
        %6647 = vst [vmem:[%s507 + $0xfa0] sm:$0xff] %v6135
        %6648 = vst [vmem:[%s507 + $0xfa8] sm:$0xff] %v6136
        %6649 = vst [vmem:[%s507 + $0xfb0] sm:$0xff] %v6137
        %6650 = vst [vmem:[%s507 + $0xfb8] sm:$0xff] %v6138
        %6651 = vst [vmem:[%s507 + $0xfc0] sm:$0xff] %v6139
        %6652 = vst [vmem:[%s507 + $0xfc8] sm:$0xff] %v6140
        %6653 = vst [vmem:[%s507 + $0xfd0] sm:$0xff] %v6141
        %6654 = vst [vmem:[%s507 + $0xfd8] sm:$0xff] %v6142
        %6655 = vst [vmem:[%s507 + $0xfe0] sm:$0xff] %v6143
        %6656 = vst [vmem:[%s507 + $0xfe8] sm:$0xff] %v6144
        %6657 = vst [vmem:[%s507 + $0xff0] sm:$0xff] %v6145
        %6658 = vst [vmem:[%s507 + $0xff8] sm:$0xff] %v6146
        %s6659 = sand.u32 %s216, 1
        %s6660 = scalar_lea.sflag [#allocation4], %s6659
        %s6661 = sand.u32 %s216, 1
        %s6662 = smul.addr %s6661, 4096
        %s6663 = scalar_lea.vmem [#allocation13], %s6662
        // Predicated region
        $region69: #{tpu_custom_call.1} parent=43 // pred_check
          %p6664 = pneg %p226
        $region70: #{tpu_custom_call.1} parent=43 // pred_check_branch
          %6666 = sbr.rel (%p6664) target = $region72
        $region71: #{tpu_custom_call.1} parent=43 // pred_region
          %s6667 = smul.u32 128, %s36
          %6669 = vsyncadd %s6660, 0
          %s6670 = smul.addr %s6667, 4
          %s6671 = smul.addr %s37, 1024
          %s6672 = sadd.s32 %s6670, %s6671
          %s6673 = smul.addr %s6672, 8
          %s6674 = scalar_lea.hbm %s6, %s6673
          %s6675 = sshll.u32 %s6663, 4
          %s6676 = int_to_ptr.vmem [resolvable:$true] %s6675
          %s6677 = sshll.u32 %s6674, 4
          %s6678 = int_to_ptr.hbm [resolvable:$true] %s6677
          %6683 = dma.vmem_to_hbm [thread:$0]  %s6676, 65536, %s6678, %s6660, 512, 512, 32
        $region72: #{tpu_custom_call.1} parent=43 // pred_fallthru
          _
      $region44: #{tpu_custom_call.1} parent=5 // pred_fallthru
        _
      %p6684 = scmp.le.s32.totalorder 2, %s27
      // Predicated region
      $region73: #{tpu_custom_call.1} parent=5 // pred_check
        %p6685 = pneg %p6684
      $region74: #{tpu_custom_call.1} parent=5 // pred_check_branch
        %6687 = sbr.rel (%p6685) target = $region76
      $region75: #{tpu_custom_call.1} parent=5 // pred_region
        %s6688 = ssub.s32 %s27, 2
        // Predicated region
        $region77: #{tpu_custom_call.1} parent=75 // pred_check
          %p6689 = pneg %p232
        $region78: #{tpu_custom_call.1} parent=75 // pred_check_branch
          %6691 = sbr.rel (%p6689) target = $region80
        $region79: #{tpu_custom_call.1} parent=75 // pred_region
          %s6692 = sand.u32 %s217, 1
          %s6693 = scalar_lea.sflag [#allocation4], %s6692
          %s6694 = sand.u32 %s217, 1
          %s6695 = smul.addr %s6694, 4096
          %s6696 = scalar_lea.vmem [#allocation13], %s6695
          %6698 = dma.done %s6693, 65536
        $region80: #{tpu_custom_call.1} parent=75 // pred_fallthru
          _
      $region76: #{tpu_custom_call.1} parent=5 // pred_fallthru
        _
    $region6: #{tpu_custom_call.1} parent=1 // loop_footer
      %s31 = sadd.s32 1, %s27
    $region7: #{tpu_custom_call.1} parent=1 // loop_footer_branch
      %26 = sbr.rel target = $region3
    $region8: #{tpu_custom_call.1} parent=1 // loop_exit
      _
    %6699 = vsyncpa [#allocation3], 1
    %s6700 = scalar_lea.sflag [#allocation3], 1
    %6701 = vsyncpa %s6700, 1
    %6702 = vsyncpa [#allocation6], 1
    %s6703 = scalar_lea.sflag [#allocation6], 1
    %6704 = vsyncpa %s6703, 1
    %6705 = vsyncpa [#allocation9], 1
    %s6706 = scalar_lea.sflag [#allocation9], 1
    %6707 = vsyncpa %s6706, 1
    %6708 = vsyncpa [#allocation12], 1
    %s6709 = scalar_lea.sflag [#allocation12], 1
    %6710 = vsyncpa %s6709, 1
    %6711 = vsyncpa [#allocation4], 1
    %s6712 = scalar_lea.sflag [#allocation4], 1
    %6713 = vsyncpa %s6712, 1

</llo_original>
